<compile_context>
chip_gen: v7x
topology: tpu7x:2x2x1
jax: 0.10.0
libtpu: 0.0.40
codegen_flags: <defaults>
</compile_context>

<pallas_src>
import jax
import jax.numpy as jnp
from jax.experimental import pallas as pl
from jax.experimental.pallas import tpu as pltpu

KS = 3          # kernel_size
PAD = 1         # get_same_padding(3, 1) == 1
LANE = 128      # TPU lane width


def _round_up(v, m):
    return (v + m - 1) // m * m


def resblock_kernel(x_ref, w1_ref, b1_ref, w2_ref, b2_ref,
                    fc1w_ref, fc1b_ref, fc2w_ref, fc2b_ref,
                    out_ref, pad_ref):
    """One batch-element block of the ResBlock forward.

    x_ref   : (BN, H, W, Cp)     f32 input block (Cp = C padded to 128)
    w*_ref  : (KS*KS*Cp, Cp)     bf16 im2col conv weights
    b*_ref  : (1, Cp)            f32 conv biases
    fc*_ref : SE linear weights/biases, transposed to (in, out), zero padded
    pad_ref : (BN, H+2, W+2, Cp) bf16 VMEM scratch (zero halo + activations)
    """
    BN, H, W, Cp = x_ref.shape

    # --- zero only the 1-pixel halo (interior is always fully overwritten) ---
    zero_row = jnp.zeros((BN, PAD, W + 2 * PAD, Cp), pad_ref.dtype)
    zero_col = jnp.zeros((BN, H, PAD, Cp), pad_ref.dtype)
    pad_ref[:, 0:PAD, :, :] = zero_row
    pad_ref[:, H + PAD:H + 2 * PAD, :, :] = zero_row
    pad_ref[:, PAD:PAD + H, 0:PAD, :] = zero_col
    pad_ref[:, PAD:PAD + H, W + PAD:W + 2 * PAD, :] = zero_col

    def conv3x3(w_ref, b_ref):
        # im2col: one (BN*H*W, 9*Cp) x (9*Cp, Cp) bf16 MXU matmul, f32 accum.
        taps = [pad_ref[:, kh:kh + H, kw:kw + W, :]
                for kh in range(KS) for kw in range(KS)]
        patch = jnp.concatenate(taps, axis=-1).reshape(BN * H * W, KS * KS * Cp)
        acc = jnp.dot(patch, w_ref[...], preferred_element_type=jnp.float32)
        return (acc + b_ref[...]).reshape(BN, H, W, Cp)

    x = x_ref[...]                                          # f32 residual copy

    # ---- conv1 + ReLU ------------------------------------------------------
    pad_ref[:, PAD:PAD + H, PAD:PAD + W, :] = x.astype(pad_ref.dtype)
    h1 = jnp.maximum(conv3x3(w1_ref, b1_ref), 0.0)

    # ---- conv2 (halo still zero; interior overwritten) ----------------------
    pad_ref[:, PAD:PAD + H, PAD:PAD + W, :] = h1.astype(pad_ref.dtype)
    h2 = conv3x3(w2_ref, b2_ref)

    # ---- SE block: GAP -> fc1 -> ReLU -> fc2 -> sigmoid -> scale (all f32) --
    y = jnp.mean(h2, axis=(1, 2))                                   # (BN, Cp)
    y = jnp.maximum(
        jnp.dot(y, fc1w_ref[...], preferred_element_type=jnp.float32)
        + fc1b_ref[...], 0.0)                                       # (BN, MIDp)
    y = (jnp.dot(y, fc2w_ref[...], preferred_element_type=jnp.float32)
         + fc2b_ref[...])                                           # (BN, Cp)
    y = pl.reciprocal(1.0 + jnp.exp(-y))         # sigmoid: exp on EUP + recip

    # ---- scale + residual add (identity path) -------------------------------
    out_ref[...] = (h2 * y[:, None, None, :] + x).astype(out_ref.dtype)


def resblock_forward(x_nchw, params):
    """Wrapper: NCHW in/out, parameters in PyTorch conventions."""
    N, C, H, W = x_nchw.shape
    c_out, c_in = params["w1"].shape[:2]
    # TODO(synk): res_translate path (inplanes!=planes or stride!=1) not implemented.
    assert c_in == C and c_out == C, "identity-residual config required"
    MID = params["fc1w"].shape[0]

    Cp = _round_up(C, LANE)       # lane-dense channel axis
    MIDp = _round_up(MID, LANE)

    def pad2(a, rows, cols):
        return jnp.pad(a, ((0, rows - a.shape[0]), (0, cols - a.shape[1])))

    def conv_w(w):   # OIHW -> (KS*KS*Cp, Cp), bf16, im2col row order (kh,kw,cin)
        wt = jnp.transpose(w, (2, 3, 1, 0))                    # (kh,kw,Cin,Cout)
        wt = jnp.pad(wt, ((0, 0), (0, 0), (0, Cp - C), (0, Cp - C)))
        return wt.reshape(KS * KS * Cp, Cp).astype(jnp.bfloat16)

    x_nhwc = jnp.transpose(x_nchw, (0, 2, 3, 1))                       # NHWC
    x_nhwc = jnp.pad(x_nhwc, ((0, 0), (0, 0), (0, 0), (0, Cp - C)))

    w1 = conv_w(params["w1"])
    w2 = conv_w(params["w2"])
    b1 = pad2(params["b1"].reshape(1, -1), 1, Cp)
    b2 = pad2(params["b2"].reshape(1, -1), 1, Cp)
    fc1w = pad2(params["fc1w"].T, Cp, MIDp)                            # (Cp, MIDp)
    fc1b = pad2(params["fc1b"].reshape(1, -1), 1, MIDp)
    fc2w = pad2(params["fc2w"].T, MIDp, Cp)                            # (MIDp, Cp)
    fc2b = pad2(params["fc2b"].reshape(1, -1), 1, Cp)

    grid = (N,)   # one batch element per grid step; SE pool needs full H,W

    out_padded = pl.pallas_call(
        resblock_kernel,
        out_shape=jax.ShapeDtypeStruct((N, H, W, Cp), jnp.float32),
        grid_spec=pltpu.PrefetchScalarGridSpec(
            num_scalar_prefetch=0,
            grid=grid,
            in_specs=[
                pl.BlockSpec((1, H, W, Cp), lambda n: (n, 0, 0, 0)),       # x
                pl.BlockSpec((KS * KS * Cp, Cp), lambda n: (0, 0)),        # w1
                pl.BlockSpec((1, Cp), lambda n: (0, 0)),                   # b1
                pl.BlockSpec((KS * KS * Cp, Cp), lambda n: (0, 0)),        # w2
                pl.BlockSpec((1, Cp), lambda n: (0, 0)),                   # b2
                pl.BlockSpec((Cp, MIDp), lambda n: (0, 0)),                # fc1w
                pl.BlockSpec((1, MIDp), lambda n: (0, 0)),                 # fc1b
                pl.BlockSpec((MIDp, Cp), lambda n: (0, 0)),                # fc2w
                pl.BlockSpec((1, Cp), lambda n: (0, 0)),                   # fc2b
            ],
            out_specs=pl.BlockSpec((1, H, W, Cp), lambda n: (n, 0, 0, 0)),
            scratch_shapes=[
                pltpu.VMEM((1, H + 2 * PAD, W + 2 * PAD, Cp), jnp.bfloat16),
            ],
        ),
        compiler_params=pltpu.CompilerParams(
            dimension_semantics=("parallel",),        # v7x: split batch over 2 TCs
            vmem_limit_bytes=32 * 1024 * 1024,
        ),
    )(x_nhwc, w1, b1, w2, b2, fc1w, fc1b, fc2w, fc2b)

    out = out_padded[:, :, :, :C]                                      # drop pad
    return jnp.transpose(out, (0, 3, 1, 2))                            # NCHW


def resblock_reference(x, p, conv_dtype=jnp.float32):
    """Pure-JAX reference matching the PyTorch forward (NCHW).

    conv_dtype=bfloat16 mirrors the kernel's bf16-operand / f32-accumulate convs.
    """
    dn = ("NCHW", "OIHW", "NCHW")

    def conv(inp, w, b):
        out = jax.lax.conv_general_dilated(
            inp.astype(conv_dtype), w.astype(conv_dtype), (1, 1),
            [(PAD, PAD), (PAD, PAD)], dimension_numbers=dn,
            preferred_element_type=jnp.float32)
        return out + b[None, :, None, None]

    h1 = jnp.maximum(conv(x, p["w1"], p["b1"]), 0.0)
    h2 = conv(h1, p["w2"], p["b2"])
    y = jnp.mean(h2, axis=(2, 3))
    y = jnp.maximum(y @ p["fc1w"].T + p["fc1b"], 0.0)
    y = jax.nn.sigmoid(y @ p["fc2w"].T + p["fc2b"])
    return h2 * y[:, :, None, None] + x


if __name__ == "__main__":
    # Small deterministic config: batch=2, inplanes=planes=8, spatial=16x16.
    N, C, H, W = 2, 8, 16, 16
    MID = C // 4  # SE reduction = 4

    key = jax.random.PRNGKey(0)
    keys = jax.random.split(key, 9)
    params = {
        "w1":   0.1 * jax.random.normal(keys[0], (C, C, KS, KS), jnp.float32),
        "b1":   0.1 * jax.random.normal(keys[1], (C,), jnp.float32),
        "w2":   0.1 * jax.random.normal(keys[2], (C, C, KS, KS), jnp.float32),
        "b2":   0.1 * jax.random.normal(keys[3], (C,), jnp.float32),
        "fc1w": 0.1 * jax.random.normal(keys[4], (MID, C), jnp.float32),
        "fc1b": 0.1 * jax.random.normal(keys[5], (MID,), jnp.float32),
        "fc2w": 0.1 * jax.random.normal(keys[6], (C, MID), jnp.float32),
        "fc2b": 0.1 * jax.random.normal(keys[7], (C,), jnp.float32),
    }
    x = jax.random.normal(keys[8], (N, C, H, W), jnp.float32)

    out = jax.block_until_ready(resblock_forward(x, params))

    # Tight check vs a reference using the same bf16-operand / f32-accum convs.
    ref_mixed = jax.block_until_ready(
        resblock_reference(x, params, conv_dtype=jnp.bfloat16))
    # Loose check vs the pure-f32 reference (bounds the bf16 quantization).
    ref_f32 = jax.block_until_ready(resblock_reference(x, params))

    assert out.shape == ref_f32.shape
    err_mixed = float(jnp.max(jnp.abs(out - ref_mixed)))
    err_f32 = float(jnp.max(jnp.abs(out - ref_f32)))
    assert err_mixed < 1e-2, f"mixed-precision reference mismatch: {err_mixed}"
    assert err_f32 < 1e-1, f"f32 reference mismatch: {err_f32}"

    print("KERNEL_OK")
</pallas_src>

<mosaic_0001>
module attributes {stable_mosaic.version = 11 : i64} {
  func.func @resblock_kernel(%arg0: i32, %arg1: memref<1x16x16x128xf32, #tpu.memory_space<vmem>>, %arg2: memref<1152x128xbf16, #tpu.memory_space<vmem>>, %arg3: memref<1x128xf32, #tpu.memory_space<vmem>>, %arg4: memref<1152x128xbf16, #tpu.memory_space<vmem>>, %arg5: memref<1x128xf32, #tpu.memory_space<vmem>>, %arg6: memref<128x128xf32, #tpu.memory_space<vmem>>, %arg7: memref<1x128xf32, #tpu.memory_space<vmem>>, %arg8: memref<128x128xf32, #tpu.memory_space<vmem>>, %arg9: memref<1x128xf32, #tpu.memory_space<vmem>>, %arg10: memref<1x16x16x128xf32, #tpu.memory_space<vmem>>, %arg11: memref<1x18x18x128xbf16, #tpu.memory_space<vmem>>) attributes {dimension_semantics = [#tpu.dimension_semantics<parallel>], iteration_bounds = array<i64: 2>, scalar_prefetch = 0 : i64, scratch_operands = 1 : i64, tpu.core_type = #tpu.core_type<tc>, window_params = [{transform_indices = @transform_0, window_bounds = array<i64: 1, 16, 16, 128>}, {pipeline_mode = #tpu.pipeline_mode<synchronous>, transform_indices = @transform_1, window_bounds = array<i64: 1152, 128>}, {pipeline_mode = #tpu.pipeline_mode<synchronous>, transform_indices = @transform_2, window_bounds = array<i64: 1, 128>}, {pipeline_mode = #tpu.pipeline_mode<synchronous>, transform_indices = @transform_3, window_bounds = array<i64: 1152, 128>}, {pipeline_mode = #tpu.pipeline_mode<synchronous>, transform_indices = @transform_4, window_bounds = array<i64: 1, 128>}, {pipeline_mode = #tpu.pipeline_mode<synchronous>, transform_indices = @transform_5, window_bounds = array<i64: 128, 128>}, {pipeline_mode = #tpu.pipeline_mode<synchronous>, transform_indices = @transform_6, window_bounds = array<i64: 1, 128>}, {pipeline_mode = #tpu.pipeline_mode<synchronous>, transform_indices = @transform_7, window_bounds = array<i64: 128, 128>}, {pipeline_mode = #tpu.pipeline_mode<synchronous>, transform_indices = @transform_8, window_bounds = array<i64: 1, 128>}, {transform_indices = @transform_9, window_bounds = array<i64: 1, 16, 16, 128>}]} {
    %cst = arith.constant 0.000000e+00 : bf16
    %0 = vector.broadcast %cst : bf16 to vector<1x1x18x128xbf16>
    %cst_0 = arith.constant 0.000000e+00 : bf16
    %1 = vector.broadcast %cst_0 : bf16 to vector<1x16x1x128xbf16>
    %c0 = arith.constant 0 : index
    %c0_1 = arith.constant 0 : index
    %c0_2 = arith.constant 0 : index
    %c0_3 = arith.constant 0 : index
    %2 = vector.load %arg11[%c0, %c0_1, %c0_2, %c0_3] : memref<1x18x18x128xbf16, #tpu.memory_space<vmem>>, vector<1x1x18x128xbf16>
    tpu.vector_store %arg11[%c0, %c0_1, %c0_2, %c0_3], %0 {strides = array<i32>} : memref<1x18x18x128xbf16, #tpu.memory_space<vmem>>, vector<1x1x18x128xbf16>,
    %c0_4 = arith.constant 0 : index
    %c17 = arith.constant 17 : index
    %c0_5 = arith.constant 0 : index
    %c0_6 = arith.constant 0 : index
    %3 = vector.load %arg11[%c0_4, %c17, %c0_5, %c0_6] : memref<1x18x18x128xbf16, #tpu.memory_space<vmem>>, vector<1x1x18x128xbf16>
    tpu.vector_store %arg11[%c0_4, %c17, %c0_5, %c0_6], %0 {strides = array<i32>} : memref<1x18x18x128xbf16, #tpu.memory_space<vmem>>, vector<1x1x18x128xbf16>,
    %c0_7 = arith.constant 0 : index
    %c1 = arith.constant 1 : index
    %c0_8 = arith.constant 0 : index
    %c0_9 = arith.constant 0 : index
    %4 = vector.load %arg11[%c0_7, %c1, %c0_8, %c0_9] : memref<1x18x18x128xbf16, #tpu.memory_space<vmem>>, vector<1x16x1x128xbf16>
    tpu.vector_store %arg11[%c0_7, %c1, %c0_8, %c0_9], %1 {strides = array<i32>} : memref<1x18x18x128xbf16, #tpu.memory_space<vmem>>, vector<1x16x1x128xbf16>,
    %c0_10 = arith.constant 0 : index
    %c1_11 = arith.constant 1 : index
    %c17_12 = arith.constant 17 : index
    %c0_13 = arith.constant 0 : index
    %5 = vector.load %arg11[%c0_10, %c1_11, %c17_12, %c0_13] : memref<1x18x18x128xbf16, #tpu.memory_space<vmem>>, vector<1x16x1x128xbf16>
    tpu.vector_store %arg11[%c0_10, %c1_11, %c17_12, %c0_13], %1 {strides = array<i32>} : memref<1x18x18x128xbf16, #tpu.memory_space<vmem>>, vector<1x16x1x128xbf16>,
    %c0_14 = arith.constant 0 : index
    %c0_15 = arith.constant 0 : index
    %c0_16 = arith.constant 0 : index
    %c0_17 = arith.constant 0 : index
    %6 = vector.load %arg1[%c0_14, %c0_15, %c0_16, %c0_17] : memref<1x16x16x128xf32, #tpu.memory_space<vmem>>, vector<1x16x16x128xf32>
    %7 = arith.truncf %6 : vector<1x16x16x128xf32> to vector<1x16x16x128xbf16>
    %c0_18 = arith.constant 0 : index
    %c1_19 = arith.constant 1 : index
    %c1_20 = arith.constant 1 : index
    %c0_21 = arith.constant 0 : index
    %8 = vector.load %arg11[%c0_18, %c1_19, %c1_20, %c0_21] : memref<1x18x18x128xbf16, #tpu.memory_space<vmem>>, vector<1x16x16x128xbf16>
    tpu.vector_store %arg11[%c0_18, %c1_19, %c1_20, %c0_21], %7 {strides = array<i32>} : memref<1x18x18x128xbf16, #tpu.memory_space<vmem>>, vector<1x16x16x128xbf16>,
    %c0_22 = arith.constant 0 : index
    %c0_23 = arith.constant 0 : index
    %c0_24 = arith.constant 0 : index
    %c0_25 = arith.constant 0 : index
    %9 = vector.load %arg11[%c0_22, %c0_23, %c0_24, %c0_25] : memref<1x18x18x128xbf16, #tpu.memory_space<vmem>>, vector<1x16x16x128xbf16>
    %c0_26 = arith.constant 0 : index
    %c0_27 = arith.constant 0 : index
    %c1_28 = arith.constant 1 : index
    %c0_29 = arith.constant 0 : index
    %10 = vector.load %arg11[%c0_26, %c0_27, %c1_28, %c0_29] : memref<1x18x18x128xbf16, #tpu.memory_space<vmem>>, vector<1x16x16x128xbf16>
    %c0_30 = arith.constant 0 : index
    %c0_31 = arith.constant 0 : index
    %c2 = arith.constant 2 : index
    %c0_32 = arith.constant 0 : index
    %11 = vector.load %arg11[%c0_30, %c0_31, %c2, %c0_32] : memref<1x18x18x128xbf16, #tpu.memory_space<vmem>>, vector<1x16x16x128xbf16>
    %c0_33 = arith.constant 0 : index
    %c1_34 = arith.constant 1 : index
    %c0_35 = arith.constant 0 : index
    %c0_36 = arith.constant 0 : index
    %12 = vector.load %arg11[%c0_33, %c1_34, %c0_35, %c0_36] : memref<1x18x18x128xbf16, #tpu.memory_space<vmem>>, vector<1x16x16x128xbf16>
    %c0_37 = arith.constant 0 : index
    %c1_38 = arith.constant 1 : index
    %c1_39 = arith.constant 1 : index
    %c0_40 = arith.constant 0 : index
    %13 = vector.load %arg11[%c0_37, %c1_38, %c1_39, %c0_40] : memref<1x18x18x128xbf16, #tpu.memory_space<vmem>>, vector<1x16x16x128xbf16>
    %c0_41 = arith.constant 0 : index
    %c1_42 = arith.constant 1 : index
    %c2_43 = arith.constant 2 : index
    %c0_44 = arith.constant 0 : index
    %14 = vector.load %arg11[%c0_41, %c1_42, %c2_43, %c0_44] : memref<1x18x18x128xbf16, #tpu.memory_space<vmem>>, vector<1x16x16x128xbf16>
    %c0_45 = arith.constant 0 : index
    %c2_46 = arith.constant 2 : index
    %c0_47 = arith.constant 0 : index
    %c0_48 = arith.constant 0 : index
    %15 = vector.load %arg11[%c0_45, %c2_46, %c0_47, %c0_48] : memref<1x18x18x128xbf16, #tpu.memory_space<vmem>>, vector<1x16x16x128xbf16>
    %c0_49 = arith.constant 0 : index
    %c2_50 = arith.constant 2 : index
    %c1_51 = arith.constant 1 : index
    %c0_52 = arith.constant 0 : index
    %16 = vector.load %arg11[%c0_49, %c2_50, %c1_51, %c0_52] : memref<1x18x18x128xbf16, #tpu.memory_space<vmem>>, vector<1x16x16x128xbf16>
    %c0_53 = arith.constant 0 : index
    %c2_54 = arith.constant 2 : index
    %c2_55 = arith.constant 2 : index
    %c0_56 = arith.constant 0 : index
    %17 = vector.load %arg11[%c0_53, %c2_54, %c2_55, %c0_56] : memref<1x18x18x128xbf16, #tpu.memory_space<vmem>>, vector<1x16x16x128xbf16>
    %18 = tpu.concatenate %9, %10, %11, %12, %13, %14, %15, %16, %17 in 3 : vector<1x16x16x128xbf16>, vector<1x16x16x128xbf16>, vector<1x16x16x128xbf16>, vector<1x16x16x128xbf16>, vector<1x16x16x128xbf16>, vector<1x16x16x128xbf16>, vector<1x16x16x128xbf16>, vector<1x16x16x128xbf16>, vector<1x16x16x128xbf16> -> vector<1x16x16x1152xbf16>
    %19 = vector.shape_cast %18 : vector<1x16x16x1152xbf16> to vector<256x1152xbf16>
    %c0_57 = arith.constant 0 : index
    %c0_58 = arith.constant 0 : index
    %20 = vector.load %arg2[%c0_57, %c0_58] : memref<1152x128xbf16, #tpu.memory_space<vmem>>, vector<1152x128xbf16>
    %cst_59 = arith.constant dense<0.000000e+00> : vector<256x128xf32>
    %21 = tpu.matmul %19, %20, %cst_59 {dimension_numbers = #tpu.dot_dimension_numbers<[1], [0], [0], [1], [0, 0, 1, 1], [], []>} : vector<256x1152xbf16>, vector<1152x128xbf16>, vector<256x128xf32> -> vector<256x128xf32>
    %c0_60 = arith.constant 0 : index
    %c0_61 = arith.constant 0 : index
    %22 = vector.load %arg3[%c0_60, %c0_61] : memref<1x128xf32, #tpu.memory_space<vmem>>, vector<1x128xf32>
    %23 = vector.broadcast %22 : vector<1x128xf32> to vector<256x128xf32>
    %24 = arith.addf %21, %23 : vector<256x128xf32>
    %25 = vector.shape_cast %24 : vector<256x128xf32> to vector<1x16x16x128xf32>
    %cst_62 = arith.constant 0.000000e+00 : f32
    %26 = vector.broadcast %cst_62 : f32 to vector<1x16x16x128xf32>
    %27 = arith.maximumf %25, %26 : vector<1x16x16x128xf32>
    %28 = arith.truncf %27 : vector<1x16x16x128xf32> to vector<1x16x16x128xbf16>
    %c0_63 = arith.constant 0 : index
    %c1_64 = arith.constant 1 : index
    %c1_65 = arith.constant 1 : index
    %c0_66 = arith.constant 0 : index
    %29 = vector.load %arg11[%c0_63, %c1_64, %c1_65, %c0_66] : memref<1x18x18x128xbf16, #tpu.memory_space<vmem>>, vector<1x16x16x128xbf16>
    tpu.vector_store %arg11[%c0_63, %c1_64, %c1_65, %c0_66], %28 {strides = array<i32>} : memref<1x18x18x128xbf16, #tpu.memory_space<vmem>>, vector<1x16x16x128xbf16>,
    %c0_67 = arith.constant 0 : index
    %c0_68 = arith.constant 0 : index
    %c0_69 = arith.constant 0 : index
    %c0_70 = arith.constant 0 : index
    %30 = vector.load %arg11[%c0_67, %c0_68, %c0_69, %c0_70] : memref<1x18x18x128xbf16, #tpu.memory_space<vmem>>, vector<1x16x16x128xbf16>
    %c0_71 = arith.constant 0 : index
    %c0_72 = arith.constant 0 : index
    %c1_73 = arith.constant 1 : index
    %c0_74 = arith.constant 0 : index
    %31 = vector.load %arg11[%c0_71, %c0_72, %c1_73, %c0_74] : memref<1x18x18x128xbf16, #tpu.memory_space<vmem>>, vector<1x16x16x128xbf16>
    %c0_75 = arith.constant 0 : index
    %c0_76 = arith.constant 0 : index
    %c2_77 = arith.constant 2 : index
    %c0_78 = arith.constant 0 : index
    %32 = vector.load %arg11[%c0_75, %c0_76, %c2_77, %c0_78] : memref<1x18x18x128xbf16, #tpu.memory_space<vmem>>, vector<1x16x16x128xbf16>
    %c0_79 = arith.constant 0 : index
    %c1_80 = arith.constant 1 : index
    %c0_81 = arith.constant 0 : index
    %c0_82 = arith.constant 0 : index
    %33 = vector.load %arg11[%c0_79, %c1_80, %c0_81, %c0_82] : memref<1x18x18x128xbf16, #tpu.memory_space<vmem>>, vector<1x16x16x128xbf16>
    %c0_83 = arith.constant 0 : index
    %c1_84 = arith.constant 1 : index
    %c1_85 = arith.constant 1 : index
    %c0_86 = arith.constant 0 : index
    %34 = vector.load %arg11[%c0_83, %c1_84, %c1_85, %c0_86] : memref<1x18x18x128xbf16, #tpu.memory_space<vmem>>, vector<1x16x16x128xbf16>
    %c0_87 = arith.constant 0 : index
    %c1_88 = arith.constant 1 : index
    %c2_89 = arith.constant 2 : index
    %c0_90 = arith.constant 0 : index
    %35 = vector.load %arg11[%c0_87, %c1_88, %c2_89, %c0_90] : memref<1x18x18x128xbf16, #tpu.memory_space<vmem>>, vector<1x16x16x128xbf16>
    %c0_91 = arith.constant 0 : index
    %c2_92 = arith.constant 2 : index
    %c0_93 = arith.constant 0 : index
    %c0_94 = arith.constant 0 : index
    %36 = vector.load %arg11[%c0_91, %c2_92, %c0_93, %c0_94] : memref<1x18x18x128xbf16, #tpu.memory_space<vmem>>, vector<1x16x16x128xbf16>
    %c0_95 = arith.constant 0 : index
    %c2_96 = arith.constant 2 : index
    %c1_97 = arith.constant 1 : index
    %c0_98 = arith.constant 0 : index
    %37 = vector.load %arg11[%c0_95, %c2_96, %c1_97, %c0_98] : memref<1x18x18x128xbf16, #tpu.memory_space<vmem>>, vector<1x16x16x128xbf16>
    %c0_99 = arith.constant 0 : index
    %c2_100 = arith.constant 2 : index
    %c2_101 = arith.constant 2 : index
    %c0_102 = arith.constant 0 : index
    %38 = vector.load %arg11[%c0_99, %c2_100, %c2_101, %c0_102] : memref<1x18x18x128xbf16, #tpu.memory_space<vmem>>, vector<1x16x16x128xbf16>
    %39 = tpu.concatenate %30, %31, %32, %33, %34, %35, %36, %37, %38 in 3 : vector<1x16x16x128xbf16>, vector<1x16x16x128xbf16>, vector<1x16x16x128xbf16>, vector<1x16x16x128xbf16>, vector<1x16x16x128xbf16>, vector<1x16x16x128xbf16>, vector<1x16x16x128xbf16>, vector<1x16x16x128xbf16>, vector<1x16x16x128xbf16> -> vector<1x16x16x1152xbf16>
    %40 = vector.shape_cast %39 : vector<1x16x16x1152xbf16> to vector<256x1152xbf16>
    %c0_103 = arith.constant 0 : index
    %c0_104 = arith.constant 0 : index
    %41 = vector.load %arg4[%c0_103, %c0_104] : memref<1152x128xbf16, #tpu.memory_space<vmem>>, vector<1152x128xbf16>
    %cst_105 = arith.constant dense<0.000000e+00> : vector<256x128xf32>
    %42 = tpu.matmul %40, %41, %cst_105 {dimension_numbers = #tpu.dot_dimension_numbers<[1], [0], [0], [1], [0, 0, 1, 1], [], []>} : vector<256x1152xbf16>, vector<1152x128xbf16>, vector<256x128xf32> -> vector<256x128xf32>
    %c0_106 = arith.constant 0 : index
    %c0_107 = arith.constant 0 : index
    %43 = vector.load %arg5[%c0_106, %c0_107] : memref<1x128xf32, #tpu.memory_space<vmem>>, vector<1x128xf32>
    %44 = vector.broadcast %43 : vector<1x128xf32> to vector<256x128xf32>
    %45 = arith.addf %42, %44 : vector<256x128xf32>
    %46 = vector.shape_cast %45 : vector<256x128xf32> to vector<1x16x16x128xf32>
    %cst_108 = arith.constant dense<0.000000e+00> : vector<1x128xf32>
    %47 = vector.multi_reduction <add>, %46, %cst_108 [1, 2] : vector<1x16x16x128xf32> to vector<1x128xf32>
    %cst_109 = arith.constant 2.560000e+02 : f32
    %48 = vector.broadcast %cst_109 : f32 to vector<1x128xf32>
    %49 = arith.divf %47, %48 : vector<1x128xf32>
    %c0_110 = arith.constant 0 : index
    %c0_111 = arith.constant 0 : index
    %50 = vector.load %arg6[%c0_110, %c0_111] : memref<128x128xf32, #tpu.memory_space<vmem>>, vector<128x128xf32>
    %cst_112 = arith.constant dense<0.000000e+00> : vector<1x128xf32>
    %51 = tpu.matmul %49, %50, %cst_112 {dimension_numbers = #tpu.dot_dimension_numbers<[1], [0], [0], [1], [0, 0, 1, 1], [], []>} : vector<1x128xf32>, vector<128x128xf32>, vector<1x128xf32> -> vector<1x128xf32>
    %c0_113 = arith.constant 0 : index
    %c0_114 = arith.constant 0 : index
    %52 = vector.load %arg7[%c0_113, %c0_114] : memref<1x128xf32, #tpu.memory_space<vmem>>, vector<1x128xf32>
    %53 = arith.addf %51, %52 : vector<1x128xf32>
    %cst_115 = arith.constant 0.000000e+00 : f32
    %54 = vector.broadcast %cst_115 : f32 to vector<1x128xf32>
    %55 = arith.maximumf %53, %54 : vector<1x128xf32>
    %c0_116 = arith.constant 0 : index
    %c0_117 = arith.constant 0 : index
    %56 = vector.load %arg8[%c0_116, %c0_117] : memref<128x128xf32, #tpu.memory_space<vmem>>, vector<128x128xf32>
    %cst_118 = arith.constant dense<0.000000e+00> : vector<1x128xf32>
    %57 = tpu.matmul %55, %56, %cst_118 {dimension_numbers = #tpu.dot_dimension_numbers<[1], [0], [0], [1], [0, 0, 1, 1], [], []>} : vector<1x128xf32>, vector<128x128xf32>, vector<1x128xf32> -> vector<1x128xf32>
    %c0_119 = arith.constant 0 : index
    %c0_120 = arith.constant 0 : index
    %58 = vector.load %arg9[%c0_119, %c0_120] : memref<1x128xf32, #tpu.memory_space<vmem>>, vector<1x128xf32>
    %59 = arith.addf %57, %58 : vector<1x128xf32>
    %cst_121 = arith.constant 0.000000e+00 : f32
    %60 = vector.broadcast %cst_121 : f32 to vector<1x128xf32>
    %61 = arith.subf %60, %59 : vector<1x128xf32>
    %62 = math.exp %61 : vector<1x128xf32>
    %cst_122 = arith.constant 1.000000e+00 : f32
    %63 = vector.broadcast %cst_122 : f32 to vector<1x128xf32>
    %64 = arith.addf %63, %62 : vector<1x128xf32>
    %65 = tpu.reciprocal %64 : vector<1x128xf32> -> vector<1x128xf32>
    %66 = vector.shape_cast %65 : vector<1x128xf32> to vector<1x1x1x128xf32>
    %67 = vector.broadcast %66 : vector<1x1x1x128xf32> to vector<1x16x16x128xf32>
    %68 = arith.mulf %46, %67 : vector<1x16x16x128xf32>
    %69 = arith.addf %68, %6 : vector<1x16x16x128xf32>
    %c0_123 = arith.constant 0 : index
    %c0_124 = arith.constant 0 : index
    %c0_125 = arith.constant 0 : index
    %c0_126 = arith.constant 0 : index
    %70 = vector.load %arg10[%c0_123, %c0_124, %c0_125, %c0_126] : memref<1x16x16x128xf32, #tpu.memory_space<vmem>>, vector<1x16x16x128xf32>
    tpu.vector_store %arg10[%c0_123, %c0_124, %c0_125, %c0_126], %69 {strides = array<i32>} : memref<1x16x16x128xf32, #tpu.memory_space<vmem>>, vector<1x16x16x128xf32>,
    return
  }
  func.func @transform_0(%arg0: i32) -> (i32, i32, i32, i32) {
    %c0_i32 = arith.constant 0 : i32
    %c0_i32_0 = arith.constant 0 : i32
    %c0_i32_1 = arith.constant 0 : i32
    %c0_i32_2 = arith.constant 0 : i32
    return %arg0, %c0_i32, %c0_i32_0, %c0_i32_1 : i32, i32, i32, i32
  }
  func.func @transform_1(%arg0: i32) -> (i32, i32) {
    %c0_i32 = arith.constant 0 : i32
    %c0_i32_0 = arith.constant 0 : i32
    %c0_i32_1 = arith.constant 0 : i32
    return %c0_i32, %c0_i32_0 : i32, i32
  }
  func.func @transform_2(%arg0: i32) -> (i32, i32) {
    %c0_i32 = arith.constant 0 : i32
    %c0_i32_0 = arith.constant 0 : i32
    %c0_i32_1 = arith.constant 0 : i32
    return %c0_i32, %c0_i32_0 : i32, i32
  }
  func.func @transform_3(%arg0: i32) -> (i32, i32) {
    %c0_i32 = arith.constant 0 : i32
    %c0_i32_0 = arith.constant 0 : i32
    %c0_i32_1 = arith.constant 0 : i32
    return %c0_i32, %c0_i32_0 : i32, i32
  }
  func.func @transform_4(%arg0: i32) -> (i32, i32) {
    %c0_i32 = arith.constant 0 : i32
    %c0_i32_0 = arith.constant 0 : i32
    %c0_i32_1 = arith.constant 0 : i32
    return %c0_i32, %c0_i32_0 : i32, i32
  }
  func.func @transform_5(%arg0: i32) -> (i32, i32) {
    %c0_i32 = arith.constant 0 : i32
    %c0_i32_0 = arith.constant 0 : i32
    %c0_i32_1 = arith.constant 0 : i32
    return %c0_i32, %c0_i32_0 : i32, i32
  }
  func.func @transform_6(%arg0: i32) -> (i32, i32) {
    %c0_i32 = arith.constant 0 : i32
    %c0_i32_0 = arith.constant 0 : i32
    %c0_i32_1 = arith.constant 0 : i32
    return %c0_i32, %c0_i32_0 : i32, i32
  }
  func.func @transform_7(%arg0: i32) -> (i32, i32) {
    %c0_i32 = arith.constant 0 : i32
    %c0_i32_0 = arith.constant 0 : i32
    %c0_i32_1 = arith.constant 0 : i32
    return %c0_i32, %c0_i32_0 : i32, i32
  }
  func.func @transform_8(%arg0: i32) -> (i32, i32) {
    %c0_i32 = arith.constant 0 : i32
    %c0_i32_0 = arith.constant 0 : i32
    %c0_i32_1 = arith.constant 0 : i32
    return %c0_i32, %c0_i32_0 : i32, i32
  }
  func.func @transform_9(%arg0: i32) -> (i32, i32, i32, i32) {
    %c0_i32 = arith.constant 0 : i32
    %c0_i32_0 = arith.constant 0 : i32
    %c0_i32_1 = arith.constant 0 : i32
    %c0_i32_2 = arith.constant 0 : i32
    return %arg0, %c0_i32, %c0_i32_0, %c0_i32_1 : i32, i32, i32, i32
  }
}

</mosaic_0001>

<llo_original>
// kernel: tpu_custom_call.1
$region0: #{tpu_custom_call.1}
  #allocation0 [shape = 'u32[]', space=smem, size = 0x4, offset = 0x4, fixed_abs, tag = 'smem constant byte address 0x4 - core index']
  #allocation1 [shape = 'u32[144,128]{1,0:T(1,128)}', space=vmem, size = 0x12000, scoped, tag = 'internal scratch']
  #allocation2 [shape = 'bf16[1,18,18,128]{3,2,1,0:T(8,128)(2,1)}', space=vmem, size = 0x1b000, scoped, tag = 'scratch operand']
  %s0 = inlined_call_operand.hbm [shape: f32[2,16,16,128], index: 0, kind: input, shape index: {}]
  %s1 = inlined_call_operand.hbm [shape: bf16[1152,128], index: 1, kind: input, shape index: {}]
  %s2 = inlined_call_operand.vmem [shape: f32[1,128], index: 2, kind: input, shape index: {}]
  %s3 = inlined_call_operand.hbm [shape: bf16[1152,128], index: 3, kind: input, shape index: {}]
  %s4 = inlined_call_operand.vmem [shape: f32[1,128], index: 4, kind: input, shape index: {}]
  %s5 = inlined_call_operand.hbm [shape: f32[128,128], index: 5, kind: input, shape index: {}]
  %s6 = inlined_call_operand.vmem [shape: f32[1,128], index: 6, kind: input, shape index: {}]
  %s7 = inlined_call_operand.hbm [shape: f32[128,128], index: 7, kind: input, shape index: {}]
  %s8 = inlined_call_operand.vmem [shape: f32[1,128], index: 8, kind: input, shape index: {}]
  %s9 = inlined_call_operand.hbm [shape: f32[2,16,16,128], index: 9, kind: output, shape index: {}]
  %s10 = sld [smem:[#allocation0]]
  $region89: #{tpu_custom_call.1} parent=0
    _
  %s12 = ssub.s32 1, %s10
  %s13 = scalar_select 0, %s12, %s10
  $region1: #{tpu_custom_call.1} parent=0
    #allocation3 [shape = 'u8[262144]{0}', space=vmem, size = 0x40000, scoped, tag = 'input window, operand 0']
    #allocation4 [shape = 's32[2]{0}', space=sflag, size = 0x8, scoped, tag = 'scoped memory for tpu_custom_call.1']
    #allocation5 [shape = 's32[2]{0}', space=sflag, size = 0x8, scoped, tag = 'scoped memory for tpu_custom_call.1']
    #allocation6 [shape = 'u8[294912]{0}', space=vmem, size = 0x48000, scoped, tag = 'input window, operand 1, single buffered']
    #allocation7 [shape = 's32[1]{0}', space=sflag, size = 0x4, scoped, tag = 'scoped memory for tpu_custom_call.1']
    #allocation8 [shape = 'u8[294912]{0}', space=vmem, size = 0x48000, scoped, tag = 'input window, operand 3, single buffered']
    #allocation9 [shape = 'u8[65536]{0}', space=vmem, size = 0x10000, scoped, tag = 'input window, operand 5, single buffered']
    #allocation10 [shape = 's32[1]{0}', space=sflag, size = 0x4, scoped, tag = 'scoped memory for tpu_custom_call.1']
    #allocation11 [shape = 'u8[65536]{0}', space=vmem, size = 0x10000, scoped, tag = 'input window, operand 7, single buffered']
    #allocation12 [shape = 'u8[262144]{0}', space=vmem, size = 0x40000, scoped, tag = 'output window, operand 0']
    %14 = vsyncpa [#allocation4], 0
    %s15 = scalar_lea.sflag [#allocation4], 1
    %16 = vsyncpa %s15, 0
    %17 = vsyncpa [#allocation7], 0
    %18 = vsyncpa [#allocation10], 0
    %19 = vsyncpa [#allocation5], 0
    %s20 = scalar_lea.sflag [#allocation5], 1
    %21 = vsyncpa %s20, 0
    loop: start=0, step=1, limit=4
    $region2: #{tpu_custom_call.1} parent=1 // loop_pre_header
      _
    $region3: #{tpu_custom_call.1} parent=1 // loop_header
      %s23 = sphi 0, %s27
      %p24 = scmp.ge.s32.totalorder %s23, 4
      %s33 = sphi 0, %s35
      %s36 = sphi 0, %s33
      %s37 = sphi 0, %s36
      %s53 = sphi 0, %s37
      %s57 = sphi 0, %s57
      %s59 = sphi 0, %s57
      %s60 = sphi 0, %s59
      %s74 = sphi 0, %s60
      %s78 = sphi 0, %s78
      %s80 = sphi 0, %s78
      %s81 = sphi 0, %s80
      %s95 = sphi 0, %s81
      %s99 = sphi 0, %s99
      %s101 = sphi 0, %s99
      %s102 = sphi 0, %s101
      %s116 = sphi 0, %s102
      %s120 = sphi 0, %s120
      %s122 = sphi 0, %s120
      %s123 = sphi 0, %s122
      %s137 = sphi 0, %s123
      %s141 = sphi 0, %s141
      %s143 = sphi 0, %s141
      %s144 = sphi 0, %s143
      %s158 = sphi 0, %s144
      %s162 = sphi 0, %s162
      %s164 = sphi 0, %s162
      %s165 = sphi 0, %s164
      %s179 = sphi 0, %s165
      %s183 = sphi 0, %s183
      %s185 = sphi 0, %s183
      %s186 = sphi 0, %s185
      %s200 = sphi 0, %s186
      %s204 = sphi 0, %s204
      %s206 = sphi 0, %s204
      %s207 = sphi 0, %s206
      %s221 = sphi 0, %s207
      %s227 = sphi 0, %s229
      %s230 = sphi 0, %s227
      %s231 = sphi 0, %s230
      %s247 = sphi 0, %s231
    $region4: #{tpu_custom_call.1} parent=1 // loop_header_branch
      %26 = sbr.rel (%p24) target = $region8
    $region5: #{tpu_custom_call.1} parent=1 // loop_body
      %s28 = ssub.s32 %s23, 1
      %s29 = ssub.s32 %s23, 2
      %s30 = sadd.s32 %s23, 1
      %s31 = ssub.s32 %s23, %s30
      %p32 = scmp.eq.s32.totalorder %s31, 0
      %s34 = sadd.s32 %s33, 1
      %s35 = scalar_select %p32, %s33, %s34
      %p38 = pneg %p32
      %p39 = scmp.eq.s32.totalorder %s23, 1
      %p40 = por %p38, %p39
      %p41 = scmp.ne.s32.totalorder %s33, %s36
      %p42 = scmp.eq.s32.totalorder %s23, 0
      %p43 = por %p41, %p42
      %p44 = scmp.ne.s32.totalorder %s33, %s36
      %p45 = scmp.eq.s32.totalorder %s28, 1
      %p46 = por %p44, %p45
      %p47 = scmp.ne.s32.totalorder %s36, %s37
      %p48 = scmp.eq.s32.totalorder %s28, 0
      %p49 = por %p47, %p48
      %p50 = scmp.ne.s32.totalorder %s36, %s37
      %p51 = scmp.eq.s32.totalorder %s29, 1
      %p52 = por %p50, %p51
      %p54 = scmp.ne.s32.totalorder %s37, %s53
      %p55 = scmp.eq.s32.totalorder %s29, 0
      %p56 = por %p54, %p55
      %s58 = sadd.s32 %s57, 1
      %p61 = scmp.eq.s32.totalorder %s23, 1
      %p62 = scmp.ne.s32.totalorder %s57, %s59
      %p63 = scmp.eq.s32.totalorder %s23, 0
      %p64 = por %p62, %p63
      %p65 = scmp.ne.s32.totalorder %s57, %s59
      %p66 = scmp.eq.s32.totalorder %s28, 1
      %p67 = por %p65, %p66
      %p68 = scmp.ne.s32.totalorder %s59, %s60
      %p69 = scmp.eq.s32.totalorder %s28, 0
      %p70 = por %p68, %p69
      %p71 = scmp.ne.s32.totalorder %s59, %s60
      %p72 = scmp.eq.s32.totalorder %s29, 1
      %p73 = por %p71, %p72
      %p75 = scmp.ne.s32.totalorder %s60, %s74
      %p76 = scmp.eq.s32.totalorder %s29, 0
      %p77 = por %p75, %p76
      %s79 = sadd.s32 %s78, 1
      %p82 = scmp.eq.s32.totalorder %s23, 1
      %p83 = scmp.ne.s32.totalorder %s78, %s80
      %p84 = scmp.eq.s32.totalorder %s23, 0
      %p85 = por %p83, %p84
      %p86 = scmp.ne.s32.totalorder %s78, %s80
      %p87 = scmp.eq.s32.totalorder %s28, 1
      %p88 = por %p86, %p87
      %p89 = scmp.ne.s32.totalorder %s80, %s81
      %p90 = scmp.eq.s32.totalorder %s28, 0
      %p91 = por %p89, %p90
      %p92 = scmp.ne.s32.totalorder %s80, %s81
      %p93 = scmp.eq.s32.totalorder %s29, 1
      %p94 = por %p92, %p93
      %p96 = scmp.ne.s32.totalorder %s81, %s95
      %p97 = scmp.eq.s32.totalorder %s29, 0
      %p98 = por %p96, %p97
      %s100 = sadd.s32 %s99, 1
      %p103 = scmp.eq.s32.totalorder %s23, 1
      %p104 = scmp.ne.s32.totalorder %s99, %s101
      %p105 = scmp.eq.s32.totalorder %s23, 0
      %p106 = por %p104, %p105
      %p107 = scmp.ne.s32.totalorder %s99, %s101
      %p108 = scmp.eq.s32.totalorder %s28, 1
      %p109 = por %p107, %p108
      %p110 = scmp.ne.s32.totalorder %s101, %s102
      %p111 = scmp.eq.s32.totalorder %s28, 0
      %p112 = por %p110, %p111
      %p113 = scmp.ne.s32.totalorder %s101, %s102
      %p114 = scmp.eq.s32.totalorder %s29, 1
      %p115 = por %p113, %p114
      %p117 = scmp.ne.s32.totalorder %s102, %s116
      %p118 = scmp.eq.s32.totalorder %s29, 0
      %p119 = por %p117, %p118
      %s121 = sadd.s32 %s120, 1
      %p124 = scmp.eq.s32.totalorder %s23, 1
      %p125 = scmp.ne.s32.totalorder %s120, %s122
      %p126 = scmp.eq.s32.totalorder %s23, 0
      %p127 = por %p125, %p126
      %p128 = scmp.ne.s32.totalorder %s120, %s122
      %p129 = scmp.eq.s32.totalorder %s28, 1
      %p130 = por %p128, %p129
      %p131 = scmp.ne.s32.totalorder %s122, %s123
      %p132 = scmp.eq.s32.totalorder %s28, 0
      %p133 = por %p131, %p132
      %p134 = scmp.ne.s32.totalorder %s122, %s123
      %p135 = scmp.eq.s32.totalorder %s29, 1
      %p136 = por %p134, %p135
      %p138 = scmp.ne.s32.totalorder %s123, %s137
      %p139 = scmp.eq.s32.totalorder %s29, 0
      %p140 = por %p138, %p139
      %s142 = sadd.s32 %s141, 1
      %p145 = scmp.eq.s32.totalorder %s23, 1
      %p146 = scmp.ne.s32.totalorder %s141, %s143
      %p147 = scmp.eq.s32.totalorder %s23, 0
      %p148 = por %p146, %p147
      %p149 = scmp.ne.s32.totalorder %s141, %s143
      %p150 = scmp.eq.s32.totalorder %s28, 1
      %p151 = por %p149, %p150
      %p152 = scmp.ne.s32.totalorder %s143, %s144
      %p153 = scmp.eq.s32.totalorder %s28, 0
      %p154 = por %p152, %p153
      %p155 = scmp.ne.s32.totalorder %s143, %s144
      %p156 = scmp.eq.s32.totalorder %s29, 1
      %p157 = por %p155, %p156
      %p159 = scmp.ne.s32.totalorder %s144, %s158
      %p160 = scmp.eq.s32.totalorder %s29, 0
      %p161 = por %p159, %p160
      %s163 = sadd.s32 %s162, 1
      %p166 = scmp.eq.s32.totalorder %s23, 1
      %p167 = scmp.ne.s32.totalorder %s162, %s164
      %p168 = scmp.eq.s32.totalorder %s23, 0
      %p169 = por %p167, %p168
      %p170 = scmp.ne.s32.totalorder %s162, %s164
      %p171 = scmp.eq.s32.totalorder %s28, 1
      %p172 = por %p170, %p171
      %p173 = scmp.ne.s32.totalorder %s164, %s165
      %p174 = scmp.eq.s32.totalorder %s28, 0
      %p175 = por %p173, %p174
      %p176 = scmp.ne.s32.totalorder %s164, %s165
      %p177 = scmp.eq.s32.totalorder %s29, 1
      %p178 = por %p176, %p177
      %p180 = scmp.ne.s32.totalorder %s165, %s179
      %p181 = scmp.eq.s32.totalorder %s29, 0
      %p182 = por %p180, %p181
      %s184 = sadd.s32 %s183, 1
      %p187 = scmp.eq.s32.totalorder %s23, 1
      %p188 = scmp.ne.s32.totalorder %s183, %s185
      %p189 = scmp.eq.s32.totalorder %s23, 0
      %p190 = por %p188, %p189
      %p191 = scmp.ne.s32.totalorder %s183, %s185
      %p192 = scmp.eq.s32.totalorder %s28, 1
      %p193 = por %p191, %p192
      %p194 = scmp.ne.s32.totalorder %s185, %s186
      %p195 = scmp.eq.s32.totalorder %s28, 0
      %p196 = por %p194, %p195
      %p197 = scmp.ne.s32.totalorder %s185, %s186
      %p198 = scmp.eq.s32.totalorder %s29, 1
      %p199 = por %p197, %p198
      %p201 = scmp.ne.s32.totalorder %s186, %s200
      %p202 = scmp.eq.s32.totalorder %s29, 0
      %p203 = por %p201, %p202
      %s205 = sadd.s32 %s204, 1
      %p208 = scmp.eq.s32.totalorder %s23, 1
      %p209 = scmp.ne.s32.totalorder %s204, %s206
      %p210 = scmp.eq.s32.totalorder %s23, 0
      %p211 = por %p209, %p210
      %p212 = scmp.ne.s32.totalorder %s204, %s206
      %p213 = scmp.eq.s32.totalorder %s28, 1
      %p214 = por %p212, %p213
      %p215 = scmp.ne.s32.totalorder %s206, %s207
      %p216 = scmp.eq.s32.totalorder %s28, 0
      %p217 = por %p215, %p216
      %p218 = scmp.ne.s32.totalorder %s206, %s207
      %p219 = scmp.eq.s32.totalorder %s29, 1
      %p220 = por %p218, %p219
      %p222 = scmp.ne.s32.totalorder %s207, %s221
      %p223 = scmp.eq.s32.totalorder %s29, 0
      %p224 = por %p222, %p223
      %s225 = ssub.s32 %s23, %s30
      %p226 = scmp.eq.s32.totalorder %s225, 0
      %s228 = sadd.s32 %s227, 1
      %s229 = scalar_select %p226, %s227, %s228
      %p232 = pneg %p226
      %p233 = scmp.eq.s32.totalorder %s23, 1
      %p234 = por %p232, %p233
      %p235 = scmp.ne.s32.totalorder %s227, %s230
      %p236 = scmp.eq.s32.totalorder %s23, 0
      %p237 = por %p235, %p236
      %p238 = scmp.ne.s32.totalorder %s227, %s230
      %p239 = scmp.eq.s32.totalorder %s28, 1
      %p240 = por %p238, %p239
      %p241 = scmp.ne.s32.totalorder %s230, %s231
      %p242 = scmp.eq.s32.totalorder %s28, 0
      %p243 = por %p241, %p242
      %p244 = scmp.ne.s32.totalorder %s230, %s231
      %p245 = scmp.eq.s32.totalorder %s29, 1
      %p246 = por %p244, %p245
      %p248 = scmp.ne.s32.totalorder %s231, %s247
      %p249 = scmp.eq.s32.totalorder %s29, 0
      %p250 = por %p248, %p249
      %p251 = scmp.le.s32.totalorder 1, %s23
      %p252 = scmp.lt.s32.totalorder %s23, 3
      %p253 = pnand %p251, %p252
      %p254 = pneg %p253
      // Predicated region
      $region9: #{tpu_custom_call.1} parent=5 // pred_check
        _
      $region10: #{tpu_custom_call.1} parent=5 // pred_check_branch
        %256 = sbr.rel (%p253) target = $region12
      $region11: #{tpu_custom_call.1} parent=5 // pred_region
        %s257 = ssub.s32 %s23, 1
        // Predicated region
        $region13: #{tpu_custom_call.1} parent=11 // pred_check
          %p258 = pneg %p70
        $region14: #{tpu_custom_call.1} parent=11 // pred_check_branch
          %260 = sbr.rel (%p258) target = $region16
        $region15: #{tpu_custom_call.1} parent=11 // pred_region
          %s262 = ssub.s32 9216, 9216
          %263 = vsyncadd [#allocation7], %s262
          %s264 = sshll.u32 [#allocation6], 4
          %s265 = int_to_ptr.vmem [resolvable:$true] %s264
          %270 = dma.hbm_to_vmem [thread:$0]  %s1, 9216, %s265, [#allocation7], 64, 64, 4
        $region16: #{tpu_custom_call.1} parent=11 // pred_fallthru
          _
        // Predicated region
        $region17: #{tpu_custom_call.1} parent=11 // pred_check
          %p271 = pneg %p91
        $region18: #{tpu_custom_call.1} parent=11 // pred_check_branch
          %273 = sbr.rel (%p271) target = $region20
        $region19: #{tpu_custom_call.1} parent=11 // pred_region
          _
        $region20: #{tpu_custom_call.1} parent=11 // pred_fallthru
          _
        // Predicated region
        $region21: #{tpu_custom_call.1} parent=11 // pred_check
          %p274 = pneg %p112
        $region22: #{tpu_custom_call.1} parent=11 // pred_check_branch
          %276 = sbr.rel (%p274) target = $region24
        $region23: #{tpu_custom_call.1} parent=11 // pred_region
          %s278 = ssub.s32 9216, 9216
          %279 = vsyncadd [#allocation7], %s278
          %s280 = sshll.u32 [#allocation8], 4
          %s281 = int_to_ptr.vmem [resolvable:$true] %s280
          %286 = dma.hbm_to_vmem [thread:$0]  %s3, 9216, %s281, [#allocation7], 64, 64, 4
        $region24: #{tpu_custom_call.1} parent=11 // pred_fallthru
          _
        // Predicated region
        $region25: #{tpu_custom_call.1} parent=11 // pred_check
          %p287 = pneg %p133
        $region26: #{tpu_custom_call.1} parent=11 // pred_check_branch
          %289 = sbr.rel (%p287) target = $region28
        $region27: #{tpu_custom_call.1} parent=11 // pred_region
          _
        $region28: #{tpu_custom_call.1} parent=11 // pred_fallthru
          _
        // Predicated region
        $region29: #{tpu_custom_call.1} parent=11 // pred_check
          %p290 = pneg %p154
        $region30: #{tpu_custom_call.1} parent=11 // pred_check_branch
          %292 = sbr.rel (%p290) target = $region32
        $region31: #{tpu_custom_call.1} parent=11 // pred_region
          %s294 = ssub.s32 2048, 2048
          %295 = vsyncadd [#allocation10], %s294
          %s296 = sshll.u32 [#allocation9], 4
          %s297 = int_to_ptr.vmem [resolvable:$true] %s296
          %302 = dma.hbm_to_vmem [thread:$0]  %s5, 2048, %s297, [#allocation10], 128, 128, 8
        $region32: #{tpu_custom_call.1} parent=11 // pred_fallthru
          _
        // Predicated region
        $region33: #{tpu_custom_call.1} parent=11 // pred_check
          %p303 = pneg %p175
        $region34: #{tpu_custom_call.1} parent=11 // pred_check_branch
          %305 = sbr.rel (%p303) target = $region36
        $region35: #{tpu_custom_call.1} parent=11 // pred_region
          _
        $region36: #{tpu_custom_call.1} parent=11 // pred_fallthru
          _
        // Predicated region
        $region37: #{tpu_custom_call.1} parent=11 // pred_check
          %p306 = pneg %p196
        $region38: #{tpu_custom_call.1} parent=11 // pred_check_branch
          %308 = sbr.rel (%p306) target = $region40
        $region39: #{tpu_custom_call.1} parent=11 // pred_region
          %s310 = ssub.s32 2048, 2048
          %311 = vsyncadd [#allocation10], %s310
          %s312 = sshll.u32 [#allocation11], 4
          %s313 = int_to_ptr.vmem [resolvable:$true] %s312
          %318 = dma.hbm_to_vmem [thread:$0]  %s7, 2048, %s313, [#allocation10], 128, 128, 8
        $region40: #{tpu_custom_call.1} parent=11 // pred_fallthru
          _
        // Predicated region
        $region41: #{tpu_custom_call.1} parent=11 // pred_check
          %p319 = pneg %p217
        $region42: #{tpu_custom_call.1} parent=11 // pred_check_branch
          %321 = sbr.rel (%p319) target = $region44
        $region43: #{tpu_custom_call.1} parent=11 // pred_region
          _
        $region44: #{tpu_custom_call.1} parent=11 // pred_fallthru
          _
      $region12: #{tpu_custom_call.1} parent=5 // pred_fallthru
        _
      %p322 = scmp.lt.s32.totalorder %s23, 2
      // Predicated region
      $region45: #{tpu_custom_call.1} parent=5 // pred_check
        %p323 = pneg %p322
      $region46: #{tpu_custom_call.1} parent=5 // pred_check_branch
        %325 = sbr.rel (%p323) target = $region48
      $region47: #{tpu_custom_call.1} parent=5 // pred_region
        // Predicated region
        $region49: #{tpu_custom_call.1} parent=47 // pred_check
          %p326 = pneg %p43
        $region50: #{tpu_custom_call.1} parent=47 // pred_check_branch
          %328 = sbr.rel (%p326) target = $region52
        $region51: #{tpu_custom_call.1} parent=47 // pred_region
          %s329 = sand.u32 %s33, 1
          %s330 = scalar_lea.sflag [#allocation4], %s329
          %s331 = sand.u32 %s33, 1
          %s332 = smul.addr %s331, 256
          %s333 = scalar_lea.vmem [#allocation3], %s332
          %s335 = ssub.s32 4096, 4096
          %336 = vsyncadd %s330, %s335
          %s337 = smul.addr %s23, 32
          %s338 = smul.addr %s337, 128
          %s339 = scalar_lea.hbm %s0, %s338
          %s340 = sshll.u32 %s333, 4
          %s341 = int_to_ptr.vmem [resolvable:$true] %s340
          %346 = dma.hbm_to_vmem [thread:$0]  %s339, 4096, %s341, %s330, 128, 128, 8
        $region52: #{tpu_custom_call.1} parent=47 // pred_fallthru
          _
      $region48: #{tpu_custom_call.1} parent=5 // pred_fallthru
        _
      %p347 = scmp.le.s32.totalorder 1, %s23
      %p348 = scmp.lt.s32.totalorder %s23, 3
      %p349 = pnand %p347, %p348
      %p350 = pneg %p349
      // Predicated region
      $region53: #{tpu_custom_call.1} parent=5 // pred_check
        _
      $region54: #{tpu_custom_call.1} parent=5 // pred_check_branch
        %352 = sbr.rel (%p349) target = $region56
      $region55: #{tpu_custom_call.1} parent=5 // pred_region
        %s353 = ssub.s32 %s23, 1
        %s354 = sand.u32 %s36, 1
        %s355 = scalar_lea.sflag [#allocation4], %s354
        %s356 = sand.u32 %s36, 1
        %s357 = smul.addr %s356, 256
        %s358 = scalar_lea.vmem [#allocation3], %s357
        // Predicated region
        $region57: #{tpu_custom_call.1} parent=55 // pred_check
          %p359 = pneg %p49
        $region58: #{tpu_custom_call.1} parent=55 // pred_check_branch
          %361 = sbr.rel (%p359) target = $region60
        $region59: #{tpu_custom_call.1} parent=55 // pred_region
          %362 = dma.done %s355, 4096
        $region60: #{tpu_custom_call.1} parent=55 // pred_fallthru
          _
        // Predicated region
        $region61: #{tpu_custom_call.1} parent=55 // pred_check
          %p363 = pneg %p70
        $region62: #{tpu_custom_call.1} parent=55 // pred_check_branch
          %365 = sbr.rel (%p363) target = $region64
        $region63: #{tpu_custom_call.1} parent=55 // pred_region
          %366 = dma.done [#allocation7], 9216
        $region64: #{tpu_custom_call.1} parent=55 // pred_fallthru
          _
        // Predicated region
        $region65: #{tpu_custom_call.1} parent=55 // pred_check
          %p367 = pneg %p112
        $region66: #{tpu_custom_call.1} parent=55 // pred_check_branch
          %369 = sbr.rel (%p367) target = $region68
        $region67: #{tpu_custom_call.1} parent=55 // pred_region
          %370 = dma.done [#allocation7], 9216
        $region68: #{tpu_custom_call.1} parent=55 // pred_fallthru
          _
        // Predicated region
        $region69: #{tpu_custom_call.1} parent=55 // pred_check
          %p371 = pneg %p154
        $region70: #{tpu_custom_call.1} parent=55 // pred_check_branch
          %373 = sbr.rel (%p371) target = $region72
        $region71: #{tpu_custom_call.1} parent=55 // pred_region
          %374 = dma.done [#allocation10], 2048
        $region72: #{tpu_custom_call.1} parent=55 // pred_fallthru
          _
        // Predicated region
        $region73: #{tpu_custom_call.1} parent=55 // pred_check
          %p375 = pneg %p196
        $region74: #{tpu_custom_call.1} parent=55 // pred_check_branch
          %377 = sbr.rel (%p375) target = $region76
        $region75: #{tpu_custom_call.1} parent=55 // pred_region
          %378 = dma.done [#allocation10], 2048
        $region76: #{tpu_custom_call.1} parent=55 // pred_fallthru
          _
        %s379 = sand.u32 %s36, 1
        %s380 = scalar_lea.sflag [#allocation4], %s379
        %s381 = sand.u32 %s36, 1
        %s382 = smul.addr %s381, 256
        %s383 = scalar_lea.vmem [#allocation3], %s382
        %p384 = pneg %p49
        %p385 = pneg %p46
        %p386 = pneg %p70
        %p387 = pneg %p67
        %p388 = pneg %p91
        %p389 = pneg %p88
        %p390 = pneg %p112
        %p391 = pneg %p109
        %p392 = pneg %p133
        %p393 = pneg %p130
        %p394 = pneg %p154
        %p395 = pneg %p151
        %p396 = pneg %p175
        %p397 = pneg %p172
        %p398 = pneg %p196
        %p399 = pneg %p193
        %p400 = pneg %p217
        %p401 = pneg %p214
        %p402 = pneg %p243
        %p403 = pneg %p240
        %s404 = sand.u32 %s230, 1
        %s405 = scalar_lea.sflag [#allocation5], %s404
        %s406 = sand.u32 %s230, 1
        %s407 = smul.addr %s406, 256
        %s408 = scalar_lea.vmem [#allocation12], %s407
        %410 = vst [vmem:[#allocation2] sm:$0xf] 0
        %411 = vst [vmem:[#allocation2 + $0x4] sm:$0xf] 0
        %412 = vst [vmem:[#allocation2 + $0x8] sm:$0x1] 0
        %s413 = scalar_lea.vmem [#allocation2], 204
        %414 = vst [vmem:[%s413] sm:$0xf] 0
        %415 = vst [vmem:[%s413 + $0x4] sm:$0xf] 0
        %416 = vst [vmem:[%s413 + $0x8] sm:$0x1] 0
        %s417 = scalar_lea.vmem [#allocation2], 12
        %vm418 = vcmask 1040384
        %vm419 = vsmask.f32 256
        %vm420 = vmand %vm418, %vm419
        %v421 = vld [vmem:[%s417] sm:$0x1]
        %v422 = vsel %vm420, 0, %v421
        %423 = vst [vmem:[%s417] sm:$0x1] %v422
        %v424 = vld [vmem:[%s417 + $0xc] sm:$0x1]
        %v425 = vsel %vm420, 0, %v424
        %426 = vst [vmem:[%s417 + $0xc] sm:$0x1] %v425
        %v427 = vld [vmem:[%s417 + $0x18] sm:$0x1]
        %v428 = vsel %vm420, 0, %v427
        %429 = vst [vmem:[%s417 + $0x18] sm:$0x1] %v428
        %v430 = vld [vmem:[%s417 + $0x24] sm:$0x1]
        %v431 = vsel %vm420, 0, %v430
        %432 = vst [vmem:[%s417 + $0x24] sm:$0x1] %v431
        %v433 = vld [vmem:[%s417 + $0x30] sm:$0x1]
        %v434 = vsel %vm420, 0, %v433
        %435 = vst [vmem:[%s417 + $0x30] sm:$0x1] %v434
        %v436 = vld [vmem:[%s417 + $0x3c] sm:$0x1]
        %v437 = vsel %vm420, 0, %v436
        %438 = vst [vmem:[%s417 + $0x3c] sm:$0x1] %v437
        %v439 = vld [vmem:[%s417 + $0x48] sm:$0x1]
        %v440 = vsel %vm420, 0, %v439
        %441 = vst [vmem:[%s417 + $0x48] sm:$0x1] %v440
        %v442 = vld [vmem:[%s417 + $0x54] sm:$0x1]
        %v443 = vsel %vm420, 0, %v442
        %444 = vst [vmem:[%s417 + $0x54] sm:$0x1] %v443
        %v445 = vld [vmem:[%s417 + $0x60] sm:$0x1]
        %v446 = vsel %vm420, 0, %v445
        %447 = vst [vmem:[%s417 + $0x60] sm:$0x1] %v446
        %v448 = vld [vmem:[%s417 + $0x6c] sm:$0x1]
        %v449 = vsel %vm420, 0, %v448
        %450 = vst [vmem:[%s417 + $0x6c] sm:$0x1] %v449
        %v451 = vld [vmem:[%s417 + $0x78] sm:$0x1]
        %v452 = vsel %vm420, 0, %v451
        %453 = vst [vmem:[%s417 + $0x78] sm:$0x1] %v452
        %v454 = vld [vmem:[%s417 + $0x84] sm:$0x1]
        %v455 = vsel %vm420, 0, %v454
        %456 = vst [vmem:[%s417 + $0x84] sm:$0x1] %v455
        %v457 = vld [vmem:[%s417 + $0x90] sm:$0x1]
        %v458 = vsel %vm420, 0, %v457
        %459 = vst [vmem:[%s417 + $0x90] sm:$0x1] %v458
        %v460 = vld [vmem:[%s417 + $0x9c] sm:$0x1]
        %v461 = vsel %vm420, 0, %v460
        %462 = vst [vmem:[%s417 + $0x9c] sm:$0x1] %v461
        %v463 = vld [vmem:[%s417 + $0xa8] sm:$0x1]
        %v464 = vsel %vm420, 0, %v463
        %465 = vst [vmem:[%s417 + $0xa8] sm:$0x1] %v464
        %v466 = vld [vmem:[%s417 + $0xb4] sm:$0x1]
        %v467 = vsel %vm420, 0, %v466
        %468 = vst [vmem:[%s417 + $0xb4] sm:$0x1] %v467
        %vm469 = vsmask.f32 7938
        %vm470 = vmand %vm418, %vm469
        %v471 = vld [vmem:[%s417 + $0x8] sm:$0x1]
        %v472 = vsel %vm470, 0, %v471
        %473 = vst [vmem:[%s417 + $0x8] sm:$0x1] %v472
        %v474 = vld [vmem:[%s417 + $0x14] sm:$0x1]
        %v475 = vsel %vm470, 0, %v474
        %476 = vst [vmem:[%s417 + $0x14] sm:$0x1] %v475
        %v477 = vld [vmem:[%s417 + $0x20] sm:$0x1]
        %v478 = vsel %vm470, 0, %v477
        %479 = vst [vmem:[%s417 + $0x20] sm:$0x1] %v478
        %v480 = vld [vmem:[%s417 + $0x2c] sm:$0x1]
        %v481 = vsel %vm470, 0, %v480
        %482 = vst [vmem:[%s417 + $0x2c] sm:$0x1] %v481
        %v483 = vld [vmem:[%s417 + $0x38] sm:$0x1]
        %v484 = vsel %vm470, 0, %v483
        %485 = vst [vmem:[%s417 + $0x38] sm:$0x1] %v484
        %v486 = vld [vmem:[%s417 + $0x44] sm:$0x1]
        %v487 = vsel %vm470, 0, %v486
        %488 = vst [vmem:[%s417 + $0x44] sm:$0x1] %v487
        %v489 = vld [vmem:[%s417 + $0x50] sm:$0x1]
        %v490 = vsel %vm470, 0, %v489
        %491 = vst [vmem:[%s417 + $0x50] sm:$0x1] %v490
        %v492 = vld [vmem:[%s417 + $0x5c] sm:$0x1]
        %v493 = vsel %vm470, 0, %v492
        %494 = vst [vmem:[%s417 + $0x5c] sm:$0x1] %v493
        %v495 = vld [vmem:[%s417 + $0x68] sm:$0x1]
        %v496 = vsel %vm470, 0, %v495
        %497 = vst [vmem:[%s417 + $0x68] sm:$0x1] %v496
        %v498 = vld [vmem:[%s417 + $0x74] sm:$0x1]
        %v499 = vsel %vm470, 0, %v498
        %500 = vst [vmem:[%s417 + $0x74] sm:$0x1] %v499
        %v501 = vld [vmem:[%s417 + $0x80] sm:$0x1]
        %v502 = vsel %vm470, 0, %v501
        %503 = vst [vmem:[%s417 + $0x80] sm:$0x1] %v502
        %v504 = vld [vmem:[%s417 + $0x8c] sm:$0x1]
        %v505 = vsel %vm470, 0, %v504
        %506 = vst [vmem:[%s417 + $0x8c] sm:$0x1] %v505
        %v507 = vld [vmem:[%s417 + $0x98] sm:$0x1]
        %v508 = vsel %vm470, 0, %v507
        %509 = vst [vmem:[%s417 + $0x98] sm:$0x1] %v508
        %v510 = vld [vmem:[%s417 + $0xa4] sm:$0x1]
        %v511 = vsel %vm470, 0, %v510
        %512 = vst [vmem:[%s417 + $0xa4] sm:$0x1] %v511
        %v513 = vld [vmem:[%s417 + $0xb0] sm:$0x1]
        %v514 = vsel %vm470, 0, %v513
        %515 = vst [vmem:[%s417 + $0xb0] sm:$0x1] %v514
        %v516 = vld [vmem:[%s417 + $0xbc] sm:$0x1]
        %v517 = vsel %vm470, 0, %v516
        %518 = vst [vmem:[%s417 + $0xbc] sm:$0x1] %v517
        %v519 = vld [vmem:[%s358] sm:$0xff]
        %v520 = vld [vmem:[%s358 + $0x8] sm:$0xff]
        %v521 = vld [vmem:[%s358 + $0x10] sm:$0xff]
        %v522 = vld [vmem:[%s358 + $0x18] sm:$0xff]
        %v523 = vld [vmem:[%s358 + $0x20] sm:$0xff]
        %v524 = vld [vmem:[%s358 + $0x28] sm:$0xff]
        %v525 = vld [vmem:[%s358 + $0x30] sm:$0xff]
        %v526 = vld [vmem:[%s358 + $0x38] sm:$0xff]
        %v527 = vld [vmem:[%s358 + $0x40] sm:$0xff]
        %v528 = vld [vmem:[%s358 + $0x48] sm:$0xff]
        %v529 = vld [vmem:[%s358 + $0x50] sm:$0xff]
        %v530 = vld [vmem:[%s358 + $0x58] sm:$0xff]
        %v531 = vld [vmem:[%s358 + $0x60] sm:$0xff]
        %v532 = vld [vmem:[%s358 + $0x68] sm:$0xff]
        %v533 = vld [vmem:[%s358 + $0x70] sm:$0xff]
        %v534 = vld [vmem:[%s358 + $0x78] sm:$0xff]
        %v535 = vld [vmem:[%s358 + $0x80] sm:$0xff]
        %v536 = vld [vmem:[%s358 + $0x88] sm:$0xff]
        %v537 = vld [vmem:[%s358 + $0x90] sm:$0xff]
        %v538 = vld [vmem:[%s358 + $0x98] sm:$0xff]
        %v539 = vld [vmem:[%s358 + $0xa0] sm:$0xff]
        %v540 = vld [vmem:[%s358 + $0xa8] sm:$0xff]
        %v541 = vld [vmem:[%s358 + $0xb0] sm:$0xff]
        %v542 = vld [vmem:[%s358 + $0xb8] sm:$0xff]
        %v543 = vld [vmem:[%s358 + $0xc0] sm:$0xff]
        %v544 = vld [vmem:[%s358 + $0xc8] sm:$0xff]
        %v545 = vld [vmem:[%s358 + $0xd0] sm:$0xff]
        %v546 = vld [vmem:[%s358 + $0xd8] sm:$0xff]
        %v547 = vld [vmem:[%s358 + $0xe0] sm:$0xff]
        %v548 = vld [vmem:[%s358 + $0xe8] sm:$0xff]
        %v549 = vld [vmem:[%s358 + $0xf0] sm:$0xff]
        %v550 = vld [vmem:[%s358 + $0xf8] sm:$0xff]
        %v551 = vpack.c.bf16 %v520, %v519
        %v552 = vpack.c.bf16 %v522, %v521
        %v553 = vpack.c.bf16 %v524, %v523
        %v554 = vpack.c.bf16 %v526, %v525
        %v555 = vpack.c.bf16 %v528, %v527
        %v556 = vpack.c.bf16 %v530, %v529
        %v557 = vpack.c.bf16 %v532, %v531
        %v558 = vpack.c.bf16 %v534, %v533
        %v559 = vpack.c.bf16 %v536, %v535
        %v560 = vpack.c.bf16 %v538, %v537
        %v561 = vpack.c.bf16 %v540, %v539
        %v562 = vpack.c.bf16 %v542, %v541
        %v563 = vpack.c.bf16 %v544, %v543
        %v564 = vpack.c.bf16 %v546, %v545
        %v565 = vpack.c.bf16 %v548, %v547
        %v566 = vpack.c.bf16 %v550, %v549
        %v583 = vunpack.c.l.b16 %v551
        %v584 = vunpack.c.h.b16 %v551
        %v585 = vunpack.c.l.b16 %v552
        %v586 = vunpack.c.h.b16 %v552
        %v587 = vunpack.c.l.b16 %v553
        %v588 = vunpack.c.h.b16 %v553
        %v589 = vunpack.c.l.b16 %v554
        %v590 = vunpack.c.h.b16 %v554
        %v591 = vunpack.c.l.b16 %v555
        %v592 = vunpack.c.h.b16 %v555
        %v593 = vunpack.c.l.b16 %v556
        %v594 = vunpack.c.h.b16 %v556
        %v595 = vunpack.c.l.b16 %v557
        %v596 = vunpack.c.h.b16 %v557
        %v597 = vunpack.c.l.b16 %v558
        %v598 = vunpack.c.h.b16 %v558
        %v599 = vunpack.c.l.b16 %v559
        %v600 = vunpack.c.h.b16 %v559
        %v601 = vunpack.c.l.b16 %v560
        %v602 = vunpack.c.h.b16 %v560
        %v603 = vunpack.c.l.b16 %v561
        %v604 = vunpack.c.h.b16 %v561
        %v605 = vunpack.c.l.b16 %v562
        %v606 = vunpack.c.h.b16 %v562
        %v607 = vunpack.c.l.b16 %v563
        %v608 = vunpack.c.h.b16 %v563
        %v609 = vunpack.c.l.b16 %v564
        %v610 = vunpack.c.h.b16 %v564
        %v611 = vunpack.c.l.b16 %v565
        %v612 = vunpack.c.h.b16 %v565
        %v613 = vunpack.c.l.b16 %v566
        %v614 = vunpack.c.h.b16 %v566
        %v615 = vpack.c.b16 %v583, %v583
        %v616 = vpack.c.b16 %v584, %v584
        %v617 = vpack.c.b16 %v585, %v585
        %v618 = vpack.c.b16 %v586, %v586
        %v619 = vpack.c.b16 %v587, %v587
        %v620 = vpack.c.b16 %v588, %v588
        %v621 = vpack.c.b16 %v589, %v589
        %v622 = vpack.c.b16 %v590, %v590
        %v623 = vpack.c.b16 %v591, %v591
        %v624 = vpack.c.b16 %v592, %v592
        %v625 = vpack.c.b16 %v593, %v593
        %v626 = vpack.c.b16 %v594, %v594
        %v627 = vpack.c.b16 %v595, %v595
        %v628 = vpack.c.b16 %v596, %v596
        %v629 = vpack.c.b16 %v597, %v597
        %v630 = vpack.c.b16 %v598, %v598
        %v631 = vpack.c.b16 %v599, %v599
        %v632 = vpack.c.b16 %v600, %v600
        %v633 = vpack.c.b16 %v601, %v601
        %v634 = vpack.c.b16 %v602, %v602
        %v635 = vpack.c.b16 %v603, %v603
        %v636 = vpack.c.b16 %v604, %v604
        %v637 = vpack.c.b16 %v605, %v605
        %v638 = vpack.c.b16 %v606, %v606
        %v639 = vpack.c.b16 %v607, %v607
        %v640 = vpack.c.b16 %v608, %v608
        %v641 = vpack.c.b16 %v609, %v609
        %v642 = vpack.c.b16 %v610, %v610
        %v643 = vpack.c.b16 %v611, %v611
        %v644 = vpack.c.b16 %v612, %v612
        %v645 = vpack.c.b16 %v613, %v613
        %v646 = vpack.c.b16 %v614, %v614
        %vm647 = vsmask.f32 4368
        %vm648 = vmor %vm419, %vm647
        %v650 = vshrl.u32 %v615, 16
        %v652 = vrot.slane %v650, 7
        %v653 = vshll.u32 %v615, 16
        %v655 = vor.u32 %v652, %v653
        %v656 = vrot.slane %v652, 4
        %v658 = vshrl.u32 %v616, 16
        %v660 = vrot.slane %v658, 7
        %v661 = vshll.u32 %v616, 16
        %v663 = vor.u32 %v660, %v661
        %v664 = vsel %vm648, %v656, %v663
        %v665 = vrot.slane %v660, 4
        %v667 = vshrl.u32 %v617, 16
        %v669 = vrot.slane %v667, 7
        %v670 = vshll.u32 %v617, 16
        %v672 = vor.u32 %v669, %v670
        %v673 = vrot.slane %v669, 4
        %v675 = vshrl.u32 %v618, 16
        %v677 = vrot.slane %v675, 7
        %v678 = vshll.u32 %v618, 16
        %v680 = vor.u32 %v677, %v678
        %v681 = vsel %vm648, %v673, %v680
        %v682 = vrot.slane %v677, 4
        %v684 = vshrl.u32 %v619, 16
        %v686 = vrot.slane %v684, 7
        %v687 = vshll.u32 %v619, 16
        %v689 = vor.u32 %v686, %v687
        %v690 = vrot.slane %v686, 4
        %v692 = vshrl.u32 %v620, 16
        %v694 = vrot.slane %v692, 7
        %v695 = vshll.u32 %v620, 16
        %v697 = vor.u32 %v694, %v695
        %v698 = vsel %vm648, %v690, %v697
        %v699 = vrot.slane %v694, 4
        %v701 = vshrl.u32 %v621, 16
        %v703 = vrot.slane %v701, 7
        %v704 = vshll.u32 %v621, 16
        %v706 = vor.u32 %v703, %v704
        %v707 = vrot.slane %v703, 4
        %v709 = vshrl.u32 %v622, 16
        %v711 = vrot.slane %v709, 7
        %v712 = vshll.u32 %v622, 16
        %v714 = vor.u32 %v711, %v712
        %v715 = vsel %vm648, %v707, %v714
        %v716 = vrot.slane %v711, 4
        %v718 = vshrl.u32 %v623, 16
        %v720 = vrot.slane %v718, 7
        %v721 = vshll.u32 %v623, 16
        %v723 = vor.u32 %v720, %v721
        %v724 = vrot.slane %v720, 4
        %v726 = vshrl.u32 %v624, 16
        %v728 = vrot.slane %v726, 7
        %v729 = vshll.u32 %v624, 16
        %v731 = vor.u32 %v728, %v729
        %v732 = vsel %vm648, %v724, %v731
        %v733 = vrot.slane %v728, 4
        %v735 = vshrl.u32 %v625, 16
        %v737 = vrot.slane %v735, 7
        %v738 = vshll.u32 %v625, 16
        %v740 = vor.u32 %v737, %v738
        %v741 = vrot.slane %v737, 4
        %v743 = vshrl.u32 %v626, 16
        %v745 = vrot.slane %v743, 7
        %v746 = vshll.u32 %v626, 16
        %v748 = vor.u32 %v745, %v746
        %v749 = vsel %vm648, %v741, %v748
        %v750 = vrot.slane %v745, 4
        %v752 = vshrl.u32 %v627, 16
        %v754 = vrot.slane %v752, 7
        %v755 = vshll.u32 %v627, 16
        %v757 = vor.u32 %v754, %v755
        %v758 = vrot.slane %v754, 4
        %v760 = vshrl.u32 %v628, 16
        %v762 = vrot.slane %v760, 7
        %v763 = vshll.u32 %v628, 16
        %v765 = vor.u32 %v762, %v763
        %v766 = vsel %vm648, %v758, %v765
        %v767 = vrot.slane %v762, 4
        %v769 = vshrl.u32 %v629, 16
        %v771 = vrot.slane %v769, 7
        %v772 = vshll.u32 %v629, 16
        %v774 = vor.u32 %v771, %v772
        %v775 = vrot.slane %v771, 4
        %v777 = vshrl.u32 %v630, 16
        %v779 = vrot.slane %v777, 7
        %v780 = vshll.u32 %v630, 16
        %v782 = vor.u32 %v779, %v780
        %v783 = vsel %vm648, %v775, %v782
        %v784 = vrot.slane %v779, 4
        %v786 = vshrl.u32 %v631, 16
        %v788 = vrot.slane %v786, 7
        %v789 = vshll.u32 %v631, 16
        %v791 = vor.u32 %v788, %v789
        %v792 = vrot.slane %v788, 4
        %v794 = vshrl.u32 %v632, 16
        %v796 = vrot.slane %v794, 7
        %v797 = vshll.u32 %v632, 16
        %v799 = vor.u32 %v796, %v797
        %v800 = vsel %vm648, %v792, %v799
        %v801 = vrot.slane %v796, 4
        %v803 = vshrl.u32 %v633, 16
        %v805 = vrot.slane %v803, 7
        %v806 = vshll.u32 %v633, 16
        %v808 = vor.u32 %v805, %v806
        %v809 = vrot.slane %v805, 4
        %v811 = vshrl.u32 %v634, 16
        %v813 = vrot.slane %v811, 7
        %v814 = vshll.u32 %v634, 16
        %v816 = vor.u32 %v813, %v814
        %v817 = vsel %vm648, %v809, %v816
        %v818 = vrot.slane %v813, 4
        %v820 = vshrl.u32 %v635, 16
        %v822 = vrot.slane %v820, 7
        %v823 = vshll.u32 %v635, 16
        %v825 = vor.u32 %v822, %v823
        %v826 = vrot.slane %v822, 4
        %v828 = vshrl.u32 %v636, 16
        %v830 = vrot.slane %v828, 7
        %v831 = vshll.u32 %v636, 16
        %v833 = vor.u32 %v830, %v831
        %v834 = vsel %vm648, %v826, %v833
        %v835 = vrot.slane %v830, 4
        %v837 = vshrl.u32 %v637, 16
        %v839 = vrot.slane %v837, 7
        %v840 = vshll.u32 %v637, 16
        %v842 = vor.u32 %v839, %v840
        %v843 = vrot.slane %v839, 4
        %v845 = vshrl.u32 %v638, 16
        %v847 = vrot.slane %v845, 7
        %v848 = vshll.u32 %v638, 16
        %v850 = vor.u32 %v847, %v848
        %v851 = vsel %vm648, %v843, %v850
        %v852 = vrot.slane %v847, 4
        %v854 = vshrl.u32 %v639, 16
        %v856 = vrot.slane %v854, 7
        %v857 = vshll.u32 %v639, 16
        %v859 = vor.u32 %v856, %v857
        %v860 = vrot.slane %v856, 4
        %v862 = vshrl.u32 %v640, 16
        %v864 = vrot.slane %v862, 7
        %v865 = vshll.u32 %v640, 16
        %v867 = vor.u32 %v864, %v865
        %v868 = vsel %vm648, %v860, %v867
        %v869 = vrot.slane %v864, 4
        %v871 = vshrl.u32 %v641, 16
        %v873 = vrot.slane %v871, 7
        %v874 = vshll.u32 %v641, 16
        %v876 = vor.u32 %v873, %v874
        %v877 = vrot.slane %v873, 4
        %v879 = vshrl.u32 %v642, 16
        %v881 = vrot.slane %v879, 7
        %v882 = vshll.u32 %v642, 16
        %v884 = vor.u32 %v881, %v882
        %v885 = vsel %vm648, %v877, %v884
        %v886 = vrot.slane %v881, 4
        %v888 = vshrl.u32 %v643, 16
        %v890 = vrot.slane %v888, 7
        %v891 = vshll.u32 %v643, 16
        %v893 = vor.u32 %v890, %v891
        %v894 = vrot.slane %v890, 4
        %v896 = vshrl.u32 %v644, 16
        %v898 = vrot.slane %v896, 7
        %v899 = vshll.u32 %v644, 16
        %v901 = vor.u32 %v898, %v899
        %v902 = vsel %vm648, %v894, %v901
        %v903 = vrot.slane %v898, 4
        %v905 = vshrl.u32 %v645, 16
        %v907 = vrot.slane %v905, 7
        %v908 = vshll.u32 %v645, 16
        %v910 = vor.u32 %v907, %v908
        %v911 = vrot.slane %v907, 4
        %v913 = vshrl.u32 %v646, 16
        %v915 = vrot.slane %v913, 7
        %v916 = vshll.u32 %v646, 16
        %v918 = vor.u32 %v915, %v916
        %v919 = vsel %vm648, %v911, %v918
        %v920 = vrot.slane %v915, 4
        %vm969 = vcmask 1043456
        %vm970 = vmand %vm969, %vm469
        %v971 = vld [vmem:[%s417] sm:$0xf]
        %v972 = vsel %vm970, %v655, %v971
        %973 = vst [vmem:[%s417] sm:$0xf] %v972
        %974 = vst [vmem:[%s417 + $0x4] sm:$0xf] %v664
        %v975 = vld [vmem:[%s417 + $0x8] sm:$0x1]
        %v976 = vsel %vm420, %v665, %v975
        %977 = vst [vmem:[%s417 + $0x8] sm:$0x1] %v976
        %v978 = vld [vmem:[%s417 + $0xc] sm:$0xf]
        %v979 = vsel %vm970, %v672, %v978
        %980 = vst [vmem:[%s417 + $0xc] sm:$0xf] %v979
        %981 = vst [vmem:[%s417 + $0x10] sm:$0xf] %v681
        %v982 = vld [vmem:[%s417 + $0x14] sm:$0x1]
        %v983 = vsel %vm420, %v682, %v982
        %984 = vst [vmem:[%s417 + $0x14] sm:$0x1] %v983
        %v985 = vld [vmem:[%s417 + $0x18] sm:$0xf]
        %v986 = vsel %vm970, %v689, %v985
        %987 = vst [vmem:[%s417 + $0x18] sm:$0xf] %v986
        %988 = vst [vmem:[%s417 + $0x1c] sm:$0xf] %v698
        %v989 = vld [vmem:[%s417 + $0x20] sm:$0x1]
        %v990 = vsel %vm420, %v699, %v989
        %991 = vst [vmem:[%s417 + $0x20] sm:$0x1] %v990
        %v992 = vld [vmem:[%s417 + $0x24] sm:$0xf]
        %v993 = vsel %vm970, %v706, %v992
        %994 = vst [vmem:[%s417 + $0x24] sm:$0xf] %v993
        %995 = vst [vmem:[%s417 + $0x28] sm:$0xf] %v715
        %v996 = vld [vmem:[%s417 + $0x2c] sm:$0x1]
        %v997 = vsel %vm420, %v716, %v996
        %998 = vst [vmem:[%s417 + $0x2c] sm:$0x1] %v997
        %v999 = vld [vmem:[%s417 + $0x30] sm:$0xf]
        %v1000 = vsel %vm970, %v723, %v999
        %1001 = vst [vmem:[%s417 + $0x30] sm:$0xf] %v1000
        %1002 = vst [vmem:[%s417 + $0x34] sm:$0xf] %v732
        %v1003 = vld [vmem:[%s417 + $0x38] sm:$0x1]
        %v1004 = vsel %vm420, %v733, %v1003
        %1005 = vst [vmem:[%s417 + $0x38] sm:$0x1] %v1004
        %v1006 = vld [vmem:[%s417 + $0x3c] sm:$0xf]
        %v1007 = vsel %vm970, %v740, %v1006
        %1008 = vst [vmem:[%s417 + $0x3c] sm:$0xf] %v1007
        %1009 = vst [vmem:[%s417 + $0x40] sm:$0xf] %v749
        %v1010 = vld [vmem:[%s417 + $0x44] sm:$0x1]
        %v1011 = vsel %vm420, %v750, %v1010
        %1012 = vst [vmem:[%s417 + $0x44] sm:$0x1] %v1011
        %v1013 = vld [vmem:[%s417 + $0x48] sm:$0xf]
        %v1014 = vsel %vm970, %v757, %v1013
        %1015 = vst [vmem:[%s417 + $0x48] sm:$0xf] %v1014
        %1016 = vst [vmem:[%s417 + $0x4c] sm:$0xf] %v766
        %v1017 = vld [vmem:[%s417 + $0x50] sm:$0x1]
        %v1018 = vsel %vm420, %v767, %v1017
        %1019 = vst [vmem:[%s417 + $0x50] sm:$0x1] %v1018
        %v1020 = vld [vmem:[%s417 + $0x54] sm:$0xf]
        %v1021 = vsel %vm970, %v774, %v1020
        %1022 = vst [vmem:[%s417 + $0x54] sm:$0xf] %v1021
        %1023 = vst [vmem:[%s417 + $0x58] sm:$0xf] %v783
        %v1024 = vld [vmem:[%s417 + $0x5c] sm:$0x1]
        %v1025 = vsel %vm420, %v784, %v1024
        %1026 = vst [vmem:[%s417 + $0x5c] sm:$0x1] %v1025
        %v1027 = vld [vmem:[%s417 + $0x60] sm:$0xf]
        %v1028 = vsel %vm970, %v791, %v1027
        %1029 = vst [vmem:[%s417 + $0x60] sm:$0xf] %v1028
        %1030 = vst [vmem:[%s417 + $0x64] sm:$0xf] %v800
        %v1031 = vld [vmem:[%s417 + $0x68] sm:$0x1]
        %v1032 = vsel %vm420, %v801, %v1031
        %1033 = vst [vmem:[%s417 + $0x68] sm:$0x1] %v1032
        %v1034 = vld [vmem:[%s417 + $0x6c] sm:$0xf]
        %v1035 = vsel %vm970, %v808, %v1034
        %1036 = vst [vmem:[%s417 + $0x6c] sm:$0xf] %v1035
        %1037 = vst [vmem:[%s417 + $0x70] sm:$0xf] %v817
        %v1038 = vld [vmem:[%s417 + $0x74] sm:$0x1]
        %v1039 = vsel %vm420, %v818, %v1038
        %1040 = vst [vmem:[%s417 + $0x74] sm:$0x1] %v1039
        %v1041 = vld [vmem:[%s417 + $0x78] sm:$0xf]
        %v1042 = vsel %vm970, %v825, %v1041
        %1043 = vst [vmem:[%s417 + $0x78] sm:$0xf] %v1042
        %1044 = vst [vmem:[%s417 + $0x7c] sm:$0xf] %v834
        %v1045 = vld [vmem:[%s417 + $0x80] sm:$0x1]
        %v1046 = vsel %vm420, %v835, %v1045
        %1047 = vst [vmem:[%s417 + $0x80] sm:$0x1] %v1046
        %v1048 = vld [vmem:[%s417 + $0x84] sm:$0xf]
        %v1049 = vsel %vm970, %v842, %v1048
        %1050 = vst [vmem:[%s417 + $0x84] sm:$0xf] %v1049
        %1051 = vst [vmem:[%s417 + $0x88] sm:$0xf] %v851
        %v1052 = vld [vmem:[%s417 + $0x8c] sm:$0x1]
        %v1053 = vsel %vm420, %v852, %v1052
        %1054 = vst [vmem:[%s417 + $0x8c] sm:$0x1] %v1053
        %v1055 = vld [vmem:[%s417 + $0x90] sm:$0xf]
        %v1056 = vsel %vm970, %v859, %v1055
        %1057 = vst [vmem:[%s417 + $0x90] sm:$0xf] %v1056
        %1058 = vst [vmem:[%s417 + $0x94] sm:$0xf] %v868
        %v1059 = vld [vmem:[%s417 + $0x98] sm:$0x1]
        %v1060 = vsel %vm420, %v869, %v1059
        %1061 = vst [vmem:[%s417 + $0x98] sm:$0x1] %v1060
        %v1062 = vld [vmem:[%s417 + $0x9c] sm:$0xf]
        %v1063 = vsel %vm970, %v876, %v1062
        %1064 = vst [vmem:[%s417 + $0x9c] sm:$0xf] %v1063
        %1065 = vst [vmem:[%s417 + $0xa0] sm:$0xf] %v885
        %v1066 = vld [vmem:[%s417 + $0xa4] sm:$0x1]
        %v1067 = vsel %vm420, %v886, %v1066
        %1068 = vst [vmem:[%s417 + $0xa4] sm:$0x1] %v1067
        %v1069 = vld [vmem:[%s417 + $0xa8] sm:$0xf]
        %v1070 = vsel %vm970, %v893, %v1069
        %1071 = vst [vmem:[%s417 + $0xa8] sm:$0xf] %v1070
        %1072 = vst [vmem:[%s417 + $0xac] sm:$0xf] %v902
        %v1073 = vld [vmem:[%s417 + $0xb0] sm:$0x1]
        %v1074 = vsel %vm420, %v903, %v1073
        %1075 = vst [vmem:[%s417 + $0xb0] sm:$0x1] %v1074
        %v1076 = vld [vmem:[%s417 + $0xb4] sm:$0xf]
        %v1077 = vsel %vm970, %v910, %v1076
        %1078 = vst [vmem:[%s417 + $0xb4] sm:$0xf] %v1077
        %1079 = vst [vmem:[%s417 + $0xb8] sm:$0xf] %v919
        %v1080 = vld [vmem:[%s417 + $0xbc] sm:$0x1]
        %v1081 = vsel %vm420, %v920, %v1080
        %1082 = vst [vmem:[%s417 + $0xbc] sm:$0x1] %v1081
        %v1083 = vld [vmem:[#allocation2] sm:$0xf]
        %v1084 = vld [vmem:[#allocation2 + $0x4] sm:$0xf]
        %v1085 = vld [vmem:[#allocation2 + $0xc] sm:$0xf]
        %v1086 = vld [vmem:[#allocation2 + $0x10] sm:$0xf]
        %v1087 = vld [vmem:[#allocation2 + $0x18] sm:$0xf]
        %v1088 = vld [vmem:[#allocation2 + $0x1c] sm:$0xf]
        %v1089 = vld [vmem:[#allocation2 + $0x24] sm:$0xf]
        %v1090 = vld [vmem:[#allocation2 + $0x28] sm:$0xf]
        %v1091 = vld [vmem:[#allocation2 + $0x30] sm:$0xf]
        %v1092 = vld [vmem:[#allocation2 + $0x34] sm:$0xf]
        %v1093 = vld [vmem:[#allocation2 + $0x3c] sm:$0xf]
        %v1094 = vld [vmem:[#allocation2 + $0x40] sm:$0xf]
        %v1095 = vld [vmem:[#allocation2 + $0x48] sm:$0xf]
        %v1096 = vld [vmem:[#allocation2 + $0x4c] sm:$0xf]
        %v1097 = vld [vmem:[#allocation2 + $0x54] sm:$0xf]
        %v1098 = vld [vmem:[#allocation2 + $0x58] sm:$0xf]
        %v1099 = vld [vmem:[#allocation2 + $0x60] sm:$0xf]
        %v1100 = vld [vmem:[#allocation2 + $0x64] sm:$0xf]
        %v1101 = vld [vmem:[#allocation2 + $0x6c] sm:$0xf]
        %v1102 = vld [vmem:[#allocation2 + $0x70] sm:$0xf]
        %v1103 = vld [vmem:[#allocation2 + $0x78] sm:$0xf]
        %v1104 = vld [vmem:[#allocation2 + $0x7c] sm:$0xf]
        %v1105 = vld [vmem:[#allocation2 + $0x84] sm:$0xf]
        %v1106 = vld [vmem:[#allocation2 + $0x88] sm:$0xf]
        %v1107 = vld [vmem:[#allocation2 + $0x90] sm:$0xf]
        %v1108 = vld [vmem:[#allocation2 + $0x94] sm:$0xf]
        %v1109 = vld [vmem:[#allocation2 + $0x9c] sm:$0xf]
        %v1110 = vld [vmem:[#allocation2 + $0xa0] sm:$0xf]
        %v1111 = vld [vmem:[#allocation2 + $0xa8] sm:$0xf]
        %v1112 = vld [vmem:[#allocation2 + $0xac] sm:$0xf]
        %v1113 = vld [vmem:[#allocation2 + $0xb4] sm:$0xf]
        %v1114 = vld [vmem:[#allocation2 + $0xb8] sm:$0xf]
        %v1115 = vld [vmem:[#allocation2 + $0x8] sm:$0x1]
        %v1116 = vld [vmem:[#allocation2 + $0x14] sm:$0x1]
        %v1117 = vld [vmem:[#allocation2 + $0x20] sm:$0x1]
        %v1118 = vld [vmem:[#allocation2 + $0x2c] sm:$0x1]
        %v1119 = vld [vmem:[#allocation2 + $0x38] sm:$0x1]
        %v1120 = vld [vmem:[#allocation2 + $0x44] sm:$0x1]
        %v1121 = vld [vmem:[#allocation2 + $0x50] sm:$0x1]
        %v1122 = vld [vmem:[#allocation2 + $0x5c] sm:$0x1]
        %v1123 = vld [vmem:[#allocation2 + $0x68] sm:$0x1]
        %v1124 = vld [vmem:[#allocation2 + $0x74] sm:$0x1]
        %v1125 = vld [vmem:[#allocation2 + $0x80] sm:$0x1]
        %v1126 = vld [vmem:[#allocation2 + $0x8c] sm:$0x1]
        %v1127 = vld [vmem:[#allocation2 + $0x98] sm:$0x1]
        %v1128 = vld [vmem:[#allocation2 + $0xa4] sm:$0x1]
        %v1129 = vld [vmem:[#allocation2 + $0xb0] sm:$0x1]
        %v1130 = vld [vmem:[#allocation2 + $0xbc] sm:$0x1]
        %v1131 = vld [vmem:[#allocation2] sm:$0xe]
        %v1132 = vld [vmem:[#allocation2 + $0xc] sm:$0xe]
        %v1133 = vld [vmem:[#allocation2 + $0x18] sm:$0xe]
        %v1134 = vld [vmem:[#allocation2 + $0x24] sm:$0xe]
        %v1135 = vld [vmem:[#allocation2 + $0x30] sm:$0xe]
        %v1136 = vld [vmem:[#allocation2 + $0x3c] sm:$0xe]
        %v1137 = vld [vmem:[#allocation2 + $0x48] sm:$0xe]
        %v1138 = vld [vmem:[#allocation2 + $0x54] sm:$0xe]
        %v1139 = vld [vmem:[#allocation2 + $0x60] sm:$0xe]
        %v1140 = vld [vmem:[#allocation2 + $0x6c] sm:$0xe]
        %v1141 = vld [vmem:[#allocation2 + $0x78] sm:$0xe]
        %v1142 = vld [vmem:[#allocation2 + $0x84] sm:$0xe]
        %v1143 = vld [vmem:[#allocation2 + $0x90] sm:$0xe]
        %v1144 = vld [vmem:[#allocation2 + $0x9c] sm:$0xe]
        %v1145 = vld [vmem:[#allocation2 + $0xa8] sm:$0xe]
        %v1146 = vld [vmem:[#allocation2 + $0xb4] sm:$0xe]
        %v1147 = vld [vmem:[%s417] sm:$0xf]
        %v1148 = vld [vmem:[%s417 + $0x4] sm:$0xf]
        %v1149 = vld [vmem:[%s417 + $0xc] sm:$0xf]
        %v1150 = vld [vmem:[%s417 + $0x10] sm:$0xf]
        %v1151 = vld [vmem:[%s417 + $0x18] sm:$0xf]
        %v1152 = vld [vmem:[%s417 + $0x1c] sm:$0xf]
        %v1153 = vld [vmem:[%s417 + $0x24] sm:$0xf]
        %v1154 = vld [vmem:[%s417 + $0x28] sm:$0xf]
        %v1155 = vld [vmem:[%s417 + $0x30] sm:$0xf]
        %v1156 = vld [vmem:[%s417 + $0x34] sm:$0xf]
        %v1157 = vld [vmem:[%s417 + $0x3c] sm:$0xf]
        %v1158 = vld [vmem:[%s417 + $0x40] sm:$0xf]
        %v1159 = vld [vmem:[%s417 + $0x48] sm:$0xf]
        %v1160 = vld [vmem:[%s417 + $0x4c] sm:$0xf]
        %v1161 = vld [vmem:[%s417 + $0x54] sm:$0xf]
        %v1162 = vld [vmem:[%s417 + $0x58] sm:$0xf]
        %v1163 = vld [vmem:[%s417 + $0x60] sm:$0xf]
        %v1164 = vld [vmem:[%s417 + $0x64] sm:$0xf]
        %v1165 = vld [vmem:[%s417 + $0x6c] sm:$0xf]
        %v1166 = vld [vmem:[%s417 + $0x70] sm:$0xf]
        %v1167 = vld [vmem:[%s417 + $0x78] sm:$0xf]
        %v1168 = vld [vmem:[%s417 + $0x7c] sm:$0xf]
        %v1169 = vld [vmem:[%s417 + $0x84] sm:$0xf]
        %v1170 = vld [vmem:[%s417 + $0x88] sm:$0xf]
        %v1171 = vld [vmem:[%s417 + $0x90] sm:$0xf]
        %v1172 = vld [vmem:[%s417 + $0x94] sm:$0xf]
        %v1173 = vld [vmem:[%s417 + $0x9c] sm:$0xf]
        %v1174 = vld [vmem:[%s417 + $0xa0] sm:$0xf]
        %v1175 = vld [vmem:[%s417 + $0xa8] sm:$0xf]
        %v1176 = vld [vmem:[%s417 + $0xac] sm:$0xf]
        %v1177 = vld [vmem:[%s417 + $0xb4] sm:$0xf]
        %v1178 = vld [vmem:[%s417 + $0xb8] sm:$0xf]
        %v1179 = vld [vmem:[%s417 + $0x8] sm:$0x1]
        %v1180 = vld [vmem:[%s417 + $0x14] sm:$0x1]
        %v1181 = vld [vmem:[%s417 + $0x20] sm:$0x1]
        %v1182 = vld [vmem:[%s417 + $0x2c] sm:$0x1]
        %v1183 = vld [vmem:[%s417 + $0x38] sm:$0x1]
        %v1184 = vld [vmem:[%s417 + $0x44] sm:$0x1]
        %v1185 = vld [vmem:[%s417 + $0x50] sm:$0x1]
        %v1186 = vld [vmem:[%s417 + $0x5c] sm:$0x1]
        %v1187 = vld [vmem:[%s417 + $0x68] sm:$0x1]
        %v1188 = vld [vmem:[%s417 + $0x74] sm:$0x1]
        %v1189 = vld [vmem:[%s417 + $0x80] sm:$0x1]
        %v1190 = vld [vmem:[%s417 + $0x8c] sm:$0x1]
        %v1191 = vld [vmem:[%s417 + $0x98] sm:$0x1]
        %v1192 = vld [vmem:[%s417 + $0xa4] sm:$0x1]
        %v1193 = vld [vmem:[%s417 + $0xb0] sm:$0x1]
        %v1194 = vld [vmem:[%s417 + $0xbc] sm:$0x1]
        %v1195 = vld [vmem:[%s417] sm:$0xe]
        %v1196 = vld [vmem:[%s417 + $0xc] sm:$0xe]
        %v1197 = vld [vmem:[%s417 + $0x18] sm:$0xe]
        %v1198 = vld [vmem:[%s417 + $0x24] sm:$0xe]
        %v1199 = vld [vmem:[%s417 + $0x30] sm:$0xe]
        %v1200 = vld [vmem:[%s417 + $0x3c] sm:$0xe]
        %v1201 = vld [vmem:[%s417 + $0x48] sm:$0xe]
        %v1202 = vld [vmem:[%s417 + $0x54] sm:$0xe]
        %v1203 = vld [vmem:[%s417 + $0x60] sm:$0xe]
        %v1204 = vld [vmem:[%s417 + $0x6c] sm:$0xe]
        %v1205 = vld [vmem:[%s417 + $0x78] sm:$0xe]
        %v1206 = vld [vmem:[%s417 + $0x84] sm:$0xe]
        %v1207 = vld [vmem:[%s417 + $0x90] sm:$0xe]
        %v1208 = vld [vmem:[%s417 + $0x9c] sm:$0xe]
        %v1209 = vld [vmem:[%s417 + $0xa8] sm:$0xe]
        %v1210 = vld [vmem:[%s417 + $0xb4] sm:$0xe]
        %s1211 = scalar_lea.vmem [#allocation2], 24
        %v1212 = vld [vmem:[%s1211] sm:$0xf]
        %v1213 = vld [vmem:[%s1211 + $0x4] sm:$0xf]
        %v1214 = vld [vmem:[%s1211 + $0xc] sm:$0xf]
        %v1215 = vld [vmem:[%s1211 + $0x10] sm:$0xf]
        %v1216 = vld [vmem:[%s1211 + $0x18] sm:$0xf]
        %v1217 = vld [vmem:[%s1211 + $0x1c] sm:$0xf]
        %v1218 = vld [vmem:[%s1211 + $0x24] sm:$0xf]
        %v1219 = vld [vmem:[%s1211 + $0x28] sm:$0xf]
        %v1220 = vld [vmem:[%s1211 + $0x30] sm:$0xf]
        %v1221 = vld [vmem:[%s1211 + $0x34] sm:$0xf]
        %v1222 = vld [vmem:[%s1211 + $0x3c] sm:$0xf]
        %v1223 = vld [vmem:[%s1211 + $0x40] sm:$0xf]
        %v1224 = vld [vmem:[%s1211 + $0x48] sm:$0xf]
        %v1225 = vld [vmem:[%s1211 + $0x4c] sm:$0xf]
        %v1226 = vld [vmem:[%s1211 + $0x54] sm:$0xf]
        %v1227 = vld [vmem:[%s1211 + $0x58] sm:$0xf]
        %v1228 = vld [vmem:[%s1211 + $0x60] sm:$0xf]
        %v1229 = vld [vmem:[%s1211 + $0x64] sm:$0xf]
        %v1230 = vld [vmem:[%s1211 + $0x6c] sm:$0xf]
        %v1231 = vld [vmem:[%s1211 + $0x70] sm:$0xf]
        %v1232 = vld [vmem:[%s1211 + $0x78] sm:$0xf]
        %v1233 = vld [vmem:[%s1211 + $0x7c] sm:$0xf]
        %v1234 = vld [vmem:[%s1211 + $0x84] sm:$0xf]
        %v1235 = vld [vmem:[%s1211 + $0x88] sm:$0xf]
        %v1236 = vld [vmem:[%s1211 + $0x90] sm:$0xf]
        %v1237 = vld [vmem:[%s1211 + $0x94] sm:$0xf]
        %v1238 = vld [vmem:[%s1211 + $0x9c] sm:$0xf]
        %v1239 = vld [vmem:[%s1211 + $0xa0] sm:$0xf]
        %v1240 = vld [vmem:[%s1211 + $0xa8] sm:$0xf]
        %v1241 = vld [vmem:[%s1211 + $0xac] sm:$0xf]
        %v1242 = vld [vmem:[%s1211 + $0xb4] sm:$0xf]
        %v1243 = vld [vmem:[%s1211 + $0xb8] sm:$0xf]
        %v1244 = vld [vmem:[%s1211 + $0x8] sm:$0x1]
        %v1245 = vld [vmem:[%s1211 + $0x14] sm:$0x1]
        %v1246 = vld [vmem:[%s1211 + $0x20] sm:$0x1]
        %v1247 = vld [vmem:[%s1211 + $0x2c] sm:$0x1]
        %v1248 = vld [vmem:[%s1211 + $0x38] sm:$0x1]
        %v1249 = vld [vmem:[%s1211 + $0x44] sm:$0x1]
        %v1250 = vld [vmem:[%s1211 + $0x50] sm:$0x1]
        %v1251 = vld [vmem:[%s1211 + $0x5c] sm:$0x1]
        %v1252 = vld [vmem:[%s1211 + $0x68] sm:$0x1]
        %v1253 = vld [vmem:[%s1211 + $0x74] sm:$0x1]
        %v1254 = vld [vmem:[%s1211 + $0x80] sm:$0x1]
        %v1255 = vld [vmem:[%s1211 + $0x8c] sm:$0x1]
        %v1256 = vld [vmem:[%s1211 + $0x98] sm:$0x1]
        %v1257 = vld [vmem:[%s1211 + $0xa4] sm:$0x1]
        %v1258 = vld [vmem:[%s1211 + $0xb0] sm:$0x1]
        %v1259 = vld [vmem:[%s1211 + $0xbc] sm:$0x1]
        %v1260 = vld [vmem:[%s1211] sm:$0xe]
        %v1261 = vld [vmem:[%s1211 + $0xc] sm:$0xe]
        %v1262 = vld [vmem:[%s1211 + $0x18] sm:$0xe]
        %v1263 = vld [vmem:[%s1211 + $0x24] sm:$0xe]
        %v1264 = vld [vmem:[%s1211 + $0x30] sm:$0xe]
        %v1265 = vld [vmem:[%s1211 + $0x3c] sm:$0xe]
        %v1266 = vld [vmem:[%s1211 + $0x48] sm:$0xe]
        %v1267 = vld [vmem:[%s1211 + $0x54] sm:$0xe]
        %v1268 = vld [vmem:[%s1211 + $0x60] sm:$0xe]
        %v1269 = vld [vmem:[%s1211 + $0x6c] sm:$0xe]
        %v1270 = vld [vmem:[%s1211 + $0x78] sm:$0xe]
        %v1271 = vld [vmem:[%s1211 + $0x84] sm:$0xe]
        %v1272 = vld [vmem:[%s1211 + $0x90] sm:$0xe]
        %v1273 = vld [vmem:[%s1211 + $0x9c] sm:$0xe]
        %v1274 = vld [vmem:[%s1211 + $0xa8] sm:$0xe]
        %v1275 = vld [vmem:[%s1211 + $0xb4] sm:$0xe]
        %v1308 = vunpack.c.l.b16 %v1083
        %v1309 = vunpack.c.l.b16 %v1084
        %v1310 = vunpack.c.l.b16 %v1085
        %v1311 = vunpack.c.l.b16 %v1086
        %v1312 = vunpack.c.l.b16 %v1087
        %v1313 = vunpack.c.l.b16 %v1088
        %v1314 = vunpack.c.l.b16 %v1089
        %v1315 = vunpack.c.l.b16 %v1090
        %v1316 = vunpack.c.l.b16 %v1091
        %v1317 = vunpack.c.l.b16 %v1092
        %v1318 = vunpack.c.l.b16 %v1093
        %v1319 = vunpack.c.l.b16 %v1094
        %v1320 = vunpack.c.l.b16 %v1095
        %v1321 = vunpack.c.l.b16 %v1096
        %v1322 = vunpack.c.l.b16 %v1097
        %v1323 = vunpack.c.l.b16 %v1098
        %v1324 = vunpack.c.l.b16 %v1099
        %v1325 = vunpack.c.l.b16 %v1100
        %v1326 = vunpack.c.l.b16 %v1101
        %v1327 = vunpack.c.l.b16 %v1102
        %v1328 = vunpack.c.l.b16 %v1103
        %v1329 = vunpack.c.l.b16 %v1104
        %v1330 = vunpack.c.l.b16 %v1105
        %v1331 = vunpack.c.l.b16 %v1106
        %v1332 = vunpack.c.l.b16 %v1107
        %v1333 = vunpack.c.l.b16 %v1108
        %v1334 = vunpack.c.l.b16 %v1109
        %v1335 = vunpack.c.l.b16 %v1110
        %v1336 = vunpack.c.l.b16 %v1111
        %v1337 = vunpack.c.l.b16 %v1112
        %v1338 = vunpack.c.l.b16 %v1113
        %v1339 = vunpack.c.l.b16 %v1114
        %v1340 = vpack.c.b16 %v1309, %v1308
        %v1341 = vpack.c.b16 %v1311, %v1310
        %v1342 = vpack.c.b16 %v1313, %v1312
        %v1343 = vpack.c.b16 %v1315, %v1314
        %v1344 = vpack.c.b16 %v1317, %v1316
        %v1345 = vpack.c.b16 %v1319, %v1318
        %v1346 = vpack.c.b16 %v1321, %v1320
        %v1347 = vpack.c.b16 %v1323, %v1322
        %v1348 = vpack.c.b16 %v1325, %v1324
        %v1349 = vpack.c.b16 %v1327, %v1326
        %v1350 = vpack.c.b16 %v1329, %v1328
        %v1351 = vpack.c.b16 %v1331, %v1330
        %v1352 = vpack.c.b16 %v1333, %v1332
        %v1353 = vpack.c.b16 %v1335, %v1334
        %v1354 = vpack.c.b16 %v1337, %v1336
        %v1355 = vpack.c.b16 %v1339, %v1338
        %v1388 = vunpack.c.l.b16 %v1115
        %v1389 = vunpack.c.l.b16 %v1116
        %v1390 = vunpack.c.l.b16 %v1117
        %v1391 = vunpack.c.l.b16 %v1118
        %v1392 = vunpack.c.l.b16 %v1119
        %v1393 = vunpack.c.l.b16 %v1120
        %v1394 = vunpack.c.l.b16 %v1121
        %v1395 = vunpack.c.l.b16 %v1122
        %v1396 = vunpack.c.l.b16 %v1123
        %v1397 = vunpack.c.l.b16 %v1124
        %v1398 = vunpack.c.l.b16 %v1125
        %v1399 = vunpack.c.l.b16 %v1126
        %v1400 = vunpack.c.l.b16 %v1127
        %v1401 = vunpack.c.l.b16 %v1128
        %v1402 = vunpack.c.l.b16 %v1129
        %v1403 = vunpack.c.l.b16 %v1130
        %v1404 = vpack.c.b16 %v1388, %v1388
        %v1405 = vpack.c.b16 %v1389, %v1389
        %v1406 = vpack.c.b16 %v1390, %v1390
        %v1407 = vpack.c.b16 %v1391, %v1391
        %v1408 = vpack.c.b16 %v1392, %v1392
        %v1409 = vpack.c.b16 %v1393, %v1393
        %v1410 = vpack.c.b16 %v1394, %v1394
        %v1411 = vpack.c.b16 %v1395, %v1395
        %v1412 = vpack.c.b16 %v1396, %v1396
        %v1413 = vpack.c.b16 %v1397, %v1397
        %v1414 = vpack.c.b16 %v1398, %v1398
        %v1415 = vpack.c.b16 %v1399, %v1399
        %v1416 = vpack.c.b16 %v1400, %v1400
        %v1417 = vpack.c.b16 %v1401, %v1401
        %v1418 = vpack.c.b16 %v1402, %v1402
        %v1419 = vpack.c.b16 %v1403, %v1403
        %vm1420 = vsmask.f32 7424
        %v1422 = vshrl.u32 %v1340, 16
        %v1424 = vshll.u32 %v1340, 16
        %v1426 = vrot.slane %v1424, 1
        %v1427 = vor.u32 %v1422, %v1426
        %v1429 = vshll.u32 %v1404, 16
        %v1431 = vrot.slane %v1429, 1
        %v1432 = vsel %vm1420, %v1427, %v1431
        %v1434 = vshrl.u32 %v1341, 16
        %v1436 = vshll.u32 %v1341, 16
        %v1438 = vrot.slane %v1436, 1
        %v1439 = vor.u32 %v1434, %v1438
        %v1441 = vshll.u32 %v1405, 16
        %v1443 = vrot.slane %v1441, 1
        %v1444 = vsel %vm1420, %v1439, %v1443
        %v1446 = vshrl.u32 %v1342, 16
        %v1448 = vshll.u32 %v1342, 16
        %v1450 = vrot.slane %v1448, 1
        %v1451 = vor.u32 %v1446, %v1450
        %v1453 = vshll.u32 %v1406, 16
        %v1455 = vrot.slane %v1453, 1
        %v1456 = vsel %vm1420, %v1451, %v1455
        %v1458 = vshrl.u32 %v1343, 16
        %v1460 = vshll.u32 %v1343, 16
        %v1462 = vrot.slane %v1460, 1
        %v1463 = vor.u32 %v1458, %v1462
        %v1465 = vshll.u32 %v1407, 16
        %v1467 = vrot.slane %v1465, 1
        %v1468 = vsel %vm1420, %v1463, %v1467
        %v1470 = vshrl.u32 %v1344, 16
        %v1472 = vshll.u32 %v1344, 16
        %v1474 = vrot.slane %v1472, 1
        %v1475 = vor.u32 %v1470, %v1474
        %v1477 = vshll.u32 %v1408, 16
        %v1479 = vrot.slane %v1477, 1
        %v1480 = vsel %vm1420, %v1475, %v1479
        %v1482 = vshrl.u32 %v1345, 16
        %v1484 = vshll.u32 %v1345, 16
        %v1486 = vrot.slane %v1484, 1
        %v1487 = vor.u32 %v1482, %v1486
        %v1489 = vshll.u32 %v1409, 16
        %v1491 = vrot.slane %v1489, 1
        %v1492 = vsel %vm1420, %v1487, %v1491
        %v1494 = vshrl.u32 %v1346, 16
        %v1496 = vshll.u32 %v1346, 16
        %v1498 = vrot.slane %v1496, 1
        %v1499 = vor.u32 %v1494, %v1498
        %v1501 = vshll.u32 %v1410, 16
        %v1503 = vrot.slane %v1501, 1
        %v1504 = vsel %vm1420, %v1499, %v1503
        %v1506 = vshrl.u32 %v1347, 16
        %v1508 = vshll.u32 %v1347, 16
        %v1510 = vrot.slane %v1508, 1
        %v1511 = vor.u32 %v1506, %v1510
        %v1513 = vshll.u32 %v1411, 16
        %v1515 = vrot.slane %v1513, 1
        %v1516 = vsel %vm1420, %v1511, %v1515
        %v1518 = vshrl.u32 %v1348, 16
        %v1520 = vshll.u32 %v1348, 16
        %v1522 = vrot.slane %v1520, 1
        %v1523 = vor.u32 %v1518, %v1522
        %v1525 = vshll.u32 %v1412, 16
        %v1527 = vrot.slane %v1525, 1
        %v1528 = vsel %vm1420, %v1523, %v1527
        %v1530 = vshrl.u32 %v1349, 16
        %v1532 = vshll.u32 %v1349, 16
        %v1534 = vrot.slane %v1532, 1
        %v1535 = vor.u32 %v1530, %v1534
        %v1537 = vshll.u32 %v1413, 16
        %v1539 = vrot.slane %v1537, 1
        %v1540 = vsel %vm1420, %v1535, %v1539
        %v1542 = vshrl.u32 %v1350, 16
        %v1544 = vshll.u32 %v1350, 16
        %v1546 = vrot.slane %v1544, 1
        %v1547 = vor.u32 %v1542, %v1546
        %v1549 = vshll.u32 %v1414, 16
        %v1551 = vrot.slane %v1549, 1
        %v1552 = vsel %vm1420, %v1547, %v1551
        %v1554 = vshrl.u32 %v1351, 16
        %v1556 = vshll.u32 %v1351, 16
        %v1558 = vrot.slane %v1556, 1
        %v1559 = vor.u32 %v1554, %v1558
        %v1561 = vshll.u32 %v1415, 16
        %v1563 = vrot.slane %v1561, 1
        %v1564 = vsel %vm1420, %v1559, %v1563
        %v1566 = vshrl.u32 %v1352, 16
        %v1568 = vshll.u32 %v1352, 16
        %v1570 = vrot.slane %v1568, 1
        %v1571 = vor.u32 %v1566, %v1570
        %v1573 = vshll.u32 %v1416, 16
        %v1575 = vrot.slane %v1573, 1
        %v1576 = vsel %vm1420, %v1571, %v1575
        %v1578 = vshrl.u32 %v1353, 16
        %v1580 = vshll.u32 %v1353, 16
        %v1582 = vrot.slane %v1580, 1
        %v1583 = vor.u32 %v1578, %v1582
        %v1585 = vshll.u32 %v1417, 16
        %v1587 = vrot.slane %v1585, 1
        %v1588 = vsel %vm1420, %v1583, %v1587
        %v1590 = vshrl.u32 %v1354, 16
        %v1592 = vshll.u32 %v1354, 16
        %v1594 = vrot.slane %v1592, 1
        %v1595 = vor.u32 %v1590, %v1594
        %v1597 = vshll.u32 %v1418, 16
        %v1599 = vrot.slane %v1597, 1
        %v1600 = vsel %vm1420, %v1595, %v1599
        %v1602 = vshrl.u32 %v1355, 16
        %v1604 = vshll.u32 %v1355, 16
        %v1606 = vrot.slane %v1604, 1
        %v1607 = vor.u32 %v1602, %v1606
        %v1609 = vshll.u32 %v1419, 16
        %v1611 = vrot.slane %v1609, 1
        %v1612 = vsel %vm1420, %v1607, %v1611
        %v1645 = vunpack.c.l.b16 %v1131
        %v1646 = vunpack.c.l.b16 %v1132
        %v1647 = vunpack.c.l.b16 %v1133
        %v1648 = vunpack.c.l.b16 %v1134
        %v1649 = vunpack.c.l.b16 %v1135
        %v1650 = vunpack.c.l.b16 %v1136
        %v1651 = vunpack.c.l.b16 %v1137
        %v1652 = vunpack.c.l.b16 %v1138
        %v1653 = vunpack.c.l.b16 %v1139
        %v1654 = vunpack.c.l.b16 %v1140
        %v1655 = vunpack.c.l.b16 %v1141
        %v1656 = vunpack.c.l.b16 %v1142
        %v1657 = vunpack.c.l.b16 %v1143
        %v1658 = vunpack.c.l.b16 %v1144
        %v1659 = vunpack.c.l.b16 %v1145
        %v1660 = vunpack.c.l.b16 %v1146
        %v1661 = vpack.c.b16 %v1309, %v1645
        %v1662 = vpack.c.b16 %v1311, %v1646
        %v1663 = vpack.c.b16 %v1313, %v1647
        %v1664 = vpack.c.b16 %v1315, %v1648
        %v1665 = vpack.c.b16 %v1317, %v1649
        %v1666 = vpack.c.b16 %v1319, %v1650
        %v1667 = vpack.c.b16 %v1321, %v1651
        %v1668 = vpack.c.b16 %v1323, %v1652
        %v1669 = vpack.c.b16 %v1325, %v1653
        %v1670 = vpack.c.b16 %v1327, %v1654
        %v1671 = vpack.c.b16 %v1329, %v1655
        %v1672 = vpack.c.b16 %v1331, %v1656
        %v1673 = vpack.c.b16 %v1333, %v1657
        %v1674 = vpack.c.b16 %v1335, %v1658
        %v1675 = vpack.c.b16 %v1337, %v1659
        %v1676 = vpack.c.b16 %v1339, %v1660
        %vm1677 = vcmask 1046528
        %v1678 = vrot.slane %v1661, 1
        %v1679 = vrot.slane %v1404, 1
        %v1680 = vsel %vm1677, %v1678, %v1679
        %v1681 = vrot.slane %v1662, 1
        %v1682 = vrot.slane %v1405, 1
        %v1683 = vsel %vm1677, %v1681, %v1682
        %v1684 = vrot.slane %v1663, 1
        %v1685 = vrot.slane %v1406, 1
        %v1686 = vsel %vm1677, %v1684, %v1685
        %v1687 = vrot.slane %v1664, 1
        %v1688 = vrot.slane %v1407, 1
        %v1689 = vsel %vm1677, %v1687, %v1688
        %v1690 = vrot.slane %v1665, 1
        %v1691 = vrot.slane %v1408, 1
        %v1692 = vsel %vm1677, %v1690, %v1691
        %v1693 = vrot.slane %v1666, 1
        %v1694 = vrot.slane %v1409, 1
        %v1695 = vsel %vm1677, %v1693, %v1694
        %v1696 = vrot.slane %v1667, 1
        %v1697 = vrot.slane %v1410, 1
        %v1698 = vsel %vm1677, %v1696, %v1697
        %v1699 = vrot.slane %v1668, 1
        %v1700 = vrot.slane %v1411, 1
        %v1701 = vsel %vm1677, %v1699, %v1700
        %v1702 = vrot.slane %v1669, 1
        %v1703 = vrot.slane %v1412, 1
        %v1704 = vsel %vm1677, %v1702, %v1703
        %v1705 = vrot.slane %v1670, 1
        %v1706 = vrot.slane %v1413, 1
        %v1707 = vsel %vm1677, %v1705, %v1706
        %v1708 = vrot.slane %v1671, 1
        %v1709 = vrot.slane %v1414, 1
        %v1710 = vsel %vm1677, %v1708, %v1709
        %v1711 = vrot.slane %v1672, 1
        %v1712 = vrot.slane %v1415, 1
        %v1713 = vsel %vm1677, %v1711, %v1712
        %v1714 = vrot.slane %v1673, 1
        %v1715 = vrot.slane %v1416, 1
        %v1716 = vsel %vm1677, %v1714, %v1715
        %v1717 = vrot.slane %v1674, 1
        %v1718 = vrot.slane %v1417, 1
        %v1719 = vsel %vm1677, %v1717, %v1718
        %v1720 = vrot.slane %v1675, 1
        %v1721 = vrot.slane %v1418, 1
        %v1722 = vsel %vm1677, %v1720, %v1721
        %v1723 = vrot.slane %v1676, 1
        %v1724 = vrot.slane %v1419, 1
        %v1725 = vsel %vm1677, %v1723, %v1724
        %v1774 = vunpack.c.l.b16 %v1147
        %v1775 = vunpack.c.l.b16 %v1148
        %v1776 = vunpack.c.l.b16 %v1149
        %v1777 = vunpack.c.l.b16 %v1150
        %v1778 = vunpack.c.l.b16 %v1151
        %v1779 = vunpack.c.l.b16 %v1152
        %v1780 = vunpack.c.l.b16 %v1153
        %v1781 = vunpack.c.l.b16 %v1154
        %v1782 = vunpack.c.l.b16 %v1155
        %v1783 = vunpack.c.l.b16 %v1156
        %v1784 = vunpack.c.l.b16 %v1157
        %v1785 = vunpack.c.l.b16 %v1158
        %v1786 = vunpack.c.l.b16 %v1159
        %v1787 = vunpack.c.l.b16 %v1160
        %v1788 = vunpack.c.l.b16 %v1161
        %v1789 = vunpack.c.l.b16 %v1162
        %v1790 = vunpack.c.l.b16 %v1163
        %v1791 = vunpack.c.l.b16 %v1164
        %v1792 = vunpack.c.l.b16 %v1165
        %v1793 = vunpack.c.l.b16 %v1166
        %v1794 = vunpack.c.l.b16 %v1167
        %v1795 = vunpack.c.l.b16 %v1168
        %v1796 = vunpack.c.l.b16 %v1169
        %v1797 = vunpack.c.l.b16 %v1170
        %v1798 = vunpack.c.l.b16 %v1171
        %v1799 = vunpack.c.l.b16 %v1172
        %v1800 = vunpack.c.l.b16 %v1173
        %v1801 = vunpack.c.l.b16 %v1174
        %v1802 = vunpack.c.l.b16 %v1175
        %v1803 = vunpack.c.l.b16 %v1176
        %v1804 = vunpack.c.l.b16 %v1177
        %v1805 = vunpack.c.l.b16 %v1178
        %v1806 = vpack.c.b16 %v1775, %v1774
        %v1807 = vpack.c.b16 %v1777, %v1776
        %v1808 = vpack.c.b16 %v1779, %v1778
        %v1809 = vpack.c.b16 %v1781, %v1780
        %v1810 = vpack.c.b16 %v1783, %v1782
        %v1811 = vpack.c.b16 %v1785, %v1784
        %v1812 = vpack.c.b16 %v1787, %v1786
        %v1813 = vpack.c.b16 %v1789, %v1788
        %v1814 = vpack.c.b16 %v1791, %v1790
        %v1815 = vpack.c.b16 %v1793, %v1792
        %v1816 = vpack.c.b16 %v1795, %v1794
        %v1817 = vpack.c.b16 %v1797, %v1796
        %v1818 = vpack.c.b16 %v1799, %v1798
        %v1819 = vpack.c.b16 %v1801, %v1800
        %v1820 = vpack.c.b16 %v1803, %v1802
        %v1821 = vpack.c.b16 %v1805, %v1804
        %v1854 = vunpack.c.l.b16 %v1179
        %v1855 = vunpack.c.l.b16 %v1180
        %v1856 = vunpack.c.l.b16 %v1181
        %v1857 = vunpack.c.l.b16 %v1182
        %v1858 = vunpack.c.l.b16 %v1183
        %v1859 = vunpack.c.l.b16 %v1184
        %v1860 = vunpack.c.l.b16 %v1185
        %v1861 = vunpack.c.l.b16 %v1186
        %v1862 = vunpack.c.l.b16 %v1187
        %v1863 = vunpack.c.l.b16 %v1188
        %v1864 = vunpack.c.l.b16 %v1189
        %v1865 = vunpack.c.l.b16 %v1190
        %v1866 = vunpack.c.l.b16 %v1191
        %v1867 = vunpack.c.l.b16 %v1192
        %v1868 = vunpack.c.l.b16 %v1193
        %v1869 = vunpack.c.l.b16 %v1194
        %v1870 = vpack.c.b16 %v1854, %v1854
        %v1871 = vpack.c.b16 %v1855, %v1855
        %v1872 = vpack.c.b16 %v1856, %v1856
        %v1873 = vpack.c.b16 %v1857, %v1857
        %v1874 = vpack.c.b16 %v1858, %v1858
        %v1875 = vpack.c.b16 %v1859, %v1859
        %v1876 = vpack.c.b16 %v1860, %v1860
        %v1877 = vpack.c.b16 %v1861, %v1861
        %v1878 = vpack.c.b16 %v1862, %v1862
        %v1879 = vpack.c.b16 %v1863, %v1863
        %v1880 = vpack.c.b16 %v1864, %v1864
        %v1881 = vpack.c.b16 %v1865, %v1865
        %v1882 = vpack.c.b16 %v1866, %v1866
        %v1883 = vpack.c.b16 %v1867, %v1867
        %v1884 = vpack.c.b16 %v1868, %v1868
        %v1885 = vpack.c.b16 %v1869, %v1869
        %v1887 = vshrl.u32 %v1806, 16
        %v1889 = vshll.u32 %v1806, 16
        %v1891 = vrot.slane %v1889, 1
        %v1892 = vor.u32 %v1887, %v1891
        %v1894 = vshll.u32 %v1870, 16
        %v1896 = vrot.slane %v1894, 1
        %v1897 = vsel %vm1420, %v1892, %v1896
        %v1899 = vshrl.u32 %v1807, 16
        %v1901 = vshll.u32 %v1807, 16
        %v1903 = vrot.slane %v1901, 1
        %v1904 = vor.u32 %v1899, %v1903
        %v1906 = vshll.u32 %v1871, 16
        %v1908 = vrot.slane %v1906, 1
        %v1909 = vsel %vm1420, %v1904, %v1908
        %v1911 = vshrl.u32 %v1808, 16
        %v1913 = vshll.u32 %v1808, 16
        %v1915 = vrot.slane %v1913, 1
        %v1916 = vor.u32 %v1911, %v1915
        %v1918 = vshll.u32 %v1872, 16
        %v1920 = vrot.slane %v1918, 1
        %v1921 = vsel %vm1420, %v1916, %v1920
        %v1923 = vshrl.u32 %v1809, 16
        %v1925 = vshll.u32 %v1809, 16
        %v1927 = vrot.slane %v1925, 1
        %v1928 = vor.u32 %v1923, %v1927
        %v1930 = vshll.u32 %v1873, 16
        %v1932 = vrot.slane %v1930, 1
        %v1933 = vsel %vm1420, %v1928, %v1932
        %v1935 = vshrl.u32 %v1810, 16
        %v1937 = vshll.u32 %v1810, 16
        %v1939 = vrot.slane %v1937, 1
        %v1940 = vor.u32 %v1935, %v1939
        %v1942 = vshll.u32 %v1874, 16
        %v1944 = vrot.slane %v1942, 1
        %v1945 = vsel %vm1420, %v1940, %v1944
        %v1947 = vshrl.u32 %v1811, 16
        %v1949 = vshll.u32 %v1811, 16
        %v1951 = vrot.slane %v1949, 1
        %v1952 = vor.u32 %v1947, %v1951
        %v1954 = vshll.u32 %v1875, 16
        %v1956 = vrot.slane %v1954, 1
        %v1957 = vsel %vm1420, %v1952, %v1956
        %v1959 = vshrl.u32 %v1812, 16
        %v1961 = vshll.u32 %v1812, 16
        %v1963 = vrot.slane %v1961, 1
        %v1964 = vor.u32 %v1959, %v1963
        %v1966 = vshll.u32 %v1876, 16
        %v1968 = vrot.slane %v1966, 1
        %v1969 = vsel %vm1420, %v1964, %v1968
        %v1971 = vshrl.u32 %v1813, 16
        %v1973 = vshll.u32 %v1813, 16
        %v1975 = vrot.slane %v1973, 1
        %v1976 = vor.u32 %v1971, %v1975
        %v1978 = vshll.u32 %v1877, 16
        %v1980 = vrot.slane %v1978, 1
        %v1981 = vsel %vm1420, %v1976, %v1980
        %v1983 = vshrl.u32 %v1814, 16
        %v1985 = vshll.u32 %v1814, 16
        %v1987 = vrot.slane %v1985, 1
        %v1988 = vor.u32 %v1983, %v1987
        %v1990 = vshll.u32 %v1878, 16
        %v1992 = vrot.slane %v1990, 1
        %v1993 = vsel %vm1420, %v1988, %v1992
        %v1995 = vshrl.u32 %v1815, 16
        %v1997 = vshll.u32 %v1815, 16
        %v1999 = vrot.slane %v1997, 1
        %v2000 = vor.u32 %v1995, %v1999
        %v2002 = vshll.u32 %v1879, 16
        %v2004 = vrot.slane %v2002, 1
        %v2005 = vsel %vm1420, %v2000, %v2004
        %v2007 = vshrl.u32 %v1816, 16
        %v2009 = vshll.u32 %v1816, 16
        %v2011 = vrot.slane %v2009, 1
        %v2012 = vor.u32 %v2007, %v2011
        %v2014 = vshll.u32 %v1880, 16
        %v2016 = vrot.slane %v2014, 1
        %v2017 = vsel %vm1420, %v2012, %v2016
        %v2019 = vshrl.u32 %v1817, 16
        %v2021 = vshll.u32 %v1817, 16
        %v2023 = vrot.slane %v2021, 1
        %v2024 = vor.u32 %v2019, %v2023
        %v2026 = vshll.u32 %v1881, 16
        %v2028 = vrot.slane %v2026, 1
        %v2029 = vsel %vm1420, %v2024, %v2028
        %v2031 = vshrl.u32 %v1818, 16
        %v2033 = vshll.u32 %v1818, 16
        %v2035 = vrot.slane %v2033, 1
        %v2036 = vor.u32 %v2031, %v2035
        %v2038 = vshll.u32 %v1882, 16
        %v2040 = vrot.slane %v2038, 1
        %v2041 = vsel %vm1420, %v2036, %v2040
        %v2043 = vshrl.u32 %v1819, 16
        %v2045 = vshll.u32 %v1819, 16
        %v2047 = vrot.slane %v2045, 1
        %v2048 = vor.u32 %v2043, %v2047
        %v2050 = vshll.u32 %v1883, 16
        %v2052 = vrot.slane %v2050, 1
        %v2053 = vsel %vm1420, %v2048, %v2052
        %v2055 = vshrl.u32 %v1820, 16
        %v2057 = vshll.u32 %v1820, 16
        %v2059 = vrot.slane %v2057, 1
        %v2060 = vor.u32 %v2055, %v2059
        %v2062 = vshll.u32 %v1884, 16
        %v2064 = vrot.slane %v2062, 1
        %v2065 = vsel %vm1420, %v2060, %v2064
        %v2067 = vshrl.u32 %v1821, 16
        %v2069 = vshll.u32 %v1821, 16
        %v2071 = vrot.slane %v2069, 1
        %v2072 = vor.u32 %v2067, %v2071
        %v2074 = vshll.u32 %v1885, 16
        %v2076 = vrot.slane %v2074, 1
        %v2077 = vsel %vm1420, %v2072, %v2076
        %v2110 = vunpack.c.l.b16 %v1195
        %v2111 = vunpack.c.l.b16 %v1196
        %v2112 = vunpack.c.l.b16 %v1197
        %v2113 = vunpack.c.l.b16 %v1198
        %v2114 = vunpack.c.l.b16 %v1199
        %v2115 = vunpack.c.l.b16 %v1200
        %v2116 = vunpack.c.l.b16 %v1201
        %v2117 = vunpack.c.l.b16 %v1202
        %v2118 = vunpack.c.l.b16 %v1203
        %v2119 = vunpack.c.l.b16 %v1204
        %v2120 = vunpack.c.l.b16 %v1205
        %v2121 = vunpack.c.l.b16 %v1206
        %v2122 = vunpack.c.l.b16 %v1207
        %v2123 = vunpack.c.l.b16 %v1208
        %v2124 = vunpack.c.l.b16 %v1209
        %v2125 = vunpack.c.l.b16 %v1210
        %v2126 = vpack.c.b16 %v1775, %v2110
        %v2127 = vpack.c.b16 %v1777, %v2111
        %v2128 = vpack.c.b16 %v1779, %v2112
        %v2129 = vpack.c.b16 %v1781, %v2113
        %v2130 = vpack.c.b16 %v1783, %v2114
        %v2131 = vpack.c.b16 %v1785, %v2115
        %v2132 = vpack.c.b16 %v1787, %v2116
        %v2133 = vpack.c.b16 %v1789, %v2117
        %v2134 = vpack.c.b16 %v1791, %v2118
        %v2135 = vpack.c.b16 %v1793, %v2119
        %v2136 = vpack.c.b16 %v1795, %v2120
        %v2137 = vpack.c.b16 %v1797, %v2121
        %v2138 = vpack.c.b16 %v1799, %v2122
        %v2139 = vpack.c.b16 %v1801, %v2123
        %v2140 = vpack.c.b16 %v1803, %v2124
        %v2141 = vpack.c.b16 %v1805, %v2125
        %v2142 = vrot.slane %v2126, 1
        %v2143 = vrot.slane %v1870, 1
        %v2144 = vsel %vm1677, %v2142, %v2143
        %v2145 = vrot.slane %v2127, 1
        %v2146 = vrot.slane %v1871, 1
        %v2147 = vsel %vm1677, %v2145, %v2146
        %v2148 = vrot.slane %v2128, 1
        %v2149 = vrot.slane %v1872, 1
        %v2150 = vsel %vm1677, %v2148, %v2149
        %v2151 = vrot.slane %v2129, 1
        %v2152 = vrot.slane %v1873, 1
        %v2153 = vsel %vm1677, %v2151, %v2152
        %v2154 = vrot.slane %v2130, 1
        %v2155 = vrot.slane %v1874, 1
        %v2156 = vsel %vm1677, %v2154, %v2155
        %v2157 = vrot.slane %v2131, 1
        %v2158 = vrot.slane %v1875, 1
        %v2159 = vsel %vm1677, %v2157, %v2158
        %v2160 = vrot.slane %v2132, 1
        %v2161 = vrot.slane %v1876, 1
        %v2162 = vsel %vm1677, %v2160, %v2161
        %v2163 = vrot.slane %v2133, 1
        %v2164 = vrot.slane %v1877, 1
        %v2165 = vsel %vm1677, %v2163, %v2164
        %v2166 = vrot.slane %v2134, 1
        %v2167 = vrot.slane %v1878, 1
        %v2168 = vsel %vm1677, %v2166, %v2167
        %v2169 = vrot.slane %v2135, 1
        %v2170 = vrot.slane %v1879, 1
        %v2171 = vsel %vm1677, %v2169, %v2170
        %v2172 = vrot.slane %v2136, 1
        %v2173 = vrot.slane %v1880, 1
        %v2174 = vsel %vm1677, %v2172, %v2173
        %v2175 = vrot.slane %v2137, 1
        %v2176 = vrot.slane %v1881, 1
        %v2177 = vsel %vm1677, %v2175, %v2176
        %v2178 = vrot.slane %v2138, 1
        %v2179 = vrot.slane %v1882, 1
        %v2180 = vsel %vm1677, %v2178, %v2179
        %v2181 = vrot.slane %v2139, 1
        %v2182 = vrot.slane %v1883, 1
        %v2183 = vsel %vm1677, %v2181, %v2182
        %v2184 = vrot.slane %v2140, 1
        %v2185 = vrot.slane %v1884, 1
        %v2186 = vsel %vm1677, %v2184, %v2185
        %v2187 = vrot.slane %v2141, 1
        %v2188 = vrot.slane %v1885, 1
        %v2189 = vsel %vm1677, %v2187, %v2188
        %v2238 = vunpack.c.l.b16 %v1212
        %v2239 = vunpack.c.l.b16 %v1213
        %v2240 = vunpack.c.l.b16 %v1214
        %v2241 = vunpack.c.l.b16 %v1215
        %v2242 = vunpack.c.l.b16 %v1216
        %v2243 = vunpack.c.l.b16 %v1217
        %v2244 = vunpack.c.l.b16 %v1218
        %v2245 = vunpack.c.l.b16 %v1219
        %v2246 = vunpack.c.l.b16 %v1220
        %v2247 = vunpack.c.l.b16 %v1221
        %v2248 = vunpack.c.l.b16 %v1222
        %v2249 = vunpack.c.l.b16 %v1223
        %v2250 = vunpack.c.l.b16 %v1224
        %v2251 = vunpack.c.l.b16 %v1225
        %v2252 = vunpack.c.l.b16 %v1226
        %v2253 = vunpack.c.l.b16 %v1227
        %v2254 = vunpack.c.l.b16 %v1228
        %v2255 = vunpack.c.l.b16 %v1229
        %v2256 = vunpack.c.l.b16 %v1230
        %v2257 = vunpack.c.l.b16 %v1231
        %v2258 = vunpack.c.l.b16 %v1232
        %v2259 = vunpack.c.l.b16 %v1233
        %v2260 = vunpack.c.l.b16 %v1234
        %v2261 = vunpack.c.l.b16 %v1235
        %v2262 = vunpack.c.l.b16 %v1236
        %v2263 = vunpack.c.l.b16 %v1237
        %v2264 = vunpack.c.l.b16 %v1238
        %v2265 = vunpack.c.l.b16 %v1239
        %v2266 = vunpack.c.l.b16 %v1240
        %v2267 = vunpack.c.l.b16 %v1241
        %v2268 = vunpack.c.l.b16 %v1242
        %v2269 = vunpack.c.l.b16 %v1243
        %v2270 = vpack.c.b16 %v2239, %v2238
        %v2271 = vpack.c.b16 %v2241, %v2240
        %v2272 = vpack.c.b16 %v2243, %v2242
        %v2273 = vpack.c.b16 %v2245, %v2244
        %v2274 = vpack.c.b16 %v2247, %v2246
        %v2275 = vpack.c.b16 %v2249, %v2248
        %v2276 = vpack.c.b16 %v2251, %v2250
        %v2277 = vpack.c.b16 %v2253, %v2252
        %v2278 = vpack.c.b16 %v2255, %v2254
        %v2279 = vpack.c.b16 %v2257, %v2256
        %v2280 = vpack.c.b16 %v2259, %v2258
        %v2281 = vpack.c.b16 %v2261, %v2260
        %v2282 = vpack.c.b16 %v2263, %v2262
        %v2283 = vpack.c.b16 %v2265, %v2264
        %v2284 = vpack.c.b16 %v2267, %v2266
        %v2285 = vpack.c.b16 %v2269, %v2268
        %v2318 = vunpack.c.l.b16 %v1244
        %v2319 = vunpack.c.l.b16 %v1245
        %v2320 = vunpack.c.l.b16 %v1246
        %v2321 = vunpack.c.l.b16 %v1247
        %v2322 = vunpack.c.l.b16 %v1248
        %v2323 = vunpack.c.l.b16 %v1249
        %v2324 = vunpack.c.l.b16 %v1250
        %v2325 = vunpack.c.l.b16 %v1251
        %v2326 = vunpack.c.l.b16 %v1252
        %v2327 = vunpack.c.l.b16 %v1253
        %v2328 = vunpack.c.l.b16 %v1254
        %v2329 = vunpack.c.l.b16 %v1255
        %v2330 = vunpack.c.l.b16 %v1256
        %v2331 = vunpack.c.l.b16 %v1257
        %v2332 = vunpack.c.l.b16 %v1258
        %v2333 = vunpack.c.l.b16 %v1259
        %v2334 = vpack.c.b16 %v2318, %v2318
        %v2335 = vpack.c.b16 %v2319, %v2319
        %v2336 = vpack.c.b16 %v2320, %v2320
        %v2337 = vpack.c.b16 %v2321, %v2321
        %v2338 = vpack.c.b16 %v2322, %v2322
        %v2339 = vpack.c.b16 %v2323, %v2323
        %v2340 = vpack.c.b16 %v2324, %v2324
        %v2341 = vpack.c.b16 %v2325, %v2325
        %v2342 = vpack.c.b16 %v2326, %v2326
        %v2343 = vpack.c.b16 %v2327, %v2327
        %v2344 = vpack.c.b16 %v2328, %v2328
        %v2345 = vpack.c.b16 %v2329, %v2329
        %v2346 = vpack.c.b16 %v2330, %v2330
        %v2347 = vpack.c.b16 %v2331, %v2331
        %v2348 = vpack.c.b16 %v2332, %v2332
        %v2349 = vpack.c.b16 %v2333, %v2333
        %v2351 = vshrl.u32 %v2270, 16
        %v2353 = vshll.u32 %v2270, 16
        %v2355 = vrot.slane %v2353, 1
        %v2356 = vor.u32 %v2351, %v2355
        %v2358 = vshll.u32 %v2334, 16
        %v2360 = vrot.slane %v2358, 1
        %v2361 = vsel %vm1420, %v2356, %v2360
        %v2363 = vshrl.u32 %v2271, 16
        %v2365 = vshll.u32 %v2271, 16
        %v2367 = vrot.slane %v2365, 1
        %v2368 = vor.u32 %v2363, %v2367
        %v2370 = vshll.u32 %v2335, 16
        %v2372 = vrot.slane %v2370, 1
        %v2373 = vsel %vm1420, %v2368, %v2372
        %v2375 = vshrl.u32 %v2272, 16
        %v2377 = vshll.u32 %v2272, 16
        %v2379 = vrot.slane %v2377, 1
        %v2380 = vor.u32 %v2375, %v2379
        %v2382 = vshll.u32 %v2336, 16
        %v2384 = vrot.slane %v2382, 1
        %v2385 = vsel %vm1420, %v2380, %v2384
        %v2387 = vshrl.u32 %v2273, 16
        %v2389 = vshll.u32 %v2273, 16
        %v2391 = vrot.slane %v2389, 1
        %v2392 = vor.u32 %v2387, %v2391
        %v2394 = vshll.u32 %v2337, 16
        %v2396 = vrot.slane %v2394, 1
        %v2397 = vsel %vm1420, %v2392, %v2396
        %v2399 = vshrl.u32 %v2274, 16
        %v2401 = vshll.u32 %v2274, 16
        %v2403 = vrot.slane %v2401, 1
        %v2404 = vor.u32 %v2399, %v2403
        %v2406 = vshll.u32 %v2338, 16
        %v2408 = vrot.slane %v2406, 1
        %v2409 = vsel %vm1420, %v2404, %v2408
        %v2411 = vshrl.u32 %v2275, 16
        %v2413 = vshll.u32 %v2275, 16
        %v2415 = vrot.slane %v2413, 1
        %v2416 = vor.u32 %v2411, %v2415
        %v2418 = vshll.u32 %v2339, 16
        %v2420 = vrot.slane %v2418, 1
        %v2421 = vsel %vm1420, %v2416, %v2420
        %v2423 = vshrl.u32 %v2276, 16
        %v2425 = vshll.u32 %v2276, 16
        %v2427 = vrot.slane %v2425, 1
        %v2428 = vor.u32 %v2423, %v2427
        %v2430 = vshll.u32 %v2340, 16
        %v2432 = vrot.slane %v2430, 1
        %v2433 = vsel %vm1420, %v2428, %v2432
        %v2435 = vshrl.u32 %v2277, 16
        %v2437 = vshll.u32 %v2277, 16
        %v2439 = vrot.slane %v2437, 1
        %v2440 = vor.u32 %v2435, %v2439
        %v2442 = vshll.u32 %v2341, 16
        %v2444 = vrot.slane %v2442, 1
        %v2445 = vsel %vm1420, %v2440, %v2444
        %v2447 = vshrl.u32 %v2278, 16
        %v2449 = vshll.u32 %v2278, 16
        %v2451 = vrot.slane %v2449, 1
        %v2452 = vor.u32 %v2447, %v2451
        %v2454 = vshll.u32 %v2342, 16
        %v2456 = vrot.slane %v2454, 1
        %v2457 = vsel %vm1420, %v2452, %v2456
        %v2459 = vshrl.u32 %v2279, 16
        %v2461 = vshll.u32 %v2279, 16
        %v2463 = vrot.slane %v2461, 1
        %v2464 = vor.u32 %v2459, %v2463
        %v2466 = vshll.u32 %v2343, 16
        %v2468 = vrot.slane %v2466, 1
        %v2469 = vsel %vm1420, %v2464, %v2468
        %v2471 = vshrl.u32 %v2280, 16
        %v2473 = vshll.u32 %v2280, 16
        %v2475 = vrot.slane %v2473, 1
        %v2476 = vor.u32 %v2471, %v2475
        %v2478 = vshll.u32 %v2344, 16
        %v2480 = vrot.slane %v2478, 1
        %v2481 = vsel %vm1420, %v2476, %v2480
        %v2483 = vshrl.u32 %v2281, 16
        %v2485 = vshll.u32 %v2281, 16
        %v2487 = vrot.slane %v2485, 1
        %v2488 = vor.u32 %v2483, %v2487
        %v2490 = vshll.u32 %v2345, 16
        %v2492 = vrot.slane %v2490, 1
        %v2493 = vsel %vm1420, %v2488, %v2492
        %v2495 = vshrl.u32 %v2282, 16
        %v2497 = vshll.u32 %v2282, 16
        %v2499 = vrot.slane %v2497, 1
        %v2500 = vor.u32 %v2495, %v2499
        %v2502 = vshll.u32 %v2346, 16
        %v2504 = vrot.slane %v2502, 1
        %v2505 = vsel %vm1420, %v2500, %v2504
        %v2507 = vshrl.u32 %v2283, 16
        %v2509 = vshll.u32 %v2283, 16
        %v2511 = vrot.slane %v2509, 1
        %v2512 = vor.u32 %v2507, %v2511
        %v2514 = vshll.u32 %v2347, 16
        %v2516 = vrot.slane %v2514, 1
        %v2517 = vsel %vm1420, %v2512, %v2516
        %v2519 = vshrl.u32 %v2284, 16
        %v2521 = vshll.u32 %v2284, 16
        %v2523 = vrot.slane %v2521, 1
        %v2524 = vor.u32 %v2519, %v2523
        %v2526 = vshll.u32 %v2348, 16
        %v2528 = vrot.slane %v2526, 1
        %v2529 = vsel %vm1420, %v2524, %v2528
        %v2531 = vshrl.u32 %v2285, 16
        %v2533 = vshll.u32 %v2285, 16
        %v2535 = vrot.slane %v2533, 1
        %v2536 = vor.u32 %v2531, %v2535
        %v2538 = vshll.u32 %v2349, 16
        %v2540 = vrot.slane %v2538, 1
        %v2541 = vsel %vm1420, %v2536, %v2540
        %v2574 = vunpack.c.l.b16 %v1260
        %v2575 = vunpack.c.l.b16 %v1261
        %v2576 = vunpack.c.l.b16 %v1262
        %v2577 = vunpack.c.l.b16 %v1263
        %v2578 = vunpack.c.l.b16 %v1264
        %v2579 = vunpack.c.l.b16 %v1265
        %v2580 = vunpack.c.l.b16 %v1266
        %v2581 = vunpack.c.l.b16 %v1267
        %v2582 = vunpack.c.l.b16 %v1268
        %v2583 = vunpack.c.l.b16 %v1269
        %v2584 = vunpack.c.l.b16 %v1270
        %v2585 = vunpack.c.l.b16 %v1271
        %v2586 = vunpack.c.l.b16 %v1272
        %v2587 = vunpack.c.l.b16 %v1273
        %v2588 = vunpack.c.l.b16 %v1274
        %v2589 = vunpack.c.l.b16 %v1275
        %v2590 = vpack.c.b16 %v2239, %v2574
        %v2591 = vpack.c.b16 %v2241, %v2575
        %v2592 = vpack.c.b16 %v2243, %v2576
        %v2593 = vpack.c.b16 %v2245, %v2577
        %v2594 = vpack.c.b16 %v2247, %v2578
        %v2595 = vpack.c.b16 %v2249, %v2579
        %v2596 = vpack.c.b16 %v2251, %v2580
        %v2597 = vpack.c.b16 %v2253, %v2581
        %v2598 = vpack.c.b16 %v2255, %v2582
        %v2599 = vpack.c.b16 %v2257, %v2583
        %v2600 = vpack.c.b16 %v2259, %v2584
        %v2601 = vpack.c.b16 %v2261, %v2585
        %v2602 = vpack.c.b16 %v2263, %v2586
        %v2603 = vpack.c.b16 %v2265, %v2587
        %v2604 = vpack.c.b16 %v2267, %v2588
        %v2605 = vpack.c.b16 %v2269, %v2589
        %v2606 = vrot.slane %v2590, 1
        %v2607 = vrot.slane %v2334, 1
        %v2608 = vsel %vm1677, %v2606, %v2607
        %v2609 = vrot.slane %v2591, 1
        %v2610 = vrot.slane %v2335, 1
        %v2611 = vsel %vm1677, %v2609, %v2610
        %v2612 = vrot.slane %v2592, 1
        %v2613 = vrot.slane %v2336, 1
        %v2614 = vsel %vm1677, %v2612, %v2613
        %v2615 = vrot.slane %v2593, 1
        %v2616 = vrot.slane %v2337, 1
        %v2617 = vsel %vm1677, %v2615, %v2616
        %v2618 = vrot.slane %v2594, 1
        %v2619 = vrot.slane %v2338, 1
        %v2620 = vsel %vm1677, %v2618, %v2619
        %v2621 = vrot.slane %v2595, 1
        %v2622 = vrot.slane %v2339, 1
        %v2623 = vsel %vm1677, %v2621, %v2622
        %v2624 = vrot.slane %v2596, 1
        %v2625 = vrot.slane %v2340, 1
        %v2626 = vsel %vm1677, %v2624, %v2625
        %v2627 = vrot.slane %v2597, 1
        %v2628 = vrot.slane %v2341, 1
        %v2629 = vsel %vm1677, %v2627, %v2628
        %v2630 = vrot.slane %v2598, 1
        %v2631 = vrot.slane %v2342, 1
        %v2632 = vsel %vm1677, %v2630, %v2631
        %v2633 = vrot.slane %v2599, 1
        %v2634 = vrot.slane %v2343, 1
        %v2635 = vsel %vm1677, %v2633, %v2634
        %v2636 = vrot.slane %v2600, 1
        %v2637 = vrot.slane %v2344, 1
        %v2638 = vsel %vm1677, %v2636, %v2637
        %v2639 = vrot.slane %v2601, 1
        %v2640 = vrot.slane %v2345, 1
        %v2641 = vsel %vm1677, %v2639, %v2640
        %v2642 = vrot.slane %v2602, 1
        %v2643 = vrot.slane %v2346, 1
        %v2644 = vsel %vm1677, %v2642, %v2643
        %v2645 = vrot.slane %v2603, 1
        %v2646 = vrot.slane %v2347, 1
        %v2647 = vsel %vm1677, %v2645, %v2646
        %v2648 = vrot.slane %v2604, 1
        %v2649 = vrot.slane %v2348, 1
        %v2650 = vsel %vm1677, %v2648, %v2649
        %v2651 = vrot.slane %v2605, 1
        %v2652 = vrot.slane %v2349, 1
        %v2653 = vsel %vm1677, %v2651, %v2652
        %v2670 = vld [vmem:[#allocation6] sm:$0xf]
        %v2671 = vld [vmem:[#allocation6 + $0x4] sm:$0xf]
        %v2672 = vld [vmem:[#allocation6 + $0x8] sm:$0xf]
        %v2673 = vld [vmem:[#allocation6 + $0xc] sm:$0xf]
        %v2674 = vld [vmem:[#allocation6 + $0x10] sm:$0xf]
        %v2675 = vld [vmem:[#allocation6 + $0x14] sm:$0xf]
        %v2676 = vld [vmem:[#allocation6 + $0x18] sm:$0xf]
        %v2677 = vld [vmem:[#allocation6 + $0x1c] sm:$0xf]
        %v2678 = vld [vmem:[#allocation6 + $0x20] sm:$0xf]
        %v2679 = vld [vmem:[#allocation6 + $0x24] sm:$0xf]
        %v2680 = vld [vmem:[#allocation6 + $0x28] sm:$0xf]
        %v2681 = vld [vmem:[#allocation6 + $0x2c] sm:$0xf]
        %v2682 = vld [vmem:[#allocation6 + $0x30] sm:$0xf]
        %v2683 = vld [vmem:[#allocation6 + $0x34] sm:$0xf]
        %v2684 = vld [vmem:[#allocation6 + $0x38] sm:$0xf]
        %v2685 = vld [vmem:[#allocation6 + $0x3c] sm:$0xf]
        %v2686 = vld [vmem:[#allocation6 + $0x40] sm:$0xf]
        %v2687 = vld [vmem:[#allocation6 + $0x44] sm:$0xf]
        %v2688 = vld [vmem:[#allocation6 + $0x48] sm:$0xf]
        %v2689 = vld [vmem:[#allocation6 + $0x4c] sm:$0xf]
        %v2690 = vld [vmem:[#allocation6 + $0x50] sm:$0xf]
        %v2691 = vld [vmem:[#allocation6 + $0x54] sm:$0xf]
        %v2692 = vld [vmem:[#allocation6 + $0x58] sm:$0xf]
        %v2693 = vld [vmem:[#allocation6 + $0x5c] sm:$0xf]
        %v2694 = vld [vmem:[#allocation6 + $0x60] sm:$0xf]
        %v2695 = vld [vmem:[#allocation6 + $0x64] sm:$0xf]
        %v2696 = vld [vmem:[#allocation6 + $0x68] sm:$0xf]
        %v2697 = vld [vmem:[#allocation6 + $0x6c] sm:$0xf]
        %v2698 = vld [vmem:[#allocation6 + $0x70] sm:$0xf]
        %v2699 = vld [vmem:[#allocation6 + $0x74] sm:$0xf]
        %v2700 = vld [vmem:[#allocation6 + $0x78] sm:$0xf]
        %v2701 = vld [vmem:[#allocation6 + $0x7c] sm:$0xf]
        %v2702 = vld [vmem:[#allocation6 + $0x80] sm:$0xf]
        %v2703 = vld [vmem:[#allocation6 + $0x84] sm:$0xf]
        %v2704 = vld [vmem:[#allocation6 + $0x88] sm:$0xf]
        %v2705 = vld [vmem:[#allocation6 + $0x8c] sm:$0xf]
        %v2706 = vld [vmem:[#allocation6 + $0x90] sm:$0xf]
        %v2707 = vld [vmem:[#allocation6 + $0x94] sm:$0xf]
        %v2708 = vld [vmem:[#allocation6 + $0x98] sm:$0xf]
        %v2709 = vld [vmem:[#allocation6 + $0x9c] sm:$0xf]
        %v2710 = vld [vmem:[#allocation6 + $0xa0] sm:$0xf]
        %v2711 = vld [vmem:[#allocation6 + $0xa4] sm:$0xf]
        %v2712 = vld [vmem:[#allocation6 + $0xa8] sm:$0xf]
        %v2713 = vld [vmem:[#allocation6 + $0xac] sm:$0xf]
        %v2714 = vld [vmem:[#allocation6 + $0xb0] sm:$0xf]
        %v2715 = vld [vmem:[#allocation6 + $0xb4] sm:$0xf]
        %v2716 = vld [vmem:[#allocation6 + $0xb8] sm:$0xf]
        %v2717 = vld [vmem:[#allocation6 + $0xbc] sm:$0xf]
        %v2718 = vld [vmem:[#allocation6 + $0xc0] sm:$0xf]
        %v2719 = vld [vmem:[#allocation6 + $0xc4] sm:$0xf]
        %v2720 = vld [vmem:[#allocation6 + $0xc8] sm:$0xf]
        %v2721 = vld [vmem:[#allocation6 + $0xcc] sm:$0xf]
        %v2722 = vld [vmem:[#allocation6 + $0xd0] sm:$0xf]
        %v2723 = vld [vmem:[#allocation6 + $0xd4] sm:$0xf]
        %v2724 = vld [vmem:[#allocation6 + $0xd8] sm:$0xf]
        %v2725 = vld [vmem:[#allocation6 + $0xdc] sm:$0xf]
        %v2726 = vld [vmem:[#allocation6 + $0xe0] sm:$0xf]
        %v2727 = vld [vmem:[#allocation6 + $0xe4] sm:$0xf]
        %v2728 = vld [vmem:[#allocation6 + $0xe8] sm:$0xf]
        %v2729 = vld [vmem:[#allocation6 + $0xec] sm:$0xf]
        %v2730 = vld [vmem:[#allocation6 + $0xf0] sm:$0xf]
        %v2731 = vld [vmem:[#allocation6 + $0xf4] sm:$0xf]
        %v2732 = vld [vmem:[#allocation6 + $0xf8] sm:$0xf]
        %v2733 = vld [vmem:[#allocation6 + $0xfc] sm:$0xf]
        %v2734 = vld [vmem:[#allocation6 + $0x100] sm:$0xf]
        %v2735 = vld [vmem:[#allocation6 + $0x104] sm:$0xf]
        %v2736 = vld [vmem:[#allocation6 + $0x108] sm:$0xf]
        %v2737 = vld [vmem:[#allocation6 + $0x10c] sm:$0xf]
        %v2738 = vld [vmem:[#allocation6 + $0x110] sm:$0xf]
        %v2739 = vld [vmem:[#allocation6 + $0x114] sm:$0xf]
        %v2740 = vld [vmem:[#allocation6 + $0x118] sm:$0xf]
        %v2741 = vld [vmem:[#allocation6 + $0x11c] sm:$0xf]
        %v2742 = vld [vmem:[#allocation6 + $0x120] sm:$0xf]
        %v2743 = vld [vmem:[#allocation6 + $0x124] sm:$0xf]
        %v2744 = vld [vmem:[#allocation6 + $0x128] sm:$0xf]
        %v2745 = vld [vmem:[#allocation6 + $0x12c] sm:$0xf]
        %v2746 = vld [vmem:[#allocation6 + $0x130] sm:$0xf]
        %v2747 = vld [vmem:[#allocation6 + $0x134] sm:$0xf]
        %v2748 = vld [vmem:[#allocation6 + $0x138] sm:$0xf]
        %v2749 = vld [vmem:[#allocation6 + $0x13c] sm:$0xf]
        %v2750 = vld [vmem:[#allocation6 + $0x140] sm:$0xf]
        %v2751 = vld [vmem:[#allocation6 + $0x144] sm:$0xf]
        %v2752 = vld [vmem:[#allocation6 + $0x148] sm:$0xf]
        %v2753 = vld [vmem:[#allocation6 + $0x14c] sm:$0xf]
        %v2754 = vld [vmem:[#allocation6 + $0x150] sm:$0xf]
        %v2755 = vld [vmem:[#allocation6 + $0x154] sm:$0xf]
        %v2756 = vld [vmem:[#allocation6 + $0x158] sm:$0xf]
        %v2757 = vld [vmem:[#allocation6 + $0x15c] sm:$0xf]
        %v2758 = vld [vmem:[#allocation6 + $0x160] sm:$0xf]
        %v2759 = vld [vmem:[#allocation6 + $0x164] sm:$0xf]
        %v2760 = vld [vmem:[#allocation6 + $0x168] sm:$0xf]
        %v2761 = vld [vmem:[#allocation6 + $0x16c] sm:$0xf]
        %v2762 = vld [vmem:[#allocation6 + $0x170] sm:$0xf]
        %v2763 = vld [vmem:[#allocation6 + $0x174] sm:$0xf]
        %v2764 = vld [vmem:[#allocation6 + $0x178] sm:$0xf]
        %v2765 = vld [vmem:[#allocation6 + $0x17c] sm:$0xf]
        %v2766 = vld [vmem:[#allocation6 + $0x180] sm:$0xf]
        %v2767 = vld [vmem:[#allocation6 + $0x184] sm:$0xf]
        %v2768 = vld [vmem:[#allocation6 + $0x188] sm:$0xf]
        %v2769 = vld [vmem:[#allocation6 + $0x18c] sm:$0xf]
        %v2770 = vld [vmem:[#allocation6 + $0x190] sm:$0xf]
        %v2771 = vld [vmem:[#allocation6 + $0x194] sm:$0xf]
        %v2772 = vld [vmem:[#allocation6 + $0x198] sm:$0xf]
        %v2773 = vld [vmem:[#allocation6 + $0x19c] sm:$0xf]
        %v2774 = vld [vmem:[#allocation6 + $0x1a0] sm:$0xf]
        %v2775 = vld [vmem:[#allocation6 + $0x1a4] sm:$0xf]
        %v2776 = vld [vmem:[#allocation6 + $0x1a8] sm:$0xf]
        %v2777 = vld [vmem:[#allocation6 + $0x1ac] sm:$0xf]
        %v2778 = vld [vmem:[#allocation6 + $0x1b0] sm:$0xf]
        %v2779 = vld [vmem:[#allocation6 + $0x1b4] sm:$0xf]
        %v2780 = vld [vmem:[#allocation6 + $0x1b8] sm:$0xf]
        %v2781 = vld [vmem:[#allocation6 + $0x1bc] sm:$0xf]
        %v2782 = vld [vmem:[#allocation6 + $0x1c0] sm:$0xf]
        %v2783 = vld [vmem:[#allocation6 + $0x1c4] sm:$0xf]
        %v2784 = vld [vmem:[#allocation6 + $0x1c8] sm:$0xf]
        %v2785 = vld [vmem:[#allocation6 + $0x1cc] sm:$0xf]
        %v2786 = vld [vmem:[#allocation6 + $0x1d0] sm:$0xf]
        %v2787 = vld [vmem:[#allocation6 + $0x1d4] sm:$0xf]
        %v2788 = vld [vmem:[#allocation6 + $0x1d8] sm:$0xf]
        %v2789 = vld [vmem:[#allocation6 + $0x1dc] sm:$0xf]
        %v2790 = vld [vmem:[#allocation6 + $0x1e0] sm:$0xf]
        %v2791 = vld [vmem:[#allocation6 + $0x1e4] sm:$0xf]
        %v2792 = vld [vmem:[#allocation6 + $0x1e8] sm:$0xf]
        %v2793 = vld [vmem:[#allocation6 + $0x1ec] sm:$0xf]
        %v2794 = vld [vmem:[#allocation6 + $0x1f0] sm:$0xf]
        %v2795 = vld [vmem:[#allocation6 + $0x1f4] sm:$0xf]
        %v2796 = vld [vmem:[#allocation6 + $0x1f8] sm:$0xf]
        %v2797 = vld [vmem:[#allocation6 + $0x1fc] sm:$0xf]
        %v2798 = vld [vmem:[#allocation6 + $0x200] sm:$0xf]
        %v2799 = vld [vmem:[#allocation6 + $0x204] sm:$0xf]
        %v2800 = vld [vmem:[#allocation6 + $0x208] sm:$0xf]
        %v2801 = vld [vmem:[#allocation6 + $0x20c] sm:$0xf]
        %v2802 = vld [vmem:[#allocation6 + $0x210] sm:$0xf]
        %v2803 = vld [vmem:[#allocation6 + $0x214] sm:$0xf]
        %v2804 = vld [vmem:[#allocation6 + $0x218] sm:$0xf]
        %v2805 = vld [vmem:[#allocation6 + $0x21c] sm:$0xf]
        %v2806 = vld [vmem:[#allocation6 + $0x220] sm:$0xf]
        %v2807 = vld [vmem:[#allocation6 + $0x224] sm:$0xf]
        %v2808 = vld [vmem:[#allocation6 + $0x228] sm:$0xf]
        %v2809 = vld [vmem:[#allocation6 + $0x22c] sm:$0xf]
        %v2810 = vld [vmem:[#allocation6 + $0x230] sm:$0xf]
        %v2811 = vld [vmem:[#allocation6 + $0x234] sm:$0xf]
        %v2812 = vld [vmem:[#allocation6 + $0x238] sm:$0xf]
        %v2813 = vld [vmem:[#allocation6 + $0x23c] sm:$0xf]
        %v2814 = vld [vmem:[%s2] sm:$0x1]
        %v2816 = vlaneseq
        %v2817 = vshrl.u32 %v2816, 7
        %v2818 = vsub.s32 0, %v2817
        %v2819 = vrot.slane %v2814, %v2818
        %v2965 = vunpack.c.l.b16 %v2670
        %v2966 = vunpack.c.l.b16 %v2671
        %v2967 = vunpack.c.l.b16 %v2672
        %v2968 = vunpack.c.l.b16 %v2673
        %v2969 = vunpack.c.l.b16 %v2674
        %v2970 = vunpack.c.l.b16 %v2675
        %v2971 = vunpack.c.l.b16 %v2676
        %v2972 = vunpack.c.l.b16 %v2677
        %v2973 = vunpack.c.l.b16 %v2678
        %v2974 = vunpack.c.l.b16 %v2679
        %v2975 = vunpack.c.l.b16 %v2680
        %v2976 = vunpack.c.l.b16 %v2681
        %v2977 = vunpack.c.l.b16 %v2682
        %v2978 = vunpack.c.l.b16 %v2683
        %v2979 = vunpack.c.l.b16 %v2684
        %v2980 = vunpack.c.l.b16 %v2685
        %v2981 = vunpack.c.l.b16 %v2686
        %v2982 = vunpack.c.l.b16 %v2687
        %v2983 = vunpack.c.l.b16 %v2688
        %v2984 = vunpack.c.l.b16 %v2689
        %v2985 = vunpack.c.l.b16 %v2690
        %v2986 = vunpack.c.l.b16 %v2691
        %v2987 = vunpack.c.l.b16 %v2692
        %v2988 = vunpack.c.l.b16 %v2693
        %v2989 = vunpack.c.l.b16 %v2694
        %v2990 = vunpack.c.l.b16 %v2695
        %v2991 = vunpack.c.l.b16 %v2696
        %v2992 = vunpack.c.l.b16 %v2697
        %v2993 = vunpack.c.l.b16 %v2698
        %v2994 = vunpack.c.l.b16 %v2699
        %v2995 = vunpack.c.l.b16 %v2700
        %v2996 = vunpack.c.l.b16 %v2701
        %v2997 = vunpack.c.l.b16 %v2702
        %v2998 = vunpack.c.l.b16 %v2703
        %v2999 = vunpack.c.l.b16 %v2704
        %v3000 = vunpack.c.l.b16 %v2705
        %v3001 = vunpack.c.l.b16 %v2706
        %v3002 = vunpack.c.l.b16 %v2707
        %v3003 = vunpack.c.l.b16 %v2708
        %v3004 = vunpack.c.l.b16 %v2709
        %v3005 = vunpack.c.l.b16 %v2710
        %v3006 = vunpack.c.l.b16 %v2711
        %v3007 = vunpack.c.l.b16 %v2712
        %v3008 = vunpack.c.l.b16 %v2713
        %v3009 = vunpack.c.l.b16 %v2714
        %v3010 = vunpack.c.l.b16 %v2715
        %v3011 = vunpack.c.l.b16 %v2716
        %v3012 = vunpack.c.l.b16 %v2717
        %v3013 = vunpack.c.l.b16 %v2718
        %v3014 = vunpack.c.l.b16 %v2719
        %v3015 = vunpack.c.l.b16 %v2720
        %v3016 = vunpack.c.l.b16 %v2721
        %v3017 = vunpack.c.l.b16 %v2722
        %v3018 = vunpack.c.l.b16 %v2723
        %v3019 = vunpack.c.l.b16 %v2724
        %v3020 = vunpack.c.l.b16 %v2725
        %v3021 = vunpack.c.l.b16 %v2726
        %v3022 = vunpack.c.l.b16 %v2727
        %v3023 = vunpack.c.l.b16 %v2728
        %v3024 = vunpack.c.l.b16 %v2729
        %v3025 = vunpack.c.l.b16 %v2730
        %v3026 = vunpack.c.l.b16 %v2731
        %v3027 = vunpack.c.l.b16 %v2732
        %v3028 = vunpack.c.l.b16 %v2733
        %v3029 = vunpack.c.l.b16 %v2734
        %v3030 = vunpack.c.l.b16 %v2735
        %v3031 = vunpack.c.l.b16 %v2736
        %v3032 = vunpack.c.l.b16 %v2737
        %v3033 = vunpack.c.l.b16 %v2738
        %v3034 = vunpack.c.l.b16 %v2739
        %v3035 = vunpack.c.l.b16 %v2740
        %v3036 = vunpack.c.l.b16 %v2741
        %v3037 = vunpack.c.l.b16 %v2742
        %v3038 = vunpack.c.l.b16 %v2743
        %v3039 = vunpack.c.l.b16 %v2744
        %v3040 = vunpack.c.l.b16 %v2745
        %v3041 = vunpack.c.l.b16 %v2746
        %v3042 = vunpack.c.l.b16 %v2747
        %v3043 = vunpack.c.l.b16 %v2748
        %v3044 = vunpack.c.l.b16 %v2749
        %v3045 = vunpack.c.l.b16 %v2750
        %v3046 = vunpack.c.l.b16 %v2751
        %v3047 = vunpack.c.l.b16 %v2752
        %v3048 = vunpack.c.l.b16 %v2753
        %v3049 = vunpack.c.l.b16 %v2754
        %v3050 = vunpack.c.l.b16 %v2755
        %v3051 = vunpack.c.l.b16 %v2756
        %v3052 = vunpack.c.l.b16 %v2757
        %v3053 = vunpack.c.l.b16 %v2758
        %v3054 = vunpack.c.l.b16 %v2759
        %v3055 = vunpack.c.l.b16 %v2760
        %v3056 = vunpack.c.l.b16 %v2761
        %v3057 = vunpack.c.l.b16 %v2762
        %v3058 = vunpack.c.l.b16 %v2763
        %v3059 = vunpack.c.l.b16 %v2764
        %v3060 = vunpack.c.l.b16 %v2765
        %v3061 = vunpack.c.l.b16 %v2766
        %v3062 = vunpack.c.l.b16 %v2767
        %v3063 = vunpack.c.l.b16 %v2768
        %v3064 = vunpack.c.l.b16 %v2769
        %v3065 = vunpack.c.l.b16 %v2770
        %v3066 = vunpack.c.l.b16 %v2771
        %v3067 = vunpack.c.l.b16 %v2772
        %v3068 = vunpack.c.l.b16 %v2773
        %v3069 = vunpack.c.l.b16 %v2774
        %v3070 = vunpack.c.l.b16 %v2775
        %v3071 = vunpack.c.l.b16 %v2776
        %v3072 = vunpack.c.l.b16 %v2777
        %v3073 = vunpack.c.l.b16 %v2778
        %v3074 = vunpack.c.l.b16 %v2779
        %v3075 = vunpack.c.l.b16 %v2780
        %v3076 = vunpack.c.l.b16 %v2781
        %v3077 = vunpack.c.l.b16 %v2782
        %v3078 = vunpack.c.l.b16 %v2783
        %v3079 = vunpack.c.l.b16 %v2784
        %v3080 = vunpack.c.l.b16 %v2785
        %v3081 = vunpack.c.l.b16 %v2786
        %v3082 = vunpack.c.l.b16 %v2787
        %v3083 = vunpack.c.l.b16 %v2788
        %v3084 = vunpack.c.l.b16 %v2789
        %v3085 = vunpack.c.l.b16 %v2790
        %v3086 = vunpack.c.l.b16 %v2791
        %v3087 = vunpack.c.l.b16 %v2792
        %v3088 = vunpack.c.l.b16 %v2793
        %v3089 = vunpack.c.l.b16 %v2794
        %v3090 = vunpack.c.l.b16 %v2795
        %v3091 = vunpack.c.l.b16 %v2796
        %v3092 = vunpack.c.l.b16 %v2797
        %v3093 = vunpack.c.l.b16 %v2798
        %v3094 = vunpack.c.l.b16 %v2799
        %v3095 = vunpack.c.l.b16 %v2800
        %v3096 = vunpack.c.l.b16 %v2801
        %v3097 = vunpack.c.l.b16 %v2802
        %v3098 = vunpack.c.l.b16 %v2803
        %v3099 = vunpack.c.l.b16 %v2804
        %v3100 = vunpack.c.l.b16 %v2805
        %v3101 = vunpack.c.l.b16 %v2806
        %v3102 = vunpack.c.l.b16 %v2807
        %v3103 = vunpack.c.l.b16 %v2808
        %v3104 = vunpack.c.l.b16 %v2809
        %v3105 = vunpack.c.l.b16 %v2810
        %v3106 = vunpack.c.l.b16 %v2811
        %v3107 = vunpack.c.l.b16 %v2812
        %v3108 = vunpack.c.l.b16 %v2813
        %v3109 = vpack.c.b16 %v2966, %v2965
        %v3110 = vpack.c.b16 %v2968, %v2967
        %v3111 = vpack.c.b16 %v2970, %v2969
        %v3112 = vpack.c.b16 %v2972, %v2971
        %v3113 = vpack.c.b16 %v2974, %v2973
        %v3114 = vpack.c.b16 %v2976, %v2975
        %v3115 = vpack.c.b16 %v2978, %v2977
        %v3116 = vpack.c.b16 %v2980, %v2979
        %v3117 = vpack.c.b16 %v2982, %v2981
        %v3118 = vpack.c.b16 %v2984, %v2983
        %v3119 = vpack.c.b16 %v2986, %v2985
        %v3120 = vpack.c.b16 %v2988, %v2987
        %v3121 = vpack.c.b16 %v2990, %v2989
        %v3122 = vpack.c.b16 %v2992, %v2991
        %v3123 = vpack.c.b16 %v2994, %v2993
        %v3124 = vpack.c.b16 %v2996, %v2995
        %v3125 = vpack.c.b16 %v2998, %v2997
        %v3126 = vpack.c.b16 %v3000, %v2999
        %v3127 = vpack.c.b16 %v3002, %v3001
        %v3128 = vpack.c.b16 %v3004, %v3003
        %v3129 = vpack.c.b16 %v3006, %v3005
        %v3130 = vpack.c.b16 %v3008, %v3007
        %v3131 = vpack.c.b16 %v3010, %v3009
        %v3132 = vpack.c.b16 %v3012, %v3011
        %v3133 = vpack.c.b16 %v3014, %v3013
        %v3134 = vpack.c.b16 %v3016, %v3015
        %v3135 = vpack.c.b16 %v3018, %v3017
        %v3136 = vpack.c.b16 %v3020, %v3019
        %v3137 = vpack.c.b16 %v3022, %v3021
        %v3138 = vpack.c.b16 %v3024, %v3023
        %v3139 = vpack.c.b16 %v3026, %v3025
        %v3140 = vpack.c.b16 %v3028, %v3027
        %v3141 = vpack.c.b16 %v3030, %v3029
        %v3142 = vpack.c.b16 %v3032, %v3031
        %v3143 = vpack.c.b16 %v3034, %v3033
        %v3144 = vpack.c.b16 %v3036, %v3035
        %v3145 = vpack.c.b16 %v3038, %v3037
        %v3146 = vpack.c.b16 %v3040, %v3039
        %v3147 = vpack.c.b16 %v3042, %v3041
        %v3148 = vpack.c.b16 %v3044, %v3043
        %v3149 = vpack.c.b16 %v3046, %v3045
        %v3150 = vpack.c.b16 %v3048, %v3047
        %v3151 = vpack.c.b16 %v3050, %v3049
        %v3152 = vpack.c.b16 %v3052, %v3051
        %v3153 = vpack.c.b16 %v3054, %v3053
        %v3154 = vpack.c.b16 %v3056, %v3055
        %v3155 = vpack.c.b16 %v3058, %v3057
        %v3156 = vpack.c.b16 %v3060, %v3059
        %v3157 = vpack.c.b16 %v3062, %v3061
        %v3158 = vpack.c.b16 %v3064, %v3063
        %v3159 = vpack.c.b16 %v3066, %v3065
        %v3160 = vpack.c.b16 %v3068, %v3067
        %v3161 = vpack.c.b16 %v3070, %v3069
        %v3162 = vpack.c.b16 %v3072, %v3071
        %v3163 = vpack.c.b16 %v3074, %v3073
        %v3164 = vpack.c.b16 %v3076, %v3075
        %v3165 = vpack.c.b16 %v3078, %v3077
        %v3166 = vpack.c.b16 %v3080, %v3079
        %v3167 = vpack.c.b16 %v3082, %v3081
        %v3168 = vpack.c.b16 %v3084, %v3083
        %v3169 = vpack.c.b16 %v3086, %v3085
        %v3170 = vpack.c.b16 %v3088, %v3087
        %v3171 = vpack.c.b16 %v3090, %v3089
        %v3172 = vpack.c.b16 %v3092, %v3091
        %v3173 = vpack.c.b16 %v3094, %v3093
        %v3174 = vpack.c.b16 %v3096, %v3095
        %v3175 = vpack.c.b16 %v3098, %v3097
        %v3176 = vpack.c.b16 %v3100, %v3099
        %v3177 = vpack.c.b16 %v3102, %v3101
        %v3178 = vpack.c.b16 %v3104, %v3103
        %v3179 = vpack.c.b16 %v3106, %v3105
        %v3180 = vpack.c.b16 %v3108, %v3107
        %3253 = vmatprep.subr.bf16.mxu0 0
        %3254 = vmatpush1.bf16.msra.mxu0 %v3109
        %3255 = vmatprep.subr.bf16.mxu0 0
        %3256 = vmatpush1.bf16.msra.mxu0 %v3110
        %3257 = vmatprep.subr.bf16.mxu0 0
        %3258 = vmatpush1.bf16.msra.mxu0 %v3111
        %3259 = vmatprep.subr.bf16.mxu0 0
        %3260 = vmatpush1.bf16.msra.mxu0 %v3112
        %3261 = vmatprep.subr.bf16.mxu0 0
        %3262 = vmatpush1.bf16.msra.mxu0 %v3113
        %3263 = vmatprep.subr.bf16.mxu0 0
        %3264 = vmatpush1.bf16.msra.mxu0 %v3114
        %3265 = vmatprep.subr.bf16.mxu0 0
        %3266 = vmatpush1.bf16.msra.mxu0 %v3115
        %3267 = vmatprep.subr.bf16.mxu0 0
        %3268 = vmatpush1.bf16.msra.mxu0 %v3116
        %3269 = vmatprep.subr.bf16.mxu0 0
        %3270 = vmatpush1.bf16.msra.mxu0 %v3117
        %3271 = vmatprep.subr.bf16.mxu0 0
        %3272 = vmatpush1.bf16.msra.mxu0 %v3118
        %3273 = vmatprep.subr.bf16.mxu0 0
        %3274 = vmatpush1.bf16.msra.mxu0 %v3119
        %3275 = vmatprep.subr.bf16.mxu0 0
        %3276 = vmatpush1.bf16.msra.mxu0 %v3120
        %3277 = vmatprep.subr.bf16.mxu0 0
        %3278 = vmatpush1.bf16.msra.mxu0 %v3121
        %3279 = vmatprep.subr.bf16.mxu0 0
        %3280 = vmatpush1.bf16.msra.mxu0 %v3122
        %3281 = vmatprep.subr.bf16.mxu0 0
        %3282 = vmatpush1.bf16.msra.mxu0 %v3123
        %3283 = vmatprep.subr.bf16.mxu0 0
        %3284 = vmatpush1.bf16.msra.mxu0 %v3124
        %3285 = vmatprep.mubr.bf16.mxu0 %v1432
        %3286 = vmatmul.mubr.bf16.gmra.mrb[0].mxu0 %v1340
        %v3287 = vpop.f32.mrb[0].mxu0
        %v3288 = vadd.f32 %v2819, %v3287
        %v3289 = vpop.f32.mrb[0].mxu0
        %v3290 = vpop.f32.mrb[0].mxu0
        %v3291 = vadd.f32 %v2819, %v3290
        %v3292 = vpop.f32.mrb[0].mxu0
        %3293 = vmatprep.mubr.bf16.mxu0 %v1444
        %3294 = vmatmul.mubr.bf16.gmra.mrb[0].mxu0 %v1341
        %v3295 = vpop.f32.mrb[0].mxu0
        %v3296 = vadd.f32 %v2819, %v3295
        %v3297 = vpop.f32.mrb[0].mxu0
        %v3298 = vpop.f32.mrb[0].mxu0
        %v3299 = vadd.f32 %v2819, %v3298
        %v3300 = vpop.f32.mrb[0].mxu0
        %3301 = vmatprep.mubr.bf16.mxu0 %v1456
        %3302 = vmatmul.mubr.bf16.gmra.mrb[0].mxu0 %v1342
        %v3303 = vpop.f32.mrb[0].mxu0
        %v3304 = vadd.f32 %v2819, %v3303
        %v3305 = vpop.f32.mrb[0].mxu0
        %v3306 = vpop.f32.mrb[0].mxu0
        %v3307 = vadd.f32 %v2819, %v3306
        %v3308 = vpop.f32.mrb[0].mxu0
        %3309 = vmatprep.mubr.bf16.mxu0 %v1468
        %3310 = vmatmul.mubr.bf16.gmra.mrb[0].mxu0 %v1343
        %v3311 = vpop.f32.mrb[0].mxu0
        %v3312 = vadd.f32 %v2819, %v3311
        %v3313 = vpop.f32.mrb[0].mxu0
        %v3314 = vpop.f32.mrb[0].mxu0
        %v3315 = vadd.f32 %v2819, %v3314
        %v3316 = vpop.f32.mrb[0].mxu0
        %3317 = vmatprep.mubr.bf16.mxu0 %v1480
        %3318 = vmatmul.mubr.bf16.gmra.mrb[0].mxu0 %v1344
        %v3319 = vpop.f32.mrb[0].mxu0
        %v3320 = vadd.f32 %v2819, %v3319
        %v3321 = vpop.f32.mrb[0].mxu0
        %v3322 = vpop.f32.mrb[0].mxu0
        %v3323 = vadd.f32 %v2819, %v3322
        %v3324 = vpop.f32.mrb[0].mxu0
        %3325 = vmatprep.mubr.bf16.mxu0 %v1492
        %3326 = vmatmul.mubr.bf16.gmra.mrb[0].mxu0 %v1345
        %v3327 = vpop.f32.mrb[0].mxu0
        %v3328 = vadd.f32 %v2819, %v3327
        %v3329 = vpop.f32.mrb[0].mxu0
        %v3330 = vpop.f32.mrb[0].mxu0
        %v3331 = vadd.f32 %v2819, %v3330
        %v3332 = vpop.f32.mrb[0].mxu0
        %3333 = vmatprep.mubr.bf16.mxu0 %v1504
        %3334 = vmatmul.mubr.bf16.gmra.mrb[0].mxu0 %v1346
        %v3335 = vpop.f32.mrb[0].mxu0
        %v3336 = vadd.f32 %v2819, %v3335
        %v3337 = vpop.f32.mrb[0].mxu0
        %v3338 = vpop.f32.mrb[0].mxu0
        %v3339 = vadd.f32 %v2819, %v3338
        %v3340 = vpop.f32.mrb[0].mxu0
        %3341 = vmatprep.mubr.bf16.mxu0 %v1516
        %3342 = vmatmul.mubr.bf16.gmra.mrb[0].mxu0 %v1347
        %v3343 = vpop.f32.mrb[0].mxu0
        %v3344 = vadd.f32 %v2819, %v3343
        %v3345 = vpop.f32.mrb[0].mxu0
        %v3346 = vpop.f32.mrb[0].mxu0
        %v3347 = vadd.f32 %v2819, %v3346
        %v3348 = vpop.f32.mrb[0].mxu0
        %3349 = vmatprep.mubr.bf16.mxu0 %v1528
        %3350 = vmatmul.mubr.bf16.gmra.mrb[0].mxu0 %v1348
        %v3351 = vpop.f32.mrb[0].mxu0
        %v3352 = vadd.f32 %v2819, %v3351
        %v3353 = vpop.f32.mrb[0].mxu0
        %v3354 = vpop.f32.mrb[0].mxu0
        %v3355 = vadd.f32 %v2819, %v3354
        %v3356 = vpop.f32.mrb[0].mxu0
        %3357 = vmatprep.mubr.bf16.mxu0 %v1540
        %3358 = vmatmul.mubr.bf16.gmra.mrb[0].mxu0 %v1349
        %v3359 = vpop.f32.mrb[0].mxu0
        %v3360 = vadd.f32 %v2819, %v3359
        %v3361 = vpop.f32.mrb[0].mxu0
        %v3362 = vpop.f32.mrb[0].mxu0
        %v3363 = vadd.f32 %v2819, %v3362
        %v3364 = vpop.f32.mrb[0].mxu0
        %3365 = vmatprep.mubr.bf16.mxu0 %v1552
        %3366 = vmatmul.mubr.bf16.gmra.mrb[0].mxu0 %v1350
        %v3367 = vpop.f32.mrb[0].mxu0
        %v3368 = vadd.f32 %v2819, %v3367
        %v3369 = vpop.f32.mrb[0].mxu0
        %v3370 = vpop.f32.mrb[0].mxu0
        %v3371 = vadd.f32 %v2819, %v3370
        %v3372 = vpop.f32.mrb[0].mxu0
        %3373 = vmatprep.mubr.bf16.mxu0 %v1564
        %3374 = vmatmul.mubr.bf16.gmra.mrb[0].mxu0 %v1351
        %v3375 = vpop.f32.mrb[0].mxu0
        %v3376 = vadd.f32 %v2819, %v3375
        %v3377 = vpop.f32.mrb[0].mxu0
        %v3378 = vpop.f32.mrb[0].mxu0
        %v3379 = vadd.f32 %v2819, %v3378
        %v3380 = vpop.f32.mrb[0].mxu0
        %3381 = vmatprep.mubr.bf16.mxu0 %v1576
        %3382 = vmatmul.mubr.bf16.gmra.mrb[0].mxu0 %v1352
        %v3383 = vpop.f32.mrb[0].mxu0
        %v3384 = vadd.f32 %v2819, %v3383
        %v3385 = vpop.f32.mrb[0].mxu0
        %v3386 = vpop.f32.mrb[0].mxu0
        %v3387 = vadd.f32 %v2819, %v3386
        %v3388 = vpop.f32.mrb[0].mxu0
        %3389 = vmatprep.mubr.bf16.mxu0 %v1588
        %3390 = vmatmul.mubr.bf16.gmra.mrb[0].mxu0 %v1353
        %v3391 = vpop.f32.mrb[0].mxu0
        %v3392 = vadd.f32 %v2819, %v3391
        %v3393 = vpop.f32.mrb[0].mxu0
        %v3394 = vpop.f32.mrb[0].mxu0
        %v3395 = vadd.f32 %v2819, %v3394
        %v3396 = vpop.f32.mrb[0].mxu0
        %3397 = vmatprep.mubr.bf16.mxu0 %v1600
        %3398 = vmatmul.mubr.bf16.gmra.mrb[0].mxu0 %v1354
        %v3399 = vpop.f32.mrb[0].mxu0
        %v3400 = vadd.f32 %v2819, %v3399
        %v3401 = vpop.f32.mrb[0].mxu0
        %v3402 = vpop.f32.mrb[0].mxu0
        %v3403 = vadd.f32 %v2819, %v3402
        %v3404 = vpop.f32.mrb[0].mxu0
        %3405 = vmatprep.mubr.bf16.mxu0 %v1612
        %3406 = vmatmul.mubr.bf16.gmra.mrb[0].mxu0 %v1355
        %v3407 = vpop.f32.mrb[0].mxu0
        %v3408 = vadd.f32 %v2819, %v3407
        %v3409 = vpop.f32.mrb[0].mxu0
        %v3410 = vpop.f32.mrb[0].mxu0
        %v3411 = vadd.f32 %v2819, %v3410
        %v3412 = vpop.f32.mrb[0].mxu0
        %3413 = vdwg.mxu0
        %3414 = vmatprep.subr.bf16.mxu0 0
        %3415 = vmatpush1.bf16.msra.mxu0 %v3125
        %3416 = vmatprep.subr.bf16.mxu0 0
        %3417 = vmatpush1.bf16.msra.mxu0 %v3126
        %3418 = vmatprep.subr.bf16.mxu0 0
        %3419 = vmatpush1.bf16.msra.mxu0 %v3127
        %3420 = vmatprep.subr.bf16.mxu0 0
        %3421 = vmatpush1.bf16.msra.mxu0 %v3128
        %3422 = vmatprep.subr.bf16.mxu0 0
        %3423 = vmatpush1.bf16.msra.mxu0 %v3129
        %3424 = vmatprep.subr.bf16.mxu0 0
        %3425 = vmatpush1.bf16.msra.mxu0 %v3130
        %3426 = vmatprep.subr.bf16.mxu0 0
        %3427 = vmatpush1.bf16.msra.mxu0 %v3131
        %3428 = vmatprep.subr.bf16.mxu0 0
        %3429 = vmatpush1.bf16.msra.mxu0 %v3132
        %3430 = vmatprep.subr.bf16.mxu0 0
        %3431 = vmatpush1.bf16.msra.mxu0 %v3133
        %3432 = vmatprep.subr.bf16.mxu0 0
        %3433 = vmatpush1.bf16.msra.mxu0 %v3134
        %3434 = vmatprep.subr.bf16.mxu0 0
        %3435 = vmatpush1.bf16.msra.mxu0 %v3135
        %3436 = vmatprep.subr.bf16.mxu0 0
        %3437 = vmatpush1.bf16.msra.mxu0 %v3136
        %3438 = vmatprep.subr.bf16.mxu0 0
        %3439 = vmatpush1.bf16.msra.mxu0 %v3137
        %3440 = vmatprep.subr.bf16.mxu0 0
        %3441 = vmatpush1.bf16.msra.mxu0 %v3138
        %3442 = vmatprep.subr.bf16.mxu0 0
        %3443 = vmatpush1.bf16.msra.mxu0 %v3139
        %3444 = vmatprep.subr.bf16.mxu0 0
        %3445 = vmatpush1.bf16.msra.mxu0 %v3140
        %3446 = vmatprep.mubr.bf16.mxu0 %v1806
        %3447 = vmatmul.mubr.bf16.gmra.mrb[0].mxu0 %v1680
        %v3448 = vpop.f32.mrb[0].mxu0
        %v3449 = vadd.f32 %v3288, %v3448
        %v3450 = vpop.f32.mrb[0].mxu0
        %v3451 = vpop.f32.mrb[0].mxu0
        %v3452 = vadd.f32 %v3291, %v3451
        %v3453 = vpop.f32.mrb[0].mxu0
        %3454 = vmatprep.mubr.bf16.mxu0 %v1807
        %3455 = vmatmul.mubr.bf16.gmra.mrb[0].mxu0 %v1683
        %v3456 = vpop.f32.mrb[0].mxu0
        %v3457 = vadd.f32 %v3296, %v3456
        %v3458 = vpop.f32.mrb[0].mxu0
        %v3459 = vpop.f32.mrb[0].mxu0
        %v3460 = vadd.f32 %v3299, %v3459
        %v3461 = vpop.f32.mrb[0].mxu0
        %3462 = vmatprep.mubr.bf16.mxu0 %v1808
        %3463 = vmatmul.mubr.bf16.gmra.mrb[0].mxu0 %v1686
        %v3464 = vpop.f32.mrb[0].mxu0
        %v3465 = vadd.f32 %v3304, %v3464
        %v3466 = vpop.f32.mrb[0].mxu0
        %v3467 = vpop.f32.mrb[0].mxu0
        %v3468 = vadd.f32 %v3307, %v3467
        %v3469 = vpop.f32.mrb[0].mxu0
        %3470 = vmatprep.mubr.bf16.mxu0 %v1809
        %3471 = vmatmul.mubr.bf16.gmra.mrb[0].mxu0 %v1689
        %v3472 = vpop.f32.mrb[0].mxu0
        %v3473 = vadd.f32 %v3312, %v3472
        %v3474 = vpop.f32.mrb[0].mxu0
        %v3475 = vpop.f32.mrb[0].mxu0
        %v3476 = vadd.f32 %v3315, %v3475
        %v3477 = vpop.f32.mrb[0].mxu0
        %3478 = vmatprep.mubr.bf16.mxu0 %v1810
        %3479 = vmatmul.mubr.bf16.gmra.mrb[0].mxu0 %v1692
        %v3480 = vpop.f32.mrb[0].mxu0
        %v3481 = vadd.f32 %v3320, %v3480
        %v3482 = vpop.f32.mrb[0].mxu0
        %v3483 = vpop.f32.mrb[0].mxu0
        %v3484 = vadd.f32 %v3323, %v3483
        %v3485 = vpop.f32.mrb[0].mxu0
        %3486 = vmatprep.mubr.bf16.mxu0 %v1811
        %3487 = vmatmul.mubr.bf16.gmra.mrb[0].mxu0 %v1695
        %v3488 = vpop.f32.mrb[0].mxu0
        %v3489 = vadd.f32 %v3328, %v3488
        %v3490 = vpop.f32.mrb[0].mxu0
        %v3491 = vpop.f32.mrb[0].mxu0
        %v3492 = vadd.f32 %v3331, %v3491
        %v3493 = vpop.f32.mrb[0].mxu0
        %3494 = vmatprep.mubr.bf16.mxu0 %v1812
        %3495 = vmatmul.mubr.bf16.gmra.mrb[0].mxu0 %v1698
        %v3496 = vpop.f32.mrb[0].mxu0
        %v3497 = vadd.f32 %v3336, %v3496
        %v3498 = vpop.f32.mrb[0].mxu0
        %v3499 = vpop.f32.mrb[0].mxu0
        %v3500 = vadd.f32 %v3339, %v3499
        %v3501 = vpop.f32.mrb[0].mxu0
        %3502 = vmatprep.mubr.bf16.mxu0 %v1813
        %3503 = vmatmul.mubr.bf16.gmra.mrb[0].mxu0 %v1701
        %v3504 = vpop.f32.mrb[0].mxu0
        %v3505 = vadd.f32 %v3344, %v3504
        %v3506 = vpop.f32.mrb[0].mxu0
        %v3507 = vpop.f32.mrb[0].mxu0
        %v3508 = vadd.f32 %v3347, %v3507
        %v3509 = vpop.f32.mrb[0].mxu0
        %3510 = vmatprep.mubr.bf16.mxu0 %v1814
        %3511 = vmatmul.mubr.bf16.gmra.mrb[0].mxu0 %v1704
        %v3512 = vpop.f32.mrb[0].mxu0
        %v3513 = vadd.f32 %v3352, %v3512
        %v3514 = vpop.f32.mrb[0].mxu0
        %v3515 = vpop.f32.mrb[0].mxu0
        %v3516 = vadd.f32 %v3355, %v3515
        %v3517 = vpop.f32.mrb[0].mxu0
        %3518 = vmatprep.mubr.bf16.mxu0 %v1815
        %3519 = vmatmul.mubr.bf16.gmra.mrb[0].mxu0 %v1707
        %v3520 = vpop.f32.mrb[0].mxu0
        %v3521 = vadd.f32 %v3360, %v3520
        %v3522 = vpop.f32.mrb[0].mxu0
        %v3523 = vpop.f32.mrb[0].mxu0
        %v3524 = vadd.f32 %v3363, %v3523
        %v3525 = vpop.f32.mrb[0].mxu0
        %3526 = vmatprep.mubr.bf16.mxu0 %v1816
        %3527 = vmatmul.mubr.bf16.gmra.mrb[0].mxu0 %v1710
        %v3528 = vpop.f32.mrb[0].mxu0
        %v3529 = vadd.f32 %v3368, %v3528
        %v3530 = vpop.f32.mrb[0].mxu0
        %v3531 = vpop.f32.mrb[0].mxu0
        %v3532 = vadd.f32 %v3371, %v3531
        %v3533 = vpop.f32.mrb[0].mxu0
        %3534 = vmatprep.mubr.bf16.mxu0 %v1817
        %3535 = vmatmul.mubr.bf16.gmra.mrb[0].mxu0 %v1713
        %v3536 = vpop.f32.mrb[0].mxu0
        %v3537 = vadd.f32 %v3376, %v3536
        %v3538 = vpop.f32.mrb[0].mxu0
        %v3539 = vpop.f32.mrb[0].mxu0
        %v3540 = vadd.f32 %v3379, %v3539
        %v3541 = vpop.f32.mrb[0].mxu0
        %3542 = vmatprep.mubr.bf16.mxu0 %v1818
        %3543 = vmatmul.mubr.bf16.gmra.mrb[0].mxu0 %v1716
        %v3544 = vpop.f32.mrb[0].mxu0
        %v3545 = vadd.f32 %v3384, %v3544
        %v3546 = vpop.f32.mrb[0].mxu0
        %v3547 = vpop.f32.mrb[0].mxu0
        %v3548 = vadd.f32 %v3387, %v3547
        %v3549 = vpop.f32.mrb[0].mxu0
        %3550 = vmatprep.mubr.bf16.mxu0 %v1819
        %3551 = vmatmul.mubr.bf16.gmra.mrb[0].mxu0 %v1719
        %v3552 = vpop.f32.mrb[0].mxu0
        %v3553 = vadd.f32 %v3392, %v3552
        %v3554 = vpop.f32.mrb[0].mxu0
        %v3555 = vpop.f32.mrb[0].mxu0
        %v3556 = vadd.f32 %v3395, %v3555
        %v3557 = vpop.f32.mrb[0].mxu0
        %3558 = vmatprep.mubr.bf16.mxu0 %v1820
        %3559 = vmatmul.mubr.bf16.gmra.mrb[0].mxu0 %v1722
        %v3560 = vpop.f32.mrb[0].mxu0
        %v3561 = vadd.f32 %v3400, %v3560
        %v3562 = vpop.f32.mrb[0].mxu0
        %v3563 = vpop.f32.mrb[0].mxu0
        %v3564 = vadd.f32 %v3403, %v3563
        %v3565 = vpop.f32.mrb[0].mxu0
        %3566 = vmatprep.mubr.bf16.mxu0 %v1821
        %3567 = vmatmul.mubr.bf16.gmra.mrb[0].mxu0 %v1725
        %v3568 = vpop.f32.mrb[0].mxu0
        %v3569 = vadd.f32 %v3408, %v3568
        %v3570 = vpop.f32.mrb[0].mxu0
        %v3571 = vpop.f32.mrb[0].mxu0
        %v3572 = vadd.f32 %v3411, %v3571
        %v3573 = vpop.f32.mrb[0].mxu0
        %3574 = vdwg.mxu0
        %3575 = vmatprep.subr.bf16.mxu0 0
        %3576 = vmatpush1.bf16.msra.mxu0 %v3141
        %3577 = vmatprep.subr.bf16.mxu0 0
        %3578 = vmatpush1.bf16.msra.mxu0 %v3142
        %3579 = vmatprep.subr.bf16.mxu0 0
        %3580 = vmatpush1.bf16.msra.mxu0 %v3143
        %3581 = vmatprep.subr.bf16.mxu0 0
        %3582 = vmatpush1.bf16.msra.mxu0 %v3144
        %3583 = vmatprep.subr.bf16.mxu0 0
        %3584 = vmatpush1.bf16.msra.mxu0 %v3145
        %3585 = vmatprep.subr.bf16.mxu0 0
        %3586 = vmatpush1.bf16.msra.mxu0 %v3146
        %3587 = vmatprep.subr.bf16.mxu0 0
        %3588 = vmatpush1.bf16.msra.mxu0 %v3147
        %3589 = vmatprep.subr.bf16.mxu0 0
        %3590 = vmatpush1.bf16.msra.mxu0 %v3148
        %3591 = vmatprep.subr.bf16.mxu0 0
        %3592 = vmatpush1.bf16.msra.mxu0 %v3149
        %3593 = vmatprep.subr.bf16.mxu0 0
        %3594 = vmatpush1.bf16.msra.mxu0 %v3150
        %3595 = vmatprep.subr.bf16.mxu0 0
        %3596 = vmatpush1.bf16.msra.mxu0 %v3151
        %3597 = vmatprep.subr.bf16.mxu0 0
        %3598 = vmatpush1.bf16.msra.mxu0 %v3152
        %3599 = vmatprep.subr.bf16.mxu0 0
        %3600 = vmatpush1.bf16.msra.mxu0 %v3153
        %3601 = vmatprep.subr.bf16.mxu0 0
        %3602 = vmatpush1.bf16.msra.mxu0 %v3154
        %3603 = vmatprep.subr.bf16.mxu0 0
        %3604 = vmatpush1.bf16.msra.mxu0 %v3155
        %3605 = vmatprep.subr.bf16.mxu0 0
        %3606 = vmatpush1.bf16.msra.mxu0 %v3156
        %3607 = vmatprep.mubr.bf16.mxu0 %v2144
        %3608 = vmatmul.mubr.bf16.gmra.mrb[0].mxu0 %v1897
        %v3609 = vpop.f32.mrb[0].mxu0
        %v3610 = vadd.f32 %v3449, %v3609
        %v3611 = vpop.f32.mrb[0].mxu0
        %v3612 = vpop.f32.mrb[0].mxu0
        %v3613 = vadd.f32 %v3452, %v3612
        %v3614 = vpop.f32.mrb[0].mxu0
        %3615 = vmatprep.mubr.bf16.mxu0 %v2147
        %3616 = vmatmul.mubr.bf16.gmra.mrb[0].mxu0 %v1909
        %v3617 = vpop.f32.mrb[0].mxu0
        %v3618 = vadd.f32 %v3457, %v3617
        %v3619 = vpop.f32.mrb[0].mxu0
        %v3620 = vpop.f32.mrb[0].mxu0
        %v3621 = vadd.f32 %v3460, %v3620
        %v3622 = vpop.f32.mrb[0].mxu0
        %3623 = vmatprep.mubr.bf16.mxu0 %v2150
        %3624 = vmatmul.mubr.bf16.gmra.mrb[0].mxu0 %v1921
        %v3625 = vpop.f32.mrb[0].mxu0
        %v3626 = vadd.f32 %v3465, %v3625
        %v3627 = vpop.f32.mrb[0].mxu0
        %v3628 = vpop.f32.mrb[0].mxu0
        %v3629 = vadd.f32 %v3468, %v3628
        %v3630 = vpop.f32.mrb[0].mxu0
        %3631 = vmatprep.mubr.bf16.mxu0 %v2153
        %3632 = vmatmul.mubr.bf16.gmra.mrb[0].mxu0 %v1933
        %v3633 = vpop.f32.mrb[0].mxu0
        %v3634 = vadd.f32 %v3473, %v3633
        %v3635 = vpop.f32.mrb[0].mxu0
        %v3636 = vpop.f32.mrb[0].mxu0
        %v3637 = vadd.f32 %v3476, %v3636
        %v3638 = vpop.f32.mrb[0].mxu0
        %3639 = vmatprep.mubr.bf16.mxu0 %v2156
        %3640 = vmatmul.mubr.bf16.gmra.mrb[0].mxu0 %v1945
        %v3641 = vpop.f32.mrb[0].mxu0
        %v3642 = vadd.f32 %v3481, %v3641
        %v3643 = vpop.f32.mrb[0].mxu0
        %v3644 = vpop.f32.mrb[0].mxu0
        %v3645 = vadd.f32 %v3484, %v3644
        %v3646 = vpop.f32.mrb[0].mxu0
        %3647 = vmatprep.mubr.bf16.mxu0 %v2159
        %3648 = vmatmul.mubr.bf16.gmra.mrb[0].mxu0 %v1957
        %v3649 = vpop.f32.mrb[0].mxu0
        %v3650 = vadd.f32 %v3489, %v3649
        %v3651 = vpop.f32.mrb[0].mxu0
        %v3652 = vpop.f32.mrb[0].mxu0
        %v3653 = vadd.f32 %v3492, %v3652
        %v3654 = vpop.f32.mrb[0].mxu0
        %3655 = vmatprep.mubr.bf16.mxu0 %v2162
        %3656 = vmatmul.mubr.bf16.gmra.mrb[0].mxu0 %v1969
        %v3657 = vpop.f32.mrb[0].mxu0
        %v3658 = vadd.f32 %v3497, %v3657
        %v3659 = vpop.f32.mrb[0].mxu0
        %v3660 = vpop.f32.mrb[0].mxu0
        %v3661 = vadd.f32 %v3500, %v3660
        %v3662 = vpop.f32.mrb[0].mxu0
        %3663 = vmatprep.mubr.bf16.mxu0 %v2165
        %3664 = vmatmul.mubr.bf16.gmra.mrb[0].mxu0 %v1981
        %v3665 = vpop.f32.mrb[0].mxu0
        %v3666 = vadd.f32 %v3505, %v3665
        %v3667 = vpop.f32.mrb[0].mxu0
        %v3668 = vpop.f32.mrb[0].mxu0
        %v3669 = vadd.f32 %v3508, %v3668
        %v3670 = vpop.f32.mrb[0].mxu0
        %3671 = vmatprep.mubr.bf16.mxu0 %v2168
        %3672 = vmatmul.mubr.bf16.gmra.mrb[0].mxu0 %v1993
        %v3673 = vpop.f32.mrb[0].mxu0
        %v3674 = vadd.f32 %v3513, %v3673
        %v3675 = vpop.f32.mrb[0].mxu0
        %v3676 = vpop.f32.mrb[0].mxu0
        %v3677 = vadd.f32 %v3516, %v3676
        %v3678 = vpop.f32.mrb[0].mxu0
        %3679 = vmatprep.mubr.bf16.mxu0 %v2171
        %3680 = vmatmul.mubr.bf16.gmra.mrb[0].mxu0 %v2005
        %v3681 = vpop.f32.mrb[0].mxu0
        %v3682 = vadd.f32 %v3521, %v3681
        %v3683 = vpop.f32.mrb[0].mxu0
        %v3684 = vpop.f32.mrb[0].mxu0
        %v3685 = vadd.f32 %v3524, %v3684
        %v3686 = vpop.f32.mrb[0].mxu0
        %3687 = vmatprep.mubr.bf16.mxu0 %v2174
        %3688 = vmatmul.mubr.bf16.gmra.mrb[0].mxu0 %v2017
        %v3689 = vpop.f32.mrb[0].mxu0
        %v3690 = vadd.f32 %v3529, %v3689
        %v3691 = vpop.f32.mrb[0].mxu0
        %v3692 = vpop.f32.mrb[0].mxu0
        %v3693 = vadd.f32 %v3532, %v3692
        %v3694 = vpop.f32.mrb[0].mxu0
        %3695 = vmatprep.mubr.bf16.mxu0 %v2177
        %3696 = vmatmul.mubr.bf16.gmra.mrb[0].mxu0 %v2029
        %v3697 = vpop.f32.mrb[0].mxu0
        %v3698 = vadd.f32 %v3537, %v3697
        %v3699 = vpop.f32.mrb[0].mxu0
        %v3700 = vpop.f32.mrb[0].mxu0
        %v3701 = vadd.f32 %v3540, %v3700
        %v3702 = vpop.f32.mrb[0].mxu0
        %3703 = vmatprep.mubr.bf16.mxu0 %v2180
        %3704 = vmatmul.mubr.bf16.gmra.mrb[0].mxu0 %v2041
        %v3705 = vpop.f32.mrb[0].mxu0
        %v3706 = vadd.f32 %v3545, %v3705
        %v3707 = vpop.f32.mrb[0].mxu0
        %v3708 = vpop.f32.mrb[0].mxu0
        %v3709 = vadd.f32 %v3548, %v3708
        %v3710 = vpop.f32.mrb[0].mxu0
        %3711 = vmatprep.mubr.bf16.mxu0 %v2183
        %3712 = vmatmul.mubr.bf16.gmra.mrb[0].mxu0 %v2053
        %v3713 = vpop.f32.mrb[0].mxu0
        %v3714 = vadd.f32 %v3553, %v3713
        %v3715 = vpop.f32.mrb[0].mxu0
        %v3716 = vpop.f32.mrb[0].mxu0
        %v3717 = vadd.f32 %v3556, %v3716
        %v3718 = vpop.f32.mrb[0].mxu0
        %3719 = vmatprep.mubr.bf16.mxu0 %v2186
        %3720 = vmatmul.mubr.bf16.gmra.mrb[0].mxu0 %v2065
        %v3721 = vpop.f32.mrb[0].mxu0
        %v3722 = vadd.f32 %v3561, %v3721
        %v3723 = vpop.f32.mrb[0].mxu0
        %v3724 = vpop.f32.mrb[0].mxu0
        %v3725 = vadd.f32 %v3564, %v3724
        %v3726 = vpop.f32.mrb[0].mxu0
        %3727 = vmatprep.mubr.bf16.mxu0 %v2189
        %3728 = vmatmul.mubr.bf16.gmra.mrb[0].mxu0 %v2077
        %v3729 = vpop.f32.mrb[0].mxu0
        %v3730 = vadd.f32 %v3569, %v3729
        %v3731 = vpop.f32.mrb[0].mxu0
        %v3732 = vpop.f32.mrb[0].mxu0
        %v3733 = vadd.f32 %v3572, %v3732
        %v3734 = vpop.f32.mrb[0].mxu0
        %3735 = vdwg.mxu0
        %3736 = vmatprep.subr.bf16.mxu0 0
        %3737 = vmatpush1.bf16.msra.mxu0 %v3157
        %3738 = vmatprep.subr.bf16.mxu0 0
        %3739 = vmatpush1.bf16.msra.mxu0 %v3158
        %3740 = vmatprep.subr.bf16.mxu0 0
        %3741 = vmatpush1.bf16.msra.mxu0 %v3159
        %3742 = vmatprep.subr.bf16.mxu0 0
        %3743 = vmatpush1.bf16.msra.mxu0 %v3160
        %3744 = vmatprep.subr.bf16.mxu0 0
        %3745 = vmatpush1.bf16.msra.mxu0 %v3161
        %3746 = vmatprep.subr.bf16.mxu0 0
        %3747 = vmatpush1.bf16.msra.mxu0 %v3162
        %3748 = vmatprep.subr.bf16.mxu0 0
        %3749 = vmatpush1.bf16.msra.mxu0 %v3163
        %3750 = vmatprep.subr.bf16.mxu0 0
        %3751 = vmatpush1.bf16.msra.mxu0 %v3164
        %3752 = vmatprep.subr.bf16.mxu0 0
        %3753 = vmatpush1.bf16.msra.mxu0 %v3165
        %3754 = vmatprep.subr.bf16.mxu0 0
        %3755 = vmatpush1.bf16.msra.mxu0 %v3166
        %3756 = vmatprep.subr.bf16.mxu0 0
        %3757 = vmatpush1.bf16.msra.mxu0 %v3167
        %3758 = vmatprep.subr.bf16.mxu0 0
        %3759 = vmatpush1.bf16.msra.mxu0 %v3168
        %3760 = vmatprep.subr.bf16.mxu0 0
        %3761 = vmatpush1.bf16.msra.mxu0 %v3169
        %3762 = vmatprep.subr.bf16.mxu0 0
        %3763 = vmatpush1.bf16.msra.mxu0 %v3170
        %3764 = vmatprep.subr.bf16.mxu0 0
        %3765 = vmatpush1.bf16.msra.mxu0 %v3171
        %3766 = vmatprep.subr.bf16.mxu0 0
        %3767 = vmatpush1.bf16.msra.mxu0 %v3172
        %3768 = vmatprep.mubr.bf16.mxu0 %v2361
        %3769 = vmatmul.mubr.bf16.gmra.mrb[0].mxu0 %v2270
        %v3770 = vpop.f32.mrb[0].mxu0
        %v3771 = vadd.f32 %v3610, %v3770
        %v3772 = vpop.f32.mrb[0].mxu0
        %v3773 = vpop.f32.mrb[0].mxu0
        %v3774 = vadd.f32 %v3613, %v3773
        %v3775 = vpop.f32.mrb[0].mxu0
        %3776 = vmatprep.mubr.bf16.mxu0 %v2373
        %3777 = vmatmul.mubr.bf16.gmra.mrb[0].mxu0 %v2271
        %v3778 = vpop.f32.mrb[0].mxu0
        %v3779 = vadd.f32 %v3618, %v3778
        %v3780 = vpop.f32.mrb[0].mxu0
        %v3781 = vpop.f32.mrb[0].mxu0
        %v3782 = vadd.f32 %v3621, %v3781
        %v3783 = vpop.f32.mrb[0].mxu0
        %3784 = vmatprep.mubr.bf16.mxu0 %v2385
        %3785 = vmatmul.mubr.bf16.gmra.mrb[0].mxu0 %v2272
        %v3786 = vpop.f32.mrb[0].mxu0
        %v3787 = vadd.f32 %v3626, %v3786
        %v3788 = vpop.f32.mrb[0].mxu0
        %v3789 = vpop.f32.mrb[0].mxu0
        %v3790 = vadd.f32 %v3629, %v3789
        %v3791 = vpop.f32.mrb[0].mxu0
        %3792 = vmatprep.mubr.bf16.mxu0 %v2397
        %3793 = vmatmul.mubr.bf16.gmra.mrb[0].mxu0 %v2273
        %v3794 = vpop.f32.mrb[0].mxu0
        %v3795 = vadd.f32 %v3634, %v3794
        %v3796 = vpop.f32.mrb[0].mxu0
        %v3797 = vpop.f32.mrb[0].mxu0
        %v3798 = vadd.f32 %v3637, %v3797
        %v3799 = vpop.f32.mrb[0].mxu0
        %3800 = vmatprep.mubr.bf16.mxu0 %v2409
        %3801 = vmatmul.mubr.bf16.gmra.mrb[0].mxu0 %v2274
        %v3802 = vpop.f32.mrb[0].mxu0
        %v3803 = vadd.f32 %v3642, %v3802
        %v3804 = vpop.f32.mrb[0].mxu0
        %v3805 = vpop.f32.mrb[0].mxu0
        %v3806 = vadd.f32 %v3645, %v3805
        %v3807 = vpop.f32.mrb[0].mxu0
        %3808 = vmatprep.mubr.bf16.mxu0 %v2421
        %3809 = vmatmul.mubr.bf16.gmra.mrb[0].mxu0 %v2275
        %v3810 = vpop.f32.mrb[0].mxu0
        %v3811 = vadd.f32 %v3650, %v3810
        %v3812 = vpop.f32.mrb[0].mxu0
        %v3813 = vpop.f32.mrb[0].mxu0
        %v3814 = vadd.f32 %v3653, %v3813
        %v3815 = vpop.f32.mrb[0].mxu0
        %3816 = vmatprep.mubr.bf16.mxu0 %v2433
        %3817 = vmatmul.mubr.bf16.gmra.mrb[0].mxu0 %v2276
        %v3818 = vpop.f32.mrb[0].mxu0
        %v3819 = vadd.f32 %v3658, %v3818
        %v3820 = vpop.f32.mrb[0].mxu0
        %v3821 = vpop.f32.mrb[0].mxu0
        %v3822 = vadd.f32 %v3661, %v3821
        %v3823 = vpop.f32.mrb[0].mxu0
        %3824 = vmatprep.mubr.bf16.mxu0 %v2445
        %3825 = vmatmul.mubr.bf16.gmra.mrb[0].mxu0 %v2277
        %v3826 = vpop.f32.mrb[0].mxu0
        %v3827 = vadd.f32 %v3666, %v3826
        %v3828 = vpop.f32.mrb[0].mxu0
        %v3829 = vpop.f32.mrb[0].mxu0
        %v3830 = vadd.f32 %v3669, %v3829
        %v3831 = vpop.f32.mrb[0].mxu0
        %3832 = vmatprep.mubr.bf16.mxu0 %v2457
        %3833 = vmatmul.mubr.bf16.gmra.mrb[0].mxu0 %v2278
        %v3834 = vpop.f32.mrb[0].mxu0
        %v3835 = vadd.f32 %v3674, %v3834
        %v3836 = vpop.f32.mrb[0].mxu0
        %v3837 = vpop.f32.mrb[0].mxu0
        %v3838 = vadd.f32 %v3677, %v3837
        %v3839 = vpop.f32.mrb[0].mxu0
        %3840 = vmatprep.mubr.bf16.mxu0 %v2469
        %3841 = vmatmul.mubr.bf16.gmra.mrb[0].mxu0 %v2279
        %v3842 = vpop.f32.mrb[0].mxu0
        %v3843 = vadd.f32 %v3682, %v3842
        %v3844 = vpop.f32.mrb[0].mxu0
        %v3845 = vpop.f32.mrb[0].mxu0
        %v3846 = vadd.f32 %v3685, %v3845
        %v3847 = vpop.f32.mrb[0].mxu0
        %3848 = vmatprep.mubr.bf16.mxu0 %v2481
        %3849 = vmatmul.mubr.bf16.gmra.mrb[0].mxu0 %v2280
        %v3850 = vpop.f32.mrb[0].mxu0
        %v3851 = vadd.f32 %v3690, %v3850
        %v3852 = vpop.f32.mrb[0].mxu0
        %v3853 = vpop.f32.mrb[0].mxu0
        %v3854 = vadd.f32 %v3693, %v3853
        %v3855 = vpop.f32.mrb[0].mxu0
        %3856 = vmatprep.mubr.bf16.mxu0 %v2493
        %3857 = vmatmul.mubr.bf16.gmra.mrb[0].mxu0 %v2281
        %v3858 = vpop.f32.mrb[0].mxu0
        %v3859 = vadd.f32 %v3698, %v3858
        %v3860 = vpop.f32.mrb[0].mxu0
        %v3861 = vpop.f32.mrb[0].mxu0
        %v3862 = vadd.f32 %v3701, %v3861
        %v3863 = vpop.f32.mrb[0].mxu0
        %3864 = vmatprep.mubr.bf16.mxu0 %v2505
        %3865 = vmatmul.mubr.bf16.gmra.mrb[0].mxu0 %v2282
        %v3866 = vpop.f32.mrb[0].mxu0
        %v3867 = vadd.f32 %v3706, %v3866
        %v3868 = vpop.f32.mrb[0].mxu0
        %v3869 = vpop.f32.mrb[0].mxu0
        %v3870 = vadd.f32 %v3709, %v3869
        %v3871 = vpop.f32.mrb[0].mxu0
        %3872 = vmatprep.mubr.bf16.mxu0 %v2517
        %3873 = vmatmul.mubr.bf16.gmra.mrb[0].mxu0 %v2283
        %v3874 = vpop.f32.mrb[0].mxu0
        %v3875 = vadd.f32 %v3714, %v3874
        %v3876 = vpop.f32.mrb[0].mxu0
        %v3877 = vpop.f32.mrb[0].mxu0
        %v3878 = vadd.f32 %v3717, %v3877
        %v3879 = vpop.f32.mrb[0].mxu0
        %3880 = vmatprep.mubr.bf16.mxu0 %v2529
        %3881 = vmatmul.mubr.bf16.gmra.mrb[0].mxu0 %v2284
        %v3882 = vpop.f32.mrb[0].mxu0
        %v3883 = vadd.f32 %v3722, %v3882
        %v3884 = vpop.f32.mrb[0].mxu0
        %v3885 = vpop.f32.mrb[0].mxu0
        %v3886 = vadd.f32 %v3725, %v3885
        %v3887 = vpop.f32.mrb[0].mxu0
        %3888 = vmatprep.mubr.bf16.mxu0 %v2541
        %3889 = vmatmul.mubr.bf16.gmra.mrb[0].mxu0 %v2285
        %v3890 = vpop.f32.mrb[0].mxu0
        %v3891 = vadd.f32 %v3730, %v3890
        %v3892 = vpop.f32.mrb[0].mxu0
        %v3893 = vpop.f32.mrb[0].mxu0
        %v3894 = vadd.f32 %v3733, %v3893
        %v3895 = vpop.f32.mrb[0].mxu0
        %3896 = vdwg.mxu0
        %3897 = vmatprep.subr.bf16.mxu0 0
        %3898 = vmatpush1.bf16.msra.mxu0 %v3173
        %3899 = vmatprep.subr.bf16.mxu0 0
        %3900 = vmatpush1.bf16.msra.mxu0 %v3174
        %3901 = vmatprep.subr.bf16.mxu0 0
        %3902 = vmatpush1.bf16.msra.mxu0 %v3175
        %3903 = vmatprep.subr.bf16.mxu0 0
        %3904 = vmatpush1.bf16.msra.mxu0 %v3176
        %3905 = vmatprep.subr.bf16.mxu0 0
        %3906 = vmatpush1.bf16.msra.mxu0 %v3177
        %3907 = vmatprep.subr.bf16.mxu0 0
        %3908 = vmatpush1.bf16.msra.mxu0 %v3178
        %3909 = vmatprep.subr.bf16.mxu0 0
        %3910 = vmatpush1.bf16.msra.mxu0 %v3179
        %3911 = vmatprep.subr.bf16.mxu0 0
        %3912 = vmatpush1.bf16.msra.mxu0 %v3180
        %3913 = vmatprep.subr.bf16.mxu0 0
        %3914 = vmatpush1.bf16.msra.mxu0 0
        %3915 = vmatprep.subr.bf16.mxu0 0
        %3916 = vmatpush1.bf16.msra.mxu0 0
        %3917 = vmatprep.subr.bf16.mxu0 0
        %3918 = vmatpush1.bf16.msra.mxu0 0
        %3919 = vmatprep.subr.bf16.mxu0 0
        %3920 = vmatpush1.bf16.msra.mxu0 0
        %3921 = vmatprep.subr.bf16.mxu0 0
        %3922 = vmatpush1.bf16.msra.mxu0 0
        %3923 = vmatprep.subr.bf16.mxu0 0
        %3924 = vmatpush1.bf16.msra.mxu0 0
        %3925 = vmatprep.subr.bf16.mxu0 0
        %3926 = vmatpush1.bf16.msra.mxu0 0
        %3927 = vmatprep.subr.bf16.mxu0 0
        %3928 = vmatpush1.bf16.msra.mxu0 0
        %3929 = vmatprep.mubr.bf16.mxu0 0
        %3930 = vmatmul.mubr.bf16.gmra.mrb[0].mxu0 %v2608
        %v3931 = vpop.f32.mrb[0].mxu0
        %v3932 = vadd.f32 %v3771, %v3931
        %v3933 = vpop.f32.mrb[0].mxu0
        %v3934 = vpop.f32.mrb[0].mxu0
        %v3935 = vadd.f32 %v3774, %v3934
        %v3936 = vpop.f32.mrb[0].mxu0
        %3937 = vmatprep.mubr.bf16.mxu0 0
        %3938 = vmatmul.mubr.bf16.gmra.mrb[0].mxu0 %v2611
        %v3939 = vpop.f32.mrb[0].mxu0
        %v3940 = vadd.f32 %v3779, %v3939
        %v3941 = vpop.f32.mrb[0].mxu0
        %v3942 = vpop.f32.mrb[0].mxu0
        %v3943 = vadd.f32 %v3782, %v3942
        %v3944 = vpop.f32.mrb[0].mxu0
        %3945 = vmatprep.mubr.bf16.mxu0 0
        %3946 = vmatmul.mubr.bf16.gmra.mrb[0].mxu0 %v2614
        %v3947 = vpop.f32.mrb[0].mxu0
        %v3948 = vadd.f32 %v3787, %v3947
        %v3949 = vpop.f32.mrb[0].mxu0
        %v3950 = vpop.f32.mrb[0].mxu0
        %v3951 = vadd.f32 %v3790, %v3950
        %v3952 = vpop.f32.mrb[0].mxu0
        %3953 = vmatprep.mubr.bf16.mxu0 0
        %3954 = vmatmul.mubr.bf16.gmra.mrb[0].mxu0 %v2617
        %v3955 = vpop.f32.mrb[0].mxu0
        %v3956 = vadd.f32 %v3795, %v3955
        %v3957 = vpop.f32.mrb[0].mxu0
        %v3958 = vpop.f32.mrb[0].mxu0
        %v3959 = vadd.f32 %v3798, %v3958
        %v3960 = vpop.f32.mrb[0].mxu0
        %3961 = vmatprep.mubr.bf16.mxu0 0
        %3962 = vmatmul.mubr.bf16.gmra.mrb[0].mxu0 %v2620
        %v3963 = vpop.f32.mrb[0].mxu0
        %v3964 = vadd.f32 %v3803, %v3963
        %v3965 = vpop.f32.mrb[0].mxu0
        %v3966 = vpop.f32.mrb[0].mxu0
        %v3967 = vadd.f32 %v3806, %v3966
        %v3968 = vpop.f32.mrb[0].mxu0
        %3969 = vmatprep.mubr.bf16.mxu0 0
        %3970 = vmatmul.mubr.bf16.gmra.mrb[0].mxu0 %v2623
        %v3971 = vpop.f32.mrb[0].mxu0
        %v3972 = vadd.f32 %v3811, %v3971
        %v3973 = vpop.f32.mrb[0].mxu0
        %v3974 = vpop.f32.mrb[0].mxu0
        %v3975 = vadd.f32 %v3814, %v3974
        %v3976 = vpop.f32.mrb[0].mxu0
        %3977 = vmatprep.mubr.bf16.mxu0 0
        %3978 = vmatmul.mubr.bf16.gmra.mrb[0].mxu0 %v2626
        %v3979 = vpop.f32.mrb[0].mxu0
        %v3980 = vadd.f32 %v3819, %v3979
        %v3981 = vpop.f32.mrb[0].mxu0
        %v3982 = vpop.f32.mrb[0].mxu0
        %v3983 = vadd.f32 %v3822, %v3982
        %v3984 = vpop.f32.mrb[0].mxu0
        %3985 = vmatprep.mubr.bf16.mxu0 0
        %3986 = vmatmul.mubr.bf16.gmra.mrb[0].mxu0 %v2629
        %v3987 = vpop.f32.mrb[0].mxu0
        %v3988 = vadd.f32 %v3827, %v3987
        %v3989 = vpop.f32.mrb[0].mxu0
        %v3990 = vpop.f32.mrb[0].mxu0
        %v3991 = vadd.f32 %v3830, %v3990
        %v3992 = vpop.f32.mrb[0].mxu0
        %3993 = vmatprep.mubr.bf16.mxu0 0
        %3994 = vmatmul.mubr.bf16.gmra.mrb[0].mxu0 %v2632
        %v3995 = vpop.f32.mrb[0].mxu0
        %v3996 = vadd.f32 %v3835, %v3995
        %v3997 = vpop.f32.mrb[0].mxu0
        %v3998 = vpop.f32.mrb[0].mxu0
        %v3999 = vadd.f32 %v3838, %v3998
        %v4000 = vpop.f32.mrb[0].mxu0
        %4001 = vmatprep.mubr.bf16.mxu0 0
        %4002 = vmatmul.mubr.bf16.gmra.mrb[0].mxu0 %v2635
        %v4003 = vpop.f32.mrb[0].mxu0
        %v4004 = vadd.f32 %v3843, %v4003
        %v4005 = vpop.f32.mrb[0].mxu0
        %v4006 = vpop.f32.mrb[0].mxu0
        %v4007 = vadd.f32 %v3846, %v4006
        %v4008 = vpop.f32.mrb[0].mxu0
        %4009 = vmatprep.mubr.bf16.mxu0 0
        %4010 = vmatmul.mubr.bf16.gmra.mrb[0].mxu0 %v2638
        %v4011 = vpop.f32.mrb[0].mxu0
        %v4012 = vadd.f32 %v3851, %v4011
        %v4013 = vpop.f32.mrb[0].mxu0
        %v4014 = vpop.f32.mrb[0].mxu0
        %v4015 = vadd.f32 %v3854, %v4014
        %v4016 = vpop.f32.mrb[0].mxu0
        %4017 = vmatprep.mubr.bf16.mxu0 0
        %4018 = vmatmul.mubr.bf16.gmra.mrb[0].mxu0 %v2641
        %v4019 = vpop.f32.mrb[0].mxu0
        %v4020 = vadd.f32 %v3859, %v4019
        %v4021 = vpop.f32.mrb[0].mxu0
        %v4022 = vpop.f32.mrb[0].mxu0
        %v4023 = vadd.f32 %v3862, %v4022
        %v4024 = vpop.f32.mrb[0].mxu0
        %4025 = vmatprep.mubr.bf16.mxu0 0
        %4026 = vmatmul.mubr.bf16.gmra.mrb[0].mxu0 %v2644
        %v4027 = vpop.f32.mrb[0].mxu0
        %v4028 = vadd.f32 %v3867, %v4027
        %v4029 = vpop.f32.mrb[0].mxu0
        %v4030 = vpop.f32.mrb[0].mxu0
        %v4031 = vadd.f32 %v3870, %v4030
        %v4032 = vpop.f32.mrb[0].mxu0
        %4033 = vmatprep.mubr.bf16.mxu0 0
        %4034 = vmatmul.mubr.bf16.gmra.mrb[0].mxu0 %v2647
        %v4035 = vpop.f32.mrb[0].mxu0
        %v4036 = vadd.f32 %v3875, %v4035
        %v4037 = vpop.f32.mrb[0].mxu0
        %v4038 = vpop.f32.mrb[0].mxu0
        %v4039 = vadd.f32 %v3878, %v4038
        %v4040 = vpop.f32.mrb[0].mxu0
        %4041 = vmatprep.mubr.bf16.mxu0 0
        %4042 = vmatmul.mubr.bf16.gmra.mrb[0].mxu0 %v2650
        %v4043 = vpop.f32.mrb[0].mxu0
        %v4044 = vadd.f32 %v3883, %v4043
        %v4045 = vpop.f32.mrb[0].mxu0
        %v4046 = vpop.f32.mrb[0].mxu0
        %v4047 = vadd.f32 %v3886, %v4046
        %v4048 = vpop.f32.mrb[0].mxu0
        %4049 = vmatprep.mubr.bf16.mxu0 0
        %4050 = vmatmul.mubr.bf16.gmra.mrb[0].mxu0 %v2653
        %v4051 = vpop.f32.mrb[0].mxu0
        %v4052 = vadd.f32 %v3891, %v4051
        %v4053 = vpop.f32.mrb[0].mxu0
        %v4054 = vpop.f32.mrb[0].mxu0
        %v4055 = vadd.f32 %v3894, %v4054
        %v4056 = vpop.f32.mrb[0].mxu0
        %4057 = vdwg.mxu0
        %v4058 = vmax.f32 %v3932, 0.0
        %v4059 = vmax.f32 %v3935, 0.0
        %v4060 = vmax.f32 %v3940, 0.0
        %v4061 = vmax.f32 %v3943, 0.0
        %v4062 = vmax.f32 %v3948, 0.0
        %v4063 = vmax.f32 %v3951, 0.0
        %v4064 = vmax.f32 %v3956, 0.0
        %v4065 = vmax.f32 %v3959, 0.0
        %v4066 = vmax.f32 %v3964, 0.0
        %v4067 = vmax.f32 %v3967, 0.0
        %v4068 = vmax.f32 %v3972, 0.0
        %v4069 = vmax.f32 %v3975, 0.0
        %v4070 = vmax.f32 %v3980, 0.0
        %v4071 = vmax.f32 %v3983, 0.0
        %v4072 = vmax.f32 %v3988, 0.0
        %v4073 = vmax.f32 %v3991, 0.0
        %v4074 = vmax.f32 %v3996, 0.0
        %v4075 = vmax.f32 %v3999, 0.0
        %v4076 = vmax.f32 %v4004, 0.0
        %v4077 = vmax.f32 %v4007, 0.0
        %v4078 = vmax.f32 %v4012, 0.0
        %v4079 = vmax.f32 %v4015, 0.0
        %v4080 = vmax.f32 %v4020, 0.0
        %v4081 = vmax.f32 %v4023, 0.0
        %v4082 = vmax.f32 %v4028, 0.0
        %v4083 = vmax.f32 %v4031, 0.0
        %v4084 = vmax.f32 %v4036, 0.0
        %v4085 = vmax.f32 %v4039, 0.0
        %v4086 = vmax.f32 %v4044, 0.0
        %v4087 = vmax.f32 %v4047, 0.0
        %v4088 = vmax.f32 %v4052, 0.0
        %v4089 = vmax.f32 %v4055, 0.0
        %v4090 = vpack.c.bf16 %v4059, %v4058
        %v4091 = vpack.c.bf16 %v4061, %v4060
        %v4092 = vpack.c.bf16 %v4063, %v4062
        %v4093 = vpack.c.bf16 %v4065, %v4064
        %v4094 = vpack.c.bf16 %v4067, %v4066
        %v4095 = vpack.c.bf16 %v4069, %v4068
        %v4096 = vpack.c.bf16 %v4071, %v4070
        %v4097 = vpack.c.bf16 %v4073, %v4072
        %v4098 = vpack.c.bf16 %v4075, %v4074
        %v4099 = vpack.c.bf16 %v4077, %v4076
        %v4100 = vpack.c.bf16 %v4079, %v4078
        %v4101 = vpack.c.bf16 %v4081, %v4080
        %v4102 = vpack.c.bf16 %v4083, %v4082
        %v4103 = vpack.c.bf16 %v4085, %v4084
        %v4104 = vpack.c.bf16 %v4087, %v4086
        %v4105 = vpack.c.bf16 %v4089, %v4088
        %v4122 = vunpack.c.l.b16 %v4090
        %v4123 = vunpack.c.h.b16 %v4090
        %v4124 = vunpack.c.l.b16 %v4091
        %v4125 = vunpack.c.h.b16 %v4091
        %v4126 = vunpack.c.l.b16 %v4092
        %v4127 = vunpack.c.h.b16 %v4092
        %v4128 = vunpack.c.l.b16 %v4093
        %v4129 = vunpack.c.h.b16 %v4093
        %v4130 = vunpack.c.l.b16 %v4094
        %v4131 = vunpack.c.h.b16 %v4094
        %v4132 = vunpack.c.l.b16 %v4095
        %v4133 = vunpack.c.h.b16 %v4095
        %v4134 = vunpack.c.l.b16 %v4096
        %v4135 = vunpack.c.h.b16 %v4096
        %v4136 = vunpack.c.l.b16 %v4097
        %v4137 = vunpack.c.h.b16 %v4097
        %v4138 = vunpack.c.l.b16 %v4098
        %v4139 = vunpack.c.h.b16 %v4098
        %v4140 = vunpack.c.l.b16 %v4099
        %v4141 = vunpack.c.h.b16 %v4099
        %v4142 = vunpack.c.l.b16 %v4100
        %v4143 = vunpack.c.h.b16 %v4100
        %v4144 = vunpack.c.l.b16 %v4101
        %v4145 = vunpack.c.h.b16 %v4101
        %v4146 = vunpack.c.l.b16 %v4102
        %v4147 = vunpack.c.h.b16 %v4102
        %v4148 = vunpack.c.l.b16 %v4103
        %v4149 = vunpack.c.h.b16 %v4103
        %v4150 = vunpack.c.l.b16 %v4104
        %v4151 = vunpack.c.h.b16 %v4104
        %v4152 = vunpack.c.l.b16 %v4105
        %v4153 = vunpack.c.h.b16 %v4105
        %v4154 = vpack.c.b16 %v4122, %v4122
        %v4155 = vpack.c.b16 %v4123, %v4123
        %v4156 = vpack.c.b16 %v4124, %v4124
        %v4157 = vpack.c.b16 %v4125, %v4125
        %v4158 = vpack.c.b16 %v4126, %v4126
        %v4159 = vpack.c.b16 %v4127, %v4127
        %v4160 = vpack.c.b16 %v4128, %v4128
        %v4161 = vpack.c.b16 %v4129, %v4129
        %v4162 = vpack.c.b16 %v4130, %v4130
        %v4163 = vpack.c.b16 %v4131, %v4131
        %v4164 = vpack.c.b16 %v4132, %v4132
        %v4165 = vpack.c.b16 %v4133, %v4133
        %v4166 = vpack.c.b16 %v4134, %v4134
        %v4167 = vpack.c.b16 %v4135, %v4135
        %v4168 = vpack.c.b16 %v4136, %v4136
        %v4169 = vpack.c.b16 %v4137, %v4137
        %v4170 = vpack.c.b16 %v4138, %v4138
        %v4171 = vpack.c.b16 %v4139, %v4139
        %v4172 = vpack.c.b16 %v4140, %v4140
        %v4173 = vpack.c.b16 %v4141, %v4141
        %v4174 = vpack.c.b16 %v4142, %v4142
        %v4175 = vpack.c.b16 %v4143, %v4143
        %v4176 = vpack.c.b16 %v4144, %v4144
        %v4177 = vpack.c.b16 %v4145, %v4145
        %v4178 = vpack.c.b16 %v4146, %v4146
        %v4179 = vpack.c.b16 %v4147, %v4147
        %v4180 = vpack.c.b16 %v4148, %v4148
        %v4181 = vpack.c.b16 %v4149, %v4149
        %v4182 = vpack.c.b16 %v4150, %v4150
        %v4183 = vpack.c.b16 %v4151, %v4151
        %v4184 = vpack.c.b16 %v4152, %v4152
        %v4185 = vpack.c.b16 %v4153, %v4153
        %v4187 = vshrl.u32 %v4154, 16
        %v4189 = vrot.slane %v4187, 7
        %v4190 = vshll.u32 %v4154, 16
        %v4192 = vor.u32 %v4189, %v4190
        %v4193 = vrot.slane %v4189, 4
        %v4195 = vshrl.u32 %v4155, 16
        %v4197 = vrot.slane %v4195, 7
        %v4198 = vshll.u32 %v4155, 16
        %v4200 = vor.u32 %v4197, %v4198
        %v4201 = vsel %vm648, %v4193, %v4200
        %v4202 = vrot.slane %v4197, 4
        %v4204 = vshrl.u32 %v4156, 16
        %v4206 = vrot.slane %v4204, 7
        %v4207 = vshll.u32 %v4156, 16
        %v4209 = vor.u32 %v4206, %v4207
        %v4210 = vrot.slane %v4206, 4
        %v4212 = vshrl.u32 %v4157, 16
        %v4214 = vrot.slane %v4212, 7
        %v4215 = vshll.u32 %v4157, 16
        %v4217 = vor.u32 %v4214, %v4215
        %v4218 = vsel %vm648, %v4210, %v4217
        %v4219 = vrot.slane %v4214, 4
        %v4221 = vshrl.u32 %v4158, 16
        %v4223 = vrot.slane %v4221, 7
        %v4224 = vshll.u32 %v4158, 16
        %v4226 = vor.u32 %v4223, %v4224
        %v4227 = vrot.slane %v4223, 4
        %v4229 = vshrl.u32 %v4159, 16
        %v4231 = vrot.slane %v4229, 7
        %v4232 = vshll.u32 %v4159, 16
        %v4234 = vor.u32 %v4231, %v4232
        %v4235 = vsel %vm648, %v4227, %v4234
        %v4236 = vrot.slane %v4231, 4
        %v4238 = vshrl.u32 %v4160, 16
        %v4240 = vrot.slane %v4238, 7
        %v4241 = vshll.u32 %v4160, 16
        %v4243 = vor.u32 %v4240, %v4241
        %v4244 = vrot.slane %v4240, 4
        %v4246 = vshrl.u32 %v4161, 16
        %v4248 = vrot.slane %v4246, 7
        %v4249 = vshll.u32 %v4161, 16
        %v4251 = vor.u32 %v4248, %v4249
        %v4252 = vsel %vm648, %v4244, %v4251
        %v4253 = vrot.slane %v4248, 4
        %v4255 = vshrl.u32 %v4162, 16
        %v4257 = vrot.slane %v4255, 7
        %v4258 = vshll.u32 %v4162, 16
        %v4260 = vor.u32 %v4257, %v4258
        %v4261 = vrot.slane %v4257, 4
        %v4263 = vshrl.u32 %v4163, 16
        %v4265 = vrot.slane %v4263, 7
        %v4266 = vshll.u32 %v4163, 16
        %v4268 = vor.u32 %v4265, %v4266
        %v4269 = vsel %vm648, %v4261, %v4268
        %v4270 = vrot.slane %v4265, 4
        %v4272 = vshrl.u32 %v4164, 16
        %v4274 = vrot.slane %v4272, 7
        %v4275 = vshll.u32 %v4164, 16
        %v4277 = vor.u32 %v4274, %v4275
        %v4278 = vrot.slane %v4274, 4
        %v4280 = vshrl.u32 %v4165, 16
        %v4282 = vrot.slane %v4280, 7
        %v4283 = vshll.u32 %v4165, 16
        %v4285 = vor.u32 %v4282, %v4283
        %v4286 = vsel %vm648, %v4278, %v4285
        %v4287 = vrot.slane %v4282, 4
        %v4289 = vshrl.u32 %v4166, 16
        %v4291 = vrot.slane %v4289, 7
        %v4292 = vshll.u32 %v4166, 16
        %v4294 = vor.u32 %v4291, %v4292
        %v4295 = vrot.slane %v4291, 4
        %v4297 = vshrl.u32 %v4167, 16
        %v4299 = vrot.slane %v4297, 7
        %v4300 = vshll.u32 %v4167, 16
        %v4302 = vor.u32 %v4299, %v4300
        %v4303 = vsel %vm648, %v4295, %v4302
        %v4304 = vrot.slane %v4299, 4
        %v4306 = vshrl.u32 %v4168, 16
        %v4308 = vrot.slane %v4306, 7
        %v4309 = vshll.u32 %v4168, 16
        %v4311 = vor.u32 %v4308, %v4309
        %v4312 = vrot.slane %v4308, 4
        %v4314 = vshrl.u32 %v4169, 16
        %v4316 = vrot.slane %v4314, 7
        %v4317 = vshll.u32 %v4169, 16
        %v4319 = vor.u32 %v4316, %v4317
        %v4320 = vsel %vm648, %v4312, %v4319
        %v4321 = vrot.slane %v4316, 4
        %v4323 = vshrl.u32 %v4170, 16
        %v4325 = vrot.slane %v4323, 7
        %v4326 = vshll.u32 %v4170, 16
        %v4328 = vor.u32 %v4325, %v4326
        %v4329 = vrot.slane %v4325, 4
        %v4331 = vshrl.u32 %v4171, 16
        %v4333 = vrot.slane %v4331, 7
        %v4334 = vshll.u32 %v4171, 16
        %v4336 = vor.u32 %v4333, %v4334
        %v4337 = vsel %vm648, %v4329, %v4336
        %v4338 = vrot.slane %v4333, 4
        %v4340 = vshrl.u32 %v4172, 16
        %v4342 = vrot.slane %v4340, 7
        %v4343 = vshll.u32 %v4172, 16
        %v4345 = vor.u32 %v4342, %v4343
        %v4346 = vrot.slane %v4342, 4
        %v4348 = vshrl.u32 %v4173, 16
        %v4350 = vrot.slane %v4348, 7
        %v4351 = vshll.u32 %v4173, 16
        %v4353 = vor.u32 %v4350, %v4351
        %v4354 = vsel %vm648, %v4346, %v4353
        %v4355 = vrot.slane %v4350, 4
        %v4357 = vshrl.u32 %v4174, 16
        %v4359 = vrot.slane %v4357, 7
        %v4360 = vshll.u32 %v4174, 16
        %v4362 = vor.u32 %v4359, %v4360
        %v4363 = vrot.slane %v4359, 4
        %v4365 = vshrl.u32 %v4175, 16
        %v4367 = vrot.slane %v4365, 7
        %v4368 = vshll.u32 %v4175, 16
        %v4370 = vor.u32 %v4367, %v4368
        %v4371 = vsel %vm648, %v4363, %v4370
        %v4372 = vrot.slane %v4367, 4
        %v4374 = vshrl.u32 %v4176, 16
        %v4376 = vrot.slane %v4374, 7
        %v4377 = vshll.u32 %v4176, 16
        %v4379 = vor.u32 %v4376, %v4377
        %v4380 = vrot.slane %v4376, 4
        %v4382 = vshrl.u32 %v4177, 16
        %v4384 = vrot.slane %v4382, 7
        %v4385 = vshll.u32 %v4177, 16
        %v4387 = vor.u32 %v4384, %v4385
        %v4388 = vsel %vm648, %v4380, %v4387
        %v4389 = vrot.slane %v4384, 4
        %v4391 = vshrl.u32 %v4178, 16
        %v4393 = vrot.slane %v4391, 7
        %v4394 = vshll.u32 %v4178, 16
        %v4396 = vor.u32 %v4393, %v4394
        %v4397 = vrot.slane %v4393, 4
        %v4399 = vshrl.u32 %v4179, 16
        %v4401 = vrot.slane %v4399, 7
        %v4402 = vshll.u32 %v4179, 16
        %v4404 = vor.u32 %v4401, %v4402
        %v4405 = vsel %vm648, %v4397, %v4404
        %v4406 = vrot.slane %v4401, 4
        %v4408 = vshrl.u32 %v4180, 16
        %v4410 = vrot.slane %v4408, 7
        %v4411 = vshll.u32 %v4180, 16
        %v4413 = vor.u32 %v4410, %v4411
        %v4414 = vrot.slane %v4410, 4
        %v4416 = vshrl.u32 %v4181, 16
        %v4418 = vrot.slane %v4416, 7
        %v4419 = vshll.u32 %v4181, 16
        %v4421 = vor.u32 %v4418, %v4419
        %v4422 = vsel %vm648, %v4414, %v4421
        %v4423 = vrot.slane %v4418, 4
        %v4425 = vshrl.u32 %v4182, 16
        %v4427 = vrot.slane %v4425, 7
        %v4428 = vshll.u32 %v4182, 16
        %v4430 = vor.u32 %v4427, %v4428
        %v4431 = vrot.slane %v4427, 4
        %v4433 = vshrl.u32 %v4183, 16
        %v4435 = vrot.slane %v4433, 7
        %v4436 = vshll.u32 %v4183, 16
        %v4438 = vor.u32 %v4435, %v4436
        %v4439 = vsel %vm648, %v4431, %v4438
        %v4440 = vrot.slane %v4435, 4
        %v4442 = vshrl.u32 %v4184, 16
        %v4444 = vrot.slane %v4442, 7
        %v4445 = vshll.u32 %v4184, 16
        %v4447 = vor.u32 %v4444, %v4445
        %v4448 = vrot.slane %v4444, 4
        %v4450 = vshrl.u32 %v4185, 16
        %v4452 = vrot.slane %v4450, 7
        %v4453 = vshll.u32 %v4185, 16
        %v4455 = vor.u32 %v4452, %v4453
        %v4456 = vsel %vm648, %v4448, %v4455
        %v4457 = vrot.slane %v4452, 4
        %v4506 = vsel %vm970, %v4192, %v1147
        %4507 = vst [vmem:[%s417] sm:$0xf] %v4506
        %4508 = vst [vmem:[%s417 + $0x4] sm:$0xf] %v4201
        %v4509 = vld [vmem:[%s417 + $0x8] sm:$0x1]
        %v4510 = vsel %vm420, %v4202, %v4509
        %4511 = vst [vmem:[%s417 + $0x8] sm:$0x1] %v4510
        %v4512 = vld [vmem:[%s417 + $0xc] sm:$0xf]
        %v4513 = vsel %vm970, %v4209, %v4512
        %4514 = vst [vmem:[%s417 + $0xc] sm:$0xf] %v4513
        %4515 = vst [vmem:[%s417 + $0x10] sm:$0xf] %v4218
        %v4516 = vld [vmem:[%s417 + $0x14] sm:$0x1]
        %v4517 = vsel %vm420, %v4219, %v4516
        %4518 = vst [vmem:[%s417 + $0x14] sm:$0x1] %v4517
        %v4519 = vld [vmem:[%s417 + $0x18] sm:$0xf]
        %v4520 = vsel %vm970, %v4226, %v4519
        %4521 = vst [vmem:[%s417 + $0x18] sm:$0xf] %v4520
        %4522 = vst [vmem:[%s417 + $0x1c] sm:$0xf] %v4235
        %v4523 = vld [vmem:[%s417 + $0x20] sm:$0x1]
        %v4524 = vsel %vm420, %v4236, %v4523
        %4525 = vst [vmem:[%s417 + $0x20] sm:$0x1] %v4524
        %v4526 = vld [vmem:[%s417 + $0x24] sm:$0xf]
        %v4527 = vsel %vm970, %v4243, %v4526
        %4528 = vst [vmem:[%s417 + $0x24] sm:$0xf] %v4527
        %4529 = vst [vmem:[%s417 + $0x28] sm:$0xf] %v4252
        %v4530 = vld [vmem:[%s417 + $0x2c] sm:$0x1]
        %v4531 = vsel %vm420, %v4253, %v4530
        %4532 = vst [vmem:[%s417 + $0x2c] sm:$0x1] %v4531
        %v4533 = vld [vmem:[%s417 + $0x30] sm:$0xf]
        %v4534 = vsel %vm970, %v4260, %v4533
        %4535 = vst [vmem:[%s417 + $0x30] sm:$0xf] %v4534
        %4536 = vst [vmem:[%s417 + $0x34] sm:$0xf] %v4269
        %v4537 = vld [vmem:[%s417 + $0x38] sm:$0x1]
        %v4538 = vsel %vm420, %v4270, %v4537
        %4539 = vst [vmem:[%s417 + $0x38] sm:$0x1] %v4538
        %v4540 = vld [vmem:[%s417 + $0x3c] sm:$0xf]
        %v4541 = vsel %vm970, %v4277, %v4540
        %4542 = vst [vmem:[%s417 + $0x3c] sm:$0xf] %v4541
        %4543 = vst [vmem:[%s417 + $0x40] sm:$0xf] %v4286
        %v4544 = vld [vmem:[%s417 + $0x44] sm:$0x1]
        %v4545 = vsel %vm420, %v4287, %v4544
        %4546 = vst [vmem:[%s417 + $0x44] sm:$0x1] %v4545
        %v4547 = vld [vmem:[%s417 + $0x48] sm:$0xf]
        %v4548 = vsel %vm970, %v4294, %v4547
        %4549 = vst [vmem:[%s417 + $0x48] sm:$0xf] %v4548
        %4550 = vst [vmem:[%s417 + $0x4c] sm:$0xf] %v4303
        %v4551 = vld [vmem:[%s417 + $0x50] sm:$0x1]
        %v4552 = vsel %vm420, %v4304, %v4551
        %4553 = vst [vmem:[%s417 + $0x50] sm:$0x1] %v4552
        %v4554 = vld [vmem:[%s417 + $0x54] sm:$0xf]
        %v4555 = vsel %vm970, %v4311, %v4554
        %4556 = vst [vmem:[%s417 + $0x54] sm:$0xf] %v4555
        %4557 = vst [vmem:[%s417 + $0x58] sm:$0xf] %v4320
        %v4558 = vld [vmem:[%s417 + $0x5c] sm:$0x1]
        %v4559 = vsel %vm420, %v4321, %v4558
        %4560 = vst [vmem:[%s417 + $0x5c] sm:$0x1] %v4559
        %v4561 = vld [vmem:[%s417 + $0x60] sm:$0xf]
        %v4562 = vsel %vm970, %v4328, %v4561
        %4563 = vst [vmem:[%s417 + $0x60] sm:$0xf] %v4562
        %4564 = vst [vmem:[%s417 + $0x64] sm:$0xf] %v4337
        %v4565 = vld [vmem:[%s417 + $0x68] sm:$0x1]
        %v4566 = vsel %vm420, %v4338, %v4565
        %4567 = vst [vmem:[%s417 + $0x68] sm:$0x1] %v4566
        %v4568 = vld [vmem:[%s417 + $0x6c] sm:$0xf]
        %v4569 = vsel %vm970, %v4345, %v4568
        %4570 = vst [vmem:[%s417 + $0x6c] sm:$0xf] %v4569
        %4571 = vst [vmem:[%s417 + $0x70] sm:$0xf] %v4354
        %v4572 = vld [vmem:[%s417 + $0x74] sm:$0x1]
        %v4573 = vsel %vm420, %v4355, %v4572
        %4574 = vst [vmem:[%s417 + $0x74] sm:$0x1] %v4573
        %v4575 = vld [vmem:[%s417 + $0x78] sm:$0xf]
        %v4576 = vsel %vm970, %v4362, %v4575
        %4577 = vst [vmem:[%s417 + $0x78] sm:$0xf] %v4576
        %4578 = vst [vmem:[%s417 + $0x7c] sm:$0xf] %v4371
        %v4579 = vld [vmem:[%s417 + $0x80] sm:$0x1]
        %v4580 = vsel %vm420, %v4372, %v4579
        %4581 = vst [vmem:[%s417 + $0x80] sm:$0x1] %v4580
        %v4582 = vld [vmem:[%s417 + $0x84] sm:$0xf]
        %v4583 = vsel %vm970, %v4379, %v4582
        %4584 = vst [vmem:[%s417 + $0x84] sm:$0xf] %v4583
        %4585 = vst [vmem:[%s417 + $0x88] sm:$0xf] %v4388
        %v4586 = vld [vmem:[%s417 + $0x8c] sm:$0x1]
        %v4587 = vsel %vm420, %v4389, %v4586
        %4588 = vst [vmem:[%s417 + $0x8c] sm:$0x1] %v4587
        %v4589 = vld [vmem:[%s417 + $0x90] sm:$0xf]
        %v4590 = vsel %vm970, %v4396, %v4589
        %4591 = vst [vmem:[%s417 + $0x90] sm:$0xf] %v4590
        %4592 = vst [vmem:[%s417 + $0x94] sm:$0xf] %v4405
        %v4593 = vld [vmem:[%s417 + $0x98] sm:$0x1]
        %v4594 = vsel %vm420, %v4406, %v4593
        %4595 = vst [vmem:[%s417 + $0x98] sm:$0x1] %v4594
        %v4596 = vld [vmem:[%s417 + $0x9c] sm:$0xf]
        %v4597 = vsel %vm970, %v4413, %v4596
        %4598 = vst [vmem:[%s417 + $0x9c] sm:$0xf] %v4597
        %4599 = vst [vmem:[%s417 + $0xa0] sm:$0xf] %v4422
        %v4600 = vld [vmem:[%s417 + $0xa4] sm:$0x1]
        %v4601 = vsel %vm420, %v4423, %v4600
        %4602 = vst [vmem:[%s417 + $0xa4] sm:$0x1] %v4601
        %v4603 = vld [vmem:[%s417 + $0xa8] sm:$0xf]
        %v4604 = vsel %vm970, %v4430, %v4603
        %4605 = vst [vmem:[%s417 + $0xa8] sm:$0xf] %v4604
        %4606 = vst [vmem:[%s417 + $0xac] sm:$0xf] %v4439
        %v4607 = vld [vmem:[%s417 + $0xb0] sm:$0x1]
        %v4608 = vsel %vm420, %v4440, %v4607
        %4609 = vst [vmem:[%s417 + $0xb0] sm:$0x1] %v4608
        %v4610 = vld [vmem:[%s417 + $0xb4] sm:$0xf]
        %v4611 = vsel %vm970, %v4447, %v4610
        %4612 = vst [vmem:[%s417 + $0xb4] sm:$0xf] %v4611
        %4613 = vst [vmem:[%s417 + $0xb8] sm:$0xf] %v4456
        %v4614 = vld [vmem:[%s417 + $0xbc] sm:$0x1]
        %v4615 = vsel %vm420, %v4457, %v4614
        %4616 = vst [vmem:[%s417 + $0xbc] sm:$0x1] %v4615
        %v4617 = vld [vmem:[#allocation2] sm:$0xf]
        %v4618 = vld [vmem:[#allocation2 + $0x4] sm:$0xf]
        %v4619 = vld [vmem:[#allocation2 + $0xc] sm:$0xf]
        %v4620 = vld [vmem:[#allocation2 + $0x10] sm:$0xf]
        %v4621 = vld [vmem:[#allocation2 + $0x18] sm:$0xf]
        %v4622 = vld [vmem:[#allocation2 + $0x1c] sm:$0xf]
        %v4623 = vld [vmem:[#allocation2 + $0x24] sm:$0xf]
        %v4624 = vld [vmem:[#allocation2 + $0x28] sm:$0xf]
        %v4625 = vld [vmem:[#allocation2 + $0x30] sm:$0xf]
        %v4626 = vld [vmem:[#allocation2 + $0x34] sm:$0xf]
        %v4627 = vld [vmem:[#allocation2 + $0x3c] sm:$0xf]
        %v4628 = vld [vmem:[#allocation2 + $0x40] sm:$0xf]
        %v4629 = vld [vmem:[#allocation2 + $0x48] sm:$0xf]
        %v4630 = vld [vmem:[#allocation2 + $0x4c] sm:$0xf]
        %v4631 = vld [vmem:[#allocation2 + $0x54] sm:$0xf]
        %v4632 = vld [vmem:[#allocation2 + $0x58] sm:$0xf]
        %v4633 = vld [vmem:[#allocation2 + $0x60] sm:$0xf]
        %v4634 = vld [vmem:[#allocation2 + $0x64] sm:$0xf]
        %v4635 = vld [vmem:[#allocation2 + $0x6c] sm:$0xf]
        %v4636 = vld [vmem:[#allocation2 + $0x70] sm:$0xf]
        %v4637 = vld [vmem:[#allocation2 + $0x78] sm:$0xf]
        %v4638 = vld [vmem:[#allocation2 + $0x7c] sm:$0xf]
        %v4639 = vld [vmem:[#allocation2 + $0x84] sm:$0xf]
        %v4640 = vld [vmem:[#allocation2 + $0x88] sm:$0xf]
        %v4641 = vld [vmem:[#allocation2 + $0x90] sm:$0xf]
        %v4642 = vld [vmem:[#allocation2 + $0x94] sm:$0xf]
        %v4643 = vld [vmem:[#allocation2 + $0x9c] sm:$0xf]
        %v4644 = vld [vmem:[#allocation2 + $0xa0] sm:$0xf]
        %v4645 = vld [vmem:[#allocation2 + $0xa8] sm:$0xf]
        %v4646 = vld [vmem:[#allocation2 + $0xac] sm:$0xf]
        %v4647 = vld [vmem:[#allocation2 + $0xb4] sm:$0xf]
        %v4648 = vld [vmem:[#allocation2 + $0xb8] sm:$0xf]
        %v4649 = vld [vmem:[#allocation2 + $0x8] sm:$0x1]
        %v4650 = vld [vmem:[#allocation2 + $0x14] sm:$0x1]
        %v4651 = vld [vmem:[#allocation2 + $0x20] sm:$0x1]
        %v4652 = vld [vmem:[#allocation2 + $0x2c] sm:$0x1]
        %v4653 = vld [vmem:[#allocation2 + $0x38] sm:$0x1]
        %v4654 = vld [vmem:[#allocation2 + $0x44] sm:$0x1]
        %v4655 = vld [vmem:[#allocation2 + $0x50] sm:$0x1]
        %v4656 = vld [vmem:[#allocation2 + $0x5c] sm:$0x1]
        %v4657 = vld [vmem:[#allocation2 + $0x68] sm:$0x1]
        %v4658 = vld [vmem:[#allocation2 + $0x74] sm:$0x1]
        %v4659 = vld [vmem:[#allocation2 + $0x80] sm:$0x1]
        %v4660 = vld [vmem:[#allocation2 + $0x8c] sm:$0x1]
        %v4661 = vld [vmem:[#allocation2 + $0x98] sm:$0x1]
        %v4662 = vld [vmem:[#allocation2 + $0xa4] sm:$0x1]
        %v4663 = vld [vmem:[#allocation2 + $0xb0] sm:$0x1]
        %v4664 = vld [vmem:[#allocation2 + $0xbc] sm:$0x1]
        %v4665 = vld [vmem:[#allocation2] sm:$0xe]
        %v4666 = vld [vmem:[#allocation2 + $0xc] sm:$0xe]
        %v4667 = vld [vmem:[#allocation2 + $0x18] sm:$0xe]
        %v4668 = vld [vmem:[#allocation2 + $0x24] sm:$0xe]
        %v4669 = vld [vmem:[#allocation2 + $0x30] sm:$0xe]
        %v4670 = vld [vmem:[#allocation2 + $0x3c] sm:$0xe]
        %v4671 = vld [vmem:[#allocation2 + $0x48] sm:$0xe]
        %v4672 = vld [vmem:[#allocation2 + $0x54] sm:$0xe]
        %v4673 = vld [vmem:[#allocation2 + $0x60] sm:$0xe]
        %v4674 = vld [vmem:[#allocation2 + $0x6c] sm:$0xe]
        %v4675 = vld [vmem:[#allocation2 + $0x78] sm:$0xe]
        %v4676 = vld [vmem:[#allocation2 + $0x84] sm:$0xe]
        %v4677 = vld [vmem:[#allocation2 + $0x90] sm:$0xe]
        %v4678 = vld [vmem:[#allocation2 + $0x9c] sm:$0xe]
        %v4679 = vld [vmem:[#allocation2 + $0xa8] sm:$0xe]
        %v4680 = vld [vmem:[#allocation2 + $0xb4] sm:$0xe]
        %v4681 = vld [vmem:[%s417] sm:$0xf]
        %v4682 = vld [vmem:[%s417 + $0x4] sm:$0xf]
        %v4683 = vld [vmem:[%s417 + $0xc] sm:$0xf]
        %v4684 = vld [vmem:[%s417 + $0x10] sm:$0xf]
        %v4685 = vld [vmem:[%s417 + $0x18] sm:$0xf]
        %v4686 = vld [vmem:[%s417 + $0x1c] sm:$0xf]
        %v4687 = vld [vmem:[%s417 + $0x24] sm:$0xf]
        %v4688 = vld [vmem:[%s417 + $0x28] sm:$0xf]
        %v4689 = vld [vmem:[%s417 + $0x30] sm:$0xf]
        %v4690 = vld [vmem:[%s417 + $0x34] sm:$0xf]
        %v4691 = vld [vmem:[%s417 + $0x3c] sm:$0xf]
        %v4692 = vld [vmem:[%s417 + $0x40] sm:$0xf]
        %v4693 = vld [vmem:[%s417 + $0x48] sm:$0xf]
        %v4694 = vld [vmem:[%s417 + $0x4c] sm:$0xf]
        %v4695 = vld [vmem:[%s417 + $0x54] sm:$0xf]
        %v4696 = vld [vmem:[%s417 + $0x58] sm:$0xf]
        %v4697 = vld [vmem:[%s417 + $0x60] sm:$0xf]
        %v4698 = vld [vmem:[%s417 + $0x64] sm:$0xf]
        %v4699 = vld [vmem:[%s417 + $0x6c] sm:$0xf]
        %v4700 = vld [vmem:[%s417 + $0x70] sm:$0xf]
        %v4701 = vld [vmem:[%s417 + $0x78] sm:$0xf]
        %v4702 = vld [vmem:[%s417 + $0x7c] sm:$0xf]
        %v4703 = vld [vmem:[%s417 + $0x84] sm:$0xf]
        %v4704 = vld [vmem:[%s417 + $0x88] sm:$0xf]
        %v4705 = vld [vmem:[%s417 + $0x90] sm:$0xf]
        %v4706 = vld [vmem:[%s417 + $0x94] sm:$0xf]
        %v4707 = vld [vmem:[%s417 + $0x9c] sm:$0xf]
        %v4708 = vld [vmem:[%s417 + $0xa0] sm:$0xf]
        %v4709 = vld [vmem:[%s417 + $0xa8] sm:$0xf]
        %v4710 = vld [vmem:[%s417 + $0xac] sm:$0xf]
        %v4711 = vld [vmem:[%s417 + $0xb4] sm:$0xf]
        %v4712 = vld [vmem:[%s417 + $0xb8] sm:$0xf]
        %v4713 = vld [vmem:[%s417 + $0x8] sm:$0x1]
        %v4714 = vld [vmem:[%s417 + $0x14] sm:$0x1]
        %v4715 = vld [vmem:[%s417 + $0x20] sm:$0x1]
        %v4716 = vld [vmem:[%s417 + $0x2c] sm:$0x1]
        %v4717 = vld [vmem:[%s417 + $0x38] sm:$0x1]
        %v4718 = vld [vmem:[%s417 + $0x44] sm:$0x1]
        %v4719 = vld [vmem:[%s417 + $0x50] sm:$0x1]
        %v4720 = vld [vmem:[%s417 + $0x5c] sm:$0x1]
        %v4721 = vld [vmem:[%s417 + $0x68] sm:$0x1]
        %v4722 = vld [vmem:[%s417 + $0x74] sm:$0x1]
        %v4723 = vld [vmem:[%s417 + $0x80] sm:$0x1]
        %v4724 = vld [vmem:[%s417 + $0x8c] sm:$0x1]
        %v4725 = vld [vmem:[%s417 + $0x98] sm:$0x1]
        %v4726 = vld [vmem:[%s417 + $0xa4] sm:$0x1]
        %v4727 = vld [vmem:[%s417 + $0xb0] sm:$0x1]
        %v4728 = vld [vmem:[%s417 + $0xbc] sm:$0x1]
        %v4729 = vld [vmem:[%s417] sm:$0xe]
        %v4730 = vld [vmem:[%s417 + $0xc] sm:$0xe]
        %v4731 = vld [vmem:[%s417 + $0x18] sm:$0xe]
        %v4732 = vld [vmem:[%s417 + $0x24] sm:$0xe]
        %v4733 = vld [vmem:[%s417 + $0x30] sm:$0xe]
        %v4734 = vld [vmem:[%s417 + $0x3c] sm:$0xe]
        %v4735 = vld [vmem:[%s417 + $0x48] sm:$0xe]
        %v4736 = vld [vmem:[%s417 + $0x54] sm:$0xe]
        %v4737 = vld [vmem:[%s417 + $0x60] sm:$0xe]
        %v4738 = vld [vmem:[%s417 + $0x6c] sm:$0xe]
        %v4739 = vld [vmem:[%s417 + $0x78] sm:$0xe]
        %v4740 = vld [vmem:[%s417 + $0x84] sm:$0xe]
        %v4741 = vld [vmem:[%s417 + $0x90] sm:$0xe]
        %v4742 = vld [vmem:[%s417 + $0x9c] sm:$0xe]
        %v4743 = vld [vmem:[%s417 + $0xa8] sm:$0xe]
        %v4744 = vld [vmem:[%s417 + $0xb4] sm:$0xe]
        %v4745 = vld [vmem:[%s1211] sm:$0xf]
        %v4746 = vld [vmem:[%s1211 + $0x4] sm:$0xf]
        %v4747 = vld [vmem:[%s1211 + $0xc] sm:$0xf]
        %v4748 = vld [vmem:[%s1211 + $0x10] sm:$0xf]
        %v4749 = vld [vmem:[%s1211 + $0x18] sm:$0xf]
        %v4750 = vld [vmem:[%s1211 + $0x1c] sm:$0xf]
        %v4751 = vld [vmem:[%s1211 + $0x24] sm:$0xf]
        %v4752 = vld [vmem:[%s1211 + $0x28] sm:$0xf]
        %v4753 = vld [vmem:[%s1211 + $0x30] sm:$0xf]
        %v4754 = vld [vmem:[%s1211 + $0x34] sm:$0xf]
        %v4755 = vld [vmem:[%s1211 + $0x3c] sm:$0xf]
        %v4756 = vld [vmem:[%s1211 + $0x40] sm:$0xf]
        %v4757 = vld [vmem:[%s1211 + $0x48] sm:$0xf]
        %v4758 = vld [vmem:[%s1211 + $0x4c] sm:$0xf]
        %v4759 = vld [vmem:[%s1211 + $0x54] sm:$0xf]
        %v4760 = vld [vmem:[%s1211 + $0x58] sm:$0xf]
        %v4761 = vld [vmem:[%s1211 + $0x60] sm:$0xf]
        %v4762 = vld [vmem:[%s1211 + $0x64] sm:$0xf]
        %v4763 = vld [vmem:[%s1211 + $0x6c] sm:$0xf]
        %v4764 = vld [vmem:[%s1211 + $0x70] sm:$0xf]
        %v4765 = vld [vmem:[%s1211 + $0x78] sm:$0xf]
        %v4766 = vld [vmem:[%s1211 + $0x7c] sm:$0xf]
        %v4767 = vld [vmem:[%s1211 + $0x84] sm:$0xf]
        %v4768 = vld [vmem:[%s1211 + $0x88] sm:$0xf]
        %v4769 = vld [vmem:[%s1211 + $0x90] sm:$0xf]
        %v4770 = vld [vmem:[%s1211 + $0x94] sm:$0xf]
        %v4771 = vld [vmem:[%s1211 + $0x9c] sm:$0xf]
        %v4772 = vld [vmem:[%s1211 + $0xa0] sm:$0xf]
        %v4773 = vld [vmem:[%s1211 + $0xa8] sm:$0xf]
        %v4774 = vld [vmem:[%s1211 + $0xac] sm:$0xf]
        %v4775 = vld [vmem:[%s1211 + $0xb4] sm:$0xf]
        %v4776 = vld [vmem:[%s1211 + $0xb8] sm:$0xf]
        %v4777 = vld [vmem:[%s1211 + $0x8] sm:$0x1]
        %v4778 = vld [vmem:[%s1211 + $0x14] sm:$0x1]
        %v4779 = vld [vmem:[%s1211 + $0x20] sm:$0x1]
        %v4780 = vld [vmem:[%s1211 + $0x2c] sm:$0x1]
        %v4781 = vld [vmem:[%s1211 + $0x38] sm:$0x1]
        %v4782 = vld [vmem:[%s1211 + $0x44] sm:$0x1]
        %v4783 = vld [vmem:[%s1211 + $0x50] sm:$0x1]
        %v4784 = vld [vmem:[%s1211 + $0x5c] sm:$0x1]
        %v4785 = vld [vmem:[%s1211 + $0x68] sm:$0x1]
        %v4786 = vld [vmem:[%s1211 + $0x74] sm:$0x1]
        %v4787 = vld [vmem:[%s1211 + $0x80] sm:$0x1]
        %v4788 = vld [vmem:[%s1211 + $0x8c] sm:$0x1]
        %v4789 = vld [vmem:[%s1211 + $0x98] sm:$0x1]
        %v4790 = vld [vmem:[%s1211 + $0xa4] sm:$0x1]
        %v4791 = vld [vmem:[%s1211 + $0xb0] sm:$0x1]
        %v4792 = vld [vmem:[%s1211 + $0xbc] sm:$0x1]
        %v4793 = vld [vmem:[%s1211] sm:$0xe]
        %v4794 = vld [vmem:[%s1211 + $0xc] sm:$0xe]
        %v4795 = vld [vmem:[%s1211 + $0x18] sm:$0xe]
        %v4796 = vld [vmem:[%s1211 + $0x24] sm:$0xe]
        %v4797 = vld [vmem:[%s1211 + $0x30] sm:$0xe]
        %v4798 = vld [vmem:[%s1211 + $0x3c] sm:$0xe]
        %v4799 = vld [vmem:[%s1211 + $0x48] sm:$0xe]
        %v4800 = vld [vmem:[%s1211 + $0x54] sm:$0xe]
        %v4801 = vld [vmem:[%s1211 + $0x60] sm:$0xe]
        %v4802 = vld [vmem:[%s1211 + $0x6c] sm:$0xe]
        %v4803 = vld [vmem:[%s1211 + $0x78] sm:$0xe]
        %v4804 = vld [vmem:[%s1211 + $0x84] sm:$0xe]
        %v4805 = vld [vmem:[%s1211 + $0x90] sm:$0xe]
        %v4806 = vld [vmem:[%s1211 + $0x9c] sm:$0xe]
        %v4807 = vld [vmem:[%s1211 + $0xa8] sm:$0xe]
        %v4808 = vld [vmem:[%s1211 + $0xb4] sm:$0xe]
        %v4841 = vunpack.c.l.b16 %v4617
        %v4842 = vunpack.c.l.b16 %v4618
        %v4843 = vunpack.c.l.b16 %v4619
        %v4844 = vunpack.c.l.b16 %v4620
        %v4845 = vunpack.c.l.b16 %v4621
        %v4846 = vunpack.c.l.b16 %v4622
        %v4847 = vunpack.c.l.b16 %v4623
        %v4848 = vunpack.c.l.b16 %v4624
        %v4849 = vunpack.c.l.b16 %v4625
        %v4850 = vunpack.c.l.b16 %v4626
        %v4851 = vunpack.c.l.b16 %v4627
        %v4852 = vunpack.c.l.b16 %v4628
        %v4853 = vunpack.c.l.b16 %v4629
        %v4854 = vunpack.c.l.b16 %v4630
        %v4855 = vunpack.c.l.b16 %v4631
        %v4856 = vunpack.c.l.b16 %v4632
        %v4857 = vunpack.c.l.b16 %v4633
        %v4858 = vunpack.c.l.b16 %v4634
        %v4859 = vunpack.c.l.b16 %v4635
        %v4860 = vunpack.c.l.b16 %v4636
        %v4861 = vunpack.c.l.b16 %v4637
        %v4862 = vunpack.c.l.b16 %v4638
        %v4863 = vunpack.c.l.b16 %v4639
        %v4864 = vunpack.c.l.b16 %v4640
        %v4865 = vunpack.c.l.b16 %v4641
        %v4866 = vunpack.c.l.b16 %v4642
        %v4867 = vunpack.c.l.b16 %v4643
        %v4868 = vunpack.c.l.b16 %v4644
        %v4869 = vunpack.c.l.b16 %v4645
        %v4870 = vunpack.c.l.b16 %v4646
        %v4871 = vunpack.c.l.b16 %v4647
        %v4872 = vunpack.c.l.b16 %v4648
        %v4873 = vpack.c.b16 %v4842, %v4841
        %v4874 = vpack.c.b16 %v4844, %v4843
        %v4875 = vpack.c.b16 %v4846, %v4845
        %v4876 = vpack.c.b16 %v4848, %v4847
        %v4877 = vpack.c.b16 %v4850, %v4849
        %v4878 = vpack.c.b16 %v4852, %v4851
        %v4879 = vpack.c.b16 %v4854, %v4853
        %v4880 = vpack.c.b16 %v4856, %v4855
        %v4881 = vpack.c.b16 %v4858, %v4857
        %v4882 = vpack.c.b16 %v4860, %v4859
        %v4883 = vpack.c.b16 %v4862, %v4861
        %v4884 = vpack.c.b16 %v4864, %v4863
        %v4885 = vpack.c.b16 %v4866, %v4865
        %v4886 = vpack.c.b16 %v4868, %v4867
        %v4887 = vpack.c.b16 %v4870, %v4869
        %v4888 = vpack.c.b16 %v4872, %v4871
        %v4921 = vunpack.c.l.b16 %v4649
        %v4922 = vunpack.c.l.b16 %v4650
        %v4923 = vunpack.c.l.b16 %v4651
        %v4924 = vunpack.c.l.b16 %v4652
        %v4925 = vunpack.c.l.b16 %v4653
        %v4926 = vunpack.c.l.b16 %v4654
        %v4927 = vunpack.c.l.b16 %v4655
        %v4928 = vunpack.c.l.b16 %v4656
        %v4929 = vunpack.c.l.b16 %v4657
        %v4930 = vunpack.c.l.b16 %v4658
        %v4931 = vunpack.c.l.b16 %v4659
        %v4932 = vunpack.c.l.b16 %v4660
        %v4933 = vunpack.c.l.b16 %v4661
        %v4934 = vunpack.c.l.b16 %v4662
        %v4935 = vunpack.c.l.b16 %v4663
        %v4936 = vunpack.c.l.b16 %v4664
        %v4937 = vpack.c.b16 %v4921, %v4921
        %v4938 = vpack.c.b16 %v4922, %v4922
        %v4939 = vpack.c.b16 %v4923, %v4923
        %v4940 = vpack.c.b16 %v4924, %v4924
        %v4941 = vpack.c.b16 %v4925, %v4925
        %v4942 = vpack.c.b16 %v4926, %v4926
        %v4943 = vpack.c.b16 %v4927, %v4927
        %v4944 = vpack.c.b16 %v4928, %v4928
        %v4945 = vpack.c.b16 %v4929, %v4929
        %v4946 = vpack.c.b16 %v4930, %v4930
        %v4947 = vpack.c.b16 %v4931, %v4931
        %v4948 = vpack.c.b16 %v4932, %v4932
        %v4949 = vpack.c.b16 %v4933, %v4933
        %v4950 = vpack.c.b16 %v4934, %v4934
        %v4951 = vpack.c.b16 %v4935, %v4935
        %v4952 = vpack.c.b16 %v4936, %v4936
        %v4954 = vshrl.u32 %v4873, 16
        %v4956 = vshll.u32 %v4873, 16
        %v4958 = vrot.slane %v4956, 1
        %v4959 = vor.u32 %v4954, %v4958
        %v4961 = vshll.u32 %v4937, 16
        %v4963 = vrot.slane %v4961, 1
        %v4964 = vsel %vm1420, %v4959, %v4963
        %v4966 = vshrl.u32 %v4874, 16
        %v4968 = vshll.u32 %v4874, 16
        %v4970 = vrot.slane %v4968, 1
        %v4971 = vor.u32 %v4966, %v4970
        %v4973 = vshll.u32 %v4938, 16
        %v4975 = vrot.slane %v4973, 1
        %v4976 = vsel %vm1420, %v4971, %v4975
        %v4978 = vshrl.u32 %v4875, 16
        %v4980 = vshll.u32 %v4875, 16
        %v4982 = vrot.slane %v4980, 1
        %v4983 = vor.u32 %v4978, %v4982
        %v4985 = vshll.u32 %v4939, 16
        %v4987 = vrot.slane %v4985, 1
        %v4988 = vsel %vm1420, %v4983, %v4987
        %v4990 = vshrl.u32 %v4876, 16
        %v4992 = vshll.u32 %v4876, 16
        %v4994 = vrot.slane %v4992, 1
        %v4995 = vor.u32 %v4990, %v4994
        %v4997 = vshll.u32 %v4940, 16
        %v4999 = vrot.slane %v4997, 1
        %v5000 = vsel %vm1420, %v4995, %v4999
        %v5002 = vshrl.u32 %v4877, 16
        %v5004 = vshll.u32 %v4877, 16
        %v5006 = vrot.slane %v5004, 1
        %v5007 = vor.u32 %v5002, %v5006
        %v5009 = vshll.u32 %v4941, 16
        %v5011 = vrot.slane %v5009, 1
        %v5012 = vsel %vm1420, %v5007, %v5011
        %v5014 = vshrl.u32 %v4878, 16
        %v5016 = vshll.u32 %v4878, 16
        %v5018 = vrot.slane %v5016, 1
        %v5019 = vor.u32 %v5014, %v5018
        %v5021 = vshll.u32 %v4942, 16
        %v5023 = vrot.slane %v5021, 1
        %v5024 = vsel %vm1420, %v5019, %v5023
        %v5026 = vshrl.u32 %v4879, 16
        %v5028 = vshll.u32 %v4879, 16
        %v5030 = vrot.slane %v5028, 1
        %v5031 = vor.u32 %v5026, %v5030
        %v5033 = vshll.u32 %v4943, 16
        %v5035 = vrot.slane %v5033, 1
        %v5036 = vsel %vm1420, %v5031, %v5035
        %v5038 = vshrl.u32 %v4880, 16
        %v5040 = vshll.u32 %v4880, 16
        %v5042 = vrot.slane %v5040, 1
        %v5043 = vor.u32 %v5038, %v5042
        %v5045 = vshll.u32 %v4944, 16
        %v5047 = vrot.slane %v5045, 1
        %v5048 = vsel %vm1420, %v5043, %v5047
        %v5050 = vshrl.u32 %v4881, 16
        %v5052 = vshll.u32 %v4881, 16
        %v5054 = vrot.slane %v5052, 1
        %v5055 = vor.u32 %v5050, %v5054
        %v5057 = vshll.u32 %v4945, 16
        %v5059 = vrot.slane %v5057, 1
        %v5060 = vsel %vm1420, %v5055, %v5059
        %v5062 = vshrl.u32 %v4882, 16
        %v5064 = vshll.u32 %v4882, 16
        %v5066 = vrot.slane %v5064, 1
        %v5067 = vor.u32 %v5062, %v5066
        %v5069 = vshll.u32 %v4946, 16
        %v5071 = vrot.slane %v5069, 1
        %v5072 = vsel %vm1420, %v5067, %v5071
        %v5074 = vshrl.u32 %v4883, 16
        %v5076 = vshll.u32 %v4883, 16
        %v5078 = vrot.slane %v5076, 1
        %v5079 = vor.u32 %v5074, %v5078
        %v5081 = vshll.u32 %v4947, 16
        %v5083 = vrot.slane %v5081, 1
        %v5084 = vsel %vm1420, %v5079, %v5083
        %v5086 = vshrl.u32 %v4884, 16
        %v5088 = vshll.u32 %v4884, 16
        %v5090 = vrot.slane %v5088, 1
        %v5091 = vor.u32 %v5086, %v5090
        %v5093 = vshll.u32 %v4948, 16
        %v5095 = vrot.slane %v5093, 1
        %v5096 = vsel %vm1420, %v5091, %v5095
        %v5098 = vshrl.u32 %v4885, 16
        %v5100 = vshll.u32 %v4885, 16
        %v5102 = vrot.slane %v5100, 1
        %v5103 = vor.u32 %v5098, %v5102
        %v5105 = vshll.u32 %v4949, 16
        %v5107 = vrot.slane %v5105, 1
        %v5108 = vsel %vm1420, %v5103, %v5107
        %v5110 = vshrl.u32 %v4886, 16
        %v5112 = vshll.u32 %v4886, 16
        %v5114 = vrot.slane %v5112, 1
        %v5115 = vor.u32 %v5110, %v5114
        %v5117 = vshll.u32 %v4950, 16
        %v5119 = vrot.slane %v5117, 1
        %v5120 = vsel %vm1420, %v5115, %v5119
        %v5122 = vshrl.u32 %v4887, 16
        %v5124 = vshll.u32 %v4887, 16
        %v5126 = vrot.slane %v5124, 1
        %v5127 = vor.u32 %v5122, %v5126
        %v5129 = vshll.u32 %v4951, 16
        %v5131 = vrot.slane %v5129, 1
        %v5132 = vsel %vm1420, %v5127, %v5131
        %v5134 = vshrl.u32 %v4888, 16
        %v5136 = vshll.u32 %v4888, 16
        %v5138 = vrot.slane %v5136, 1
        %v5139 = vor.u32 %v5134, %v5138
        %v5141 = vshll.u32 %v4952, 16
        %v5143 = vrot.slane %v5141, 1
        %v5144 = vsel %vm1420, %v5139, %v5143
        %v5177 = vunpack.c.l.b16 %v4665
        %v5178 = vunpack.c.l.b16 %v4666
        %v5179 = vunpack.c.l.b16 %v4667
        %v5180 = vunpack.c.l.b16 %v4668
        %v5181 = vunpack.c.l.b16 %v4669
        %v5182 = vunpack.c.l.b16 %v4670
        %v5183 = vunpack.c.l.b16 %v4671
        %v5184 = vunpack.c.l.b16 %v4672
        %v5185 = vunpack.c.l.b16 %v4673
        %v5186 = vunpack.c.l.b16 %v4674
        %v5187 = vunpack.c.l.b16 %v4675
        %v5188 = vunpack.c.l.b16 %v4676
        %v5189 = vunpack.c.l.b16 %v4677
        %v5190 = vunpack.c.l.b16 %v4678
        %v5191 = vunpack.c.l.b16 %v4679
        %v5192 = vunpack.c.l.b16 %v4680
        %v5193 = vpack.c.b16 %v4842, %v5177
        %v5194 = vpack.c.b16 %v4844, %v5178
        %v5195 = vpack.c.b16 %v4846, %v5179
        %v5196 = vpack.c.b16 %v4848, %v5180
        %v5197 = vpack.c.b16 %v4850, %v5181
        %v5198 = vpack.c.b16 %v4852, %v5182
        %v5199 = vpack.c.b16 %v4854, %v5183
        %v5200 = vpack.c.b16 %v4856, %v5184
        %v5201 = vpack.c.b16 %v4858, %v5185
        %v5202 = vpack.c.b16 %v4860, %v5186
        %v5203 = vpack.c.b16 %v4862, %v5187
        %v5204 = vpack.c.b16 %v4864, %v5188
        %v5205 = vpack.c.b16 %v4866, %v5189
        %v5206 = vpack.c.b16 %v4868, %v5190
        %v5207 = vpack.c.b16 %v4870, %v5191
        %v5208 = vpack.c.b16 %v4872, %v5192
        %v5209 = vrot.slane %v5193, 1
        %v5210 = vrot.slane %v4937, 1
        %v5211 = vsel %vm1677, %v5209, %v5210
        %v5212 = vrot.slane %v5194, 1
        %v5213 = vrot.slane %v4938, 1
        %v5214 = vsel %vm1677, %v5212, %v5213
        %v5215 = vrot.slane %v5195, 1
        %v5216 = vrot.slane %v4939, 1
        %v5217 = vsel %vm1677, %v5215, %v5216
        %v5218 = vrot.slane %v5196, 1
        %v5219 = vrot.slane %v4940, 1
        %v5220 = vsel %vm1677, %v5218, %v5219
        %v5221 = vrot.slane %v5197, 1
        %v5222 = vrot.slane %v4941, 1
        %v5223 = vsel %vm1677, %v5221, %v5222
        %v5224 = vrot.slane %v5198, 1
        %v5225 = vrot.slane %v4942, 1
        %v5226 = vsel %vm1677, %v5224, %v5225
        %v5227 = vrot.slane %v5199, 1
        %v5228 = vrot.slane %v4943, 1
        %v5229 = vsel %vm1677, %v5227, %v5228
        %v5230 = vrot.slane %v5200, 1
        %v5231 = vrot.slane %v4944, 1
        %v5232 = vsel %vm1677, %v5230, %v5231
        %v5233 = vrot.slane %v5201, 1
        %v5234 = vrot.slane %v4945, 1
        %v5235 = vsel %vm1677, %v5233, %v5234
        %v5236 = vrot.slane %v5202, 1
        %v5237 = vrot.slane %v4946, 1
        %v5238 = vsel %vm1677, %v5236, %v5237
        %v5239 = vrot.slane %v5203, 1
        %v5240 = vrot.slane %v4947, 1
        %v5241 = vsel %vm1677, %v5239, %v5240
        %v5242 = vrot.slane %v5204, 1
        %v5243 = vrot.slane %v4948, 1
        %v5244 = vsel %vm1677, %v5242, %v5243
        %v5245 = vrot.slane %v5205, 1
        %v5246 = vrot.slane %v4949, 1
        %v5247 = vsel %vm1677, %v5245, %v5246
        %v5248 = vrot.slane %v5206, 1
        %v5249 = vrot.slane %v4950, 1
        %v5250 = vsel %vm1677, %v5248, %v5249
        %v5251 = vrot.slane %v5207, 1
        %v5252 = vrot.slane %v4951, 1
        %v5253 = vsel %vm1677, %v5251, %v5252
        %v5254 = vrot.slane %v5208, 1
        %v5255 = vrot.slane %v4952, 1
        %v5256 = vsel %vm1677, %v5254, %v5255
        %v5305 = vunpack.c.l.b16 %v4681
        %v5306 = vunpack.c.l.b16 %v4682
        %v5307 = vunpack.c.l.b16 %v4683
        %v5308 = vunpack.c.l.b16 %v4684
        %v5309 = vunpack.c.l.b16 %v4685
        %v5310 = vunpack.c.l.b16 %v4686
        %v5311 = vunpack.c.l.b16 %v4687
        %v5312 = vunpack.c.l.b16 %v4688
        %v5313 = vunpack.c.l.b16 %v4689
        %v5314 = vunpack.c.l.b16 %v4690
        %v5315 = vunpack.c.l.b16 %v4691
        %v5316 = vunpack.c.l.b16 %v4692
        %v5317 = vunpack.c.l.b16 %v4693
        %v5318 = vunpack.c.l.b16 %v4694
        %v5319 = vunpack.c.l.b16 %v4695
        %v5320 = vunpack.c.l.b16 %v4696
        %v5321 = vunpack.c.l.b16 %v4697
        %v5322 = vunpack.c.l.b16 %v4698
        %v5323 = vunpack.c.l.b16 %v4699
        %v5324 = vunpack.c.l.b16 %v4700
        %v5325 = vunpack.c.l.b16 %v4701
        %v5326 = vunpack.c.l.b16 %v4702
        %v5327 = vunpack.c.l.b16 %v4703
        %v5328 = vunpack.c.l.b16 %v4704
        %v5329 = vunpack.c.l.b16 %v4705
        %v5330 = vunpack.c.l.b16 %v4706
        %v5331 = vunpack.c.l.b16 %v4707
        %v5332 = vunpack.c.l.b16 %v4708
        %v5333 = vunpack.c.l.b16 %v4709
        %v5334 = vunpack.c.l.b16 %v4710
        %v5335 = vunpack.c.l.b16 %v4711
        %v5336 = vunpack.c.l.b16 %v4712
        %v5337 = vpack.c.b16 %v5306, %v5305
        %v5338 = vpack.c.b16 %v5308, %v5307
        %v5339 = vpack.c.b16 %v5310, %v5309
        %v5340 = vpack.c.b16 %v5312, %v5311
        %v5341 = vpack.c.b16 %v5314, %v5313
        %v5342 = vpack.c.b16 %v5316, %v5315
        %v5343 = vpack.c.b16 %v5318, %v5317
        %v5344 = vpack.c.b16 %v5320, %v5319
        %v5345 = vpack.c.b16 %v5322, %v5321
        %v5346 = vpack.c.b16 %v5324, %v5323
        %v5347 = vpack.c.b16 %v5326, %v5325
        %v5348 = vpack.c.b16 %v5328, %v5327
        %v5349 = vpack.c.b16 %v5330, %v5329
        %v5350 = vpack.c.b16 %v5332, %v5331
        %v5351 = vpack.c.b16 %v5334, %v5333
        %v5352 = vpack.c.b16 %v5336, %v5335
        %v5385 = vunpack.c.l.b16 %v4713
        %v5386 = vunpack.c.l.b16 %v4714
        %v5387 = vunpack.c.l.b16 %v4715
        %v5388 = vunpack.c.l.b16 %v4716
        %v5389 = vunpack.c.l.b16 %v4717
        %v5390 = vunpack.c.l.b16 %v4718
        %v5391 = vunpack.c.l.b16 %v4719
        %v5392 = vunpack.c.l.b16 %v4720
        %v5393 = vunpack.c.l.b16 %v4721
        %v5394 = vunpack.c.l.b16 %v4722
        %v5395 = vunpack.c.l.b16 %v4723
        %v5396 = vunpack.c.l.b16 %v4724
        %v5397 = vunpack.c.l.b16 %v4725
        %v5398 = vunpack.c.l.b16 %v4726
        %v5399 = vunpack.c.l.b16 %v4727
        %v5400 = vunpack.c.l.b16 %v4728
        %v5401 = vpack.c.b16 %v5385, %v5385
        %v5402 = vpack.c.b16 %v5386, %v5386
        %v5403 = vpack.c.b16 %v5387, %v5387
        %v5404 = vpack.c.b16 %v5388, %v5388
        %v5405 = vpack.c.b16 %v5389, %v5389
        %v5406 = vpack.c.b16 %v5390, %v5390
        %v5407 = vpack.c.b16 %v5391, %v5391
        %v5408 = vpack.c.b16 %v5392, %v5392
        %v5409 = vpack.c.b16 %v5393, %v5393
        %v5410 = vpack.c.b16 %v5394, %v5394
        %v5411 = vpack.c.b16 %v5395, %v5395
        %v5412 = vpack.c.b16 %v5396, %v5396
        %v5413 = vpack.c.b16 %v5397, %v5397
        %v5414 = vpack.c.b16 %v5398, %v5398
        %v5415 = vpack.c.b16 %v5399, %v5399
        %v5416 = vpack.c.b16 %v5400, %v5400
        %v5418 = vshrl.u32 %v5337, 16
        %v5420 = vshll.u32 %v5337, 16
        %v5422 = vrot.slane %v5420, 1
        %v5423 = vor.u32 %v5418, %v5422
        %v5425 = vshll.u32 %v5401, 16
        %v5427 = vrot.slane %v5425, 1
        %v5428 = vsel %vm1420, %v5423, %v5427
        %v5430 = vshrl.u32 %v5338, 16
        %v5432 = vshll.u32 %v5338, 16
        %v5434 = vrot.slane %v5432, 1
        %v5435 = vor.u32 %v5430, %v5434
        %v5437 = vshll.u32 %v5402, 16
        %v5439 = vrot.slane %v5437, 1
        %v5440 = vsel %vm1420, %v5435, %v5439
        %v5442 = vshrl.u32 %v5339, 16
        %v5444 = vshll.u32 %v5339, 16
        %v5446 = vrot.slane %v5444, 1
        %v5447 = vor.u32 %v5442, %v5446
        %v5449 = vshll.u32 %v5403, 16
        %v5451 = vrot.slane %v5449, 1
        %v5452 = vsel %vm1420, %v5447, %v5451
        %v5454 = vshrl.u32 %v5340, 16
        %v5456 = vshll.u32 %v5340, 16
        %v5458 = vrot.slane %v5456, 1
        %v5459 = vor.u32 %v5454, %v5458
        %v5461 = vshll.u32 %v5404, 16
        %v5463 = vrot.slane %v5461, 1
        %v5464 = vsel %vm1420, %v5459, %v5463
        %v5466 = vshrl.u32 %v5341, 16
        %v5468 = vshll.u32 %v5341, 16
        %v5470 = vrot.slane %v5468, 1
        %v5471 = vor.u32 %v5466, %v5470
        %v5473 = vshll.u32 %v5405, 16
        %v5475 = vrot.slane %v5473, 1
        %v5476 = vsel %vm1420, %v5471, %v5475
        %v5478 = vshrl.u32 %v5342, 16
        %v5480 = vshll.u32 %v5342, 16
        %v5482 = vrot.slane %v5480, 1
        %v5483 = vor.u32 %v5478, %v5482
        %v5485 = vshll.u32 %v5406, 16
        %v5487 = vrot.slane %v5485, 1
        %v5488 = vsel %vm1420, %v5483, %v5487
        %v5490 = vshrl.u32 %v5343, 16
        %v5492 = vshll.u32 %v5343, 16
        %v5494 = vrot.slane %v5492, 1
        %v5495 = vor.u32 %v5490, %v5494
        %v5497 = vshll.u32 %v5407, 16
        %v5499 = vrot.slane %v5497, 1
        %v5500 = vsel %vm1420, %v5495, %v5499
        %v5502 = vshrl.u32 %v5344, 16
        %v5504 = vshll.u32 %v5344, 16
        %v5506 = vrot.slane %v5504, 1
        %v5507 = vor.u32 %v5502, %v5506
        %v5509 = vshll.u32 %v5408, 16
        %v5511 = vrot.slane %v5509, 1
        %v5512 = vsel %vm1420, %v5507, %v5511
        %v5514 = vshrl.u32 %v5345, 16
        %v5516 = vshll.u32 %v5345, 16
        %v5518 = vrot.slane %v5516, 1
        %v5519 = vor.u32 %v5514, %v5518
        %v5521 = vshll.u32 %v5409, 16
        %v5523 = vrot.slane %v5521, 1
        %v5524 = vsel %vm1420, %v5519, %v5523
        %v5526 = vshrl.u32 %v5346, 16
        %v5528 = vshll.u32 %v5346, 16
        %v5530 = vrot.slane %v5528, 1
        %v5531 = vor.u32 %v5526, %v5530
        %v5533 = vshll.u32 %v5410, 16
        %v5535 = vrot.slane %v5533, 1
        %v5536 = vsel %vm1420, %v5531, %v5535
        %v5538 = vshrl.u32 %v5347, 16
        %v5540 = vshll.u32 %v5347, 16
        %v5542 = vrot.slane %v5540, 1
        %v5543 = vor.u32 %v5538, %v5542
        %v5545 = vshll.u32 %v5411, 16
        %v5547 = vrot.slane %v5545, 1
        %v5548 = vsel %vm1420, %v5543, %v5547
        %v5550 = vshrl.u32 %v5348, 16
        %v5552 = vshll.u32 %v5348, 16
        %v5554 = vrot.slane %v5552, 1
        %v5555 = vor.u32 %v5550, %v5554
        %v5557 = vshll.u32 %v5412, 16
        %v5559 = vrot.slane %v5557, 1
        %v5560 = vsel %vm1420, %v5555, %v5559
        %v5562 = vshrl.u32 %v5349, 16
        %v5564 = vshll.u32 %v5349, 16
        %v5566 = vrot.slane %v5564, 1
        %v5567 = vor.u32 %v5562, %v5566
        %v5569 = vshll.u32 %v5413, 16
        %v5571 = vrot.slane %v5569, 1
        %v5572 = vsel %vm1420, %v5567, %v5571
        %v5574 = vshrl.u32 %v5350, 16
        %v5576 = vshll.u32 %v5350, 16
        %v5578 = vrot.slane %v5576, 1
        %v5579 = vor.u32 %v5574, %v5578
        %v5581 = vshll.u32 %v5414, 16
        %v5583 = vrot.slane %v5581, 1
        %v5584 = vsel %vm1420, %v5579, %v5583
        %v5586 = vshrl.u32 %v5351, 16
        %v5588 = vshll.u32 %v5351, 16
        %v5590 = vrot.slane %v5588, 1
        %v5591 = vor.u32 %v5586, %v5590
        %v5593 = vshll.u32 %v5415, 16
        %v5595 = vrot.slane %v5593, 1
        %v5596 = vsel %vm1420, %v5591, %v5595
        %v5598 = vshrl.u32 %v5352, 16
        %v5600 = vshll.u32 %v5352, 16
        %v5602 = vrot.slane %v5600, 1
        %v5603 = vor.u32 %v5598, %v5602
        %v5605 = vshll.u32 %v5416, 16
        %v5607 = vrot.slane %v5605, 1
        %v5608 = vsel %vm1420, %v5603, %v5607
        %v5641 = vunpack.c.l.b16 %v4729
        %v5642 = vunpack.c.l.b16 %v4730
        %v5643 = vunpack.c.l.b16 %v4731
        %v5644 = vunpack.c.l.b16 %v4732
        %v5645 = vunpack.c.l.b16 %v4733
        %v5646 = vunpack.c.l.b16 %v4734
        %v5647 = vunpack.c.l.b16 %v4735
        %v5648 = vunpack.c.l.b16 %v4736
        %v5649 = vunpack.c.l.b16 %v4737
        %v5650 = vunpack.c.l.b16 %v4738
        %v5651 = vunpack.c.l.b16 %v4739
        %v5652 = vunpack.c.l.b16 %v4740
        %v5653 = vunpack.c.l.b16 %v4741
        %v5654 = vunpack.c.l.b16 %v4742
        %v5655 = vunpack.c.l.b16 %v4743
        %v5656 = vunpack.c.l.b16 %v4744
        %v5657 = vpack.c.b16 %v5306, %v5641
        %v5658 = vpack.c.b16 %v5308, %v5642
        %v5659 = vpack.c.b16 %v5310, %v5643
        %v5660 = vpack.c.b16 %v5312, %v5644
        %v5661 = vpack.c.b16 %v5314, %v5645
        %v5662 = vpack.c.b16 %v5316, %v5646
        %v5663 = vpack.c.b16 %v5318, %v5647
        %v5664 = vpack.c.b16 %v5320, %v5648
        %v5665 = vpack.c.b16 %v5322, %v5649
        %v5666 = vpack.c.b16 %v5324, %v5650
        %v5667 = vpack.c.b16 %v5326, %v5651
        %v5668 = vpack.c.b16 %v5328, %v5652
        %v5669 = vpack.c.b16 %v5330, %v5653
        %v5670 = vpack.c.b16 %v5332, %v5654
        %v5671 = vpack.c.b16 %v5334, %v5655
        %v5672 = vpack.c.b16 %v5336, %v5656
        %v5673 = vrot.slane %v5657, 1
        %v5674 = vrot.slane %v5401, 1
        %v5675 = vsel %vm1677, %v5673, %v5674
        %v5676 = vrot.slane %v5658, 1
        %v5677 = vrot.slane %v5402, 1
        %v5678 = vsel %vm1677, %v5676, %v5677
        %v5679 = vrot.slane %v5659, 1
        %v5680 = vrot.slane %v5403, 1
        %v5681 = vsel %vm1677, %v5679, %v5680
        %v5682 = vrot.slane %v5660, 1
        %v5683 = vrot.slane %v5404, 1
        %v5684 = vsel %vm1677, %v5682, %v5683
        %v5685 = vrot.slane %v5661, 1
        %v5686 = vrot.slane %v5405, 1
        %v5687 = vsel %vm1677, %v5685, %v5686
        %v5688 = vrot.slane %v5662, 1
        %v5689 = vrot.slane %v5406, 1
        %v5690 = vsel %vm1677, %v5688, %v5689
        %v5691 = vrot.slane %v5663, 1
        %v5692 = vrot.slane %v5407, 1
        %v5693 = vsel %vm1677, %v5691, %v5692
        %v5694 = vrot.slane %v5664, 1
        %v5695 = vrot.slane %v5408, 1
        %v5696 = vsel %vm1677, %v5694, %v5695
        %v5697 = vrot.slane %v5665, 1
        %v5698 = vrot.slane %v5409, 1
        %v5699 = vsel %vm1677, %v5697, %v5698
        %v5700 = vrot.slane %v5666, 1
        %v5701 = vrot.slane %v5410, 1
        %v5702 = vsel %vm1677, %v5700, %v5701
        %v5703 = vrot.slane %v5667, 1
        %v5704 = vrot.slane %v5411, 1
        %v5705 = vsel %vm1677, %v5703, %v5704
        %v5706 = vrot.slane %v5668, 1
        %v5707 = vrot.slane %v5412, 1
        %v5708 = vsel %vm1677, %v5706, %v5707
        %v5709 = vrot.slane %v5669, 1
        %v5710 = vrot.slane %v5413, 1
        %v5711 = vsel %vm1677, %v5709, %v5710
        %v5712 = vrot.slane %v5670, 1
        %v5713 = vrot.slane %v5414, 1
        %v5714 = vsel %vm1677, %v5712, %v5713
        %v5715 = vrot.slane %v5671, 1
        %v5716 = vrot.slane %v5415, 1
        %v5717 = vsel %vm1677, %v5715, %v5716
        %v5718 = vrot.slane %v5672, 1
        %v5719 = vrot.slane %v5416, 1
        %v5720 = vsel %vm1677, %v5718, %v5719
        %v5769 = vunpack.c.l.b16 %v4745
        %v5770 = vunpack.c.l.b16 %v4746
        %v5771 = vunpack.c.l.b16 %v4747
        %v5772 = vunpack.c.l.b16 %v4748
        %v5773 = vunpack.c.l.b16 %v4749
        %v5774 = vunpack.c.l.b16 %v4750
        %v5775 = vunpack.c.l.b16 %v4751
        %v5776 = vunpack.c.l.b16 %v4752
        %v5777 = vunpack.c.l.b16 %v4753
        %v5778 = vunpack.c.l.b16 %v4754
        %v5779 = vunpack.c.l.b16 %v4755
        %v5780 = vunpack.c.l.b16 %v4756
        %v5781 = vunpack.c.l.b16 %v4757
        %v5782 = vunpack.c.l.b16 %v4758
        %v5783 = vunpack.c.l.b16 %v4759
        %v5784 = vunpack.c.l.b16 %v4760
        %v5785 = vunpack.c.l.b16 %v4761
        %v5786 = vunpack.c.l.b16 %v4762
        %v5787 = vunpack.c.l.b16 %v4763
        %v5788 = vunpack.c.l.b16 %v4764
        %v5789 = vunpack.c.l.b16 %v4765
        %v5790 = vunpack.c.l.b16 %v4766
        %v5791 = vunpack.c.l.b16 %v4767
        %v5792 = vunpack.c.l.b16 %v4768
        %v5793 = vunpack.c.l.b16 %v4769
        %v5794 = vunpack.c.l.b16 %v4770
        %v5795 = vunpack.c.l.b16 %v4771
        %v5796 = vunpack.c.l.b16 %v4772
        %v5797 = vunpack.c.l.b16 %v4773
        %v5798 = vunpack.c.l.b16 %v4774
        %v5799 = vunpack.c.l.b16 %v4775
        %v5800 = vunpack.c.l.b16 %v4776
        %v5801 = vpack.c.b16 %v5770, %v5769
        %v5802 = vpack.c.b16 %v5772, %v5771
        %v5803 = vpack.c.b16 %v5774, %v5773
        %v5804 = vpack.c.b16 %v5776, %v5775
        %v5805 = vpack.c.b16 %v5778, %v5777
        %v5806 = vpack.c.b16 %v5780, %v5779
        %v5807 = vpack.c.b16 %v5782, %v5781
        %v5808 = vpack.c.b16 %v5784, %v5783
        %v5809 = vpack.c.b16 %v5786, %v5785
        %v5810 = vpack.c.b16 %v5788, %v5787
        %v5811 = vpack.c.b16 %v5790, %v5789
        %v5812 = vpack.c.b16 %v5792, %v5791
        %v5813 = vpack.c.b16 %v5794, %v5793
        %v5814 = vpack.c.b16 %v5796, %v5795
        %v5815 = vpack.c.b16 %v5798, %v5797
        %v5816 = vpack.c.b16 %v5800, %v5799
        %v5849 = vunpack.c.l.b16 %v4777
        %v5850 = vunpack.c.l.b16 %v4778
        %v5851 = vunpack.c.l.b16 %v4779
        %v5852 = vunpack.c.l.b16 %v4780
        %v5853 = vunpack.c.l.b16 %v4781
        %v5854 = vunpack.c.l.b16 %v4782
        %v5855 = vunpack.c.l.b16 %v4783
        %v5856 = vunpack.c.l.b16 %v4784
        %v5857 = vunpack.c.l.b16 %v4785
        %v5858 = vunpack.c.l.b16 %v4786
        %v5859 = vunpack.c.l.b16 %v4787
        %v5860 = vunpack.c.l.b16 %v4788
        %v5861 = vunpack.c.l.b16 %v4789
        %v5862 = vunpack.c.l.b16 %v4790
        %v5863 = vunpack.c.l.b16 %v4791
        %v5864 = vunpack.c.l.b16 %v4792
        %v5865 = vpack.c.b16 %v5849, %v5849
        %v5866 = vpack.c.b16 %v5850, %v5850
        %v5867 = vpack.c.b16 %v5851, %v5851
        %v5868 = vpack.c.b16 %v5852, %v5852
        %v5869 = vpack.c.b16 %v5853, %v5853
        %v5870 = vpack.c.b16 %v5854, %v5854
        %v5871 = vpack.c.b16 %v5855, %v5855
        %v5872 = vpack.c.b16 %v5856, %v5856
        %v5873 = vpack.c.b16 %v5857, %v5857
        %v5874 = vpack.c.b16 %v5858, %v5858
        %v5875 = vpack.c.b16 %v5859, %v5859
        %v5876 = vpack.c.b16 %v5860, %v5860
        %v5877 = vpack.c.b16 %v5861, %v5861
        %v5878 = vpack.c.b16 %v5862, %v5862
        %v5879 = vpack.c.b16 %v5863, %v5863
        %v5880 = vpack.c.b16 %v5864, %v5864
        %v5882 = vshrl.u32 %v5801, 16
        %v5884 = vshll.u32 %v5801, 16
        %v5886 = vrot.slane %v5884, 1
        %v5887 = vor.u32 %v5882, %v5886
        %v5889 = vshll.u32 %v5865, 16
        %v5891 = vrot.slane %v5889, 1
        %v5892 = vsel %vm1420, %v5887, %v5891
        %v5894 = vshrl.u32 %v5802, 16
        %v5896 = vshll.u32 %v5802, 16
        %v5898 = vrot.slane %v5896, 1
        %v5899 = vor.u32 %v5894, %v5898
        %v5901 = vshll.u32 %v5866, 16
        %v5903 = vrot.slane %v5901, 1
        %v5904 = vsel %vm1420, %v5899, %v5903
        %v5906 = vshrl.u32 %v5803, 16
        %v5908 = vshll.u32 %v5803, 16
        %v5910 = vrot.slane %v5908, 1
        %v5911 = vor.u32 %v5906, %v5910
        %v5913 = vshll.u32 %v5867, 16
        %v5915 = vrot.slane %v5913, 1
        %v5916 = vsel %vm1420, %v5911, %v5915
        %v5918 = vshrl.u32 %v5804, 16
        %v5920 = vshll.u32 %v5804, 16
        %v5922 = vrot.slane %v5920, 1
        %v5923 = vor.u32 %v5918, %v5922
        %v5925 = vshll.u32 %v5868, 16
        %v5927 = vrot.slane %v5925, 1
        %v5928 = vsel %vm1420, %v5923, %v5927
        %v5930 = vshrl.u32 %v5805, 16
        %v5932 = vshll.u32 %v5805, 16
        %v5934 = vrot.slane %v5932, 1
        %v5935 = vor.u32 %v5930, %v5934
        %v5937 = vshll.u32 %v5869, 16
        %v5939 = vrot.slane %v5937, 1
        %v5940 = vsel %vm1420, %v5935, %v5939
        %v5942 = vshrl.u32 %v5806, 16
        %v5944 = vshll.u32 %v5806, 16
        %v5946 = vrot.slane %v5944, 1
        %v5947 = vor.u32 %v5942, %v5946
        %v5949 = vshll.u32 %v5870, 16
        %v5951 = vrot.slane %v5949, 1
        %v5952 = vsel %vm1420, %v5947, %v5951
        %v5954 = vshrl.u32 %v5807, 16
        %v5956 = vshll.u32 %v5807, 16
        %v5958 = vrot.slane %v5956, 1
        %v5959 = vor.u32 %v5954, %v5958
        %v5961 = vshll.u32 %v5871, 16
        %v5963 = vrot.slane %v5961, 1
        %v5964 = vsel %vm1420, %v5959, %v5963
        %v5966 = vshrl.u32 %v5808, 16
        %v5968 = vshll.u32 %v5808, 16
        %v5970 = vrot.slane %v5968, 1
        %v5971 = vor.u32 %v5966, %v5970
        %v5973 = vshll.u32 %v5872, 16
        %v5975 = vrot.slane %v5973, 1
        %v5976 = vsel %vm1420, %v5971, %v5975
        %v5978 = vshrl.u32 %v5809, 16
        %v5980 = vshll.u32 %v5809, 16
        %v5982 = vrot.slane %v5980, 1
        %v5983 = vor.u32 %v5978, %v5982
        %v5985 = vshll.u32 %v5873, 16
        %v5987 = vrot.slane %v5985, 1
        %v5988 = vsel %vm1420, %v5983, %v5987
        %v5990 = vshrl.u32 %v5810, 16
        %v5992 = vshll.u32 %v5810, 16
        %v5994 = vrot.slane %v5992, 1
        %v5995 = vor.u32 %v5990, %v5994
        %v5997 = vshll.u32 %v5874, 16
        %v5999 = vrot.slane %v5997, 1
        %v6000 = vsel %vm1420, %v5995, %v5999
        %v6002 = vshrl.u32 %v5811, 16
        %v6004 = vshll.u32 %v5811, 16
        %v6006 = vrot.slane %v6004, 1
        %v6007 = vor.u32 %v6002, %v6006
        %v6009 = vshll.u32 %v5875, 16
        %v6011 = vrot.slane %v6009, 1
        %v6012 = vsel %vm1420, %v6007, %v6011
        %v6014 = vshrl.u32 %v5812, 16
        %v6016 = vshll.u32 %v5812, 16
        %v6018 = vrot.slane %v6016, 1
        %v6019 = vor.u32 %v6014, %v6018
        %v6021 = vshll.u32 %v5876, 16
        %v6023 = vrot.slane %v6021, 1
        %v6024 = vsel %vm1420, %v6019, %v6023
        %v6026 = vshrl.u32 %v5813, 16
        %v6028 = vshll.u32 %v5813, 16
        %v6030 = vrot.slane %v6028, 1
        %v6031 = vor.u32 %v6026, %v6030
        %v6033 = vshll.u32 %v5877, 16
        %v6035 = vrot.slane %v6033, 1
        %v6036 = vsel %vm1420, %v6031, %v6035
        %v6038 = vshrl.u32 %v5814, 16
        %v6040 = vshll.u32 %v5814, 16
        %v6042 = vrot.slane %v6040, 1
        %v6043 = vor.u32 %v6038, %v6042
        %v6045 = vshll.u32 %v5878, 16
        %v6047 = vrot.slane %v6045, 1
        %v6048 = vsel %vm1420, %v6043, %v6047
        %v6050 = vshrl.u32 %v5815, 16
        %v6052 = vshll.u32 %v5815, 16
        %v6054 = vrot.slane %v6052, 1
        %v6055 = vor.u32 %v6050, %v6054
        %v6057 = vshll.u32 %v5879, 16
        %v6059 = vrot.slane %v6057, 1
        %v6060 = vsel %vm1420, %v6055, %v6059
        %v6062 = vshrl.u32 %v5816, 16
        %v6064 = vshll.u32 %v5816, 16
        %v6066 = vrot.slane %v6064, 1
        %v6067 = vor.u32 %v6062, %v6066
        %v6069 = vshll.u32 %v5880, 16
        %v6071 = vrot.slane %v6069, 1
        %v6072 = vsel %vm1420, %v6067, %v6071
        %v6105 = vunpack.c.l.b16 %v4793
        %v6106 = vunpack.c.l.b16 %v4794
        %v6107 = vunpack.c.l.b16 %v4795
        %v6108 = vunpack.c.l.b16 %v4796
        %v6109 = vunpack.c.l.b16 %v4797
        %v6110 = vunpack.c.l.b16 %v4798
        %v6111 = vunpack.c.l.b16 %v4799
        %v6112 = vunpack.c.l.b16 %v4800
        %v6113 = vunpack.c.l.b16 %v4801
        %v6114 = vunpack.c.l.b16 %v4802
        %v6115 = vunpack.c.l.b16 %v4803
        %v6116 = vunpack.c.l.b16 %v4804
        %v6117 = vunpack.c.l.b16 %v4805
        %v6118 = vunpack.c.l.b16 %v4806
        %v6119 = vunpack.c.l.b16 %v4807
        %v6120 = vunpack.c.l.b16 %v4808
        %v6121 = vpack.c.b16 %v5770, %v6105
        %v6122 = vpack.c.b16 %v5772, %v6106
        %v6123 = vpack.c.b16 %v5774, %v6107
        %v6124 = vpack.c.b16 %v5776, %v6108
        %v6125 = vpack.c.b16 %v5778, %v6109
        %v6126 = vpack.c.b16 %v5780, %v6110
        %v6127 = vpack.c.b16 %v5782, %v6111
        %v6128 = vpack.c.b16 %v5784, %v6112
        %v6129 = vpack.c.b16 %v5786, %v6113
        %v6130 = vpack.c.b16 %v5788, %v6114
        %v6131 = vpack.c.b16 %v5790, %v6115
        %v6132 = vpack.c.b16 %v5792, %v6116
        %v6133 = vpack.c.b16 %v5794, %v6117
        %v6134 = vpack.c.b16 %v5796, %v6118
        %v6135 = vpack.c.b16 %v5798, %v6119
        %v6136 = vpack.c.b16 %v5800, %v6120
        %v6137 = vrot.slane %v6121, 1
        %v6138 = vrot.slane %v5865, 1
        %v6139 = vsel %vm1677, %v6137, %v6138
        %v6140 = vrot.slane %v6122, 1
        %v6141 = vrot.slane %v5866, 1
        %v6142 = vsel %vm1677, %v6140, %v6141
        %v6143 = vrot.slane %v6123, 1
        %v6144 = vrot.slane %v5867, 1
        %v6145 = vsel %vm1677, %v6143, %v6144
        %v6146 = vrot.slane %v6124, 1
        %v6147 = vrot.slane %v5868, 1
        %v6148 = vsel %vm1677, %v6146, %v6147
        %v6149 = vrot.slane %v6125, 1
        %v6150 = vrot.slane %v5869, 1
        %v6151 = vsel %vm1677, %v6149, %v6150
        %v6152 = vrot.slane %v6126, 1
        %v6153 = vrot.slane %v5870, 1
        %v6154 = vsel %vm1677, %v6152, %v6153
        %v6155 = vrot.slane %v6127, 1
        %v6156 = vrot.slane %v5871, 1
        %v6157 = vsel %vm1677, %v6155, %v6156
        %v6158 = vrot.slane %v6128, 1
        %v6159 = vrot.slane %v5872, 1
        %v6160 = vsel %vm1677, %v6158, %v6159
        %v6161 = vrot.slane %v6129, 1
        %v6162 = vrot.slane %v5873, 1
        %v6163 = vsel %vm1677, %v6161, %v6162
        %v6164 = vrot.slane %v6130, 1
        %v6165 = vrot.slane %v5874, 1
        %v6166 = vsel %vm1677, %v6164, %v6165
        %v6167 = vrot.slane %v6131, 1
        %v6168 = vrot.slane %v5875, 1
        %v6169 = vsel %vm1677, %v6167, %v6168
        %v6170 = vrot.slane %v6132, 1
        %v6171 = vrot.slane %v5876, 1
        %v6172 = vsel %vm1677, %v6170, %v6171
        %v6173 = vrot.slane %v6133, 1
        %v6174 = vrot.slane %v5877, 1
        %v6175 = vsel %vm1677, %v6173, %v6174
        %v6176 = vrot.slane %v6134, 1
        %v6177 = vrot.slane %v5878, 1
        %v6178 = vsel %vm1677, %v6176, %v6177
        %v6179 = vrot.slane %v6135, 1
        %v6180 = vrot.slane %v5879, 1
        %v6181 = vsel %vm1677, %v6179, %v6180
        %v6182 = vrot.slane %v6136, 1
        %v6183 = vrot.slane %v5880, 1
        %v6184 = vsel %vm1677, %v6182, %v6183
        %v6201 = vld [vmem:[#allocation8] sm:$0xf]
        %v6202 = vld [vmem:[#allocation8 + $0x4] sm:$0xf]
        %v6203 = vld [vmem:[#allocation8 + $0x8] sm:$0xf]
        %v6204 = vld [vmem:[#allocation8 + $0xc] sm:$0xf]
        %v6205 = vld [vmem:[#allocation8 + $0x10] sm:$0xf]
        %v6206 = vld [vmem:[#allocation8 + $0x14] sm:$0xf]
        %v6207 = vld [vmem:[#allocation8 + $0x18] sm:$0xf]
        %v6208 = vld [vmem:[#allocation8 + $0x1c] sm:$0xf]
        %v6209 = vld [vmem:[#allocation8 + $0x20] sm:$0xf]
        %v6210 = vld [vmem:[#allocation8 + $0x24] sm:$0xf]
        %v6211 = vld [vmem:[#allocation8 + $0x28] sm:$0xf]
        %v6212 = vld [vmem:[#allocation8 + $0x2c] sm:$0xf]
        %v6213 = vld [vmem:[#allocation8 + $0x30] sm:$0xf]
        %v6214 = vld [vmem:[#allocation8 + $0x34] sm:$0xf]
        %v6215 = vld [vmem:[#allocation8 + $0x38] sm:$0xf]
        %v6216 = vld [vmem:[#allocation8 + $0x3c] sm:$0xf]
        %v6217 = vld [vmem:[#allocation8 + $0x40] sm:$0xf]
        %v6218 = vld [vmem:[#allocation8 + $0x44] sm:$0xf]
        %v6219 = vld [vmem:[#allocation8 + $0x48] sm:$0xf]
        %v6220 = vld [vmem:[#allocation8 + $0x4c] sm:$0xf]
        %v6221 = vld [vmem:[#allocation8 + $0x50] sm:$0xf]
        %v6222 = vld [vmem:[#allocation8 + $0x54] sm:$0xf]
        %v6223 = vld [vmem:[#allocation8 + $0x58] sm:$0xf]
        %v6224 = vld [vmem:[#allocation8 + $0x5c] sm:$0xf]
        %v6225 = vld [vmem:[#allocation8 + $0x60] sm:$0xf]
        %v6226 = vld [vmem:[#allocation8 + $0x64] sm:$0xf]
        %v6227 = vld [vmem:[#allocation8 + $0x68] sm:$0xf]
        %v6228 = vld [vmem:[#allocation8 + $0x6c] sm:$0xf]
        %v6229 = vld [vmem:[#allocation8 + $0x70] sm:$0xf]
        %v6230 = vld [vmem:[#allocation8 + $0x74] sm:$0xf]
        %v6231 = vld [vmem:[#allocation8 + $0x78] sm:$0xf]
        %v6232 = vld [vmem:[#allocation8 + $0x7c] sm:$0xf]
        %v6233 = vld [vmem:[#allocation8 + $0x80] sm:$0xf]
        %v6234 = vld [vmem:[#allocation8 + $0x84] sm:$0xf]
        %v6235 = vld [vmem:[#allocation8 + $0x88] sm:$0xf]
        %v6236 = vld [vmem:[#allocation8 + $0x8c] sm:$0xf]
        %v6237 = vld [vmem:[#allocation8 + $0x90] sm:$0xf]
        %v6238 = vld [vmem:[#allocation8 + $0x94] sm:$0xf]
        %v6239 = vld [vmem:[#allocation8 + $0x98] sm:$0xf]
        %v6240 = vld [vmem:[#allocation8 + $0x9c] sm:$0xf]
        %v6241 = vld [vmem:[#allocation8 + $0xa0] sm:$0xf]
        %v6242 = vld [vmem:[#allocation8 + $0xa4] sm:$0xf]
        %v6243 = vld [vmem:[#allocation8 + $0xa8] sm:$0xf]
        %v6244 = vld [vmem:[#allocation8 + $0xac] sm:$0xf]
        %v6245 = vld [vmem:[#allocation8 + $0xb0] sm:$0xf]
        %v6246 = vld [vmem:[#allocation8 + $0xb4] sm:$0xf]
        %v6247 = vld [vmem:[#allocation8 + $0xb8] sm:$0xf]
        %v6248 = vld [vmem:[#allocation8 + $0xbc] sm:$0xf]
        %v6249 = vld [vmem:[#allocation8 + $0xc0] sm:$0xf]
        %v6250 = vld [vmem:[#allocation8 + $0xc4] sm:$0xf]
        %v6251 = vld [vmem:[#allocation8 + $0xc8] sm:$0xf]
        %v6252 = vld [vmem:[#allocation8 + $0xcc] sm:$0xf]
        %v6253 = vld [vmem:[#allocation8 + $0xd0] sm:$0xf]
        %v6254 = vld [vmem:[#allocation8 + $0xd4] sm:$0xf]
        %v6255 = vld [vmem:[#allocation8 + $0xd8] sm:$0xf]
        %v6256 = vld [vmem:[#allocation8 + $0xdc] sm:$0xf]
        %v6257 = vld [vmem:[#allocation8 + $0xe0] sm:$0xf]
        %v6258 = vld [vmem:[#allocation8 + $0xe4] sm:$0xf]
        %v6259 = vld [vmem:[#allocation8 + $0xe8] sm:$0xf]
        %v6260 = vld [vmem:[#allocation8 + $0xec] sm:$0xf]
        %v6261 = vld [vmem:[#allocation8 + $0xf0] sm:$0xf]
        %v6262 = vld [vmem:[#allocation8 + $0xf4] sm:$0xf]
        %v6263 = vld [vmem:[#allocation8 + $0xf8] sm:$0xf]
        %v6264 = vld [vmem:[#allocation8 + $0xfc] sm:$0xf]
        %v6265 = vld [vmem:[#allocation8 + $0x100] sm:$0xf]
        %v6266 = vld [vmem:[#allocation8 + $0x104] sm:$0xf]
        %v6267 = vld [vmem:[#allocation8 + $0x108] sm:$0xf]
        %v6268 = vld [vmem:[#allocation8 + $0x10c] sm:$0xf]
        %v6269 = vld [vmem:[#allocation8 + $0x110] sm:$0xf]
        %v6270 = vld [vmem:[#allocation8 + $0x114] sm:$0xf]
        %v6271 = vld [vmem:[#allocation8 + $0x118] sm:$0xf]
        %v6272 = vld [vmem:[#allocation8 + $0x11c] sm:$0xf]
        %v6273 = vld [vmem:[#allocation8 + $0x120] sm:$0xf]
        %v6274 = vld [vmem:[#allocation8 + $0x124] sm:$0xf]
        %v6275 = vld [vmem:[#allocation8 + $0x128] sm:$0xf]
        %v6276 = vld [vmem:[#allocation8 + $0x12c] sm:$0xf]
        %v6277 = vld [vmem:[#allocation8 + $0x130] sm:$0xf]
        %v6278 = vld [vmem:[#allocation8 + $0x134] sm:$0xf]
        %v6279 = vld [vmem:[#allocation8 + $0x138] sm:$0xf]
        %v6280 = vld [vmem:[#allocation8 + $0x13c] sm:$0xf]
        %v6281 = vld [vmem:[#allocation8 + $0x140] sm:$0xf]
        %v6282 = vld [vmem:[#allocation8 + $0x144] sm:$0xf]
        %v6283 = vld [vmem:[#allocation8 + $0x148] sm:$0xf]
        %v6284 = vld [vmem:[#allocation8 + $0x14c] sm:$0xf]
        %v6285 = vld [vmem:[#allocation8 + $0x150] sm:$0xf]
        %v6286 = vld [vmem:[#allocation8 + $0x154] sm:$0xf]
        %v6287 = vld [vmem:[#allocation8 + $0x158] sm:$0xf]
        %v6288 = vld [vmem:[#allocation8 + $0x15c] sm:$0xf]
        %v6289 = vld [vmem:[#allocation8 + $0x160] sm:$0xf]
        %v6290 = vld [vmem:[#allocation8 + $0x164] sm:$0xf]
        %v6291 = vld [vmem:[#allocation8 + $0x168] sm:$0xf]
        %v6292 = vld [vmem:[#allocation8 + $0x16c] sm:$0xf]
        %v6293 = vld [vmem:[#allocation8 + $0x170] sm:$0xf]
        %v6294 = vld [vmem:[#allocation8 + $0x174] sm:$0xf]
        %v6295 = vld [vmem:[#allocation8 + $0x178] sm:$0xf]
        %v6296 = vld [vmem:[#allocation8 + $0x17c] sm:$0xf]
        %v6297 = vld [vmem:[#allocation8 + $0x180] sm:$0xf]
        %v6298 = vld [vmem:[#allocation8 + $0x184] sm:$0xf]
        %v6299 = vld [vmem:[#allocation8 + $0x188] sm:$0xf]
        %v6300 = vld [vmem:[#allocation8 + $0x18c] sm:$0xf]
        %v6301 = vld [vmem:[#allocation8 + $0x190] sm:$0xf]
        %v6302 = vld [vmem:[#allocation8 + $0x194] sm:$0xf]
        %v6303 = vld [vmem:[#allocation8 + $0x198] sm:$0xf]
        %v6304 = vld [vmem:[#allocation8 + $0x19c] sm:$0xf]
        %v6305 = vld [vmem:[#allocation8 + $0x1a0] sm:$0xf]
        %v6306 = vld [vmem:[#allocation8 + $0x1a4] sm:$0xf]
        %v6307 = vld [vmem:[#allocation8 + $0x1a8] sm:$0xf]
        %v6308 = vld [vmem:[#allocation8 + $0x1ac] sm:$0xf]
        %v6309 = vld [vmem:[#allocation8 + $0x1b0] sm:$0xf]
        %v6310 = vld [vmem:[#allocation8 + $0x1b4] sm:$0xf]
        %v6311 = vld [vmem:[#allocation8 + $0x1b8] sm:$0xf]
        %v6312 = vld [vmem:[#allocation8 + $0x1bc] sm:$0xf]
        %v6313 = vld [vmem:[#allocation8 + $0x1c0] sm:$0xf]
        %v6314 = vld [vmem:[#allocation8 + $0x1c4] sm:$0xf]
        %v6315 = vld [vmem:[#allocation8 + $0x1c8] sm:$0xf]
        %v6316 = vld [vmem:[#allocation8 + $0x1cc] sm:$0xf]
        %v6317 = vld [vmem:[#allocation8 + $0x1d0] sm:$0xf]
        %v6318 = vld [vmem:[#allocation8 + $0x1d4] sm:$0xf]
        %v6319 = vld [vmem:[#allocation8 + $0x1d8] sm:$0xf]
        %v6320 = vld [vmem:[#allocation8 + $0x1dc] sm:$0xf]
        %v6321 = vld [vmem:[#allocation8 + $0x1e0] sm:$0xf]
        %v6322 = vld [vmem:[#allocation8 + $0x1e4] sm:$0xf]
        %v6323 = vld [vmem:[#allocation8 + $0x1e8] sm:$0xf]
        %v6324 = vld [vmem:[#allocation8 + $0x1ec] sm:$0xf]
        %v6325 = vld [vmem:[#allocation8 + $0x1f0] sm:$0xf]
        %v6326 = vld [vmem:[#allocation8 + $0x1f4] sm:$0xf]
        %v6327 = vld [vmem:[#allocation8 + $0x1f8] sm:$0xf]
        %v6328 = vld [vmem:[#allocation8 + $0x1fc] sm:$0xf]
        %v6329 = vld [vmem:[#allocation8 + $0x200] sm:$0xf]
        %v6330 = vld [vmem:[#allocation8 + $0x204] sm:$0xf]
        %v6331 = vld [vmem:[#allocation8 + $0x208] sm:$0xf]
        %v6332 = vld [vmem:[#allocation8 + $0x20c] sm:$0xf]
        %v6333 = vld [vmem:[#allocation8 + $0x210] sm:$0xf]
        %v6334 = vld [vmem:[#allocation8 + $0x214] sm:$0xf]
        %v6335 = vld [vmem:[#allocation8 + $0x218] sm:$0xf]
        %v6336 = vld [vmem:[#allocation8 + $0x21c] sm:$0xf]
        %v6337 = vld [vmem:[#allocation8 + $0x220] sm:$0xf]
        %v6338 = vld [vmem:[#allocation8 + $0x224] sm:$0xf]
        %v6339 = vld [vmem:[#allocation8 + $0x228] sm:$0xf]
        %v6340 = vld [vmem:[#allocation8 + $0x22c] sm:$0xf]
        %v6341 = vld [vmem:[#allocation8 + $0x230] sm:$0xf]
        %v6342 = vld [vmem:[#allocation8 + $0x234] sm:$0xf]
        %v6343 = vld [vmem:[#allocation8 + $0x238] sm:$0xf]
        %v6344 = vld [vmem:[#allocation8 + $0x23c] sm:$0xf]
        %v6345 = vld [vmem:[%s4] sm:$0x1]
        %v6347 = vlaneseq
        %v6348 = vshrl.u32 %v6347, 7
        %v6349 = vsub.s32 0, %v6348
        %v6350 = vrot.slane %v6345, %v6349
        %v6496 = vunpack.c.l.b16 %v6201
        %v6497 = vunpack.c.l.b16 %v6202
        %v6498 = vunpack.c.l.b16 %v6203
        %v6499 = vunpack.c.l.b16 %v6204
        %v6500 = vunpack.c.l.b16 %v6205
        %v6501 = vunpack.c.l.b16 %v6206
        %v6502 = vunpack.c.l.b16 %v6207
        %v6503 = vunpack.c.l.b16 %v6208
        %v6504 = vunpack.c.l.b16 %v6209
        %v6505 = vunpack.c.l.b16 %v6210
        %v6506 = vunpack.c.l.b16 %v6211
        %v6507 = vunpack.c.l.b16 %v6212
        %v6508 = vunpack.c.l.b16 %v6213
        %v6509 = vunpack.c.l.b16 %v6214
        %v6510 = vunpack.c.l.b16 %v6215
        %v6511 = vunpack.c.l.b16 %v6216
        %v6512 = vunpack.c.l.b16 %v6217
        %v6513 = vunpack.c.l.b16 %v6218
        %v6514 = vunpack.c.l.b16 %v6219
        %v6515 = vunpack.c.l.b16 %v6220
        %v6516 = vunpack.c.l.b16 %v6221
        %v6517 = vunpack.c.l.b16 %v6222
        %v6518 = vunpack.c.l.b16 %v6223
        %v6519 = vunpack.c.l.b16 %v6224
        %v6520 = vunpack.c.l.b16 %v6225
        %v6521 = vunpack.c.l.b16 %v6226
        %v6522 = vunpack.c.l.b16 %v6227
        %v6523 = vunpack.c.l.b16 %v6228
        %v6524 = vunpack.c.l.b16 %v6229
        %v6525 = vunpack.c.l.b16 %v6230
        %v6526 = vunpack.c.l.b16 %v6231
        %v6527 = vunpack.c.l.b16 %v6232
        %v6528 = vunpack.c.l.b16 %v6233
        %v6529 = vunpack.c.l.b16 %v6234
        %v6530 = vunpack.c.l.b16 %v6235
        %v6531 = vunpack.c.l.b16 %v6236
        %v6532 = vunpack.c.l.b16 %v6237
        %v6533 = vunpack.c.l.b16 %v6238
        %v6534 = vunpack.c.l.b16 %v6239
        %v6535 = vunpack.c.l.b16 %v6240
        %v6536 = vunpack.c.l.b16 %v6241
        %v6537 = vunpack.c.l.b16 %v6242
        %v6538 = vunpack.c.l.b16 %v6243
        %v6539 = vunpack.c.l.b16 %v6244
        %v6540 = vunpack.c.l.b16 %v6245
        %v6541 = vunpack.c.l.b16 %v6246
        %v6542 = vunpack.c.l.b16 %v6247
        %v6543 = vunpack.c.l.b16 %v6248
        %v6544 = vunpack.c.l.b16 %v6249
        %v6545 = vunpack.c.l.b16 %v6250
        %v6546 = vunpack.c.l.b16 %v6251
        %v6547 = vunpack.c.l.b16 %v6252
        %v6548 = vunpack.c.l.b16 %v6253
        %v6549 = vunpack.c.l.b16 %v6254
        %v6550 = vunpack.c.l.b16 %v6255
        %v6551 = vunpack.c.l.b16 %v6256
        %v6552 = vunpack.c.l.b16 %v6257
        %v6553 = vunpack.c.l.b16 %v6258
        %v6554 = vunpack.c.l.b16 %v6259
        %v6555 = vunpack.c.l.b16 %v6260
        %v6556 = vunpack.c.l.b16 %v6261
        %v6557 = vunpack.c.l.b16 %v6262
        %v6558 = vunpack.c.l.b16 %v6263
        %v6559 = vunpack.c.l.b16 %v6264
        %v6560 = vunpack.c.l.b16 %v6265
        %v6561 = vunpack.c.l.b16 %v6266
        %v6562 = vunpack.c.l.b16 %v6267
        %v6563 = vunpack.c.l.b16 %v6268
        %v6564 = vunpack.c.l.b16 %v6269
        %v6565 = vunpack.c.l.b16 %v6270
        %v6566 = vunpack.c.l.b16 %v6271
        %v6567 = vunpack.c.l.b16 %v6272
        %v6568 = vunpack.c.l.b16 %v6273
        %v6569 = vunpack.c.l.b16 %v6274
        %v6570 = vunpack.c.l.b16 %v6275
        %v6571 = vunpack.c.l.b16 %v6276
        %v6572 = vunpack.c.l.b16 %v6277
        %v6573 = vunpack.c.l.b16 %v6278
        %v6574 = vunpack.c.l.b16 %v6279
        %v6575 = vunpack.c.l.b16 %v6280
        %v6576 = vunpack.c.l.b16 %v6281
        %v6577 = vunpack.c.l.b16 %v6282
        %v6578 = vunpack.c.l.b16 %v6283
        %v6579 = vunpack.c.l.b16 %v6284
        %v6580 = vunpack.c.l.b16 %v6285
        %v6581 = vunpack.c.l.b16 %v6286
        %v6582 = vunpack.c.l.b16 %v6287
        %v6583 = vunpack.c.l.b16 %v6288
        %v6584 = vunpack.c.l.b16 %v6289
        %v6585 = vunpack.c.l.b16 %v6290
        %v6586 = vunpack.c.l.b16 %v6291
        %v6587 = vunpack.c.l.b16 %v6292
        %v6588 = vunpack.c.l.b16 %v6293
        %v6589 = vunpack.c.l.b16 %v6294
        %v6590 = vunpack.c.l.b16 %v6295
        %v6591 = vunpack.c.l.b16 %v6296
        %v6592 = vunpack.c.l.b16 %v6297
        %v6593 = vunpack.c.l.b16 %v6298
        %v6594 = vunpack.c.l.b16 %v6299
        %v6595 = vunpack.c.l.b16 %v6300
        %v6596 = vunpack.c.l.b16 %v6301
        %v6597 = vunpack.c.l.b16 %v6302
        %v6598 = vunpack.c.l.b16 %v6303
        %v6599 = vunpack.c.l.b16 %v6304
        %v6600 = vunpack.c.l.b16 %v6305
        %v6601 = vunpack.c.l.b16 %v6306
        %v6602 = vunpack.c.l.b16 %v6307
        %v6603 = vunpack.c.l.b16 %v6308
        %v6604 = vunpack.c.l.b16 %v6309
        %v6605 = vunpack.c.l.b16 %v6310
        %v6606 = vunpack.c.l.b16 %v6311
        %v6607 = vunpack.c.l.b16 %v6312
        %v6608 = vunpack.c.l.b16 %v6313
        %v6609 = vunpack.c.l.b16 %v6314
        %v6610 = vunpack.c.l.b16 %v6315
        %v6611 = vunpack.c.l.b16 %v6316
        %v6612 = vunpack.c.l.b16 %v6317
        %v6613 = vunpack.c.l.b16 %v6318
        %v6614 = vunpack.c.l.b16 %v6319
        %v6615 = vunpack.c.l.b16 %v6320
        %v6616 = vunpack.c.l.b16 %v6321
        %v6617 = vunpack.c.l.b16 %v6322
        %v6618 = vunpack.c.l.b16 %v6323
        %v6619 = vunpack.c.l.b16 %v6324
        %v6620 = vunpack.c.l.b16 %v6325
        %v6621 = vunpack.c.l.b16 %v6326
        %v6622 = vunpack.c.l.b16 %v6327
        %v6623 = vunpack.c.l.b16 %v6328
        %v6624 = vunpack.c.l.b16 %v6329
        %v6625 = vunpack.c.l.b16 %v6330
        %v6626 = vunpack.c.l.b16 %v6331
        %v6627 = vunpack.c.l.b16 %v6332
        %v6628 = vunpack.c.l.b16 %v6333
        %v6629 = vunpack.c.l.b16 %v6334
        %v6630 = vunpack.c.l.b16 %v6335
        %v6631 = vunpack.c.l.b16 %v6336
        %v6632 = vunpack.c.l.b16 %v6337
        %v6633 = vunpack.c.l.b16 %v6338
        %v6634 = vunpack.c.l.b16 %v6339
        %v6635 = vunpack.c.l.b16 %v6340
        %v6636 = vunpack.c.l.b16 %v6341
        %v6637 = vunpack.c.l.b16 %v6342
        %v6638 = vunpack.c.l.b16 %v6343
        %v6639 = vunpack.c.l.b16 %v6344
        %v6640 = vpack.c.b16 %v6497, %v6496
        %v6641 = vpack.c.b16 %v6499, %v6498
        %v6642 = vpack.c.b16 %v6501, %v6500
        %v6643 = vpack.c.b16 %v6503, %v6502
        %v6644 = vpack.c.b16 %v6505, %v6504
        %v6645 = vpack.c.b16 %v6507, %v6506
        %v6646 = vpack.c.b16 %v6509, %v6508
        %v6647 = vpack.c.b16 %v6511, %v6510
        %v6648 = vpack.c.b16 %v6513, %v6512
        %v6649 = vpack.c.b16 %v6515, %v6514
        %v6650 = vpack.c.b16 %v6517, %v6516
        %v6651 = vpack.c.b16 %v6519, %v6518
        %v6652 = vpack.c.b16 %v6521, %v6520
        %v6653 = vpack.c.b16 %v6523, %v6522
        %v6654 = vpack.c.b16 %v6525, %v6524
        %v6655 = vpack.c.b16 %v6527, %v6526
        %v6656 = vpack.c.b16 %v6529, %v6528
        %v6657 = vpack.c.b16 %v6531, %v6530
        %v6658 = vpack.c.b16 %v6533, %v6532
        %v6659 = vpack.c.b16 %v6535, %v6534
        %v6660 = vpack.c.b16 %v6537, %v6536
        %v6661 = vpack.c.b16 %v6539, %v6538
        %v6662 = vpack.c.b16 %v6541, %v6540
        %v6663 = vpack.c.b16 %v6543, %v6542
        %v6664 = vpack.c.b16 %v6545, %v6544
        %v6665 = vpack.c.b16 %v6547, %v6546
        %v6666 = vpack.c.b16 %v6549, %v6548
        %v6667 = vpack.c.b16 %v6551, %v6550
        %v6668 = vpack.c.b16 %v6553, %v6552
        %v6669 = vpack.c.b16 %v6555, %v6554
        %v6670 = vpack.c.b16 %v6557, %v6556
        %v6671 = vpack.c.b16 %v6559, %v6558
        %v6672 = vpack.c.b16 %v6561, %v6560
        %v6673 = vpack.c.b16 %v6563, %v6562
        %v6674 = vpack.c.b16 %v6565, %v6564
        %v6675 = vpack.c.b16 %v6567, %v6566
        %v6676 = vpack.c.b16 %v6569, %v6568
        %v6677 = vpack.c.b16 %v6571, %v6570
        %v6678 = vpack.c.b16 %v6573, %v6572
        %v6679 = vpack.c.b16 %v6575, %v6574
        %v6680 = vpack.c.b16 %v6577, %v6576
        %v6681 = vpack.c.b16 %v6579, %v6578
        %v6682 = vpack.c.b16 %v6581, %v6580
        %v6683 = vpack.c.b16 %v6583, %v6582
        %v6684 = vpack.c.b16 %v6585, %v6584
        %v6685 = vpack.c.b16 %v6587, %v6586
        %v6686 = vpack.c.b16 %v6589, %v6588
        %v6687 = vpack.c.b16 %v6591, %v6590
        %v6688 = vpack.c.b16 %v6593, %v6592
        %v6689 = vpack.c.b16 %v6595, %v6594
        %v6690 = vpack.c.b16 %v6597, %v6596
        %v6691 = vpack.c.b16 %v6599, %v6598
        %v6692 = vpack.c.b16 %v6601, %v6600
        %v6693 = vpack.c.b16 %v6603, %v6602
        %v6694 = vpack.c.b16 %v6605, %v6604
        %v6695 = vpack.c.b16 %v6607, %v6606
        %v6696 = vpack.c.b16 %v6609, %v6608
        %v6697 = vpack.c.b16 %v6611, %v6610
        %v6698 = vpack.c.b16 %v6613, %v6612
        %v6699 = vpack.c.b16 %v6615, %v6614
        %v6700 = vpack.c.b16 %v6617, %v6616
        %v6701 = vpack.c.b16 %v6619, %v6618
        %v6702 = vpack.c.b16 %v6621, %v6620
        %v6703 = vpack.c.b16 %v6623, %v6622
        %v6704 = vpack.c.b16 %v6625, %v6624
        %v6705 = vpack.c.b16 %v6627, %v6626
        %v6706 = vpack.c.b16 %v6629, %v6628
        %v6707 = vpack.c.b16 %v6631, %v6630
        %v6708 = vpack.c.b16 %v6633, %v6632
        %v6709 = vpack.c.b16 %v6635, %v6634
        %v6710 = vpack.c.b16 %v6637, %v6636
        %v6711 = vpack.c.b16 %v6639, %v6638
        %6784 = vmatprep.subr.bf16.mxu0 0
        %6785 = vmatpush1.bf16.msra.mxu0 %v6640
        %6786 = vmatprep.subr.bf16.mxu0 0
        %6787 = vmatpush1.bf16.msra.mxu0 %v6641
        %6788 = vmatprep.subr.bf16.mxu0 0
        %6789 = vmatpush1.bf16.msra.mxu0 %v6642
        %6790 = vmatprep.subr.bf16.mxu0 0
        %6791 = vmatpush1.bf16.msra.mxu0 %v6643
        %6792 = vmatprep.subr.bf16.mxu0 0
        %6793 = vmatpush1.bf16.msra.mxu0 %v6644
        %6794 = vmatprep.subr.bf16.mxu0 0
        %6795 = vmatpush1.bf16.msra.mxu0 %v6645
        %6796 = vmatprep.subr.bf16.mxu0 0
        %6797 = vmatpush1.bf16.msra.mxu0 %v6646
        %6798 = vmatprep.subr.bf16.mxu0 0
        %6799 = vmatpush1.bf16.msra.mxu0 %v6647
        %6800 = vmatprep.subr.bf16.mxu0 0
        %6801 = vmatpush1.bf16.msra.mxu0 %v6648
        %6802 = vmatprep.subr.bf16.mxu0 0
        %6803 = vmatpush1.bf16.msra.mxu0 %v6649
        %6804 = vmatprep.subr.bf16.mxu0 0
        %6805 = vmatpush1.bf16.msra.mxu0 %v6650
        %6806 = vmatprep.subr.bf16.mxu0 0
        %6807 = vmatpush1.bf16.msra.mxu0 %v6651
        %6808 = vmatprep.subr.bf16.mxu0 0
        %6809 = vmatpush1.bf16.msra.mxu0 %v6652
        %6810 = vmatprep.subr.bf16.mxu0 0
        %6811 = vmatpush1.bf16.msra.mxu0 %v6653
        %6812 = vmatprep.subr.bf16.mxu0 0
        %6813 = vmatpush1.bf16.msra.mxu0 %v6654
        %6814 = vmatprep.subr.bf16.mxu0 0
        %6815 = vmatpush1.bf16.msra.mxu0 %v6655
        %6816 = vmatprep.mubr.bf16.mxu0 %v4964
        %6817 = vmatmul.mubr.bf16.gmra.mrb[0].mxu0 %v4873
        %v6818 = vpop.f32.mrb[0].mxu0
        %v6819 = vadd.f32 %v6350, %v6818
        %v6820 = vpop.f32.mrb[0].mxu0
        %v6821 = vpop.f32.mrb[0].mxu0
        %v6822 = vadd.f32 %v6350, %v6821
        %v6823 = vpop.f32.mrb[0].mxu0
        %6824 = vmatprep.mubr.bf16.mxu0 %v4976
        %6825 = vmatmul.mubr.bf16.gmra.mrb[0].mxu0 %v4874
        %v6826 = vpop.f32.mrb[0].mxu0
        %v6827 = vadd.f32 %v6350, %v6826
        %v6828 = vpop.f32.mrb[0].mxu0
        %v6829 = vpop.f32.mrb[0].mxu0
        %v6830 = vadd.f32 %v6350, %v6829
        %v6831 = vpop.f32.mrb[0].mxu0
        %6832 = vmatprep.mubr.bf16.mxu0 %v4988
        %6833 = vmatmul.mubr.bf16.gmra.mrb[0].mxu0 %v4875
        %v6834 = vpop.f32.mrb[0].mxu0
        %v6835 = vadd.f32 %v6350, %v6834
        %v6836 = vpop.f32.mrb[0].mxu0
        %v6837 = vpop.f32.mrb[0].mxu0
        %v6838 = vadd.f32 %v6350, %v6837
        %v6839 = vpop.f32.mrb[0].mxu0
        %6840 = vmatprep.mubr.bf16.mxu0 %v5000
        %6841 = vmatmul.mubr.bf16.gmra.mrb[0].mxu0 %v4876
        %v6842 = vpop.f32.mrb[0].mxu0
        %v6843 = vadd.f32 %v6350, %v6842
        %v6844 = vpop.f32.mrb[0].mxu0
        %v6845 = vpop.f32.mrb[0].mxu0
        %v6846 = vadd.f32 %v6350, %v6845
        %v6847 = vpop.f32.mrb[0].mxu0
        %6848 = vmatprep.mubr.bf16.mxu0 %v5012
        %6849 = vmatmul.mubr.bf16.gmra.mrb[0].mxu0 %v4877
        %v6850 = vpop.f32.mrb[0].mxu0
        %v6851 = vadd.f32 %v6350, %v6850
        %v6852 = vpop.f32.mrb[0].mxu0
        %v6853 = vpop.f32.mrb[0].mxu0
        %v6854 = vadd.f32 %v6350, %v6853
        %v6855 = vpop.f32.mrb[0].mxu0
        %6856 = vmatprep.mubr.bf16.mxu0 %v5024
        %6857 = vmatmul.mubr.bf16.gmra.mrb[0].mxu0 %v4878
        %v6858 = vpop.f32.mrb[0].mxu0
        %v6859 = vadd.f32 %v6350, %v6858
        %v6860 = vpop.f32.mrb[0].mxu0
        %v6861 = vpop.f32.mrb[0].mxu0
        %v6862 = vadd.f32 %v6350, %v6861
        %v6863 = vpop.f32.mrb[0].mxu0
        %6864 = vmatprep.mubr.bf16.mxu0 %v5036
        %6865 = vmatmul.mubr.bf16.gmra.mrb[0].mxu0 %v4879
        %v6866 = vpop.f32.mrb[0].mxu0
        %v6867 = vadd.f32 %v6350, %v6866
        %v6868 = vpop.f32.mrb[0].mxu0
        %v6869 = vpop.f32.mrb[0].mxu0
        %v6870 = vadd.f32 %v6350, %v6869
        %v6871 = vpop.f32.mrb[0].mxu0
        %6872 = vmatprep.mubr.bf16.mxu0 %v5048
        %6873 = vmatmul.mubr.bf16.gmra.mrb[0].mxu0 %v4880
        %v6874 = vpop.f32.mrb[0].mxu0
        %v6875 = vadd.f32 %v6350, %v6874
        %v6876 = vpop.f32.mrb[0].mxu0
        %v6877 = vpop.f32.mrb[0].mxu0
        %v6878 = vadd.f32 %v6350, %v6877
        %v6879 = vpop.f32.mrb[0].mxu0
        %6880 = vmatprep.mubr.bf16.mxu0 %v5060
        %6881 = vmatmul.mubr.bf16.gmra.mrb[0].mxu0 %v4881
        %v6882 = vpop.f32.mrb[0].mxu0
        %v6883 = vadd.f32 %v6350, %v6882
        %v6884 = vpop.f32.mrb[0].mxu0
        %v6885 = vpop.f32.mrb[0].mxu0
        %v6886 = vadd.f32 %v6350, %v6885
        %v6887 = vpop.f32.mrb[0].mxu0
        %6888 = vmatprep.mubr.bf16.mxu0 %v5072
        %6889 = vmatmul.mubr.bf16.gmra.mrb[0].mxu0 %v4882
        %v6890 = vpop.f32.mrb[0].mxu0
        %v6891 = vadd.f32 %v6350, %v6890
        %v6892 = vpop.f32.mrb[0].mxu0
        %v6893 = vpop.f32.mrb[0].mxu0
        %v6894 = vadd.f32 %v6350, %v6893
        %v6895 = vpop.f32.mrb[0].mxu0
        %6896 = vmatprep.mubr.bf16.mxu0 %v5084
        %6897 = vmatmul.mubr.bf16.gmra.mrb[0].mxu0 %v4883
        %v6898 = vpop.f32.mrb[0].mxu0
        %v6899 = vadd.f32 %v6350, %v6898
        %v6900 = vpop.f32.mrb[0].mxu0
        %v6901 = vpop.f32.mrb[0].mxu0
        %v6902 = vadd.f32 %v6350, %v6901
        %v6903 = vpop.f32.mrb[0].mxu0
        %6904 = vmatprep.mubr.bf16.mxu0 %v5096
        %6905 = vmatmul.mubr.bf16.gmra.mrb[0].mxu0 %v4884
        %v6906 = vpop.f32.mrb[0].mxu0
        %v6907 = vadd.f32 %v6350, %v6906
        %v6908 = vpop.f32.mrb[0].mxu0
        %v6909 = vpop.f32.mrb[0].mxu0
        %v6910 = vadd.f32 %v6350, %v6909
        %v6911 = vpop.f32.mrb[0].mxu0
        %6912 = vmatprep.mubr.bf16.mxu0 %v5108
        %6913 = vmatmul.mubr.bf16.gmra.mrb[0].mxu0 %v4885
        %v6914 = vpop.f32.mrb[0].mxu0
        %v6915 = vadd.f32 %v6350, %v6914
        %v6916 = vpop.f32.mrb[0].mxu0
        %v6917 = vpop.f32.mrb[0].mxu0
        %v6918 = vadd.f32 %v6350, %v6917
        %v6919 = vpop.f32.mrb[0].mxu0
        %6920 = vmatprep.mubr.bf16.mxu0 %v5120
        %6921 = vmatmul.mubr.bf16.gmra.mrb[0].mxu0 %v4886
        %v6922 = vpop.f32.mrb[0].mxu0
        %v6923 = vadd.f32 %v6350, %v6922
        %v6924 = vpop.f32.mrb[0].mxu0
        %v6925 = vpop.f32.mrb[0].mxu0
        %v6926 = vadd.f32 %v6350, %v6925
        %v6927 = vpop.f32.mrb[0].mxu0
        %6928 = vmatprep.mubr.bf16.mxu0 %v5132
        %6929 = vmatmul.mubr.bf16.gmra.mrb[0].mxu0 %v4887
        %v6930 = vpop.f32.mrb[0].mxu0
        %v6931 = vadd.f32 %v6350, %v6930
        %v6932 = vpop.f32.mrb[0].mxu0
        %v6933 = vpop.f32.mrb[0].mxu0
        %v6934 = vadd.f32 %v6350, %v6933
        %v6935 = vpop.f32.mrb[0].mxu0
        %6936 = vmatprep.mubr.bf16.mxu0 %v5144
        %6937 = vmatmul.mubr.bf16.gmra.mrb[0].mxu0 %v4888
        %v6938 = vpop.f32.mrb[0].mxu0
        %v6939 = vadd.f32 %v6350, %v6938
        %v6940 = vpop.f32.mrb[0].mxu0
        %v6941 = vpop.f32.mrb[0].mxu0
        %v6942 = vadd.f32 %v6350, %v6941
        %v6943 = vpop.f32.mrb[0].mxu0
        %6944 = vdwg.mxu0
        %6945 = vmatprep.subr.bf16.mxu0 0
        %6946 = vmatpush1.bf16.msra.mxu0 %v6656
        %6947 = vmatprep.subr.bf16.mxu0 0
        %6948 = vmatpush1.bf16.msra.mxu0 %v6657
        %6949 = vmatprep.subr.bf16.mxu0 0
        %6950 = vmatpush1.bf16.msra.mxu0 %v6658
        %6951 = vmatprep.subr.bf16.mxu0 0
        %6952 = vmatpush1.bf16.msra.mxu0 %v6659
        %6953 = vmatprep.subr.bf16.mxu0 0
        %6954 = vmatpush1.bf16.msra.mxu0 %v6660
        %6955 = vmatprep.subr.bf16.mxu0 0
        %6956 = vmatpush1.bf16.msra.mxu0 %v6661
        %6957 = vmatprep.subr.bf16.mxu0 0
        %6958 = vmatpush1.bf16.msra.mxu0 %v6662
        %6959 = vmatprep.subr.bf16.mxu0 0
        %6960 = vmatpush1.bf16.msra.mxu0 %v6663
        %6961 = vmatprep.subr.bf16.mxu0 0
        %6962 = vmatpush1.bf16.msra.mxu0 %v6664
        %6963 = vmatprep.subr.bf16.mxu0 0
        %6964 = vmatpush1.bf16.msra.mxu0 %v6665
        %6965 = vmatprep.subr.bf16.mxu0 0
        %6966 = vmatpush1.bf16.msra.mxu0 %v6666
        %6967 = vmatprep.subr.bf16.mxu0 0
        %6968 = vmatpush1.bf16.msra.mxu0 %v6667
        %6969 = vmatprep.subr.bf16.mxu0 0
        %6970 = vmatpush1.bf16.msra.mxu0 %v6668
        %6971 = vmatprep.subr.bf16.mxu0 0
        %6972 = vmatpush1.bf16.msra.mxu0 %v6669
        %6973 = vmatprep.subr.bf16.mxu0 0
        %6974 = vmatpush1.bf16.msra.mxu0 %v6670
        %6975 = vmatprep.subr.bf16.mxu0 0
        %6976 = vmatpush1.bf16.msra.mxu0 %v6671
        %6977 = vmatprep.mubr.bf16.mxu0 %v5337
        %6978 = vmatmul.mubr.bf16.gmra.mrb[0].mxu0 %v5211
        %v6979 = vpop.f32.mrb[0].mxu0
        %v6980 = vadd.f32 %v6819, %v6979
        %v6981 = vpop.f32.mrb[0].mxu0
        %v6982 = vpop.f32.mrb[0].mxu0
        %v6983 = vadd.f32 %v6822, %v6982
        %v6984 = vpop.f32.mrb[0].mxu0
        %6985 = vmatprep.mubr.bf16.mxu0 %v5338
        %6986 = vmatmul.mubr.bf16.gmra.mrb[0].mxu0 %v5214
        %v6987 = vpop.f32.mrb[0].mxu0
        %v6988 = vadd.f32 %v6827, %v6987
        %v6989 = vpop.f32.mrb[0].mxu0
        %v6990 = vpop.f32.mrb[0].mxu0
        %v6991 = vadd.f32 %v6830, %v6990
        %v6992 = vpop.f32.mrb[0].mxu0
        %6993 = vmatprep.mubr.bf16.mxu0 %v5339
        %6994 = vmatmul.mubr.bf16.gmra.mrb[0].mxu0 %v5217
        %v6995 = vpop.f32.mrb[0].mxu0
        %v6996 = vadd.f32 %v6835, %v6995
        %v6997 = vpop.f32.mrb[0].mxu0
        %v6998 = vpop.f32.mrb[0].mxu0
        %v6999 = vadd.f32 %v6838, %v6998
        %v7000 = vpop.f32.mrb[0].mxu0
        %7001 = vmatprep.mubr.bf16.mxu0 %v5340
        %7002 = vmatmul.mubr.bf16.gmra.mrb[0].mxu0 %v5220
        %v7003 = vpop.f32.mrb[0].mxu0
        %v7004 = vadd.f32 %v6843, %v7003
        %v7005 = vpop.f32.mrb[0].mxu0
        %v7006 = vpop.f32.mrb[0].mxu0
        %v7007 = vadd.f32 %v6846, %v7006
        %v7008 = vpop.f32.mrb[0].mxu0
        %7009 = vmatprep.mubr.bf16.mxu0 %v5341
        %7010 = vmatmul.mubr.bf16.gmra.mrb[0].mxu0 %v5223
        %v7011 = vpop.f32.mrb[0].mxu0
        %v7012 = vadd.f32 %v6851, %v7011
        %v7013 = vpop.f32.mrb[0].mxu0
        %v7014 = vpop.f32.mrb[0].mxu0
        %v7015 = vadd.f32 %v6854, %v7014
        %v7016 = vpop.f32.mrb[0].mxu0
        %7017 = vmatprep.mubr.bf16.mxu0 %v5342
        %7018 = vmatmul.mubr.bf16.gmra.mrb[0].mxu0 %v5226
        %v7019 = vpop.f32.mrb[0].mxu0
        %v7020 = vadd.f32 %v6859, %v7019
        %v7021 = vpop.f32.mrb[0].mxu0
        %v7022 = vpop.f32.mrb[0].mxu0
        %v7023 = vadd.f32 %v6862, %v7022
        %v7024 = vpop.f32.mrb[0].mxu0
        %7025 = vmatprep.mubr.bf16.mxu0 %v5343
        %7026 = vmatmul.mubr.bf16.gmra.mrb[0].mxu0 %v5229
        %v7027 = vpop.f32.mrb[0].mxu0
        %v7028 = vadd.f32 %v6867, %v7027
        %v7029 = vpop.f32.mrb[0].mxu0
        %v7030 = vpop.f32.mrb[0].mxu0
        %v7031 = vadd.f32 %v6870, %v7030
        %v7032 = vpop.f32.mrb[0].mxu0
        %7033 = vmatprep.mubr.bf16.mxu0 %v5344
        %7034 = vmatmul.mubr.bf16.gmra.mrb[0].mxu0 %v5232
        %v7035 = vpop.f32.mrb[0].mxu0
        %v7036 = vadd.f32 %v6875, %v7035
        %v7037 = vpop.f32.mrb[0].mxu0
        %v7038 = vpop.f32.mrb[0].mxu0
        %v7039 = vadd.f32 %v6878, %v7038
        %v7040 = vpop.f32.mrb[0].mxu0
        %7041 = vmatprep.mubr.bf16.mxu0 %v5345
        %7042 = vmatmul.mubr.bf16.gmra.mrb[0].mxu0 %v5235
        %v7043 = vpop.f32.mrb[0].mxu0
        %v7044 = vadd.f32 %v6883, %v7043
        %v7045 = vpop.f32.mrb[0].mxu0
        %v7046 = vpop.f32.mrb[0].mxu0
        %v7047 = vadd.f32 %v6886, %v7046
        %v7048 = vpop.f32.mrb[0].mxu0
        %7049 = vmatprep.mubr.bf16.mxu0 %v5346
        %7050 = vmatmul.mubr.bf16.gmra.mrb[0].mxu0 %v5238
        %v7051 = vpop.f32.mrb[0].mxu0
        %v7052 = vadd.f32 %v6891, %v7051
        %v7053 = vpop.f32.mrb[0].mxu0
        %v7054 = vpop.f32.mrb[0].mxu0
        %v7055 = vadd.f32 %v6894, %v7054
        %v7056 = vpop.f32.mrb[0].mxu0
        %7057 = vmatprep.mubr.bf16.mxu0 %v5347
        %7058 = vmatmul.mubr.bf16.gmra.mrb[0].mxu0 %v5241
        %v7059 = vpop.f32.mrb[0].mxu0
        %v7060 = vadd.f32 %v6899, %v7059
        %v7061 = vpop.f32.mrb[0].mxu0
        %v7062 = vpop.f32.mrb[0].mxu0
        %v7063 = vadd.f32 %v6902, %v7062
        %v7064 = vpop.f32.mrb[0].mxu0
        %7065 = vmatprep.mubr.bf16.mxu0 %v5348
        %7066 = vmatmul.mubr.bf16.gmra.mrb[0].mxu0 %v5244
        %v7067 = vpop.f32.mrb[0].mxu0
        %v7068 = vadd.f32 %v6907, %v7067
        %v7069 = vpop.f32.mrb[0].mxu0
        %v7070 = vpop.f32.mrb[0].mxu0
        %v7071 = vadd.f32 %v6910, %v7070
        %v7072 = vpop.f32.mrb[0].mxu0
        %7073 = vmatprep.mubr.bf16.mxu0 %v5349
        %7074 = vmatmul.mubr.bf16.gmra.mrb[0].mxu0 %v5247
        %v7075 = vpop.f32.mrb[0].mxu0
        %v7076 = vadd.f32 %v6915, %v7075
        %v7077 = vpop.f32.mrb[0].mxu0
        %v7078 = vpop.f32.mrb[0].mxu0
        %v7079 = vadd.f32 %v6918, %v7078
        %v7080 = vpop.f32.mrb[0].mxu0
        %7081 = vmatprep.mubr.bf16.mxu0 %v5350
        %7082 = vmatmul.mubr.bf16.gmra.mrb[0].mxu0 %v5250
        %v7083 = vpop.f32.mrb[0].mxu0
        %v7084 = vadd.f32 %v6923, %v7083
        %v7085 = vpop.f32.mrb[0].mxu0
        %v7086 = vpop.f32.mrb[0].mxu0
        %v7087 = vadd.f32 %v6926, %v7086
        %v7088 = vpop.f32.mrb[0].mxu0
        %7089 = vmatprep.mubr.bf16.mxu0 %v5351
        %7090 = vmatmul.mubr.bf16.gmra.mrb[0].mxu0 %v5253
        %v7091 = vpop.f32.mrb[0].mxu0
        %v7092 = vadd.f32 %v6931, %v7091
        %v7093 = vpop.f32.mrb[0].mxu0
        %v7094 = vpop.f32.mrb[0].mxu0
        %v7095 = vadd.f32 %v6934, %v7094
        %v7096 = vpop.f32.mrb[0].mxu0
        %7097 = vmatprep.mubr.bf16.mxu0 %v5352
        %7098 = vmatmul.mubr.bf16.gmra.mrb[0].mxu0 %v5256
        %v7099 = vpop.f32.mrb[0].mxu0
        %v7100 = vadd.f32 %v6939, %v7099
        %v7101 = vpop.f32.mrb[0].mxu0
        %v7102 = vpop.f32.mrb[0].mxu0
        %v7103 = vadd.f32 %v6942, %v7102
        %v7104 = vpop.f32.mrb[0].mxu0
        %7105 = vdwg.mxu0
        %7106 = vmatprep.subr.bf16.mxu0 0
        %7107 = vmatpush1.bf16.msra.mxu0 %v6672
        %7108 = vmatprep.subr.bf16.mxu0 0
        %7109 = vmatpush1.bf16.msra.mxu0 %v6673
        %7110 = vmatprep.subr.bf16.mxu0 0
        %7111 = vmatpush1.bf16.msra.mxu0 %v6674
        %7112 = vmatprep.subr.bf16.mxu0 0
        %7113 = vmatpush1.bf16.msra.mxu0 %v6675
        %7114 = vmatprep.subr.bf16.mxu0 0
        %7115 = vmatpush1.bf16.msra.mxu0 %v6676
        %7116 = vmatprep.subr.bf16.mxu0 0
        %7117 = vmatpush1.bf16.msra.mxu0 %v6677
        %7118 = vmatprep.subr.bf16.mxu0 0
        %7119 = vmatpush1.bf16.msra.mxu0 %v6678
        %7120 = vmatprep.subr.bf16.mxu0 0
        %7121 = vmatpush1.bf16.msra.mxu0 %v6679
        %7122 = vmatprep.subr.bf16.mxu0 0
        %7123 = vmatpush1.bf16.msra.mxu0 %v6680
        %7124 = vmatprep.subr.bf16.mxu0 0
        %7125 = vmatpush1.bf16.msra.mxu0 %v6681
        %7126 = vmatprep.subr.bf16.mxu0 0
        %7127 = vmatpush1.bf16.msra.mxu0 %v6682
        %7128 = vmatprep.subr.bf16.mxu0 0
        %7129 = vmatpush1.bf16.msra.mxu0 %v6683
        %7130 = vmatprep.subr.bf16.mxu0 0
        %7131 = vmatpush1.bf16.msra.mxu0 %v6684
        %7132 = vmatprep.subr.bf16.mxu0 0
        %7133 = vmatpush1.bf16.msra.mxu0 %v6685
        %7134 = vmatprep.subr.bf16.mxu0 0
        %7135 = vmatpush1.bf16.msra.mxu0 %v6686
        %7136 = vmatprep.subr.bf16.mxu0 0
        %7137 = vmatpush1.bf16.msra.mxu0 %v6687
        %7138 = vmatprep.mubr.bf16.mxu0 %v5675
        %7139 = vmatmul.mubr.bf16.gmra.mrb[0].mxu0 %v5428
        %v7140 = vpop.f32.mrb[0].mxu0
        %v7141 = vadd.f32 %v6980, %v7140
        %v7142 = vpop.f32.mrb[0].mxu0
        %v7143 = vpop.f32.mrb[0].mxu0
        %v7144 = vadd.f32 %v6983, %v7143
        %v7145 = vpop.f32.mrb[0].mxu0
        %7146 = vmatprep.mubr.bf16.mxu0 %v5678
        %7147 = vmatmul.mubr.bf16.gmra.mrb[0].mxu0 %v5440
        %v7148 = vpop.f32.mrb[0].mxu0
        %v7149 = vadd.f32 %v6988, %v7148
        %v7150 = vpop.f32.mrb[0].mxu0
        %v7151 = vpop.f32.mrb[0].mxu0
        %v7152 = vadd.f32 %v6991, %v7151
        %v7153 = vpop.f32.mrb[0].mxu0
        %7154 = vmatprep.mubr.bf16.mxu0 %v5681
        %7155 = vmatmul.mubr.bf16.gmra.mrb[0].mxu0 %v5452
        %v7156 = vpop.f32.mrb[0].mxu0
        %v7157 = vadd.f32 %v6996, %v7156
        %v7158 = vpop.f32.mrb[0].mxu0
        %v7159 = vpop.f32.mrb[0].mxu0
        %v7160 = vadd.f32 %v6999, %v7159
        %v7161 = vpop.f32.mrb[0].mxu0
        %7162 = vmatprep.mubr.bf16.mxu0 %v5684
        %7163 = vmatmul.mubr.bf16.gmra.mrb[0].mxu0 %v5464
        %v7164 = vpop.f32.mrb[0].mxu0
        %v7165 = vadd.f32 %v7004, %v7164
        %v7166 = vpop.f32.mrb[0].mxu0
        %v7167 = vpop.f32.mrb[0].mxu0
        %v7168 = vadd.f32 %v7007, %v7167
        %v7169 = vpop.f32.mrb[0].mxu0
        %7170 = vmatprep.mubr.bf16.mxu0 %v5687
        %7171 = vmatmul.mubr.bf16.gmra.mrb[0].mxu0 %v5476
        %v7172 = vpop.f32.mrb[0].mxu0
        %v7173 = vadd.f32 %v7012, %v7172
        %v7174 = vpop.f32.mrb[0].mxu0
        %v7175 = vpop.f32.mrb[0].mxu0
        %v7176 = vadd.f32 %v7015, %v7175
        %v7177 = vpop.f32.mrb[0].mxu0
        %7178 = vmatprep.mubr.bf16.mxu0 %v5690
        %7179 = vmatmul.mubr.bf16.gmra.mrb[0].mxu0 %v5488
        %v7180 = vpop.f32.mrb[0].mxu0
        %v7181 = vadd.f32 %v7020, %v7180
        %v7182 = vpop.f32.mrb[0].mxu0
        %v7183 = vpop.f32.mrb[0].mxu0
        %v7184 = vadd.f32 %v7023, %v7183
        %v7185 = vpop.f32.mrb[0].mxu0
        %7186 = vmatprep.mubr.bf16.mxu0 %v5693
        %7187 = vmatmul.mubr.bf16.gmra.mrb[0].mxu0 %v5500
        %v7188 = vpop.f32.mrb[0].mxu0
        %v7189 = vadd.f32 %v7028, %v7188
        %v7190 = vpop.f32.mrb[0].mxu0
        %v7191 = vpop.f32.mrb[0].mxu0
        %v7192 = vadd.f32 %v7031, %v7191
        %v7193 = vpop.f32.mrb[0].mxu0
        %7194 = vmatprep.mubr.bf16.mxu0 %v5696
        %7195 = vmatmul.mubr.bf16.gmra.mrb[0].mxu0 %v5512
        %v7196 = vpop.f32.mrb[0].mxu0
        %v7197 = vadd.f32 %v7036, %v7196
        %v7198 = vpop.f32.mrb[0].mxu0
        %v7199 = vpop.f32.mrb[0].mxu0
        %v7200 = vadd.f32 %v7039, %v7199
        %v7201 = vpop.f32.mrb[0].mxu0
        %7202 = vmatprep.mubr.bf16.mxu0 %v5699
        %7203 = vmatmul.mubr.bf16.gmra.mrb[0].mxu0 %v5524
        %v7204 = vpop.f32.mrb[0].mxu0
        %v7205 = vadd.f32 %v7044, %v7204
        %v7206 = vpop.f32.mrb[0].mxu0
        %v7207 = vpop.f32.mrb[0].mxu0
        %v7208 = vadd.f32 %v7047, %v7207
        %v7209 = vpop.f32.mrb[0].mxu0
        %7210 = vmatprep.mubr.bf16.mxu0 %v5702
        %7211 = vmatmul.mubr.bf16.gmra.mrb[0].mxu0 %v5536
        %v7212 = vpop.f32.mrb[0].mxu0
        %v7213 = vadd.f32 %v7052, %v7212
        %v7214 = vpop.f32.mrb[0].mxu0
        %v7215 = vpop.f32.mrb[0].mxu0
        %v7216 = vadd.f32 %v7055, %v7215
        %v7217 = vpop.f32.mrb[0].mxu0
        %7218 = vmatprep.mubr.bf16.mxu0 %v5705
        %7219 = vmatmul.mubr.bf16.gmra.mrb[0].mxu0 %v5548
        %v7220 = vpop.f32.mrb[0].mxu0
        %v7221 = vadd.f32 %v7060, %v7220
        %v7222 = vpop.f32.mrb[0].mxu0
        %v7223 = vpop.f32.mrb[0].mxu0
        %v7224 = vadd.f32 %v7063, %v7223
        %v7225 = vpop.f32.mrb[0].mxu0
        %7226 = vmatprep.mubr.bf16.mxu0 %v5708
        %7227 = vmatmul.mubr.bf16.gmra.mrb[0].mxu0 %v5560
        %v7228 = vpop.f32.mrb[0].mxu0
        %v7229 = vadd.f32 %v7068, %v7228
        %v7230 = vpop.f32.mrb[0].mxu0
        %v7231 = vpop.f32.mrb[0].mxu0
        %v7232 = vadd.f32 %v7071, %v7231
        %v7233 = vpop.f32.mrb[0].mxu0
        %7234 = vmatprep.mubr.bf16.mxu0 %v5711
        %7235 = vmatmul.mubr.bf16.gmra.mrb[0].mxu0 %v5572
        %v7236 = vpop.f32.mrb[0].mxu0
        %v7237 = vadd.f32 %v7076, %v7236
        %v7238 = vpop.f32.mrb[0].mxu0
        %v7239 = vpop.f32.mrb[0].mxu0
        %v7240 = vadd.f32 %v7079, %v7239
        %v7241 = vpop.f32.mrb[0].mxu0
        %7242 = vmatprep.mubr.bf16.mxu0 %v5714
        %7243 = vmatmul.mubr.bf16.gmra.mrb[0].mxu0 %v5584
        %v7244 = vpop.f32.mrb[0].mxu0
        %v7245 = vadd.f32 %v7084, %v7244
        %v7246 = vpop.f32.mrb[0].mxu0
        %v7247 = vpop.f32.mrb[0].mxu0
        %v7248 = vadd.f32 %v7087, %v7247
        %v7249 = vpop.f32.mrb[0].mxu0
        %7250 = vmatprep.mubr.bf16.mxu0 %v5717
        %7251 = vmatmul.mubr.bf16.gmra.mrb[0].mxu0 %v5596
        %v7252 = vpop.f32.mrb[0].mxu0
        %v7253 = vadd.f32 %v7092, %v7252
        %v7254 = vpop.f32.mrb[0].mxu0
        %v7255 = vpop.f32.mrb[0].mxu0
        %v7256 = vadd.f32 %v7095, %v7255
        %v7257 = vpop.f32.mrb[0].mxu0
        %7258 = vmatprep.mubr.bf16.mxu0 %v5720
        %7259 = vmatmul.mubr.bf16.gmra.mrb[0].mxu0 %v5608
        %v7260 = vpop.f32.mrb[0].mxu0
        %v7261 = vadd.f32 %v7100, %v7260
        %v7262 = vpop.f32.mrb[0].mxu0
        %v7263 = vpop.f32.mrb[0].mxu0
        %v7264 = vadd.f32 %v7103, %v7263
        %v7265 = vpop.f32.mrb[0].mxu0
        %7266 = vdwg.mxu0
        %7267 = vmatprep.subr.bf16.mxu0 0
        %7268 = vmatpush1.bf16.msra.mxu0 %v6688
        %7269 = vmatprep.subr.bf16.mxu0 0
        %7270 = vmatpush1.bf16.msra.mxu0 %v6689
        %7271 = vmatprep.subr.bf16.mxu0 0
        %7272 = vmatpush1.bf16.msra.mxu0 %v6690
        %7273 = vmatprep.subr.bf16.mxu0 0
        %7274 = vmatpush1.bf16.msra.mxu0 %v6691
        %7275 = vmatprep.subr.bf16.mxu0 0
        %7276 = vmatpush1.bf16.msra.mxu0 %v6692
        %7277 = vmatprep.subr.bf16.mxu0 0
        %7278 = vmatpush1.bf16.msra.mxu0 %v6693
        %7279 = vmatprep.subr.bf16.mxu0 0
        %7280 = vmatpush1.bf16.msra.mxu0 %v6694
        %7281 = vmatprep.subr.bf16.mxu0 0
        %7282 = vmatpush1.bf16.msra.mxu0 %v6695
        %7283 = vmatprep.subr.bf16.mxu0 0
        %7284 = vmatpush1.bf16.msra.mxu0 %v6696
        %7285 = vmatprep.subr.bf16.mxu0 0
        %7286 = vmatpush1.bf16.msra.mxu0 %v6697
        %7287 = vmatprep.subr.bf16.mxu0 0
        %7288 = vmatpush1.bf16.msra.mxu0 %v6698
        %7289 = vmatprep.subr.bf16.mxu0 0
        %7290 = vmatpush1.bf16.msra.mxu0 %v6699
        %7291 = vmatprep.subr.bf16.mxu0 0
        %7292 = vmatpush1.bf16.msra.mxu0 %v6700
        %7293 = vmatprep.subr.bf16.mxu0 0
        %7294 = vmatpush1.bf16.msra.mxu0 %v6701
        %7295 = vmatprep.subr.bf16.mxu0 0
        %7296 = vmatpush1.bf16.msra.mxu0 %v6702
        %7297 = vmatprep.subr.bf16.mxu0 0
        %7298 = vmatpush1.bf16.msra.mxu0 %v6703
        %7299 = vmatprep.mubr.bf16.mxu0 %v5892
        %7300 = vmatmul.mubr.bf16.gmra.mrb[0].mxu0 %v5801
        %v7301 = vpop.f32.mrb[0].mxu0
        %v7302 = vadd.f32 %v7141, %v7301
        %v7303 = vpop.f32.mrb[0].mxu0
        %v7304 = vpop.f32.mrb[0].mxu0
        %v7305 = vadd.f32 %v7144, %v7304
        %v7306 = vpop.f32.mrb[0].mxu0
        %7307 = vmatprep.mubr.bf16.mxu0 %v5904
        %7308 = vmatmul.mubr.bf16.gmra.mrb[0].mxu0 %v5802
        %v7309 = vpop.f32.mrb[0].mxu0
        %v7310 = vadd.f32 %v7149, %v7309
        %v7311 = vpop.f32.mrb[0].mxu0
        %v7312 = vpop.f32.mrb[0].mxu0
        %v7313 = vadd.f32 %v7152, %v7312
        %v7314 = vpop.f32.mrb[0].mxu0
        %7315 = vmatprep.mubr.bf16.mxu0 %v5916
        %7316 = vmatmul.mubr.bf16.gmra.mrb[0].mxu0 %v5803
        %v7317 = vpop.f32.mrb[0].mxu0
        %v7318 = vadd.f32 %v7157, %v7317
        %v7319 = vpop.f32.mrb[0].mxu0
        %v7320 = vpop.f32.mrb[0].mxu0
        %v7321 = vadd.f32 %v7160, %v7320
        %v7322 = vpop.f32.mrb[0].mxu0
        %7323 = vmatprep.mubr.bf16.mxu0 %v5928
        %7324 = vmatmul.mubr.bf16.gmra.mrb[0].mxu0 %v5804
        %v7325 = vpop.f32.mrb[0].mxu0
        %v7326 = vadd.f32 %v7165, %v7325
        %v7327 = vpop.f32.mrb[0].mxu0
        %v7328 = vpop.f32.mrb[0].mxu0
        %v7329 = vadd.f32 %v7168, %v7328
        %v7330 = vpop.f32.mrb[0].mxu0
        %7331 = vmatprep.mubr.bf16.mxu0 %v5940
        %7332 = vmatmul.mubr.bf16.gmra.mrb[0].mxu0 %v5805
        %v7333 = vpop.f32.mrb[0].mxu0
        %v7334 = vadd.f32 %v7173, %v7333
        %v7335 = vpop.f32.mrb[0].mxu0
        %v7336 = vpop.f32.mrb[0].mxu0
        %v7337 = vadd.f32 %v7176, %v7336
        %v7338 = vpop.f32.mrb[0].mxu0
        %7339 = vmatprep.mubr.bf16.mxu0 %v5952
        %7340 = vmatmul.mubr.bf16.gmra.mrb[0].mxu0 %v5806
        %v7341 = vpop.f32.mrb[0].mxu0
        %v7342 = vadd.f32 %v7181, %v7341
        %v7343 = vpop.f32.mrb[0].mxu0
        %v7344 = vpop.f32.mrb[0].mxu0
        %v7345 = vadd.f32 %v7184, %v7344
        %v7346 = vpop.f32.mrb[0].mxu0
        %7347 = vmatprep.mubr.bf16.mxu0 %v5964
        %7348 = vmatmul.mubr.bf16.gmra.mrb[0].mxu0 %v5807
        %v7349 = vpop.f32.mrb[0].mxu0
        %v7350 = vadd.f32 %v7189, %v7349
        %v7351 = vpop.f32.mrb[0].mxu0
        %v7352 = vpop.f32.mrb[0].mxu0
        %v7353 = vadd.f32 %v7192, %v7352
        %v7354 = vpop.f32.mrb[0].mxu0
        %7355 = vmatprep.mubr.bf16.mxu0 %v5976
        %7356 = vmatmul.mubr.bf16.gmra.mrb[0].mxu0 %v5808
        %v7357 = vpop.f32.mrb[0].mxu0
        %v7358 = vadd.f32 %v7197, %v7357
        %v7359 = vpop.f32.mrb[0].mxu0
        %v7360 = vpop.f32.mrb[0].mxu0
        %v7361 = vadd.f32 %v7200, %v7360
        %v7362 = vpop.f32.mrb[0].mxu0
        %7363 = vmatprep.mubr.bf16.mxu0 %v5988
        %7364 = vmatmul.mubr.bf16.gmra.mrb[0].mxu0 %v5809
        %v7365 = vpop.f32.mrb[0].mxu0
        %v7366 = vadd.f32 %v7205, %v7365
        %v7367 = vpop.f32.mrb[0].mxu0
        %v7368 = vpop.f32.mrb[0].mxu0
        %v7369 = vadd.f32 %v7208, %v7368
        %v7370 = vpop.f32.mrb[0].mxu0
        %7371 = vmatprep.mubr.bf16.mxu0 %v6000
        %7372 = vmatmul.mubr.bf16.gmra.mrb[0].mxu0 %v5810
        %v7373 = vpop.f32.mrb[0].mxu0
        %v7374 = vadd.f32 %v7213, %v7373
        %v7375 = vpop.f32.mrb[0].mxu0
        %v7376 = vpop.f32.mrb[0].mxu0
        %v7377 = vadd.f32 %v7216, %v7376
        %v7378 = vpop.f32.mrb[0].mxu0
        %7379 = vmatprep.mubr.bf16.mxu0 %v6012
        %7380 = vmatmul.mubr.bf16.gmra.mrb[0].mxu0 %v5811
        %v7381 = vpop.f32.mrb[0].mxu0
        %v7382 = vadd.f32 %v7221, %v7381
        %v7383 = vpop.f32.mrb[0].mxu0
        %v7384 = vpop.f32.mrb[0].mxu0
        %v7385 = vadd.f32 %v7224, %v7384
        %v7386 = vpop.f32.mrb[0].mxu0
        %7387 = vmatprep.mubr.bf16.mxu0 %v6024
        %7388 = vmatmul.mubr.bf16.gmra.mrb[0].mxu0 %v5812
        %v7389 = vpop.f32.mrb[0].mxu0
        %v7390 = vadd.f32 %v7229, %v7389
        %v7391 = vpop.f32.mrb[0].mxu0
        %v7392 = vpop.f32.mrb[0].mxu0
        %v7393 = vadd.f32 %v7232, %v7392
        %v7394 = vpop.f32.mrb[0].mxu0
        %7395 = vmatprep.mubr.bf16.mxu0 %v6036
        %7396 = vmatmul.mubr.bf16.gmra.mrb[0].mxu0 %v5813
        %v7397 = vpop.f32.mrb[0].mxu0
        %v7398 = vadd.f32 %v7237, %v7397
        %v7399 = vpop.f32.mrb[0].mxu0
        %v7400 = vpop.f32.mrb[0].mxu0
        %v7401 = vadd.f32 %v7240, %v7400
        %v7402 = vpop.f32.mrb[0].mxu0
        %7403 = vmatprep.mubr.bf16.mxu0 %v6048
        %7404 = vmatmul.mubr.bf16.gmra.mrb[0].mxu0 %v5814
        %v7405 = vpop.f32.mrb[0].mxu0
        %v7406 = vadd.f32 %v7245, %v7405
        %v7407 = vpop.f32.mrb[0].mxu0
        %v7408 = vpop.f32.mrb[0].mxu0
        %v7409 = vadd.f32 %v7248, %v7408
        %v7410 = vpop.f32.mrb[0].mxu0
        %7411 = vmatprep.mubr.bf16.mxu0 %v6060
        %7412 = vmatmul.mubr.bf16.gmra.mrb[0].mxu0 %v5815
        %v7413 = vpop.f32.mrb[0].mxu0
        %v7414 = vadd.f32 %v7253, %v7413
        %v7415 = vpop.f32.mrb[0].mxu0
        %v7416 = vpop.f32.mrb[0].mxu0
        %v7417 = vadd.f32 %v7256, %v7416
        %v7418 = vpop.f32.mrb[0].mxu0
        %7419 = vmatprep.mubr.bf16.mxu0 %v6072
        %7420 = vmatmul.mubr.bf16.gmra.mrb[0].mxu0 %v5816
        %v7421 = vpop.f32.mrb[0].mxu0
        %v7422 = vadd.f32 %v7261, %v7421
        %v7423 = vpop.f32.mrb[0].mxu0
        %v7424 = vpop.f32.mrb[0].mxu0
        %v7425 = vadd.f32 %v7264, %v7424
        %v7426 = vpop.f32.mrb[0].mxu0
        %7427 = vdwg.mxu0
        %7428 = vmatprep.subr.bf16.mxu0 0
        %7429 = vmatpush1.bf16.msra.mxu0 %v6704
        %7430 = vmatprep.subr.bf16.mxu0 0
        %7431 = vmatpush1.bf16.msra.mxu0 %v6705
        %7432 = vmatprep.subr.bf16.mxu0 0
        %7433 = vmatpush1.bf16.msra.mxu0 %v6706
        %7434 = vmatprep.subr.bf16.mxu0 0
        %7435 = vmatpush1.bf16.msra.mxu0 %v6707
        %7436 = vmatprep.subr.bf16.mxu0 0
        %7437 = vmatpush1.bf16.msra.mxu0 %v6708
        %7438 = vmatprep.subr.bf16.mxu0 0
        %7439 = vmatpush1.bf16.msra.mxu0 %v6709
        %7440 = vmatprep.subr.bf16.mxu0 0
        %7441 = vmatpush1.bf16.msra.mxu0 %v6710
        %7442 = vmatprep.subr.bf16.mxu0 0
        %7443 = vmatpush1.bf16.msra.mxu0 %v6711
        %7444 = vmatprep.subr.bf16.mxu0 0
        %7445 = vmatpush1.bf16.msra.mxu0 0
        %7446 = vmatprep.subr.bf16.mxu0 0
        %7447 = vmatpush1.bf16.msra.mxu0 0
        %7448 = vmatprep.subr.bf16.mxu0 0
        %7449 = vmatpush1.bf16.msra.mxu0 0
        %7450 = vmatprep.subr.bf16.mxu0 0
        %7451 = vmatpush1.bf16.msra.mxu0 0
        %7452 = vmatprep.subr.bf16.mxu0 0
        %7453 = vmatpush1.bf16.msra.mxu0 0
        %7454 = vmatprep.subr.bf16.mxu0 0
        %7455 = vmatpush1.bf16.msra.mxu0 0
        %7456 = vmatprep.subr.bf16.mxu0 0
        %7457 = vmatpush1.bf16.msra.mxu0 0
        %7458 = vmatprep.subr.bf16.mxu0 0
        %7459 = vmatpush1.bf16.msra.mxu0 0
        %7460 = vmatprep.mubr.bf16.mxu0 0
        %7461 = vmatmul.mubr.bf16.gmra.mrb[0].mxu0 %v6139
        %v7462 = vpop.f32.mrb[0].mxu0
        %v7463 = vadd.f32 %v7302, %v7462
        %v7464 = vpop.f32.mrb[0].mxu0
        %v7465 = vpop.f32.mrb[0].mxu0
        %v7466 = vadd.f32 %v7305, %v7465
        %v7467 = vpop.f32.mrb[0].mxu0
        %7468 = vmatprep.mubr.bf16.mxu0 0
        %7469 = vmatmul.mubr.bf16.gmra.mrb[0].mxu0 %v6142
        %v7470 = vpop.f32.mrb[0].mxu0
        %v7471 = vadd.f32 %v7310, %v7470
        %v7472 = vpop.f32.mrb[0].mxu0
        %v7473 = vpop.f32.mrb[0].mxu0
        %v7474 = vadd.f32 %v7313, %v7473
        %v7475 = vpop.f32.mrb[0].mxu0
        %7476 = vmatprep.mubr.bf16.mxu0 0
        %7477 = vmatmul.mubr.bf16.gmra.mrb[0].mxu0 %v6145
        %v7478 = vpop.f32.mrb[0].mxu0
        %v7479 = vadd.f32 %v7318, %v7478
        %v7480 = vpop.f32.mrb[0].mxu0
        %v7481 = vpop.f32.mrb[0].mxu0
        %v7482 = vadd.f32 %v7321, %v7481
        %v7483 = vpop.f32.mrb[0].mxu0
        %7484 = vmatprep.mubr.bf16.mxu0 0
        %7485 = vmatmul.mubr.bf16.gmra.mrb[0].mxu0 %v6148
        %v7486 = vpop.f32.mrb[0].mxu0
        %v7487 = vadd.f32 %v7326, %v7486
        %v7488 = vpop.f32.mrb[0].mxu0
        %v7489 = vpop.f32.mrb[0].mxu0
        %v7490 = vadd.f32 %v7329, %v7489
        %v7491 = vpop.f32.mrb[0].mxu0
        %7492 = vmatprep.mubr.bf16.mxu0 0
        %7493 = vmatmul.mubr.bf16.gmra.mrb[0].mxu0 %v6151
        %v7494 = vpop.f32.mrb[0].mxu0
        %v7495 = vadd.f32 %v7334, %v7494
        %v7496 = vpop.f32.mrb[0].mxu0
        %v7497 = vpop.f32.mrb[0].mxu0
        %v7498 = vadd.f32 %v7337, %v7497
        %v7499 = vpop.f32.mrb[0].mxu0
        %7500 = vmatprep.mubr.bf16.mxu0 0
        %7501 = vmatmul.mubr.bf16.gmra.mrb[0].mxu0 %v6154
        %v7502 = vpop.f32.mrb[0].mxu0
        %v7503 = vadd.f32 %v7342, %v7502
        %v7504 = vpop.f32.mrb[0].mxu0
        %v7505 = vpop.f32.mrb[0].mxu0
        %v7506 = vadd.f32 %v7345, %v7505
        %v7507 = vpop.f32.mrb[0].mxu0
        %7508 = vmatprep.mubr.bf16.mxu0 0
        %7509 = vmatmul.mubr.bf16.gmra.mrb[0].mxu0 %v6157
        %v7510 = vpop.f32.mrb[0].mxu0
        %v7511 = vadd.f32 %v7350, %v7510
        %v7512 = vpop.f32.mrb[0].mxu0
        %v7513 = vpop.f32.mrb[0].mxu0
        %v7514 = vadd.f32 %v7353, %v7513
        %v7515 = vpop.f32.mrb[0].mxu0
        %7516 = vmatprep.mubr.bf16.mxu0 0
        %7517 = vmatmul.mubr.bf16.gmra.mrb[0].mxu0 %v6160
        %v7518 = vpop.f32.mrb[0].mxu0
        %v7519 = vadd.f32 %v7358, %v7518
        %v7520 = vpop.f32.mrb[0].mxu0
        %v7521 = vpop.f32.mrb[0].mxu0
        %v7522 = vadd.f32 %v7361, %v7521
        %v7523 = vpop.f32.mrb[0].mxu0
        %7524 = vmatprep.mubr.bf16.mxu0 0
        %7525 = vmatmul.mubr.bf16.gmra.mrb[0].mxu0 %v6163
        %v7526 = vpop.f32.mrb[0].mxu0
        %v7527 = vadd.f32 %v7366, %v7526
        %v7528 = vpop.f32.mrb[0].mxu0
        %v7529 = vpop.f32.mrb[0].mxu0
        %v7530 = vadd.f32 %v7369, %v7529
        %v7531 = vpop.f32.mrb[0].mxu0
        %7532 = vmatprep.mubr.bf16.mxu0 0
        %7533 = vmatmul.mubr.bf16.gmra.mrb[0].mxu0 %v6166
        %v7534 = vpop.f32.mrb[0].mxu0
        %v7535 = vadd.f32 %v7374, %v7534
        %v7536 = vpop.f32.mrb[0].mxu0
        %v7537 = vpop.f32.mrb[0].mxu0
        %v7538 = vadd.f32 %v7377, %v7537
        %v7539 = vpop.f32.mrb[0].mxu0
        %7540 = vmatprep.mubr.bf16.mxu0 0
        %7541 = vmatmul.mubr.bf16.gmra.mrb[0].mxu0 %v6169
        %v7542 = vpop.f32.mrb[0].mxu0
        %v7543 = vadd.f32 %v7382, %v7542
        %v7544 = vpop.f32.mrb[0].mxu0
        %v7545 = vpop.f32.mrb[0].mxu0
        %v7546 = vadd.f32 %v7385, %v7545
        %v7547 = vpop.f32.mrb[0].mxu0
        %7548 = vmatprep.mubr.bf16.mxu0 0
        %7549 = vmatmul.mubr.bf16.gmra.mrb[0].mxu0 %v6172
        %v7550 = vpop.f32.mrb[0].mxu0
        %v7551 = vadd.f32 %v7390, %v7550
        %v7552 = vpop.f32.mrb[0].mxu0
        %v7553 = vpop.f32.mrb[0].mxu0
        %v7554 = vadd.f32 %v7393, %v7553
        %v7555 = vpop.f32.mrb[0].mxu0
        %7556 = vmatprep.mubr.bf16.mxu0 0
        %7557 = vmatmul.mubr.bf16.gmra.mrb[0].mxu0 %v6175
        %v7558 = vpop.f32.mrb[0].mxu0
        %v7559 = vadd.f32 %v7398, %v7558
        %v7560 = vpop.f32.mrb[0].mxu0
        %v7561 = vpop.f32.mrb[0].mxu0
        %v7562 = vadd.f32 %v7401, %v7561
        %v7563 = vpop.f32.mrb[0].mxu0
        %7564 = vmatprep.mubr.bf16.mxu0 0
        %7565 = vmatmul.mubr.bf16.gmra.mrb[0].mxu0 %v6178
        %v7566 = vpop.f32.mrb[0].mxu0
        %v7567 = vadd.f32 %v7406, %v7566
        %v7568 = vpop.f32.mrb[0].mxu0
        %v7569 = vpop.f32.mrb[0].mxu0
        %v7570 = vadd.f32 %v7409, %v7569
        %v7571 = vpop.f32.mrb[0].mxu0
        %7572 = vmatprep.mubr.bf16.mxu0 0
        %7573 = vmatmul.mubr.bf16.gmra.mrb[0].mxu0 %v6181
        %v7574 = vpop.f32.mrb[0].mxu0
        %v7575 = vadd.f32 %v7414, %v7574
        %v7576 = vpop.f32.mrb[0].mxu0
        %v7577 = vpop.f32.mrb[0].mxu0
        %v7578 = vadd.f32 %v7417, %v7577
        %v7579 = vpop.f32.mrb[0].mxu0
        %7580 = vmatprep.mubr.bf16.mxu0 0
        %7581 = vmatmul.mubr.bf16.gmra.mrb[0].mxu0 %v6184
        %v7582 = vpop.f32.mrb[0].mxu0
        %v7583 = vadd.f32 %v7422, %v7582
        %v7584 = vpop.f32.mrb[0].mxu0
        %v7585 = vpop.f32.mrb[0].mxu0
        %v7586 = vadd.f32 %v7425, %v7585
        %v7587 = vpop.f32.mrb[0].mxu0
        %7588 = vdwg.mxu0
        %v7589 = vadd.f32 %v7463, %v7466
        %v7590 = vadd.f32 %v7589, %v7471
        %v7591 = vadd.f32 %v7590, %v7474
        %v7592 = vadd.f32 %v7591, %v7479
        %v7593 = vadd.f32 %v7592, %v7482
        %v7594 = vadd.f32 %v7593, %v7487
        %v7595 = vadd.f32 %v7594, %v7490
        %v7596 = vadd.f32 %v7595, %v7495
        %v7597 = vadd.f32 %v7596, %v7498
        %v7598 = vadd.f32 %v7597, %v7503
        %v7599 = vadd.f32 %v7598, %v7506
        %v7600 = vadd.f32 %v7599, %v7511
        %v7601 = vadd.f32 %v7600, %v7514
        %v7602 = vadd.f32 %v7601, %v7519
        %v7603 = vadd.f32 %v7602, %v7522
        %v7604 = vadd.f32 %v7603, %v7527
        %v7605 = vadd.f32 %v7604, %v7530
        %v7606 = vadd.f32 %v7605, %v7535
        %v7607 = vadd.f32 %v7606, %v7538
        %v7608 = vadd.f32 %v7607, %v7543
        %v7609 = vadd.f32 %v7608, %v7546
        %v7610 = vadd.f32 %v7609, %v7551
        %v7611 = vadd.f32 %v7610, %v7554
        %v7612 = vadd.f32 %v7611, %v7559
        %v7613 = vadd.f32 %v7612, %v7562
        %v7614 = vadd.f32 %v7613, %v7567
        %v7615 = vadd.f32 %v7614, %v7570
        %v7616 = vadd.f32 %v7615, %v7575
        %v7617 = vadd.f32 %v7616, %v7578
        %v7618 = vadd.f32 %v7617, %v7583
        %v7619 = vadd.f32 %v7618, %v7586
        %v7620 = vrot.slane %v7619, 4
        %v7621 = vadd.f32 %v7619, %v7620
        %v7622 = vrot.slane %v7621, 2
        %v7623 = vadd.f32 %v7621, %v7622
        %v7624 = vrot.slane %v7623, 1
        %v7625 = vadd.f32 %v7623, %v7624
        %v7626 = vrcp.pop 256.0
        %v7627 = vmul.f32 %v7625, %v7626
        %v7628 = vld [vmem:[#allocation9] sm:$0xff]
        %v7629 = vld [vmem:[#allocation9 + $0x8] sm:$0xff]
        %v7630 = vld [vmem:[#allocation9 + $0x10] sm:$0xff]
        %v7631 = vld [vmem:[#allocation9 + $0x18] sm:$0xff]
        %v7632 = vld [vmem:[#allocation9 + $0x20] sm:$0xff]
        %v7633 = vld [vmem:[#allocation9 + $0x28] sm:$0xff]
        %v7634 = vld [vmem:[#allocation9 + $0x30] sm:$0xff]
        %v7635 = vld [vmem:[#allocation9 + $0x38] sm:$0xff]
        %v7636 = vld [vmem:[#allocation9 + $0x40] sm:$0xff]
        %v7637 = vld [vmem:[#allocation9 + $0x48] sm:$0xff]
        %v7638 = vld [vmem:[#allocation9 + $0x50] sm:$0xff]
        %v7639 = vld [vmem:[#allocation9 + $0x58] sm:$0xff]
        %v7640 = vld [vmem:[#allocation9 + $0x60] sm:$0xff]
        %v7641 = vld [vmem:[#allocation9 + $0x68] sm:$0xff]
        %v7642 = vld [vmem:[#allocation9 + $0x70] sm:$0xff]
        %v7643 = vld [vmem:[#allocation9 + $0x78] sm:$0xff]
        %v7644 = vld [vmem:[%s6] sm:$0x1]
        %7645 = vmatprep.subr.mxu0 0.0
        %7646 = vmatpush1.msra.mxu0 %v7628
        %7647 = vmatprep.subr.mxu0 0.0
        %7648 = vmatpush1.msra.mxu0 %v7629
        %7649 = vmatprep.subr.mxu0 0.0
        %7650 = vmatpush1.msra.mxu0 %v7630
        %7651 = vmatprep.subr.mxu0 0.0
        %7652 = vmatpush1.msra.mxu0 %v7631
        %7653 = vmatprep.subr.mxu0 0.0
        %7654 = vmatpush1.msra.mxu0 %v7632
        %7655 = vmatprep.subr.mxu0 0.0
        %7656 = vmatpush1.msra.mxu0 %v7633
        %7657 = vmatprep.subr.mxu0 0.0
        %7658 = vmatpush1.msra.mxu0 %v7634
        %7659 = vmatprep.subr.mxu0 0.0
        %7660 = vmatpush1.msra.mxu0 %v7635
        %7661 = vmatprep.subr.mxu0 0.0
        %7662 = vmatpush1.msra.mxu0 %v7636
        %7663 = vmatprep.subr.mxu0 0.0
        %7664 = vmatpush1.msra.mxu0 %v7637
        %7665 = vmatprep.subr.mxu0 0.0
        %7666 = vmatpush1.msra.mxu0 %v7638
        %7667 = vmatprep.subr.mxu0 0.0
        %7668 = vmatpush1.msra.mxu0 %v7639
        %7669 = vmatprep.subr.mxu0 0.0
        %7670 = vmatpush1.msra.mxu0 %v7640
        %7671 = vmatprep.subr.mxu0 0.0
        %7672 = vmatpush1.msra.mxu0 %v7641
        %7673 = vmatprep.subr.mxu0 0.0
        %7674 = vmatpush1.msra.mxu0 %v7642
        %7675 = vmatprep.subr.mxu0 0.0
        %7676 = vmatpush1.msra.mxu0 %v7643
        %7677 = vmatprep.subr.mxu0 0.0
        %7678 = vmatpush1.msra.mxu0 0.0
        %7679 = vmatprep.subr.mxu0 0.0
        %7680 = vmatpush1.msra.mxu0 0.0
        %7681 = vmatprep.subr.mxu0 0.0
        %7682 = vmatpush1.msra.mxu0 0.0
        %7683 = vmatprep.subr.mxu0 0.0
        %7684 = vmatpush1.msra.mxu0 0.0
        %7685 = vmatprep.subr.mxu0 0.0
        %7686 = vmatpush1.msra.mxu0 0.0
        %7687 = vmatprep.subr.mxu0 0.0
        %7688 = vmatpush1.msra.mxu0 0.0
        %7689 = vmatprep.subr.mxu0 0.0
        %7690 = vmatpush1.msra.mxu0 0.0
        %7691 = vmatprep.subr.mxu0 0.0
        %7692 = vmatpush1.msra.mxu0 0.0
        %7693 = vmatprep.subr.mxu0 0.0
        %7694 = vmatpush1.msra.mxu0 0.0
        %7695 = vmatprep.subr.mxu0 0.0
        %7696 = vmatpush1.msra.mxu0 0.0
        %7697 = vmatprep.subr.mxu0 0.0
        %7698 = vmatpush1.msra.mxu0 0.0
        %7699 = vmatprep.subr.mxu0 0.0
        %7700 = vmatpush1.msra.mxu0 0.0
        %7701 = vmatprep.subr.mxu0 0.0
        %7702 = vmatpush1.msra.mxu0 0.0
        %7703 = vmatprep.subr.mxu0 0.0
        %7704 = vmatpush1.msra.mxu0 0.0
        %7705 = vmatprep.subr.mxu0 0.0
        %7706 = vmatpush1.msra.mxu0 0.0
        %7707 = vmatprep.subr.mxu0 0.0
        %7708 = vmatpush1.msra.mxu0 0.0
        %7709 = vmatprep.mubr.f32.mxu0 0.0
        %7710 = vmatmul.mubr.f32.gmra.mrb[0].mxu0 %v7627
        %v7711 = vpop.f32.mrb[0].mxu0
        %v7712 = vadd.f32 %v7644, %v7711
        %v7713 = vpop.f32.mrb[0].mxu0
        %7714 = vdwg.mxu0
        %v7715 = vmax.f32 %v7712, 0.0
        %v7716 = vld [vmem:[#allocation11] sm:$0xff]
        %v7717 = vld [vmem:[#allocation11 + $0x8] sm:$0xff]
        %v7718 = vld [vmem:[#allocation11 + $0x10] sm:$0xff]
        %v7719 = vld [vmem:[#allocation11 + $0x18] sm:$0xff]
        %v7720 = vld [vmem:[#allocation11 + $0x20] sm:$0xff]
        %v7721 = vld [vmem:[#allocation11 + $0x28] sm:$0xff]
        %v7722 = vld [vmem:[#allocation11 + $0x30] sm:$0xff]
        %v7723 = vld [vmem:[#allocation11 + $0x38] sm:$0xff]
        %v7724 = vld [vmem:[#allocation11 + $0x40] sm:$0xff]
        %v7725 = vld [vmem:[#allocation11 + $0x48] sm:$0xff]
        %v7726 = vld [vmem:[#allocation11 + $0x50] sm:$0xff]
        %v7727 = vld [vmem:[#allocation11 + $0x58] sm:$0xff]
        %v7728 = vld [vmem:[#allocation11 + $0x60] sm:$0xff]
        %v7729 = vld [vmem:[#allocation11 + $0x68] sm:$0xff]
        %v7730 = vld [vmem:[#allocation11 + $0x70] sm:$0xff]
        %v7731 = vld [vmem:[#allocation11 + $0x78] sm:$0xff]
        %v7732 = vld [vmem:[%s8] sm:$0x1]
        %7733 = vmatprep.subr.mxu0 0.0
        %7734 = vmatpush1.msra.mxu0 %v7716
        %7735 = vmatprep.subr.mxu0 0.0
        %7736 = vmatpush1.msra.mxu0 %v7717
        %7737 = vmatprep.subr.mxu0 0.0
        %7738 = vmatpush1.msra.mxu0 %v7718
        %7739 = vmatprep.subr.mxu0 0.0
        %7740 = vmatpush1.msra.mxu0 %v7719
        %7741 = vmatprep.subr.mxu0 0.0
        %7742 = vmatpush1.msra.mxu0 %v7720
        %7743 = vmatprep.subr.mxu0 0.0
        %7744 = vmatpush1.msra.mxu0 %v7721
        %7745 = vmatprep.subr.mxu0 0.0
        %7746 = vmatpush1.msra.mxu0 %v7722
        %7747 = vmatprep.subr.mxu0 0.0
        %7748 = vmatpush1.msra.mxu0 %v7723
        %7749 = vmatprep.subr.mxu0 0.0
        %7750 = vmatpush1.msra.mxu0 %v7724
        %7751 = vmatprep.subr.mxu0 0.0
        %7752 = vmatpush1.msra.mxu0 %v7725
        %7753 = vmatprep.subr.mxu0 0.0
        %7754 = vmatpush1.msra.mxu0 %v7726
        %7755 = vmatprep.subr.mxu0 0.0
        %7756 = vmatpush1.msra.mxu0 %v7727
        %7757 = vmatprep.subr.mxu0 0.0
        %7758 = vmatpush1.msra.mxu0 %v7728
        %7759 = vmatprep.subr.mxu0 0.0
        %7760 = vmatpush1.msra.mxu0 %v7729
        %7761 = vmatprep.subr.mxu0 0.0
        %7762 = vmatpush1.msra.mxu0 %v7730
        %7763 = vmatprep.subr.mxu0 0.0
        %7764 = vmatpush1.msra.mxu0 %v7731
        %7765 = vmatprep.subr.mxu0 0.0
        %7766 = vmatpush1.msra.mxu0 0.0
        %7767 = vmatprep.subr.mxu0 0.0
        %7768 = vmatpush1.msra.mxu0 0.0
        %7769 = vmatprep.subr.mxu0 0.0
        %7770 = vmatpush1.msra.mxu0 0.0
        %7771 = vmatprep.subr.mxu0 0.0
        %7772 = vmatpush1.msra.mxu0 0.0
        %7773 = vmatprep.subr.mxu0 0.0
        %7774 = vmatpush1.msra.mxu0 0.0
        %7775 = vmatprep.subr.mxu0 0.0
        %7776 = vmatpush1.msra.mxu0 0.0
        %7777 = vmatprep.subr.mxu0 0.0
        %7778 = vmatpush1.msra.mxu0 0.0
        %7779 = vmatprep.subr.mxu0 0.0
        %7780 = vmatpush1.msra.mxu0 0.0
        %7781 = vmatprep.subr.mxu0 0.0
        %7782 = vmatpush1.msra.mxu0 0.0
        %7783 = vmatprep.subr.mxu0 0.0
        %7784 = vmatpush1.msra.mxu0 0.0
        %7785 = vmatprep.subr.mxu0 0.0
        %7786 = vmatpush1.msra.mxu0 0.0
        %7787 = vmatprep.subr.mxu0 0.0
        %7788 = vmatpush1.msra.mxu0 0.0
        %7789 = vmatprep.subr.mxu0 0.0
        %7790 = vmatpush1.msra.mxu0 0.0
        %7791 = vmatprep.subr.mxu0 0.0
        %7792 = vmatpush1.msra.mxu0 0.0
        %7793 = vmatprep.subr.mxu0 0.0
        %7794 = vmatpush1.msra.mxu0 0.0
        %7795 = vmatprep.subr.mxu0 0.0
        %7796 = vmatpush1.msra.mxu0 0.0
        %7797 = vmatprep.mubr.f32.mxu0 0.0
        %7798 = vmatmul.mubr.f32.gmra.mrb[0].mxu0 %v7715
        %v7799 = vpop.f32.mrb[0].mxu0
        %v7800 = vadd.f32 %v7732, %v7799
        %v7801 = vpop.f32.mrb[0].mxu0
        %7802 = vdwg.mxu0
        %v7803 = vsub.f32 0.0, %v7800
        %v7804 = vmul.f32 %v7803, 1.442695
        %v7805 = vpow.pop %v7804
        %v7806 = vadd.f32 %v7805, 1.0
        %v7807 = vrcp.pop %v7806
        %v7808 = vlaneseq
        %v7809 = vshrl.u32 %v7808, 7
        %v7810 = vsub.s32 0, %v7809
        %v7811 = vrot.slane %v7807, %v7810
        %v7812 = vmul.f32 %v7463, %v7811
        %v7813 = vmul.f32 %v7466, %v7811
        %v7814 = vmul.f32 %v7471, %v7811
        %v7815 = vmul.f32 %v7474, %v7811
        %v7816 = vmul.f32 %v7479, %v7811
        %v7817 = vmul.f32 %v7482, %v7811
        %v7818 = vmul.f32 %v7487, %v7811
        %v7819 = vmul.f32 %v7490, %v7811
        %v7820 = vmul.f32 %v7495, %v7811
        %v7821 = vmul.f32 %v7498, %v7811
        %v7822 = vmul.f32 %v7503, %v7811
        %v7823 = vmul.f32 %v7506, %v7811
        %v7824 = vmul.f32 %v7511, %v7811
        %v7825 = vmul.f32 %v7514, %v7811
        %v7826 = vmul.f32 %v7519, %v7811
        %v7827 = vmul.f32 %v7522, %v7811
        %v7828 = vmul.f32 %v7527, %v7811
        %v7829 = vmul.f32 %v7530, %v7811
        %v7830 = vmul.f32 %v7535, %v7811
        %v7831 = vmul.f32 %v7538, %v7811
        %v7832 = vmul.f32 %v7543, %v7811
        %v7833 = vmul.f32 %v7546, %v7811
        %v7834 = vmul.f32 %v7551, %v7811
        %v7835 = vmul.f32 %v7554, %v7811
        %v7836 = vmul.f32 %v7559, %v7811
        %v7837 = vmul.f32 %v7562, %v7811
        %v7838 = vmul.f32 %v7567, %v7811
        %v7839 = vmul.f32 %v7570, %v7811
        %v7840 = vmul.f32 %v7575, %v7811
        %v7841 = vmul.f32 %v7578, %v7811
        %v7842 = vmul.f32 %v7583, %v7811
        %v7843 = vmul.f32 %v7586, %v7811
        %v7844 = vadd.f32 %v7812, %v519
        %v7845 = vadd.f32 %v7813, %v520
        %v7846 = vadd.f32 %v7814, %v521
        %v7847 = vadd.f32 %v7815, %v522
        %v7848 = vadd.f32 %v7816, %v523
        %v7849 = vadd.f32 %v7817, %v524
        %v7850 = vadd.f32 %v7818, %v525
        %v7851 = vadd.f32 %v7819, %v526
        %v7852 = vadd.f32 %v7820, %v527
        %v7853 = vadd.f32 %v7821, %v528
        %v7854 = vadd.f32 %v7822, %v529
        %v7855 = vadd.f32 %v7823, %v530
        %v7856 = vadd.f32 %v7824, %v531
        %v7857 = vadd.f32 %v7825, %v532
        %v7858 = vadd.f32 %v7826, %v533
        %v7859 = vadd.f32 %v7827, %v534
        %v7860 = vadd.f32 %v7828, %v535
        %v7861 = vadd.f32 %v7829, %v536
        %v7862 = vadd.f32 %v7830, %v537
        %v7863 = vadd.f32 %v7831, %v538
        %v7864 = vadd.f32 %v7832, %v539
        %v7865 = vadd.f32 %v7833, %v540
        %v7866 = vadd.f32 %v7834, %v541
        %v7867 = vadd.f32 %v7835, %v542
        %v7868 = vadd.f32 %v7836, %v543
        %v7869 = vadd.f32 %v7837, %v544
        %v7870 = vadd.f32 %v7838, %v545
        %v7871 = vadd.f32 %v7839, %v546
        %v7872 = vadd.f32 %v7840, %v547
        %v7873 = vadd.f32 %v7841, %v548
        %v7874 = vadd.f32 %v7842, %v549
        %v7875 = vadd.f32 %v7843, %v550
        %7876 = vst [vmem:[%s408] sm:$0xff] %v7844
        %7877 = vst [vmem:[%s408 + $0x8] sm:$0xff] %v7845
        %7878 = vst [vmem:[%s408 + $0x10] sm:$0xff] %v7846
        %7879 = vst [vmem:[%s408 + $0x18] sm:$0xff] %v7847
        %7880 = vst [vmem:[%s408 + $0x20] sm:$0xff] %v7848
        %7881 = vst [vmem:[%s408 + $0x28] sm:$0xff] %v7849
        %7882 = vst [vmem:[%s408 + $0x30] sm:$0xff] %v7850
        %7883 = vst [vmem:[%s408 + $0x38] sm:$0xff] %v7851
        %7884 = vst [vmem:[%s408 + $0x40] sm:$0xff] %v7852
        %7885 = vst [vmem:[%s408 + $0x48] sm:$0xff] %v7853
        %7886 = vst [vmem:[%s408 + $0x50] sm:$0xff] %v7854
        %7887 = vst [vmem:[%s408 + $0x58] sm:$0xff] %v7855
        %7888 = vst [vmem:[%s408 + $0x60] sm:$0xff] %v7856
        %7889 = vst [vmem:[%s408 + $0x68] sm:$0xff] %v7857
        %7890 = vst [vmem:[%s408 + $0x70] sm:$0xff] %v7858
        %7891 = vst [vmem:[%s408 + $0x78] sm:$0xff] %v7859
        %7892 = vst [vmem:[%s408 + $0x80] sm:$0xff] %v7860
        %7893 = vst [vmem:[%s408 + $0x88] sm:$0xff] %v7861
        %7894 = vst [vmem:[%s408 + $0x90] sm:$0xff] %v7862
        %7895 = vst [vmem:[%s408 + $0x98] sm:$0xff] %v7863
        %7896 = vst [vmem:[%s408 + $0xa0] sm:$0xff] %v7864
        %7897 = vst [vmem:[%s408 + $0xa8] sm:$0xff] %v7865
        %7898 = vst [vmem:[%s408 + $0xb0] sm:$0xff] %v7866
        %7899 = vst [vmem:[%s408 + $0xb8] sm:$0xff] %v7867
        %7900 = vst [vmem:[%s408 + $0xc0] sm:$0xff] %v7868
        %7901 = vst [vmem:[%s408 + $0xc8] sm:$0xff] %v7869
        %7902 = vst [vmem:[%s408 + $0xd0] sm:$0xff] %v7870
        %7903 = vst [vmem:[%s408 + $0xd8] sm:$0xff] %v7871
        %7904 = vst [vmem:[%s408 + $0xe0] sm:$0xff] %v7872
        %7905 = vst [vmem:[%s408 + $0xe8] sm:$0xff] %v7873
        %7906 = vst [vmem:[%s408 + $0xf0] sm:$0xff] %v7874
        %7907 = vst [vmem:[%s408 + $0xf8] sm:$0xff] %v7875
        %s7908 = sand.u32 %s230, 1
        %s7909 = scalar_lea.sflag [#allocation5], %s7908
        %s7910 = sand.u32 %s230, 1
        %s7911 = smul.addr %s7910, 256
        %s7912 = scalar_lea.vmem [#allocation12], %s7911
        // Predicated region
        $region77: #{tpu_custom_call.1} parent=55 // pred_check
          %p7913 = pneg %p240
        $region78: #{tpu_custom_call.1} parent=55 // pred_check_branch
          %7915 = sbr.rel (%p7913) target = $region80
        $region79: #{tpu_custom_call.1} parent=55 // pred_region
          %s7917 = ssub.s32 4096, 4096
          %7918 = vsyncadd %s7909, %s7917
          %s7919 = smul.addr %s28, 32
          %s7920 = smul.addr %s7919, 128
          %s7921 = scalar_lea.hbm %s9, %s7920
          %s7922 = sshll.u32 %s7912, 4
          %s7923 = int_to_ptr.vmem [resolvable:$true] %s7922
          %7928 = dma.vmem_to_hbm [thread:$0]  %s7923, 4096, %s7921, %s7909, 128, 128, 8
        $region80: #{tpu_custom_call.1} parent=55 // pred_fallthru
          _
      $region56: #{tpu_custom_call.1} parent=5 // pred_fallthru
        _
      %p7929 = scmp.le.s32.totalorder 2, %s23
      // Predicated region
      $region81: #{tpu_custom_call.1} parent=5 // pred_check
        %p7930 = pneg %p7929
      $region82: #{tpu_custom_call.1} parent=5 // pred_check_branch
        %7932 = sbr.rel (%p7930) target = $region84
      $region83: #{tpu_custom_call.1} parent=5 // pred_region
        %s7933 = ssub.s32 %s23, 2
        // Predicated region
        $region85: #{tpu_custom_call.1} parent=83 // pred_check
          %p7934 = pneg %p246
        $region86: #{tpu_custom_call.1} parent=83 // pred_check_branch
          %7936 = sbr.rel (%p7934) target = $region88
        $region87: #{tpu_custom_call.1} parent=83 // pred_region
          %s7937 = sand.u32 %s231, 1
          %s7938 = scalar_lea.sflag [#allocation5], %s7937
          %s7939 = sand.u32 %s231, 1
          %s7940 = smul.addr %s7939, 256
          %s7941 = scalar_lea.vmem [#allocation12], %s7940
          %7942 = dma.done %s7938, 4096
        $region88: #{tpu_custom_call.1} parent=83 // pred_fallthru
          _
      $region84: #{tpu_custom_call.1} parent=5 // pred_fallthru
        _
    $region6: #{tpu_custom_call.1} parent=1 // loop_footer
      %s27 = sadd.s32 1, %s23
    $region7: #{tpu_custom_call.1} parent=1 // loop_footer_branch
      %22 = sbr.rel target = $region3
    $region8: #{tpu_custom_call.1} parent=1 // loop_exit
      _
    %7943 = vsyncpa [#allocation4], 1
    %s7944 = scalar_lea.sflag [#allocation4], 1
    %7945 = vsyncpa %s7944, 1
    %7946 = vsyncpa [#allocation7], 1
    %7947 = vsyncpa [#allocation10], 1
    %7948 = vsyncpa [#allocation5], 1
    %s7949 = scalar_lea.sflag [#allocation5], 1
    %7950 = vsyncpa %s7949, 1

</llo_original>
